<compile_context>
chip_gen: v5e
topology: v5e:2x2
jax: 0.10.0
libtpu: 0.0.40
codegen_flags: <defaults>
</compile_context>

<pallas_src>
import jax
import jax.numpy as jnp
from jax import lax
from jax.experimental import pallas as pl
from jax.experimental.pallas import tpu as pltpu


# ----------------------------------------------------------------------------
# In-kernel helpers
# ----------------------------------------------------------------------------
def _zero_halo_border(ref, Hf, Wf, C):
    """Zero only the 1-px border of a (Hf+2, Wf+2, C) bf16 scratch (no full clear)."""
    zr = jnp.zeros((1, Wf + 2, C), jnp.bfloat16)
    zc = jnp.zeros((Hf + 2, 1, C), jnp.bfloat16)
    ref[0:1, :, :] = zr
    ref[Hf + 1:Hf + 2, :, :] = zr
    ref[:, 0:1, :] = zc
    ref[:, Wf + 1:Wf + 2, :] = zc


def _conv3x3_bn_relu(src_ref, w_ref, s_ref, b_ref, Hf, Wf, Cin):
    """3x3 conv (no bias) -> folded BN -> ReLU from a halo-padded bf16 scratch.

    src_ref: (Hf+2, Wf+2, Cin) bf16,  w_ref: (3, 3*Cin, Cout) bf16 (rows = (kx, ci)),
    s_ref/b_ref: (1, Cout) f32.  Returns (Hf*Wf, Cout) f32.
    3 ky-group dots (K = 3*Cin) instead of one 9*Cin-wide patch matrix.
    """
    acc = None
    for ky in range(3):
        patch = jnp.concatenate(
            [src_ref[ky:ky + Hf, kx:kx + Wf, :] for kx in range(3)],
            axis=-1).reshape(Hf * Wf, 3 * Cin)
        d = jnp.dot(patch, w_ref[ky], preferred_element_type=jnp.float32)
        acc = d if acc is None else acc + d
    return jnp.maximum(acc * s_ref[...] + b_ref[...], 0.0)


# ----------------------------------------------------------------------------
# Fused Up-block kernel factory
# ----------------------------------------------------------------------------
def _make_up_block_kernel(H, W, Hf, Wf, Cs, Cup, Cmid, Cout, fuse_out):
    Cin = Cs + Cup
    dY, dX = Hf - 2 * H, Wf - 2 * W     # static F.pad amounts (0 for pow-2 UNets)

    def kernel(x1_ref, x2_ref, wt_ref, bt_ref, w1_ref, s1_ref, b1_ref,
               w2_ref, s2_ref, b2_ref, *rest):
        if fuse_out:
            wo_ref, bo_ref, o_ref, cat_ref, mid_ref = rest
        else:
            o_ref, cat_ref, mid_ref = rest

        # ---- ConvTranspose2d(k=2, s=2): 4 MXU dots, one per (dy, dx) sub-pixel ----
        x1 = x1_ref[0]                                   # (H*W, Cd) bf16
        bt = bt_ref[...]                                 # (1, Cup) f32
        ys = [jnp.dot(x1, wt_ref[d], preferred_element_type=jnp.float32) + bt
              for d in range(4)]                         # each (H*W, Cup) f32

        # pixel-shuffle to (2H, 2W, Cup): interleave dx on columns, dy on rows
        r0 = jnp.stack([ys[0], ys[1]], axis=1).reshape(H, 2 * W, Cup)   # rows 2h
        r1 = jnp.stack([ys[2], ys[3]], axis=1).reshape(H, 2 * W, Cup)   # rows 2h+1
        up = jnp.stack([r0, r1], axis=1).reshape(2 * H, 2 * W, Cup)
        if dY or dX:                                     # F.pad to skip size (static)
            up = jnp.pad(up, ((dY // 2, dY - dY // 2),
                              (dX // 2, dX - dX // 2), (0, 0)))

        # ---- cat([skip, up], channels) with 1-px halo, assembled in VMEM ----------
        _zero_halo_border(cat_ref, Hf, Wf, Cin)
        cat_ref[1:Hf + 1, 1:Wf + 1, :] = jnp.concatenate(
            [x2_ref[0], up.astype(jnp.bfloat16)], axis=-1)

        # ---- conv1 3x3 -> BN -> ReLU ----------------------------------------------
        h1 = _conv3x3_bn_relu(cat_ref, w1_ref, s1_ref, b1_ref, Hf, Wf, Cin)

        # stash h1 with a 1-px halo; only the border is re-zeroed each step
        _zero_halo_border(mid_ref, Hf, Wf, Cmid)
        mid_ref[1:Hf + 1, 1:Wf + 1, :] = h1.reshape(Hf, Wf, Cmid).astype(jnp.bfloat16)

        # ---- conv2 3x3 -> BN -> ReLU ----------------------------------------------
        h2 = _conv3x3_bn_relu(mid_ref, w2_ref, s2_ref, b2_ref, Hf, Wf, Cmid)

        # ---- optional fused OutConv (1x1 conv + bias) epilogue ----------------------
        if fuse_out:
            o = jnp.dot(h2.astype(jnp.bfloat16), wo_ref[...],
                        preferred_element_type=jnp.float32) + bo_ref[...]
            o_ref[0] = o                                  # (Hf*Wf, Co) f32
        else:
            o_ref[0] = h2.astype(jnp.bfloat16)            # (Hf*Wf, Cout) bf16

    return kernel


# ----------------------------------------------------------------------------
# pallas_call wrapper for one Up block
# ----------------------------------------------------------------------------
def _up_block(x1_flat, hw, x2, params, out_w=None, out_b=None):
    """x1_flat: (N, H*W, Cd) bf16, x2: (N, Hf, Wf, Cs) bf16. Returns ((N,Hf*Wf,C), (Hf,Wf))."""
    wt, bt, w1, s1, b1, w2, s2, b2 = params
    N = x1_flat.shape[0]
    H, W = hw
    Cd = x1_flat.shape[2]
    Hf, Wf, Cs = x2.shape[1], x2.shape[2], x2.shape[3]
    Cup = wt.shape[1]
    Cin = Cs + Cup
    Cmid = w1.shape[3]
    Cout = w2.shape[3]
    fuse_out = out_w is not None

    # weight packing: deconv (dy,dx)-major, im2col rows ordered (kx, ci) per ky group
    wt4 = jnp.transpose(wt, (2, 3, 0, 1)).reshape(4, Cd, Cup).astype(jnp.bfloat16)
    w1r = w1.reshape(3, 3 * Cin, Cmid).astype(jnp.bfloat16)
    w2r = w2.reshape(3, 3 * Cmid, Cout).astype(jnp.bfloat16)

    args = [x1_flat, x2, wt4,
            bt.reshape(1, Cup).astype(jnp.float32),
            w1r, s1.reshape(1, Cmid), b1.reshape(1, Cmid),
            w2r, s2.reshape(1, Cout), b2.reshape(1, Cout)]
    in_specs = [
        pl.BlockSpec((1, H * W, Cd), lambda n: (n, 0, 0)),
        pl.BlockSpec((1, Hf, Wf, Cs), lambda n: (n, 0, 0, 0)),
        pl.BlockSpec((4, Cd, Cup), lambda n: (0, 0, 0)),
        pl.BlockSpec((1, Cup), lambda n: (0, 0)),
        pl.BlockSpec((3, 3 * Cin, Cmid), lambda n: (0, 0, 0)),
        pl.BlockSpec((1, Cmid), lambda n: (0, 0)),
        pl.BlockSpec((1, Cmid), lambda n: (0, 0)),
        pl.BlockSpec((3, 3 * Cmid, Cout), lambda n: (0, 0, 0)),
        pl.BlockSpec((1, Cout), lambda n: (0, 0)),
        pl.BlockSpec((1, Cout), lambda n: (0, 0)),
    ]
    if fuse_out:
        Co = out_w.shape[1]
        args += [out_w.astype(jnp.bfloat16), out_b.reshape(1, Co).astype(jnp.float32)]
        in_specs += [pl.BlockSpec((Cout, Co), lambda n: (0, 0)),
                     pl.BlockSpec((1, Co), lambda n: (0, 0))]
        c_last, out_dtype = Co, jnp.float32
    else:
        c_last, out_dtype = Cout, jnp.bfloat16

    kernel = _make_up_block_kernel(H, W, Hf, Wf, Cs, Cup, Cmid, Cout, fuse_out)
    out = pl.pallas_call(
        kernel,
        out_shape=jax.ShapeDtypeStruct((N, Hf * Wf, c_last), out_dtype),
        grid_spec=pltpu.PrefetchScalarGridSpec(
            num_scalar_prefetch=0,
            grid=(N,),
            in_specs=in_specs,
            out_specs=pl.BlockSpec((1, Hf * Wf, c_last), lambda n: (n, 0, 0)),
            scratch_shapes=[pltpu.VMEM((Hf + 2, Wf + 2, Cin), jnp.bfloat16),
                            pltpu.VMEM((Hf + 2, Wf + 2, Cmid), jnp.bfloat16)]),
        compiler_params=pltpu.CompilerParams(
            dimension_semantics=("parallel",),
            vmem_limit_bytes=32 * 1024 * 1024),
    )(*args)
    return out, (Hf, Wf)


@jax.jit
def decoder_forward(x_nchw, skips_nchw, up_params, wo, bo):
    """Pallas implementation of Decoder.forward (eval-mode BN, bilinear=False)."""
    N, Cd, H, W = x_nchw.shape
    # NCHW -> lane-dense (N, H*W, C) bf16 (single boundary relayout per input)
    x = jnp.transpose(x_nchw, (0, 2, 3, 1)).reshape(N, H * W, Cd).astype(jnp.bfloat16)
    skips = [jnp.transpose(s, (0, 2, 3, 1)).astype(jnp.bfloat16) for s in skips_nchw]

    n_blocks = len(up_params)
    for i, p in enumerate(up_params):
        last = (i == n_blocks - 1)
        x, (H, W) = _up_block(x, (H, W), skips[-(i + 1)], p,
                              out_w=(wo if last else None),
                              out_b=(bo if last else None))
    Co = wo.shape[1]
    y = x.reshape(N, H, W, Co)
    return jnp.transpose(y, (0, 3, 1, 2))                 # back to NCHW, f32


# ----------------------------------------------------------------------------
# Pure-JAX f32 reference for validation
# ----------------------------------------------------------------------------
def decoder_reference(x_nchw, skips_nchw, up_params, wo, bo):
    def conv3(x, w_hwio):
        return lax.conv_general_dilated(
            x, w_hwio, window_strides=(1, 1), padding="SAME",
            dimension_numbers=("NCHW", "HWIO", "NCHW"))

    def bn_relu(x, s, b):
        return jnp.maximum(x * s.reshape(1, -1, 1, 1) + b.reshape(1, -1, 1, 1), 0.0)

    def deconv(x, wt, bt):
        # PyTorch ConvTranspose2d(k=2, s=2): out[2y+dy, 2x+dx] = x[y,x] . W[:, :, dy, dx]
        y = jnp.einsum("nchw,cokl->nohkwl", x, wt)
        n, co, h, _, w, _ = y.shape
        return y.reshape(n, co, 2 * h, 2 * w) + bt.reshape(1, -1, 1, 1)

    x = x_nchw
    for i, (wt, bt, w1, s1, b1, w2, s2, b2) in enumerate(up_params):
        x1 = deconv(x, wt, bt)
        x2 = skips_nchw[-(i + 1)]
        dY = x2.shape[2] - x1.shape[2]
        dX = x2.shape[3] - x1.shape[3]
        x1 = jnp.pad(x1, ((0, 0), (0, 0),
                          (dY // 2, dY - dY // 2), (dX // 2, dX - dX // 2)))
        x = jnp.concatenate([x2, x1], axis=1)
        x = bn_relu(conv3(x, w1), s1, b1)
        x = bn_relu(conv3(x, w2), s2, b2)
    return jnp.einsum("nchw,co->nohw", x, wo) + bo.reshape(1, -1, 1, 1)


# ----------------------------------------------------------------------------
# Deterministic synthetic parameters (Conv weights + folded eval-mode BN)
# ----------------------------------------------------------------------------
def _fold_bn(kg, kb, km, kv, c, eps=1e-5):
    gamma = jax.random.uniform(kg, (c,), jnp.float32, 0.5, 1.5)
    beta = 0.1 * jax.random.normal(kb, (c,), jnp.float32)
    rmean = 0.1 * jax.random.normal(km, (c,), jnp.float32)
    rvar = jax.random.uniform(kv, (c,), jnp.float32, 0.5, 1.5)
    scale = gamma / jnp.sqrt(rvar + eps)
    bias = beta - rmean * scale
    return scale, bias


def _make_up_params(key, cin, cout):
    ks = jax.random.split(key, 12)
    cup = cin // 2
    wt = jax.random.normal(ks[0], (cin, cup, 2, 2), jnp.float32) * (1.0 / (4 * cin)) ** 0.5
    bt = 0.1 * jax.random.normal(ks[1], (cup,), jnp.float32)
    # DoubleConv(cin, cout): conv1 cin->cout, conv2 cout->cout (mid defaults to out)
    w1 = jax.random.normal(ks[2], (3, 3, cin, cout), jnp.float32) * (2.0 / (9 * cin)) ** 0.5
    w2 = jax.random.normal(ks[3], (3, 3, cout, cout), jnp.float32) * (2.0 / (9 * cout)) ** 0.5
    s1, b1 = _fold_bn(ks[4], ks[5], ks[6], ks[7], cout)
    s2, b2 = _fold_bn(ks[8], ks[9], ks[10], ks[11], cout)
    return (wt, bt, w1, s1, b1, w2, s2, b2)


if __name__ == "__main__":
    key = jax.random.PRNGKey(0)
    k_x, k_s0, k_s1, k_u, k_o = jax.random.split(key, 5)

    # Decoder(hidden_channels=[32, 64, 128], out_channels=3, bilinear=False)
    #   dec_blocks = [Up(128, 64), Up(64, 32)], out_layer = OutConv(32, 3)
    hidden_channels = (32, 64, 128)
    out_channels = 3
    N = 2
    Hd = Wd = 4                                   # bottleneck spatial size

    x = jax.random.normal(k_x, (N, hidden_channels[-1], Hd, Wd), jnp.float32)
    # encoder intermediate outputs (shallow -> deep), NCHW like PyTorch
    skips = (
        jax.random.normal(k_s0, (N, hidden_channels[0], Hd * 4, Wd * 4), jnp.float32),
        jax.random.normal(k_s1, (N, hidden_channels[1], Hd * 2, Wd * 2), jnp.float32),
    )

    # mirror Decoder.__init__ (bilinear=False -> factor=1)
    rev = list(reversed(hidden_channels))
    pairs = [(rev[i], rev[i + 1]) for i in range(len(hidden_channels) - 2)]
    pairs.append((hidden_channels[1], hidden_channels[0]))
    up_keys = jax.random.split(k_u, len(pairs))
    up_params = tuple(_make_up_params(k, cin, cout)
                      for k, (cin, cout) in zip(up_keys, pairs))

    ko1, ko2 = jax.random.split(k_o)
    wo = jax.random.normal(ko1, (hidden_channels[0], out_channels), jnp.float32) \
        * (1.0 / hidden_channels[0]) ** 0.5
    bo = 0.1 * jax.random.normal(ko2, (out_channels,), jnp.float32)

    out = decoder_forward(x, skips, up_params, wo, bo)
    out = jax.block_until_ready(out)

    # Reference uses the same bf16-rounded conv weights the kernel consumes
    # (activations / accumulation stay f32 in the reference), so the comparison
    # isolates structural / indexing correctness of the kernel.
    def _r(a):
        return a.astype(jnp.bfloat16).astype(jnp.float32)

    ref_up_params = tuple(
        (_r(wt), bt, _r(w1), s1, b1, _r(w2), s2, b2)
        for (wt, bt, w1, s1, b1, w2, s2, b2) in up_params)
    ref = decoder_reference(x, skips, ref_up_params, _r(wo), bo)

    assert out.shape == (N, out_channels, Hd * 4, Wd * 4), out.shape
    max_err = float(jnp.max(jnp.abs(out - ref)))
    assert jnp.allclose(out, ref, atol=5e-2, rtol=5e-2), max_err

    print("KERNEL_OK")
</pallas_src>

<mosaic_0001>
module attributes {stable_mosaic.version = 11 : i64} {
  func.func @kernel(%arg0: i32, %arg1: memref<1x16x128xbf16, #tpu.memory_space<vmem>>, %arg2: memref<1x8x8x64xbf16, #tpu.memory_space<vmem>>, %arg3: memref<4x128x64xbf16, #tpu.memory_space<vmem>>, %arg4: memref<1x64xf32, #tpu.memory_space<vmem>>, %arg5: memref<3x384x64xbf16, #tpu.memory_space<vmem>>, %arg6: memref<1x64xf32, #tpu.memory_space<vmem>>, %arg7: memref<1x64xf32, #tpu.memory_space<vmem>>, %arg8: memref<3x192x64xbf16, #tpu.memory_space<vmem>>, %arg9: memref<1x64xf32, #tpu.memory_space<vmem>>, %arg10: memref<1x64xf32, #tpu.memory_space<vmem>>, %arg11: memref<1x64x64xbf16, #tpu.memory_space<vmem>>, %arg12: memref<10x10x128xbf16, #tpu.memory_space<vmem>>, %arg13: memref<10x10x64xbf16, #tpu.memory_space<vmem>>) attributes {dimension_semantics = [#tpu.dimension_semantics<parallel>], iteration_bounds = array<i64: 2>, scalar_prefetch = 0 : i64, scratch_operands = 2 : i64, tpu.core_type = #tpu.core_type<tc>, window_params = [{transform_indices = @transform_0, window_bounds = array<i64: 1, 16, 128>}, {transform_indices = @transform_1, window_bounds = array<i64: 1, 8, 8, 64>}, {pipeline_mode = #tpu.pipeline_mode<synchronous>, transform_indices = @transform_2, window_bounds = array<i64: 4, 128, 64>}, {pipeline_mode = #tpu.pipeline_mode<synchronous>, transform_indices = @transform_3, window_bounds = array<i64: 1, 64>}, {pipeline_mode = #tpu.pipeline_mode<synchronous>, transform_indices = @transform_4, window_bounds = array<i64: 3, 384, 64>}, {pipeline_mode = #tpu.pipeline_mode<synchronous>, transform_indices = @transform_5, window_bounds = array<i64: 1, 64>}, {pipeline_mode = #tpu.pipeline_mode<synchronous>, transform_indices = @transform_6, window_bounds = array<i64: 1, 64>}, {pipeline_mode = #tpu.pipeline_mode<synchronous>, transform_indices = @transform_7, window_bounds = array<i64: 3, 192, 64>}, {pipeline_mode = #tpu.pipeline_mode<synchronous>, transform_indices = @transform_8, window_bounds = array<i64: 1, 64>}, {pipeline_mode = #tpu.pipeline_mode<synchronous>, transform_indices = @transform_9, window_bounds = array<i64: 1, 64>}, {transform_indices = @transform_10, window_bounds = array<i64: 1, 64, 64>}]} {
    %c0 = arith.constant 0 : index
    %c0_0 = arith.constant 0 : index
    %c0_1 = arith.constant 0 : index
    %0 = vector.load %arg1[%c0, %c0_0, %c0_1] : memref<1x16x128xbf16, #tpu.memory_space<vmem>>, vector<1x16x128xbf16>
    %1 = vector.shape_cast %0 : vector<1x16x128xbf16> to vector<16x128xbf16>
    %c0_2 = arith.constant 0 : index
    %c0_3 = arith.constant 0 : index
    %2 = vector.load %arg4[%c0_2, %c0_3] : memref<1x64xf32, #tpu.memory_space<vmem>>, vector<1x64xf32>
    %c0_4 = arith.constant 0 : index
    %c0_5 = arith.constant 0 : index
    %c0_6 = arith.constant 0 : index
    %3 = vector.load %arg3[%c0_4, %c0_5, %c0_6] : memref<4x128x64xbf16, #tpu.memory_space<vmem>>, vector<1x128x64xbf16>
    %4 = vector.shape_cast %3 : vector<1x128x64xbf16> to vector<128x64xbf16>
    %cst = arith.constant dense<0.000000e+00> : vector<16x64xf32>
    %5 = tpu.matmul %1, %4, %cst {dimension_numbers = #tpu.dot_dimension_numbers<[1], [0], [0], [1], [0, 0, 1, 1], [], []>} : vector<16x128xbf16>, vector<128x64xbf16>, vector<16x64xf32> -> vector<16x64xf32>
    %6 = vector.broadcast %2 : vector<1x64xf32> to vector<16x64xf32>
    %7 = arith.addf %5, %6 : vector<16x64xf32>
    %c1 = arith.constant 1 : index
    %c0_7 = arith.constant 0 : index
    %c0_8 = arith.constant 0 : index
    %8 = vector.load %arg3[%c1, %c0_7, %c0_8] : memref<4x128x64xbf16, #tpu.memory_space<vmem>>, vector<1x128x64xbf16>
    %9 = vector.shape_cast %8 : vector<1x128x64xbf16> to vector<128x64xbf16>
    %cst_9 = arith.constant dense<0.000000e+00> : vector<16x64xf32>
    %10 = tpu.matmul %1, %9, %cst_9 {dimension_numbers = #tpu.dot_dimension_numbers<[1], [0], [0], [1], [0, 0, 1, 1], [], []>} : vector<16x128xbf16>, vector<128x64xbf16>, vector<16x64xf32> -> vector<16x64xf32>
    %11 = vector.broadcast %2 : vector<1x64xf32> to vector<16x64xf32>
    %12 = arith.addf %10, %11 : vector<16x64xf32>
    %c2 = arith.constant 2 : index
    %c0_10 = arith.constant 0 : index
    %c0_11 = arith.constant 0 : index
    %13 = vector.load %arg3[%c2, %c0_10, %c0_11] : memref<4x128x64xbf16, #tpu.memory_space<vmem>>, vector<1x128x64xbf16>
    %14 = vector.shape_cast %13 : vector<1x128x64xbf16> to vector<128x64xbf16>
    %cst_12 = arith.constant dense<0.000000e+00> : vector<16x64xf32>
    %15 = tpu.matmul %1, %14, %cst_12 {dimension_numbers = #tpu.dot_dimension_numbers<[1], [0], [0], [1], [0, 0, 1, 1], [], []>} : vector<16x128xbf16>, vector<128x64xbf16>, vector<16x64xf32> -> vector<16x64xf32>
    %16 = vector.broadcast %2 : vector<1x64xf32> to vector<16x64xf32>
    %17 = arith.addf %15, %16 : vector<16x64xf32>
    %c3 = arith.constant 3 : index
    %c0_13 = arith.constant 0 : index
    %c0_14 = arith.constant 0 : index
    %18 = vector.load %arg3[%c3, %c0_13, %c0_14] : memref<4x128x64xbf16, #tpu.memory_space<vmem>>, vector<1x128x64xbf16>
    %19 = vector.shape_cast %18 : vector<1x128x64xbf16> to vector<128x64xbf16>
    %cst_15 = arith.constant dense<0.000000e+00> : vector<16x64xf32>
    %20 = tpu.matmul %1, %19, %cst_15 {dimension_numbers = #tpu.dot_dimension_numbers<[1], [0], [0], [1], [0, 0, 1, 1], [], []>} : vector<16x128xbf16>, vector<128x64xbf16>, vector<16x64xf32> -> vector<16x64xf32>
    %21 = vector.broadcast %2 : vector<1x64xf32> to vector<16x64xf32>
    %22 = arith.addf %20, %21 : vector<16x64xf32>
    %23 = vector.shape_cast %7 : vector<16x64xf32> to vector<16x1x64xf32>
    %24 = vector.shape_cast %12 : vector<16x64xf32> to vector<16x1x64xf32>
    %25 = tpu.concatenate %23, %24 in 1 : vector<16x1x64xf32>, vector<16x1x64xf32> -> vector<16x2x64xf32>
    %26 = vector.shape_cast %25 : vector<16x2x64xf32> to vector<4x8x64xf32>
    %27 = vector.shape_cast %17 : vector<16x64xf32> to vector<16x1x64xf32>
    %28 = vector.shape_cast %22 : vector<16x64xf32> to vector<16x1x64xf32>
    %29 = tpu.concatenate %27, %28 in 1 : vector<16x1x64xf32>, vector<16x1x64xf32> -> vector<16x2x64xf32>
    %30 = vector.shape_cast %29 : vector<16x2x64xf32> to vector<4x8x64xf32>
    %31 = vector.shape_cast %26 : vector<4x8x64xf32> to vector<4x1x8x64xf32>
    %32 = vector.shape_cast %30 : vector<4x8x64xf32> to vector<4x1x8x64xf32>
    %33 = tpu.concatenate %31, %32 in 1 : vector<4x1x8x64xf32>, vector<4x1x8x64xf32> -> vector<4x2x8x64xf32>
    %34 = vector.shape_cast %33 : vector<4x2x8x64xf32> to vector<8x8x64xf32>
    %cst_16 = arith.constant 0.000000e+00 : bf16
    %35 = vector.broadcast %cst_16 : bf16 to vector<1x10x128xbf16>
    %cst_17 = arith.constant 0.000000e+00 : bf16
    %36 = vector.broadcast %cst_17 : bf16 to vector<10x1x128xbf16>
    %c0_18 = arith.constant 0 : index
    %c0_19 = arith.constant 0 : index
    %c0_20 = arith.constant 0 : index
    %37 = vector.load %arg12[%c0_18, %c0_19, %c0_20] : memref<10x10x128xbf16, #tpu.memory_space<vmem>>, vector<1x10x128xbf16>
    tpu.vector_store %arg12[%c0_18, %c0_19, %c0_20], %35 {strides = array<i32>} : memref<10x10x128xbf16, #tpu.memory_space<vmem>>, vector<1x10x128xbf16>,
    %c9 = arith.constant 9 : index
    %c0_21 = arith.constant 0 : index
    %c0_22 = arith.constant 0 : index
    %38 = vector.load %arg12[%c9, %c0_21, %c0_22] : memref<10x10x128xbf16, #tpu.memory_space<vmem>>, vector<1x10x128xbf16>
    tpu.vector_store %arg12[%c9, %c0_21, %c0_22], %35 {strides = array<i32>} : memref<10x10x128xbf16, #tpu.memory_space<vmem>>, vector<1x10x128xbf16>,
    %c0_23 = arith.constant 0 : index
    %c0_24 = arith.constant 0 : index
    %c0_25 = arith.constant 0 : index
    %39 = vector.load %arg12[%c0_23, %c0_24, %c0_25] : memref<10x10x128xbf16, #tpu.memory_space<vmem>>, vector<10x1x128xbf16>
    tpu.vector_store %arg12[%c0_23, %c0_24, %c0_25], %36 {strides = array<i32>} : memref<10x10x128xbf16, #tpu.memory_space<vmem>>, vector<10x1x128xbf16>,
    %c0_26 = arith.constant 0 : index
    %c9_27 = arith.constant 9 : index
    %c0_28 = arith.constant 0 : index
    %40 = vector.load %arg12[%c0_26, %c9_27, %c0_28] : memref<10x10x128xbf16, #tpu.memory_space<vmem>>, vector<10x1x128xbf16>
    tpu.vector_store %arg12[%c0_26, %c9_27, %c0_28], %36 {strides = array<i32>} : memref<10x10x128xbf16, #tpu.memory_space<vmem>>, vector<10x1x128xbf16>,
    %c0_29 = arith.constant 0 : index
    %c0_30 = arith.constant 0 : index
    %c0_31 = arith.constant 0 : index
    %c0_32 = arith.constant 0 : index
    %41 = vector.load %arg2[%c0_29, %c0_30, %c0_31, %c0_32] : memref<1x8x8x64xbf16, #tpu.memory_space<vmem>>, vector<1x8x8x64xbf16>
    %42 = vector.shape_cast %41 : vector<1x8x8x64xbf16> to vector<8x8x64xbf16>
    %43 = arith.truncf %34 : vector<8x8x64xf32> to vector<8x8x64xbf16>
    %44 = tpu.concatenate %42, %43 in 2 : vector<8x8x64xbf16>, vector<8x8x64xbf16> -> vector<8x8x128xbf16>
    %c1_33 = arith.constant 1 : index
    %c1_34 = arith.constant 1 : index
    %c0_35 = arith.constant 0 : index
    %45 = vector.load %arg12[%c1_33, %c1_34, %c0_35] : memref<10x10x128xbf16, #tpu.memory_space<vmem>>, vector<8x8x128xbf16>
    tpu.vector_store %arg12[%c1_33, %c1_34, %c0_35], %44 {strides = array<i32>} : memref<10x10x128xbf16, #tpu.memory_space<vmem>>, vector<8x8x128xbf16>,
    %c0_36 = arith.constant 0 : index
    %c0_37 = arith.constant 0 : index
    %c0_38 = arith.constant 0 : index
    %46 = vector.load %arg12[%c0_36, %c0_37, %c0_38] : memref<10x10x128xbf16, #tpu.memory_space<vmem>>, vector<8x8x128xbf16>
    %c0_39 = arith.constant 0 : index
    %c1_40 = arith.constant 1 : index
    %c0_41 = arith.constant 0 : index
    %47 = vector.load %arg12[%c0_39, %c1_40, %c0_41] : memref<10x10x128xbf16, #tpu.memory_space<vmem>>, vector<8x8x128xbf16>
    %c0_42 = arith.constant 0 : index
    %c2_43 = arith.constant 2 : index
    %c0_44 = arith.constant 0 : index
    %48 = vector.load %arg12[%c0_42, %c2_43, %c0_44] : memref<10x10x128xbf16, #tpu.memory_space<vmem>>, vector<8x8x128xbf16>
    %49 = tpu.concatenate %46, %47, %48 in 2 : vector<8x8x128xbf16>, vector<8x8x128xbf16>, vector<8x8x128xbf16> -> vector<8x8x384xbf16>
    %50 = vector.shape_cast %49 : vector<8x8x384xbf16> to vector<64x384xbf16>
    %c0_45 = arith.constant 0 : index
    %c0_46 = arith.constant 0 : index
    %c0_47 = arith.constant 0 : index
    %51 = vector.load %arg5[%c0_45, %c0_46, %c0_47] : memref<3x384x64xbf16, #tpu.memory_space<vmem>>, vector<1x384x64xbf16>
    %52 = vector.shape_cast %51 : vector<1x384x64xbf16> to vector<384x64xbf16>
    %cst_48 = arith.constant dense<0.000000e+00> : vector<64x64xf32>
    %53 = tpu.matmul %50, %52, %cst_48 {dimension_numbers = #tpu.dot_dimension_numbers<[1], [0], [0], [1], [0, 0, 1, 1], [], []>} : vector<64x384xbf16>, vector<384x64xbf16>, vector<64x64xf32> -> vector<64x64xf32>
    %c1_49 = arith.constant 1 : index
    %c0_50 = arith.constant 0 : index
    %c0_51 = arith.constant 0 : index
    %54 = vector.load %arg12[%c1_49, %c0_50, %c0_51] : memref<10x10x128xbf16, #tpu.memory_space<vmem>>, vector<8x8x128xbf16>
    %c1_52 = arith.constant 1 : index
    %c1_53 = arith.constant 1 : index
    %c0_54 = arith.constant 0 : index
    %55 = vector.load %arg12[%c1_52, %c1_53, %c0_54] : memref<10x10x128xbf16, #tpu.memory_space<vmem>>, vector<8x8x128xbf16>
    %c1_55 = arith.constant 1 : index
    %c2_56 = arith.constant 2 : index
    %c0_57 = arith.constant 0 : index
    %56 = vector.load %arg12[%c1_55, %c2_56, %c0_57] : memref<10x10x128xbf16, #tpu.memory_space<vmem>>, vector<8x8x128xbf16>
    %57 = tpu.concatenate %54, %55, %56 in 2 : vector<8x8x128xbf16>, vector<8x8x128xbf16>, vector<8x8x128xbf16> -> vector<8x8x384xbf16>
    %58 = vector.shape_cast %57 : vector<8x8x384xbf16> to vector<64x384xbf16>
    %c1_58 = arith.constant 1 : index
    %c0_59 = arith.constant 0 : index
    %c0_60 = arith.constant 0 : index
    %59 = vector.load %arg5[%c1_58, %c0_59, %c0_60] : memref<3x384x64xbf16, #tpu.memory_space<vmem>>, vector<1x384x64xbf16>
    %60 = vector.shape_cast %59 : vector<1x384x64xbf16> to vector<384x64xbf16>
    %cst_61 = arith.constant dense<0.000000e+00> : vector<64x64xf32>
    %61 = tpu.matmul %58, %60, %cst_61 {dimension_numbers = #tpu.dot_dimension_numbers<[1], [0], [0], [1], [0, 0, 1, 1], [], []>} : vector<64x384xbf16>, vector<384x64xbf16>, vector<64x64xf32> -> vector<64x64xf32>
    %62 = arith.addf %53, %61 : vector<64x64xf32>
    %c2_62 = arith.constant 2 : index
    %c0_63 = arith.constant 0 : index
    %c0_64 = arith.constant 0 : index
    %63 = vector.load %arg12[%c2_62, %c0_63, %c0_64] : memref<10x10x128xbf16, #tpu.memory_space<vmem>>, vector<8x8x128xbf16>
    %c2_65 = arith.constant 2 : index
    %c1_66 = arith.constant 1 : index
    %c0_67 = arith.constant 0 : index
    %64 = vector.load %arg12[%c2_65, %c1_66, %c0_67] : memref<10x10x128xbf16, #tpu.memory_space<vmem>>, vector<8x8x128xbf16>
    %c2_68 = arith.constant 2 : index
    %c2_69 = arith.constant 2 : index
    %c0_70 = arith.constant 0 : index
    %65 = vector.load %arg12[%c2_68, %c2_69, %c0_70] : memref<10x10x128xbf16, #tpu.memory_space<vmem>>, vector<8x8x128xbf16>
    %66 = tpu.concatenate %63, %64, %65 in 2 : vector<8x8x128xbf16>, vector<8x8x128xbf16>, vector<8x8x128xbf16> -> vector<8x8x384xbf16>
    %67 = vector.shape_cast %66 : vector<8x8x384xbf16> to vector<64x384xbf16>
    %c2_71 = arith.constant 2 : index
    %c0_72 = arith.constant 0 : index
    %c0_73 = arith.constant 0 : index
    %68 = vector.load %arg5[%c2_71, %c0_72, %c0_73] : memref<3x384x64xbf16, #tpu.memory_space<vmem>>, vector<1x384x64xbf16>
    %69 = vector.shape_cast %68 : vector<1x384x64xbf16> to vector<384x64xbf16>
    %cst_74 = arith.constant dense<0.000000e+00> : vector<64x64xf32>
    %70 = tpu.matmul %67, %69, %cst_74 {dimension_numbers = #tpu.dot_dimension_numbers<[1], [0], [0], [1], [0, 0, 1, 1], [], []>} : vector<64x384xbf16>, vector<384x64xbf16>, vector<64x64xf32> -> vector<64x64xf32>
    %71 = arith.addf %62, %70 : vector<64x64xf32>
    %c0_75 = arith.constant 0 : index
    %c0_76 = arith.constant 0 : index
    %72 = vector.load %arg6[%c0_75, %c0_76] : memref<1x64xf32, #tpu.memory_space<vmem>>, vector<1x64xf32>
    %73 = vector.broadcast %72 : vector<1x64xf32> to vector<64x64xf32>
    %74 = arith.mulf %71, %73 : vector<64x64xf32>
    %c0_77 = arith.constant 0 : index
    %c0_78 = arith.constant 0 : index
    %75 = vector.load %arg7[%c0_77, %c0_78] : memref<1x64xf32, #tpu.memory_space<vmem>>, vector<1x64xf32>
    %76 = vector.broadcast %75 : vector<1x64xf32> to vector<64x64xf32>
    %77 = arith.addf %74, %76 : vector<64x64xf32>
    %cst_79 = arith.constant 0.000000e+00 : f32
    %78 = vector.broadcast %cst_79 : f32 to vector<64x64xf32>
    %79 = arith.maximumf %77, %78 : vector<64x64xf32>
    %cst_80 = arith.constant 0.000000e+00 : bf16
    %80 = vector.broadcast %cst_80 : bf16 to vector<1x10x64xbf16>
    %cst_81 = arith.constant 0.000000e+00 : bf16
    %81 = vector.broadcast %cst_81 : bf16 to vector<10x1x64xbf16>
    %c0_82 = arith.constant 0 : index
    %c0_83 = arith.constant 0 : index
    %c0_84 = arith.constant 0 : index
    %82 = vector.load %arg13[%c0_82, %c0_83, %c0_84] : memref<10x10x64xbf16, #tpu.memory_space<vmem>>, vector<1x10x64xbf16>
    tpu.vector_store %arg13[%c0_82, %c0_83, %c0_84], %80 {strides = array<i32>} : memref<10x10x64xbf16, #tpu.memory_space<vmem>>, vector<1x10x64xbf16>,
    %c9_85 = arith.constant 9 : index
    %c0_86 = arith.constant 0 : index
    %c0_87 = arith.constant 0 : index
    %83 = vector.load %arg13[%c9_85, %c0_86, %c0_87] : memref<10x10x64xbf16, #tpu.memory_space<vmem>>, vector<1x10x64xbf16>
    tpu.vector_store %arg13[%c9_85, %c0_86, %c0_87], %80 {strides = array<i32>} : memref<10x10x64xbf16, #tpu.memory_space<vmem>>, vector<1x10x64xbf16>,
    %c0_88 = arith.constant 0 : index
    %c0_89 = arith.constant 0 : index
    %c0_90 = arith.constant 0 : index
    %84 = vector.load %arg13[%c0_88, %c0_89, %c0_90] : memref<10x10x64xbf16, #tpu.memory_space<vmem>>, vector<10x1x64xbf16>
    tpu.vector_store %arg13[%c0_88, %c0_89, %c0_90], %81 {strides = array<i32>} : memref<10x10x64xbf16, #tpu.memory_space<vmem>>, vector<10x1x64xbf16>,
    %c0_91 = arith.constant 0 : index
    %c9_92 = arith.constant 9 : index
    %c0_93 = arith.constant 0 : index
    %85 = vector.load %arg13[%c0_91, %c9_92, %c0_93] : memref<10x10x64xbf16, #tpu.memory_space<vmem>>, vector<10x1x64xbf16>
    tpu.vector_store %arg13[%c0_91, %c9_92, %c0_93], %81 {strides = array<i32>} : memref<10x10x64xbf16, #tpu.memory_space<vmem>>, vector<10x1x64xbf16>,
    %86 = vector.shape_cast %79 : vector<64x64xf32> to vector<8x8x64xf32>
    %87 = arith.truncf %86 : vector<8x8x64xf32> to vector<8x8x64xbf16>
    %c1_94 = arith.constant 1 : index
    %c1_95 = arith.constant 1 : index
    %c0_96 = arith.constant 0 : index
    %88 = vector.load %arg13[%c1_94, %c1_95, %c0_96] : memref<10x10x64xbf16, #tpu.memory_space<vmem>>, vector<8x8x64xbf16>
    tpu.vector_store %arg13[%c1_94, %c1_95, %c0_96], %87 {strides = array<i32>} : memref<10x10x64xbf16, #tpu.memory_space<vmem>>, vector<8x8x64xbf16>,
    %c0_97 = arith.constant 0 : index
    %c0_98 = arith.constant 0 : index
    %c0_99 = arith.constant 0 : index
    %89 = vector.load %arg13[%c0_97, %c0_98, %c0_99] : memref<10x10x64xbf16, #tpu.memory_space<vmem>>, vector<8x8x64xbf16>
    %c0_100 = arith.constant 0 : index
    %c1_101 = arith.constant 1 : index
    %c0_102 = arith.constant 0 : index
    %90 = vector.load %arg13[%c0_100, %c1_101, %c0_102] : memref<10x10x64xbf16, #tpu.memory_space<vmem>>, vector<8x8x64xbf16>
    %c0_103 = arith.constant 0 : index
    %c2_104 = arith.constant 2 : index
    %c0_105 = arith.constant 0 : index
    %91 = vector.load %arg13[%c0_103, %c2_104, %c0_105] : memref<10x10x64xbf16, #tpu.memory_space<vmem>>, vector<8x8x64xbf16>
    %92 = tpu.concatenate %89, %90, %91 in 2 : vector<8x8x64xbf16>, vector<8x8x64xbf16>, vector<8x8x64xbf16> -> vector<8x8x192xbf16>
    %93 = vector.shape_cast %92 : vector<8x8x192xbf16> to vector<64x192xbf16>
    %c0_106 = arith.constant 0 : index
    %c0_107 = arith.constant 0 : index
    %c0_108 = arith.constant 0 : index
    %94 = vector.load %arg8[%c0_106, %c0_107, %c0_108] : memref<3x192x64xbf16, #tpu.memory_space<vmem>>, vector<1x192x64xbf16>
    %95 = vector.shape_cast %94 : vector<1x192x64xbf16> to vector<192x64xbf16>
    %cst_109 = arith.constant dense<0.000000e+00> : vector<64x64xf32>
    %96 = tpu.matmul %93, %95, %cst_109 {dimension_numbers = #tpu.dot_dimension_numbers<[1], [0], [0], [1], [0, 0, 1, 1], [], []>} : vector<64x192xbf16>, vector<192x64xbf16>, vector<64x64xf32> -> vector<64x64xf32>
    %c1_110 = arith.constant 1 : index
    %c0_111 = arith.constant 0 : index
    %c0_112 = arith.constant 0 : index
    %97 = vector.load %arg13[%c1_110, %c0_111, %c0_112] : memref<10x10x64xbf16, #tpu.memory_space<vmem>>, vector<8x8x64xbf16>
    %c1_113 = arith.constant 1 : index
    %c1_114 = arith.constant 1 : index
    %c0_115 = arith.constant 0 : index
    %98 = vector.load %arg13[%c1_113, %c1_114, %c0_115] : memref<10x10x64xbf16, #tpu.memory_space<vmem>>, vector<8x8x64xbf16>
    %c1_116 = arith.constant 1 : index
    %c2_117 = arith.constant 2 : index
    %c0_118 = arith.constant 0 : index
    %99 = vector.load %arg13[%c1_116, %c2_117, %c0_118] : memref<10x10x64xbf16, #tpu.memory_space<vmem>>, vector<8x8x64xbf16>
    %100 = tpu.concatenate %97, %98, %99 in 2 : vector<8x8x64xbf16>, vector<8x8x64xbf16>, vector<8x8x64xbf16> -> vector<8x8x192xbf16>
    %101 = vector.shape_cast %100 : vector<8x8x192xbf16> to vector<64x192xbf16>
    %c1_119 = arith.constant 1 : index
    %c0_120 = arith.constant 0 : index
    %c0_121 = arith.constant 0 : index
    %102 = vector.load %arg8[%c1_119, %c0_120, %c0_121] : memref<3x192x64xbf16, #tpu.memory_space<vmem>>, vector<1x192x64xbf16>
    %103 = vector.shape_cast %102 : vector<1x192x64xbf16> to vector<192x64xbf16>
    %cst_122 = arith.constant dense<0.000000e+00> : vector<64x64xf32>
    %104 = tpu.matmul %101, %103, %cst_122 {dimension_numbers = #tpu.dot_dimension_numbers<[1], [0], [0], [1], [0, 0, 1, 1], [], []>} : vector<64x192xbf16>, vector<192x64xbf16>, vector<64x64xf32> -> vector<64x64xf32>
    %105 = arith.addf %96, %104 : vector<64x64xf32>
    %c2_123 = arith.constant 2 : index
    %c0_124 = arith.constant 0 : index
    %c0_125 = arith.constant 0 : index
    %106 = vector.load %arg13[%c2_123, %c0_124, %c0_125] : memref<10x10x64xbf16, #tpu.memory_space<vmem>>, vector<8x8x64xbf16>
    %c2_126 = arith.constant 2 : index
    %c1_127 = arith.constant 1 : index
    %c0_128 = arith.constant 0 : index
    %107 = vector.load %arg13[%c2_126, %c1_127, %c0_128] : memref<10x10x64xbf16, #tpu.memory_space<vmem>>, vector<8x8x64xbf16>
    %c2_129 = arith.constant 2 : index
    %c2_130 = arith.constant 2 : index
    %c0_131 = arith.constant 0 : index
    %108 = vector.load %arg13[%c2_129, %c2_130, %c0_131] : memref<10x10x64xbf16, #tpu.memory_space<vmem>>, vector<8x8x64xbf16>
    %109 = tpu.concatenate %106, %107, %108 in 2 : vector<8x8x64xbf16>, vector<8x8x64xbf16>, vector<8x8x64xbf16> -> vector<8x8x192xbf16>
    %110 = vector.shape_cast %109 : vector<8x8x192xbf16> to vector<64x192xbf16>
    %c2_132 = arith.constant 2 : index
    %c0_133 = arith.constant 0 : index
    %c0_134 = arith.constant 0 : index
    %111 = vector.load %arg8[%c2_132, %c0_133, %c0_134] : memref<3x192x64xbf16, #tpu.memory_space<vmem>>, vector<1x192x64xbf16>
    %112 = vector.shape_cast %111 : vector<1x192x64xbf16> to vector<192x64xbf16>
    %cst_135 = arith.constant dense<0.000000e+00> : vector<64x64xf32>
    %113 = tpu.matmul %110, %112, %cst_135 {dimension_numbers = #tpu.dot_dimension_numbers<[1], [0], [0], [1], [0, 0, 1, 1], [], []>} : vector<64x192xbf16>, vector<192x64xbf16>, vector<64x64xf32> -> vector<64x64xf32>
    %114 = arith.addf %105, %113 : vector<64x64xf32>
    %c0_136 = arith.constant 0 : index
    %c0_137 = arith.constant 0 : index
    %115 = vector.load %arg9[%c0_136, %c0_137] : memref<1x64xf32, #tpu.memory_space<vmem>>, vector<1x64xf32>
    %116 = vector.broadcast %115 : vector<1x64xf32> to vector<64x64xf32>
    %117 = arith.mulf %114, %116 : vector<64x64xf32>
    %c0_138 = arith.constant 0 : index
    %c0_139 = arith.constant 0 : index
    %118 = vector.load %arg10[%c0_138, %c0_139] : memref<1x64xf32, #tpu.memory_space<vmem>>, vector<1x64xf32>
    %119 = vector.broadcast %118 : vector<1x64xf32> to vector<64x64xf32>
    %120 = arith.addf %117, %119 : vector<64x64xf32>
    %cst_140 = arith.constant 0.000000e+00 : f32
    %121 = vector.broadcast %cst_140 : f32 to vector<64x64xf32>
    %122 = arith.maximumf %120, %121 : vector<64x64xf32>
    %123 = arith.truncf %122 : vector<64x64xf32> to vector<64x64xbf16>
    %c0_141 = arith.constant 0 : index
    %c0_142 = arith.constant 0 : index
    %c0_143 = arith.constant 0 : index
    %124 = vector.load %arg11[%c0_141, %c0_142, %c0_143] : memref<1x64x64xbf16, #tpu.memory_space<vmem>>, vector<1x64x64xbf16>
    %125 = vector.shape_cast %124 : vector<1x64x64xbf16> to vector<64x64xbf16>
    %126 = vector.shape_cast %123 : vector<64x64xbf16> to vector<1x64x64xbf16>
    tpu.vector_store %arg11[%c0_141, %c0_142, %c0_143], %126 {strides = array<i32>} : memref<1x64x64xbf16, #tpu.memory_space<vmem>>, vector<1x64x64xbf16>,
    return
  }
  func.func @transform_0(%arg0: i32) -> (i32, i32, i32) {
    %c0_i32 = arith.constant 0 : i32
    %c0_i32_0 = arith.constant 0 : i32
    %c0_i32_1 = arith.constant 0 : i32
    return %arg0, %c0_i32, %c0_i32_0 : i32, i32, i32
  }
  func.func @transform_1(%arg0: i32) -> (i32, i32, i32, i32) {
    %c0_i32 = arith.constant 0 : i32
    %c0_i32_0 = arith.constant 0 : i32
    %c0_i32_1 = arith.constant 0 : i32
    %c0_i32_2 = arith.constant 0 : i32
    return %arg0, %c0_i32, %c0_i32_0, %c0_i32_1 : i32, i32, i32, i32
  }
  func.func @transform_2(%arg0: i32) -> (i32, i32, i32) {
    %c0_i32 = arith.constant 0 : i32
    %c0_i32_0 = arith.constant 0 : i32
    %c0_i32_1 = arith.constant 0 : i32
    %c0_i32_2 = arith.constant 0 : i32
    return %c0_i32, %c0_i32_0, %c0_i32_1 : i32, i32, i32
  }
  func.func @transform_3(%arg0: i32) -> (i32, i32) {
    %c0_i32 = arith.constant 0 : i32
    %c0_i32_0 = arith.constant 0 : i32
    %c0_i32_1 = arith.constant 0 : i32
    return %c0_i32, %c0_i32_0 : i32, i32
  }
  func.func @transform_4(%arg0: i32) -> (i32, i32, i32) {
    %c0_i32 = arith.constant 0 : i32
    %c0_i32_0 = arith.constant 0 : i32
    %c0_i32_1 = arith.constant 0 : i32
    %c0_i32_2 = arith.constant 0 : i32
    return %c0_i32, %c0_i32_0, %c0_i32_1 : i32, i32, i32
  }
  func.func @transform_5(%arg0: i32) -> (i32, i32) {
    %c0_i32 = arith.constant 0 : i32
    %c0_i32_0 = arith.constant 0 : i32
    %c0_i32_1 = arith.constant 0 : i32
    return %c0_i32, %c0_i32_0 : i32, i32
  }
  func.func @transform_6(%arg0: i32) -> (i32, i32) {
    %c0_i32 = arith.constant 0 : i32
    %c0_i32_0 = arith.constant 0 : i32
    %c0_i32_1 = arith.constant 0 : i32
    return %c0_i32, %c0_i32_0 : i32, i32
  }
  func.func @transform_7(%arg0: i32) -> (i32, i32, i32) {
    %c0_i32 = arith.constant 0 : i32
    %c0_i32_0 = arith.constant 0 : i32
    %c0_i32_1 = arith.constant 0 : i32
    %c0_i32_2 = arith.constant 0 : i32
    return %c0_i32, %c0_i32_0, %c0_i32_1 : i32, i32, i32
  }
  func.func @transform_8(%arg0: i32) -> (i32, i32) {
    %c0_i32 = arith.constant 0 : i32
    %c0_i32_0 = arith.constant 0 : i32
    %c0_i32_1 = arith.constant 0 : i32
    return %c0_i32, %c0_i32_0 : i32, i32
  }
  func.func @transform_9(%arg0: i32) -> (i32, i32) {
    %c0_i32 = arith.constant 0 : i32
    %c0_i32_0 = arith.constant 0 : i32
    %c0_i32_1 = arith.constant 0 : i32
    return %c0_i32, %c0_i32_0 : i32, i32
  }
  func.func @transform_10(%arg0: i32) -> (i32, i32, i32) {
    %c0_i32 = arith.constant 0 : i32
    %c0_i32_0 = arith.constant 0 : i32
    %c0_i32_1 = arith.constant 0 : i32
    return %arg0, %c0_i32, %c0_i32_0 : i32, i32, i32
  }
}

module attributes {stable_mosaic.version = 11 : i64} {
  func.func @kernel(%arg0: i32, %arg1: memref<1x64x64xbf16, #tpu.memory_space<vmem>>, %arg2: memref<1x16x16x32xbf16, #tpu.memory_space<vmem>>, %arg3: memref<4x64x32xbf16, #tpu.memory_space<vmem>>, %arg4: memref<1x32xf32, #tpu.memory_space<vmem>>, %arg5: memref<3x192x32xbf16, #tpu.memory_space<vmem>>, %arg6: memref<1x32xf32, #tpu.memory_space<vmem>>, %arg7: memref<1x32xf32, #tpu.memory_space<vmem>>, %arg8: memref<3x96x32xbf16, #tpu.memory_space<vmem>>, %arg9: memref<1x32xf32, #tpu.memory_space<vmem>>, %arg10: memref<1x32xf32, #tpu.memory_space<vmem>>, %arg11: memref<32x3xbf16, #tpu.memory_space<vmem>>, %arg12: memref<1x3xf32, #tpu.memory_space<vmem>>, %arg13: memref<1x256x3xf32, #tpu.memory_space<vmem>>, %arg14: memref<18x18x64xbf16, #tpu.memory_space<vmem>>, %arg15: memref<18x18x32xbf16, #tpu.memory_space<vmem>>) attributes {dimension_semantics = [#tpu.dimension_semantics<parallel>], iteration_bounds = array<i64: 2>, scalar_prefetch = 0 : i64, scratch_operands = 2 : i64, tpu.core_type = #tpu.core_type<tc>, window_params = [{transform_indices = @transform_0, window_bounds = array<i64: 1, 64, 64>}, {transform_indices = @transform_1, window_bounds = array<i64: 1, 16, 16, 32>}, {pipeline_mode = #tpu.pipeline_mode<synchronous>, transform_indices = @transform_2, window_bounds = array<i64: 4, 64, 32>}, {pipeline_mode = #tpu.pipeline_mode<synchronous>, transform_indices = @transform_3, window_bounds = array<i64: 1, 32>}, {pipeline_mode = #tpu.pipeline_mode<synchronous>, transform_indices = @transform_4, window_bounds = array<i64: 3, 192, 32>}, {pipeline_mode = #tpu.pipeline_mode<synchronous>, transform_indices = @transform_5, window_bounds = array<i64: 1, 32>}, {pipeline_mode = #tpu.pipeline_mode<synchronous>, transform_indices = @transform_6, window_bounds = array<i64: 1, 32>}, {pipeline_mode = #tpu.pipeline_mode<synchronous>, transform_indices = @transform_7, window_bounds = array<i64: 3, 96, 32>}, {pipeline_mode = #tpu.pipeline_mode<synchronous>, transform_indices = @transform_8, window_bounds = array<i64: 1, 32>}, {pipeline_mode = #tpu.pipeline_mode<synchronous>, transform_indices = @transform_9, window_bounds = array<i64: 1, 32>}, {pipeline_mode = #tpu.pipeline_mode<synchronous>, transform_indices = @transform_10, window_bounds = array<i64: 32, 3>}, {pipeline_mode = #tpu.pipeline_mode<synchronous>, transform_indices = @transform_11, window_bounds = array<i64: 1, 3>}, {transform_indices = @transform_12, window_bounds = array<i64: 1, 256, 3>}]} {
    %c0 = arith.constant 0 : index
    %c0_0 = arith.constant 0 : index
    %c0_1 = arith.constant 0 : index
    %0 = vector.load %arg1[%c0, %c0_0, %c0_1] : memref<1x64x64xbf16, #tpu.memory_space<vmem>>, vector<1x64x64xbf16>
    %1 = vector.shape_cast %0 : vector<1x64x64xbf16> to vector<64x64xbf16>
    %c0_2 = arith.constant 0 : index
    %c0_3 = arith.constant 0 : index
    %2 = vector.load %arg4[%c0_2, %c0_3] : memref<1x32xf32, #tpu.memory_space<vmem>>, vector<1x32xf32>
    %c0_4 = arith.constant 0 : index
    %c0_5 = arith.constant 0 : index
    %c0_6 = arith.constant 0 : index
    %3 = vector.load %arg3[%c0_4, %c0_5, %c0_6] : memref<4x64x32xbf16, #tpu.memory_space<vmem>>, vector<1x64x32xbf16>
    %4 = vector.shape_cast %3 : vector<1x64x32xbf16> to vector<64x32xbf16>
    %cst = arith.constant dense<0.000000e+00> : vector<64x32xf32>
    %5 = tpu.matmul %1, %4, %cst {dimension_numbers = #tpu.dot_dimension_numbers<[1], [0], [0], [1], [0, 0, 1, 1], [], []>} : vector<64x64xbf16>, vector<64x32xbf16>, vector<64x32xf32> -> vector<64x32xf32>
    %6 = vector.broadcast %2 : vector<1x32xf32> to vector<64x32xf32>
    %7 = arith.addf %5, %6 : vector<64x32xf32>
    %c1 = arith.constant 1 : index
    %c0_7 = arith.constant 0 : index
    %c0_8 = arith.constant 0 : index
    %8 = vector.load %arg3[%c1, %c0_7, %c0_8] : memref<4x64x32xbf16, #tpu.memory_space<vmem>>, vector<1x64x32xbf16>
    %9 = vector.shape_cast %8 : vector<1x64x32xbf16> to vector<64x32xbf16>
    %cst_9 = arith.constant dense<0.000000e+00> : vector<64x32xf32>
    %10 = tpu.matmul %1, %9, %cst_9 {dimension_numbers = #tpu.dot_dimension_numbers<[1], [0], [0], [1], [0, 0, 1, 1], [], []>} : vector<64x64xbf16>, vector<64x32xbf16>, vector<64x32xf32> -> vector<64x32xf32>
    %11 = vector.broadcast %2 : vector<1x32xf32> to vector<64x32xf32>
    %12 = arith.addf %10, %11 : vector<64x32xf32>
    %c2 = arith.constant 2 : index
    %c0_10 = arith.constant 0 : index
    %c0_11 = arith.constant 0 : index
    %13 = vector.load %arg3[%c2, %c0_10, %c0_11] : memref<4x64x32xbf16, #tpu.memory_space<vmem>>, vector<1x64x32xbf16>
    %14 = vector.shape_cast %13 : vector<1x64x32xbf16> to vector<64x32xbf16>
    %cst_12 = arith.constant dense<0.000000e+00> : vector<64x32xf32>
    %15 = tpu.matmul %1, %14, %cst_12 {dimension_numbers = #tpu.dot_dimension_numbers<[1], [0], [0], [1], [0, 0, 1, 1], [], []>} : vector<64x64xbf16>, vector<64x32xbf16>, vector<64x32xf32> -> vector<64x32xf32>
    %16 = vector.broadcast %2 : vector<1x32xf32> to vector<64x32xf32>
    %17 = arith.addf %15, %16 : vector<64x32xf32>
    %c3 = arith.constant 3 : index
    %c0_13 = arith.constant 0 : index
    %c0_14 = arith.constant 0 : index
    %18 = vector.load %arg3[%c3, %c0_13, %c0_14] : memref<4x64x32xbf16, #tpu.memory_space<vmem>>, vector<1x64x32xbf16>
    %19 = vector.shape_cast %18 : vector<1x64x32xbf16> to vector<64x32xbf16>
    %cst_15 = arith.constant dense<0.000000e+00> : vector<64x32xf32>
    %20 = tpu.matmul %1, %19, %cst_15 {dimension_numbers = #tpu.dot_dimension_numbers<[1], [0], [0], [1], [0, 0, 1, 1], [], []>} : vector<64x64xbf16>, vector<64x32xbf16>, vector<64x32xf32> -> vector<64x32xf32>
    %21 = vector.broadcast %2 : vector<1x32xf32> to vector<64x32xf32>
    %22 = arith.addf %20, %21 : vector<64x32xf32>
    %23 = vector.shape_cast %7 : vector<64x32xf32> to vector<64x1x32xf32>
    %24 = vector.shape_cast %12 : vector<64x32xf32> to vector<64x1x32xf32>
    %25 = tpu.concatenate %23, %24 in 1 : vector<64x1x32xf32>, vector<64x1x32xf32> -> vector<64x2x32xf32>
    %26 = vector.shape_cast %25 : vector<64x2x32xf32> to vector<8x16x32xf32>
    %27 = vector.shape_cast %17 : vector<64x32xf32> to vector<64x1x32xf32>
    %28 = vector.shape_cast %22 : vector<64x32xf32> to vector<64x1x32xf32>
    %29 = tpu.concatenate %27, %28 in 1 : vector<64x1x32xf32>, vector<64x1x32xf32> -> vector<64x2x32xf32>
    %30 = vector.shape_cast %29 : vector<64x2x32xf32> to vector<8x16x32xf32>
    %31 = vector.shape_cast %26 : vector<8x16x32xf32> to vector<8x1x16x32xf32>
    %32 = vector.shape_cast %30 : vector<8x16x32xf32> to vector<8x1x16x32xf32>
    %33 = tpu.concatenate %31, %32 in 1 : vector<8x1x16x32xf32>, vector<8x1x16x32xf32> -> vector<8x2x16x32xf32>
    %34 = vector.shape_cast %33 : vector<8x2x16x32xf32> to vector<16x16x32xf32>
    %cst_16 = arith.constant 0.000000e+00 : bf16
    %35 = vector.broadcast %cst_16 : bf16 to vector<1x18x64xbf16>
    %cst_17 = arith.constant 0.000000e+00 : bf16
    %36 = vector.broadcast %cst_17 : bf16 to vector<18x1x64xbf16>
    %c0_18 = arith.constant 0 : index
    %c0_19 = arith.constant 0 : index
    %c0_20 = arith.constant 0 : index
    %37 = vector.load %arg14[%c0_18, %c0_19, %c0_20] : memref<18x18x64xbf16, #tpu.memory_space<vmem>>, vector<1x18x64xbf16>
    tpu.vector_store %arg14[%c0_18, %c0_19, %c0_20], %35 {strides = array<i32>} : memref<18x18x64xbf16, #tpu.memory_space<vmem>>, vector<1x18x64xbf16>,
    %c17 = arith.constant 17 : index
    %c0_21 = arith.constant 0 : index
    %c0_22 = arith.constant 0 : index
    %38 = vector.load %arg14[%c17, %c0_21, %c0_22] : memref<18x18x64xbf16, #tpu.memory_space<vmem>>, vector<1x18x64xbf16>
    tpu.vector_store %arg14[%c17, %c0_21, %c0_22], %35 {strides = array<i32>} : memref<18x18x64xbf16, #tpu.memory_space<vmem>>, vector<1x18x64xbf16>,
    %c0_23 = arith.constant 0 : index
    %c0_24 = arith.constant 0 : index
    %c0_25 = arith.constant 0 : index
    %39 = vector.load %arg14[%c0_23, %c0_24, %c0_25] : memref<18x18x64xbf16, #tpu.memory_space<vmem>>, vector<18x1x64xbf16>
    tpu.vector_store %arg14[%c0_23, %c0_24, %c0_25], %36 {strides = array<i32>} : memref<18x18x64xbf16, #tpu.memory_space<vmem>>, vector<18x1x64xbf16>,
    %c0_26 = arith.constant 0 : index
    %c17_27 = arith.constant 17 : index
    %c0_28 = arith.constant 0 : index
    %40 = vector.load %arg14[%c0_26, %c17_27, %c0_28] : memref<18x18x64xbf16, #tpu.memory_space<vmem>>, vector<18x1x64xbf16>
    tpu.vector_store %arg14[%c0_26, %c17_27, %c0_28], %36 {strides = array<i32>} : memref<18x18x64xbf16, #tpu.memory_space<vmem>>, vector<18x1x64xbf16>,
    %c0_29 = arith.constant 0 : index
    %c0_30 = arith.constant 0 : index
    %c0_31 = arith.constant 0 : index
    %c0_32 = arith.constant 0 : index
    %41 = vector.load %arg2[%c0_29, %c0_30, %c0_31, %c0_32] : memref<1x16x16x32xbf16, #tpu.memory_space<vmem>>, vector<1x16x16x32xbf16>
    %42 = vector.shape_cast %41 : vector<1x16x16x32xbf16> to vector<16x16x32xbf16>
    %43 = arith.truncf %34 : vector<16x16x32xf32> to vector<16x16x32xbf16>
    %44 = tpu.concatenate %42, %43 in 2 : vector<16x16x32xbf16>, vector<16x16x32xbf16> -> vector<16x16x64xbf16>
    %c1_33 = arith.constant 1 : index
    %c1_34 = arith.constant 1 : index
    %c0_35 = arith.constant 0 : index
    %45 = vector.load %arg14[%c1_33, %c1_34, %c0_35] : memref<18x18x64xbf16, #tpu.memory_space<vmem>>, vector<16x16x64xbf16>
    tpu.vector_store %arg14[%c1_33, %c1_34, %c0_35], %44 {strides = array<i32>} : memref<18x18x64xbf16, #tpu.memory_space<vmem>>, vector<16x16x64xbf16>,
    %c0_36 = arith.constant 0 : index
    %c0_37 = arith.constant 0 : index
    %c0_38 = arith.constant 0 : index
    %46 = vector.load %arg14[%c0_36, %c0_37, %c0_38] : memref<18x18x64xbf16, #tpu.memory_space<vmem>>, vector<16x16x64xbf16>
    %c0_39 = arith.constant 0 : index
    %c1_40 = arith.constant 1 : index
    %c0_41 = arith.constant 0 : index
    %47 = vector.load %arg14[%c0_39, %c1_40, %c0_41] : memref<18x18x64xbf16, #tpu.memory_space<vmem>>, vector<16x16x64xbf16>
    %c0_42 = arith.constant 0 : index
    %c2_43 = arith.constant 2 : index
    %c0_44 = arith.constant 0 : index
    %48 = vector.load %arg14[%c0_42, %c2_43, %c0_44] : memref<18x18x64xbf16, #tpu.memory_space<vmem>>, vector<16x16x64xbf16>
    %49 = tpu.concatenate %46, %47, %48 in 2 : vector<16x16x64xbf16>, vector<16x16x64xbf16>, vector<16x16x64xbf16> -> vector<16x16x192xbf16>
    %50 = vector.shape_cast %49 : vector<16x16x192xbf16> to vector<256x192xbf16>
    %c0_45 = arith.constant 0 : index
    %c0_46 = arith.constant 0 : index
    %c0_47 = arith.constant 0 : index
    %51 = vector.load %arg5[%c0_45, %c0_46, %c0_47] : memref<3x192x32xbf16, #tpu.memory_space<vmem>>, vector<1x192x32xbf16>
    %52 = vector.shape_cast %51 : vector<1x192x32xbf16> to vector<192x32xbf16>
    %cst_48 = arith.constant dense<0.000000e+00> : vector<256x32xf32>
    %53 = tpu.matmul %50, %52, %cst_48 {dimension_numbers = #tpu.dot_dimension_numbers<[1], [0], [0], [1], [0, 0, 1, 1], [], []>} : vector<256x192xbf16>, vector<192x32xbf16>, vector<256x32xf32> -> vector<256x32xf32>
    %c1_49 = arith.constant 1 : index
    %c0_50 = arith.constant 0 : index
    %c0_51 = arith.constant 0 : index
    %54 = vector.load %arg14[%c1_49, %c0_50, %c0_51] : memref<18x18x64xbf16, #tpu.memory_space<vmem>>, vector<16x16x64xbf16>
    %c1_52 = arith.constant 1 : index
    %c1_53 = arith.constant 1 : index
    %c0_54 = arith.constant 0 : index
    %55 = vector.load %arg14[%c1_52, %c1_53, %c0_54] : memref<18x18x64xbf16, #tpu.memory_space<vmem>>, vector<16x16x64xbf16>
    %c1_55 = arith.constant 1 : index
    %c2_56 = arith.constant 2 : index
    %c0_57 = arith.constant 0 : index
    %56 = vector.load %arg14[%c1_55, %c2_56, %c0_57] : memref<18x18x64xbf16, #tpu.memory_space<vmem>>, vector<16x16x64xbf16>
    %57 = tpu.concatenate %54, %55, %56 in 2 : vector<16x16x64xbf16>, vector<16x16x64xbf16>, vector<16x16x64xbf16> -> vector<16x16x192xbf16>
    %58 = vector.shape_cast %57 : vector<16x16x192xbf16> to vector<256x192xbf16>
    %c1_58 = arith.constant 1 : index
    %c0_59 = arith.constant 0 : index
    %c0_60 = arith.constant 0 : index
    %59 = vector.load %arg5[%c1_58, %c0_59, %c0_60] : memref<3x192x32xbf16, #tpu.memory_space<vmem>>, vector<1x192x32xbf16>
    %60 = vector.shape_cast %59 : vector<1x192x32xbf16> to vector<192x32xbf16>
    %cst_61 = arith.constant dense<0.000000e+00> : vector<256x32xf32>
    %61 = tpu.matmul %58, %60, %cst_61 {dimension_numbers = #tpu.dot_dimension_numbers<[1], [0], [0], [1], [0, 0, 1, 1], [], []>} : vector<256x192xbf16>, vector<192x32xbf16>, vector<256x32xf32> -> vector<256x32xf32>
    %62 = arith.addf %53, %61 : vector<256x32xf32>
    %c2_62 = arith.constant 2 : index
    %c0_63 = arith.constant 0 : index
    %c0_64 = arith.constant 0 : index
    %63 = vector.load %arg14[%c2_62, %c0_63, %c0_64] : memref<18x18x64xbf16, #tpu.memory_space<vmem>>, vector<16x16x64xbf16>
    %c2_65 = arith.constant 2 : index
    %c1_66 = arith.constant 1 : index
    %c0_67 = arith.constant 0 : index
    %64 = vector.load %arg14[%c2_65, %c1_66, %c0_67] : memref<18x18x64xbf16, #tpu.memory_space<vmem>>, vector<16x16x64xbf16>
    %c2_68 = arith.constant 2 : index
    %c2_69 = arith.constant 2 : index
    %c0_70 = arith.constant 0 : index
    %65 = vector.load %arg14[%c2_68, %c2_69, %c0_70] : memref<18x18x64xbf16, #tpu.memory_space<vmem>>, vector<16x16x64xbf16>
    %66 = tpu.concatenate %63, %64, %65 in 2 : vector<16x16x64xbf16>, vector<16x16x64xbf16>, vector<16x16x64xbf16> -> vector<16x16x192xbf16>
    %67 = vector.shape_cast %66 : vector<16x16x192xbf16> to vector<256x192xbf16>
    %c2_71 = arith.constant 2 : index
    %c0_72 = arith.constant 0 : index
    %c0_73 = arith.constant 0 : index
    %68 = vector.load %arg5[%c2_71, %c0_72, %c0_73] : memref<3x192x32xbf16, #tpu.memory_space<vmem>>, vector<1x192x32xbf16>
    %69 = vector.shape_cast %68 : vector<1x192x32xbf16> to vector<192x32xbf16>
    %cst_74 = arith.constant dense<0.000000e+00> : vector<256x32xf32>
    %70 = tpu.matmul %67, %69, %cst_74 {dimension_numbers = #tpu.dot_dimension_numbers<[1], [0], [0], [1], [0, 0, 1, 1], [], []>} : vector<256x192xbf16>, vector<192x32xbf16>, vector<256x32xf32> -> vector<256x32xf32>
    %71 = arith.addf %62, %70 : vector<256x32xf32>
    %c0_75 = arith.constant 0 : index
    %c0_76 = arith.constant 0 : index
    %72 = vector.load %arg6[%c0_75, %c0_76] : memref<1x32xf32, #tpu.memory_space<vmem>>, vector<1x32xf32>
    %73 = vector.broadcast %72 : vector<1x32xf32> to vector<256x32xf32>
    %74 = arith.mulf %71, %73 : vector<256x32xf32>
    %c0_77 = arith.constant 0 : index
    %c0_78 = arith.constant 0 : index
    %75 = vector.load %arg7[%c0_77, %c0_78] : memref<1x32xf32, #tpu.memory_space<vmem>>, vector<1x32xf32>
    %76 = vector.broadcast %75 : vector<1x32xf32> to vector<256x32xf32>
    %77 = arith.addf %74, %76 : vector<256x32xf32>
    %cst_79 = arith.constant 0.000000e+00 : f32
    %78 = vector.broadcast %cst_79 : f32 to vector<256x32xf32>
    %79 = arith.maximumf %77, %78 : vector<256x32xf32>
    %cst_80 = arith.constant 0.000000e+00 : bf16
    %80 = vector.broadcast %cst_80 : bf16 to vector<1x18x32xbf16>
    %cst_81 = arith.constant 0.000000e+00 : bf16
    %81 = vector.broadcast %cst_81 : bf16 to vector<18x1x32xbf16>
    %c0_82 = arith.constant 0 : index
    %c0_83 = arith.constant 0 : index
    %c0_84 = arith.constant 0 : index
    %82 = vector.load %arg15[%c0_82, %c0_83, %c0_84] : memref<18x18x32xbf16, #tpu.memory_space<vmem>>, vector<1x18x32xbf16>
    tpu.vector_store %arg15[%c0_82, %c0_83, %c0_84], %80 {strides = array<i32>} : memref<18x18x32xbf16, #tpu.memory_space<vmem>>, vector<1x18x32xbf16>,
    %c17_85 = arith.constant 17 : index
    %c0_86 = arith.constant 0 : index
    %c0_87 = arith.constant 0 : index
    %83 = vector.load %arg15[%c17_85, %c0_86, %c0_87] : memref<18x18x32xbf16, #tpu.memory_space<vmem>>, vector<1x18x32xbf16>
    tpu.vector_store %arg15[%c17_85, %c0_86, %c0_87], %80 {strides = array<i32>} : memref<18x18x32xbf16, #tpu.memory_space<vmem>>, vector<1x18x32xbf16>,
    %c0_88 = arith.constant 0 : index
    %c0_89 = arith.constant 0 : index
    %c0_90 = arith.constant 0 : index
    %84 = vector.load %arg15[%c0_88, %c0_89, %c0_90] : memref<18x18x32xbf16, #tpu.memory_space<vmem>>, vector<18x1x32xbf16>
    tpu.vector_store %arg15[%c0_88, %c0_89, %c0_90], %81 {strides = array<i32>} : memref<18x18x32xbf16, #tpu.memory_space<vmem>>, vector<18x1x32xbf16>,
    %c0_91 = arith.constant 0 : index
    %c17_92 = arith.constant 17 : index
    %c0_93 = arith.constant 0 : index
    %85 = vector.load %arg15[%c0_91, %c17_92, %c0_93] : memref<18x18x32xbf16, #tpu.memory_space<vmem>>, vector<18x1x32xbf16>
    tpu.vector_store %arg15[%c0_91, %c17_92, %c0_93], %81 {strides = array<i32>} : memref<18x18x32xbf16, #tpu.memory_space<vmem>>, vector<18x1x32xbf16>,
    %86 = vector.shape_cast %79 : vector<256x32xf32> to vector<16x16x32xf32>
    %87 = arith.truncf %86 : vector<16x16x32xf32> to vector<16x16x32xbf16>
    %c1_94 = arith.constant 1 : index
    %c1_95 = arith.constant 1 : index
    %c0_96 = arith.constant 0 : index
    %88 = vector.load %arg15[%c1_94, %c1_95, %c0_96] : memref<18x18x32xbf16, #tpu.memory_space<vmem>>, vector<16x16x32xbf16>
    tpu.vector_store %arg15[%c1_94, %c1_95, %c0_96], %87 {strides = array<i32>} : memref<18x18x32xbf16, #tpu.memory_space<vmem>>, vector<16x16x32xbf16>,
    %c0_97 = arith.constant 0 : index
    %c0_98 = arith.constant 0 : index
    %c0_99 = arith.constant 0 : index
    %89 = vector.load %arg15[%c0_97, %c0_98, %c0_99] : memref<18x18x32xbf16, #tpu.memory_space<vmem>>, vector<16x16x32xbf16>
    %c0_100 = arith.constant 0 : index
    %c1_101 = arith.constant 1 : index
    %c0_102 = arith.constant 0 : index
    %90 = vector.load %arg15[%c0_100, %c1_101, %c0_102] : memref<18x18x32xbf16, #tpu.memory_space<vmem>>, vector<16x16x32xbf16>
    %c0_103 = arith.constant 0 : index
    %c2_104 = arith.constant 2 : index
    %c0_105 = arith.constant 0 : index
    %91 = vector.load %arg15[%c0_103, %c2_104, %c0_105] : memref<18x18x32xbf16, #tpu.memory_space<vmem>>, vector<16x16x32xbf16>
    %92 = tpu.concatenate %89, %90, %91 in 2 : vector<16x16x32xbf16>, vector<16x16x32xbf16>, vector<16x16x32xbf16> -> vector<16x16x96xbf16>
    %93 = vector.shape_cast %92 : vector<16x16x96xbf16> to vector<256x96xbf16>
    %c0_106 = arith.constant 0 : index
    %c0_107 = arith.constant 0 : index
    %c0_108 = arith.constant 0 : index
    %94 = vector.load %arg8[%c0_106, %c0_107, %c0_108] : memref<3x96x32xbf16, #tpu.memory_space<vmem>>, vector<1x96x32xbf16>
    %95 = vector.shape_cast %94 : vector<1x96x32xbf16> to vector<96x32xbf16>
    %cst_109 = arith.constant dense<0.000000e+00> : vector<256x32xf32>
    %96 = tpu.matmul %93, %95, %cst_109 {dimension_numbers = #tpu.dot_dimension_numbers<[1], [0], [0], [1], [0, 0, 1, 1], [], []>} : vector<256x96xbf16>, vector<96x32xbf16>, vector<256x32xf32> -> vector<256x32xf32>
    %c1_110 = arith.constant 1 : index
    %c0_111 = arith.constant 0 : index
    %c0_112 = arith.constant 0 : index
    %97 = vector.load %arg15[%c1_110, %c0_111, %c0_112] : memref<18x18x32xbf16, #tpu.memory_space<vmem>>, vector<16x16x32xbf16>
    %c1_113 = arith.constant 1 : index
    %c1_114 = arith.constant 1 : index
    %c0_115 = arith.constant 0 : index
    %98 = vector.load %arg15[%c1_113, %c1_114, %c0_115] : memref<18x18x32xbf16, #tpu.memory_space<vmem>>, vector<16x16x32xbf16>
    %c1_116 = arith.constant 1 : index
    %c2_117 = arith.constant 2 : index
    %c0_118 = arith.constant 0 : index
    %99 = vector.load %arg15[%c1_116, %c2_117, %c0_118] : memref<18x18x32xbf16, #tpu.memory_space<vmem>>, vector<16x16x32xbf16>
    %100 = tpu.concatenate %97, %98, %99 in 2 : vector<16x16x32xbf16>, vector<16x16x32xbf16>, vector<16x16x32xbf16> -> vector<16x16x96xbf16>
    %101 = vector.shape_cast %100 : vector<16x16x96xbf16> to vector<256x96xbf16>
    %c1_119 = arith.constant 1 : index
    %c0_120 = arith.constant 0 : index
    %c0_121 = arith.constant 0 : index
    %102 = vector.load %arg8[%c1_119, %c0_120, %c0_121] : memref<3x96x32xbf16, #tpu.memory_space<vmem>>, vector<1x96x32xbf16>
    %103 = vector.shape_cast %102 : vector<1x96x32xbf16> to vector<96x32xbf16>
    %cst_122 = arith.constant dense<0.000000e+00> : vector<256x32xf32>
    %104 = tpu.matmul %101, %103, %cst_122 {dimension_numbers = #tpu.dot_dimension_numbers<[1], [0], [0], [1], [0, 0, 1, 1], [], []>} : vector<256x96xbf16>, vector<96x32xbf16>, vector<256x32xf32> -> vector<256x32xf32>
    %105 = arith.addf %96, %104 : vector<256x32xf32>
    %c2_123 = arith.constant 2 : index
    %c0_124 = arith.constant 0 : index
    %c0_125 = arith.constant 0 : index
    %106 = vector.load %arg15[%c2_123, %c0_124, %c0_125] : memref<18x18x32xbf16, #tpu.memory_space<vmem>>, vector<16x16x32xbf16>
    %c2_126 = arith.constant 2 : index
    %c1_127 = arith.constant 1 : index
    %c0_128 = arith.constant 0 : index
    %107 = vector.load %arg15[%c2_126, %c1_127, %c0_128] : memref<18x18x32xbf16, #tpu.memory_space<vmem>>, vector<16x16x32xbf16>
    %c2_129 = arith.constant 2 : index
    %c2_130 = arith.constant 2 : index
    %c0_131 = arith.constant 0 : index
    %108 = vector.load %arg15[%c2_129, %c2_130, %c0_131] : memref<18x18x32xbf16, #tpu.memory_space<vmem>>, vector<16x16x32xbf16>
    %109 = tpu.concatenate %106, %107, %108 in 2 : vector<16x16x32xbf16>, vector<16x16x32xbf16>, vector<16x16x32xbf16> -> vector<16x16x96xbf16>
    %110 = vector.shape_cast %109 : vector<16x16x96xbf16> to vector<256x96xbf16>
    %c2_132 = arith.constant 2 : index
    %c0_133 = arith.constant 0 : index
    %c0_134 = arith.constant 0 : index
    %111 = vector.load %arg8[%c2_132, %c0_133, %c0_134] : memref<3x96x32xbf16, #tpu.memory_space<vmem>>, vector<1x96x32xbf16>
    %112 = vector.shape_cast %111 : vector<1x96x32xbf16> to vector<96x32xbf16>
    %cst_135 = arith.constant dense<0.000000e+00> : vector<256x32xf32>
    %113 = tpu.matmul %110, %112, %cst_135 {dimension_numbers = #tpu.dot_dimension_numbers<[1], [0], [0], [1], [0, 0, 1, 1], [], []>} : vector<256x96xbf16>, vector<96x32xbf16>, vector<256x32xf32> -> vector<256x32xf32>
    %114 = arith.addf %105, %113 : vector<256x32xf32>
    %c0_136 = arith.constant 0 : index
    %c0_137 = arith.constant 0 : index
    %115 = vector.load %arg9[%c0_136, %c0_137] : memref<1x32xf32, #tpu.memory_space<vmem>>, vector<1x32xf32>
    %116 = vector.broadcast %115 : vector<1x32xf32> to vector<256x32xf32>
    %117 = arith.mulf %114, %116 : vector<256x32xf32>
    %c0_138 = arith.constant 0 : index
    %c0_139 = arith.constant 0 : index
    %118 = vector.load %arg10[%c0_138, %c0_139] : memref<1x32xf32, #tpu.memory_space<vmem>>, vector<1x32xf32>
    %119 = vector.broadcast %118 : vector<1x32xf32> to vector<256x32xf32>
    %120 = arith.addf %117, %119 : vector<256x32xf32>
    %cst_140 = arith.constant 0.000000e+00 : f32
    %121 = vector.broadcast %cst_140 : f32 to vector<256x32xf32>
    %122 = arith.maximumf %120, %121 : vector<256x32xf32>
    %123 = arith.truncf %122 : vector<256x32xf32> to vector<256x32xbf16>
    %c0_141 = arith.constant 0 : index
    %c0_142 = arith.constant 0 : index
    %124 = vector.load %arg11[%c0_141, %c0_142] : memref<32x3xbf16, #tpu.memory_space<vmem>>, vector<32x3xbf16>
    %cst_143 = arith.constant dense<0.000000e+00> : vector<256x3xf32>
    %125 = tpu.matmul %123, %124, %cst_143 {dimension_numbers = #tpu.dot_dimension_numbers<[1], [0], [0], [1], [0, 0, 1, 1], [], []>} : vector<256x32xbf16>, vector<32x3xbf16>, vector<256x3xf32> -> vector<256x3xf32>
    %c0_144 = arith.constant 0 : index
    %c0_145 = arith.constant 0 : index
    %126 = vector.load %arg12[%c0_144, %c0_145] : memref<1x3xf32, #tpu.memory_space<vmem>>, vector<1x3xf32>
    %127 = vector.broadcast %126 : vector<1x3xf32> to vector<256x3xf32>
    %128 = arith.addf %125, %127 : vector<256x3xf32>
    %c0_146 = arith.constant 0 : index
    %c0_147 = arith.constant 0 : index
    %c0_148 = arith.constant 0 : index
    %129 = vector.load %arg13[%c0_146, %c0_147, %c0_148] : memref<1x256x3xf32, #tpu.memory_space<vmem>>, vector<1x256x3xf32>
    %130 = vector.shape_cast %129 : vector<1x256x3xf32> to vector<256x3xf32>
    %131 = vector.shape_cast %128 : vector<256x3xf32> to vector<1x256x3xf32>
    tpu.vector_store %arg13[%c0_146, %c0_147, %c0_148], %131 {strides = array<i32>} : memref<1x256x3xf32, #tpu.memory_space<vmem>>, vector<1x256x3xf32>,
    return
  }
  func.func @transform_0(%arg0: i32) -> (i32, i32, i32) {
    %c0_i32 = arith.constant 0 : i32
    %c0_i32_0 = arith.constant 0 : i32
    %c0_i32_1 = arith.constant 0 : i32
    return %arg0, %c0_i32, %c0_i32_0 : i32, i32, i32
  }
  func.func @transform_1(%arg0: i32) -> (i32, i32, i32, i32) {
    %c0_i32 = arith.constant 0 : i32
    %c0_i32_0 = arith.constant 0 : i32
    %c0_i32_1 = arith.constant 0 : i32
    %c0_i32_2 = arith.constant 0 : i32
    return %arg0, %c0_i32, %c0_i32_0, %c0_i32_1 : i32, i32, i32, i32
  }
  func.func @transform_2(%arg0: i32) -> (i32, i32, i32) {
    %c0_i32 = arith.constant 0 : i32
    %c0_i32_0 = arith.constant 0 : i32
    %c0_i32_1 = arith.constant 0 : i32
    %c0_i32_2 = arith.constant 0 : i32
    return %c0_i32, %c0_i32_0, %c0_i32_1 : i32, i32, i32
  }
  func.func @transform_3(%arg0: i32) -> (i32, i32) {
    %c0_i32 = arith.constant 0 : i32
    %c0_i32_0 = arith.constant 0 : i32
    %c0_i32_1 = arith.constant 0 : i32
    return %c0_i32, %c0_i32_0 : i32, i32
  }
  func.func @transform_4(%arg0: i32) -> (i32, i32, i32) {
    %c0_i32 = arith.constant 0 : i32
    %c0_i32_0 = arith.constant 0 : i32
    %c0_i32_1 = arith.constant 0 : i32
    %c0_i32_2 = arith.constant 0 : i32
    return %c0_i32, %c0_i32_0, %c0_i32_1 : i32, i32, i32
  }
  func.func @transform_5(%arg0: i32) -> (i32, i32) {
    %c0_i32 = arith.constant 0 : i32
    %c0_i32_0 = arith.constant 0 : i32
    %c0_i32_1 = arith.constant 0 : i32
    return %c0_i32, %c0_i32_0 : i32, i32
  }
  func.func @transform_6(%arg0: i32) -> (i32, i32) {
    %c0_i32 = arith.constant 0 : i32
    %c0_i32_0 = arith.constant 0 : i32
    %c0_i32_1 = arith.constant 0 : i32
    return %c0_i32, %c0_i32_0 : i32, i32
  }
  func.func @transform_7(%arg0: i32) -> (i32, i32, i32) {
    %c0_i32 = arith.constant 0 : i32
    %c0_i32_0 = arith.constant 0 : i32
    %c0_i32_1 = arith.constant 0 : i32
    %c0_i32_2 = arith.constant 0 : i32
    return %c0_i32, %c0_i32_0, %c0_i32_1 : i32, i32, i32
  }
  func.func @transform_8(%arg0: i32) -> (i32, i32) {
    %c0_i32 = arith.constant 0 : i32
    %c0_i32_0 = arith.constant 0 : i32
    %c0_i32_1 = arith.constant 0 : i32
    return %c0_i32, %c0_i32_0 : i32, i32
  }
  func.func @transform_9(%arg0: i32) -> (i32, i32) {
    %c0_i32 = arith.constant 0 : i32
    %c0_i32_0 = arith.constant 0 : i32
    %c0_i32_1 = arith.constant 0 : i32
    return %c0_i32, %c0_i32_0 : i32, i32
  }
  func.func @transform_10(%arg0: i32) -> (i32, i32) {
    %c0_i32 = arith.constant 0 : i32
    %c0_i32_0 = arith.constant 0 : i32
    %c0_i32_1 = arith.constant 0 : i32
    return %c0_i32, %c0_i32_0 : i32, i32
  }
  func.func @transform_11(%arg0: i32) -> (i32, i32) {
    %c0_i32 = arith.constant 0 : i32
    %c0_i32_0 = arith.constant 0 : i32
    %c0_i32_1 = arith.constant 0 : i32
    return %c0_i32, %c0_i32_0 : i32, i32
  }
  func.func @transform_12(%arg0: i32) -> (i32, i32, i32) {
    %c0_i32 = arith.constant 0 : i32
    %c0_i32_0 = arith.constant 0 : i32
    %c0_i32_1 = arith.constant 0 : i32
    return %arg0, %c0_i32, %c0_i32_0 : i32, i32, i32
  }
}

</mosaic_0001>

<llo_original>
// kernel: decoder_forward.2
$region0: #{decoder_forward.2}
  #allocation0 [shape = 'u32[]', space=smem, size = 0x4, offset = 0x4, fixed_abs, tag = 'smem constant byte address 0x4 - core index']
  #allocation1 [shape = 'u32[72,128]{1,0:T(1,128)}', space=vmem, size = 0x9000, scoped, tag = 'internal scratch']
  #allocation2 [shape = 'bf16[10,10,128]{2,1,0:T(8,128)(2,1)}', space=vmem, size = 0xa000, scoped, tag = 'scratch operand']
  #allocation3 [shape = 'bf16[10,10,64]{2,1,0:T(8,128)(2,1)}', space=vmem, size = 0xa000, scoped, tag = 'scratch operand']
  %s0 = inlined_call_operand.vmem [shape: bf16[2,16,128], index: 0, kind: input, shape index: {}]
  %s1 = inlined_call_operand.vmem [shape: bf16[2,8,8,64], index: 1, kind: input, shape index: {}]
  %s2 = inlined_call_operand.vmem [shape: bf16[4,128,64], index: 2, kind: input, shape index: {}]
  %s3 = inlined_call_operand.vmem [shape: f32[1,64], index: 3, kind: input, shape index: {}]
  %s4 = inlined_call_operand.vmem [shape: bf16[3,384,64], index: 4, kind: input, shape index: {}]
  %s5 = inlined_call_operand.vmem [shape: f32[1,64], index: 5, kind: input, shape index: {}]
  %s6 = inlined_call_operand.vmem [shape: f32[1,64], index: 6, kind: input, shape index: {}]
  %s7 = inlined_call_operand.vmem [shape: bf16[3,192,64], index: 7, kind: input, shape index: {}]
  %s8 = inlined_call_operand.vmem [shape: f32[1,64], index: 8, kind: input, shape index: {}]
  %s9 = inlined_call_operand.vmem [shape: f32[1,64], index: 9, kind: input, shape index: {}]
  %s10 = inlined_call_operand.vmem [shape: bf16[2,64,64], index: 10, kind: output, shape index: {}]
  %s11 = sld [smem:[#allocation0]]
  $region73: #{decoder_forward.2} parent=0
    _
  %s13 = ssub.s32 1, %s11
  %s14 = scalar_select 0, %s13, %s11
  loop: start=0, step=1, limit=4
  $region2: #{decoder_forward.2} parent=0 // loop_pre_header
    _
  $region3: #{decoder_forward.2} parent=0 // loop_header
    %s16 = sphi 0, %s20
    %p17 = scmp.ge.s32.totalorder %s16, 4
    %s26 = sphi 0, %s28
    %s29 = sphi 0, %s26
    %s30 = sphi 0, %s29
    %s46 = sphi 0, %s30
    %s52 = sphi 0, %s54
    %s55 = sphi 0, %s52
    %s56 = sphi 0, %s55
    %s72 = sphi 0, %s56
    %s76 = sphi 0, %s76
    %s78 = sphi 0, %s76
    %s79 = sphi 0, %s78
    %s93 = sphi 0, %s79
    %s97 = sphi 0, %s97
    %s99 = sphi 0, %s97
    %s100 = sphi 0, %s99
    %s114 = sphi 0, %s100
    %s118 = sphi 0, %s118
    %s120 = sphi 0, %s118
    %s121 = sphi 0, %s120
    %s135 = sphi 0, %s121
    %s139 = sphi 0, %s139
    %s141 = sphi 0, %s139
    %s142 = sphi 0, %s141
    %s156 = sphi 0, %s142
    %s160 = sphi 0, %s160
    %s162 = sphi 0, %s160
    %s163 = sphi 0, %s162
    %s177 = sphi 0, %s163
    %s181 = sphi 0, %s181
    %s183 = sphi 0, %s181
    %s184 = sphi 0, %s183
    %s198 = sphi 0, %s184
    %s202 = sphi 0, %s202
    %s204 = sphi 0, %s202
    %s205 = sphi 0, %s204
    %s219 = sphi 0, %s205
    %s223 = sphi 0, %s223
    %s225 = sphi 0, %s223
    %s226 = sphi 0, %s225
    %s240 = sphi 0, %s226
    %s246 = sphi 0, %s248
    %s249 = sphi 0, %s246
    %s250 = sphi 0, %s249
    %s266 = sphi 0, %s250
  $region4: #{decoder_forward.2} parent=0 // loop_header_branch
    %19 = sbr.rel (%p17) target = $region8
  $region5: #{decoder_forward.2} parent=0 // loop_body
    %s21 = ssub.s32 %s16, 1
    %s22 = ssub.s32 %s16, 2
    %s23 = sadd.s32 %s16, 1
    %s24 = ssub.s32 %s16, %s23
    %p25 = scmp.eq.s32.totalorder %s24, 0
    %s27 = sadd.s32 %s26, 1
    %s28 = scalar_select %p25, %s26, %s27
    %p31 = pneg %p25
    %p32 = scmp.eq.s32.totalorder %s16, 1
    %p33 = por %p31, %p32
    %p34 = scmp.ne.s32.totalorder %s26, %s29
    %p35 = scmp.eq.s32.totalorder %s16, 0
    %p36 = por %p34, %p35
    %p37 = scmp.ne.s32.totalorder %s26, %s29
    %p38 = scmp.eq.s32.totalorder %s21, 1
    %p39 = por %p37, %p38
    %p40 = scmp.ne.s32.totalorder %s29, %s30
    %p41 = scmp.eq.s32.totalorder %s21, 0
    %p42 = por %p40, %p41
    %p43 = scmp.ne.s32.totalorder %s29, %s30
    %p44 = scmp.eq.s32.totalorder %s22, 1
    %p45 = por %p43, %p44
    %p47 = scmp.ne.s32.totalorder %s30, %s46
    %p48 = scmp.eq.s32.totalorder %s22, 0
    %p49 = por %p47, %p48
    %s50 = ssub.s32 %s16, %s23
    %p51 = scmp.eq.s32.totalorder %s50, 0
    %s53 = sadd.s32 %s52, 1
    %s54 = scalar_select %p51, %s52, %s53
    %p57 = pneg %p51
    %p58 = scmp.eq.s32.totalorder %s16, 1
    %p59 = por %p57, %p58
    %p60 = scmp.ne.s32.totalorder %s52, %s55
    %p61 = scmp.eq.s32.totalorder %s16, 0
    %p62 = por %p60, %p61
    %p63 = scmp.ne.s32.totalorder %s52, %s55
    %p64 = scmp.eq.s32.totalorder %s21, 1
    %p65 = por %p63, %p64
    %p66 = scmp.ne.s32.totalorder %s55, %s56
    %p67 = scmp.eq.s32.totalorder %s21, 0
    %p68 = por %p66, %p67
    %p69 = scmp.ne.s32.totalorder %s55, %s56
    %p70 = scmp.eq.s32.totalorder %s22, 1
    %p71 = por %p69, %p70
    %p73 = scmp.ne.s32.totalorder %s56, %s72
    %p74 = scmp.eq.s32.totalorder %s22, 0
    %p75 = por %p73, %p74
    %s77 = sadd.s32 %s76, 1
    %p80 = scmp.eq.s32.totalorder %s16, 1
    %p81 = scmp.ne.s32.totalorder %s76, %s78
    %p82 = scmp.eq.s32.totalorder %s16, 0
    %p83 = por %p81, %p82
    %p84 = scmp.ne.s32.totalorder %s76, %s78
    %p85 = scmp.eq.s32.totalorder %s21, 1
    %p86 = por %p84, %p85
    %p87 = scmp.ne.s32.totalorder %s78, %s79
    %p88 = scmp.eq.s32.totalorder %s21, 0
    %p89 = por %p87, %p88
    %p90 = scmp.ne.s32.totalorder %s78, %s79
    %p91 = scmp.eq.s32.totalorder %s22, 1
    %p92 = por %p90, %p91
    %p94 = scmp.ne.s32.totalorder %s79, %s93
    %p95 = scmp.eq.s32.totalorder %s22, 0
    %p96 = por %p94, %p95
    %s98 = sadd.s32 %s97, 1
    %p101 = scmp.eq.s32.totalorder %s16, 1
    %p102 = scmp.ne.s32.totalorder %s97, %s99
    %p103 = scmp.eq.s32.totalorder %s16, 0
    %p104 = por %p102, %p103
    %p105 = scmp.ne.s32.totalorder %s97, %s99
    %p106 = scmp.eq.s32.totalorder %s21, 1
    %p107 = por %p105, %p106
    %p108 = scmp.ne.s32.totalorder %s99, %s100
    %p109 = scmp.eq.s32.totalorder %s21, 0
    %p110 = por %p108, %p109
    %p111 = scmp.ne.s32.totalorder %s99, %s100
    %p112 = scmp.eq.s32.totalorder %s22, 1
    %p113 = por %p111, %p112
    %p115 = scmp.ne.s32.totalorder %s100, %s114
    %p116 = scmp.eq.s32.totalorder %s22, 0
    %p117 = por %p115, %p116
    %s119 = sadd.s32 %s118, 1
    %p122 = scmp.eq.s32.totalorder %s16, 1
    %p123 = scmp.ne.s32.totalorder %s118, %s120
    %p124 = scmp.eq.s32.totalorder %s16, 0
    %p125 = por %p123, %p124
    %p126 = scmp.ne.s32.totalorder %s118, %s120
    %p127 = scmp.eq.s32.totalorder %s21, 1
    %p128 = por %p126, %p127
    %p129 = scmp.ne.s32.totalorder %s120, %s121
    %p130 = scmp.eq.s32.totalorder %s21, 0
    %p131 = por %p129, %p130
    %p132 = scmp.ne.s32.totalorder %s120, %s121
    %p133 = scmp.eq.s32.totalorder %s22, 1
    %p134 = por %p132, %p133
    %p136 = scmp.ne.s32.totalorder %s121, %s135
    %p137 = scmp.eq.s32.totalorder %s22, 0
    %p138 = por %p136, %p137
    %s140 = sadd.s32 %s139, 1
    %p143 = scmp.eq.s32.totalorder %s16, 1
    %p144 = scmp.ne.s32.totalorder %s139, %s141
    %p145 = scmp.eq.s32.totalorder %s16, 0
    %p146 = por %p144, %p145
    %p147 = scmp.ne.s32.totalorder %s139, %s141
    %p148 = scmp.eq.s32.totalorder %s21, 1
    %p149 = por %p147, %p148
    %p150 = scmp.ne.s32.totalorder %s141, %s142
    %p151 = scmp.eq.s32.totalorder %s21, 0
    %p152 = por %p150, %p151
    %p153 = scmp.ne.s32.totalorder %s141, %s142
    %p154 = scmp.eq.s32.totalorder %s22, 1
    %p155 = por %p153, %p154
    %p157 = scmp.ne.s32.totalorder %s142, %s156
    %p158 = scmp.eq.s32.totalorder %s22, 0
    %p159 = por %p157, %p158
    %s161 = sadd.s32 %s160, 1
    %p164 = scmp.eq.s32.totalorder %s16, 1
    %p165 = scmp.ne.s32.totalorder %s160, %s162
    %p166 = scmp.eq.s32.totalorder %s16, 0
    %p167 = por %p165, %p166
    %p168 = scmp.ne.s32.totalorder %s160, %s162
    %p169 = scmp.eq.s32.totalorder %s21, 1
    %p170 = por %p168, %p169
    %p171 = scmp.ne.s32.totalorder %s162, %s163
    %p172 = scmp.eq.s32.totalorder %s21, 0
    %p173 = por %p171, %p172
    %p174 = scmp.ne.s32.totalorder %s162, %s163
    %p175 = scmp.eq.s32.totalorder %s22, 1
    %p176 = por %p174, %p175
    %p178 = scmp.ne.s32.totalorder %s163, %s177
    %p179 = scmp.eq.s32.totalorder %s22, 0
    %p180 = por %p178, %p179
    %s182 = sadd.s32 %s181, 1
    %p185 = scmp.eq.s32.totalorder %s16, 1
    %p186 = scmp.ne.s32.totalorder %s181, %s183
    %p187 = scmp.eq.s32.totalorder %s16, 0
    %p188 = por %p186, %p187
    %p189 = scmp.ne.s32.totalorder %s181, %s183
    %p190 = scmp.eq.s32.totalorder %s21, 1
    %p191 = por %p189, %p190
    %p192 = scmp.ne.s32.totalorder %s183, %s184
    %p193 = scmp.eq.s32.totalorder %s21, 0
    %p194 = por %p192, %p193
    %p195 = scmp.ne.s32.totalorder %s183, %s184
    %p196 = scmp.eq.s32.totalorder %s22, 1
    %p197 = por %p195, %p196
    %p199 = scmp.ne.s32.totalorder %s184, %s198
    %p200 = scmp.eq.s32.totalorder %s22, 0
    %p201 = por %p199, %p200
    %s203 = sadd.s32 %s202, 1
    %p206 = scmp.eq.s32.totalorder %s16, 1
    %p207 = scmp.ne.s32.totalorder %s202, %s204
    %p208 = scmp.eq.s32.totalorder %s16, 0
    %p209 = por %p207, %p208
    %p210 = scmp.ne.s32.totalorder %s202, %s204
    %p211 = scmp.eq.s32.totalorder %s21, 1
    %p212 = por %p210, %p211
    %p213 = scmp.ne.s32.totalorder %s204, %s205
    %p214 = scmp.eq.s32.totalorder %s21, 0
    %p215 = por %p213, %p214
    %p216 = scmp.ne.s32.totalorder %s204, %s205
    %p217 = scmp.eq.s32.totalorder %s22, 1
    %p218 = por %p216, %p217
    %p220 = scmp.ne.s32.totalorder %s205, %s219
    %p221 = scmp.eq.s32.totalorder %s22, 0
    %p222 = por %p220, %p221
    %s224 = sadd.s32 %s223, 1
    %p227 = scmp.eq.s32.totalorder %s16, 1
    %p228 = scmp.ne.s32.totalorder %s223, %s225
    %p229 = scmp.eq.s32.totalorder %s16, 0
    %p230 = por %p228, %p229
    %p231 = scmp.ne.s32.totalorder %s223, %s225
    %p232 = scmp.eq.s32.totalorder %s21, 1
    %p233 = por %p231, %p232
    %p234 = scmp.ne.s32.totalorder %s225, %s226
    %p235 = scmp.eq.s32.totalorder %s21, 0
    %p236 = por %p234, %p235
    %p237 = scmp.ne.s32.totalorder %s225, %s226
    %p238 = scmp.eq.s32.totalorder %s22, 1
    %p239 = por %p237, %p238
    %p241 = scmp.ne.s32.totalorder %s226, %s240
    %p242 = scmp.eq.s32.totalorder %s22, 0
    %p243 = por %p241, %p242
    %s244 = ssub.s32 %s16, %s23
    %p245 = scmp.eq.s32.totalorder %s244, 0
    %s247 = sadd.s32 %s246, 1
    %s248 = scalar_select %p245, %s246, %s247
    %p251 = pneg %p245
    %p252 = scmp.eq.s32.totalorder %s16, 1
    %p253 = por %p251, %p252
    %p254 = scmp.ne.s32.totalorder %s246, %s249
    %p255 = scmp.eq.s32.totalorder %s16, 0
    %p256 = por %p254, %p255
    %p257 = scmp.ne.s32.totalorder %s246, %s249
    %p258 = scmp.eq.s32.totalorder %s21, 1
    %p259 = por %p257, %p258
    %p260 = scmp.ne.s32.totalorder %s249, %s250
    %p261 = scmp.eq.s32.totalorder %s21, 0
    %p262 = por %p260, %p261
    %p263 = scmp.ne.s32.totalorder %s249, %s250
    %p264 = scmp.eq.s32.totalorder %s22, 1
    %p265 = por %p263, %p264
    %p267 = scmp.ne.s32.totalorder %s250, %s266
    %p268 = scmp.eq.s32.totalorder %s22, 0
    %p269 = por %p267, %p268
    %p270 = scmp.le.s32.totalorder 1, %s16
    %p271 = scmp.lt.s32.totalorder %s16, 3
    %p272 = pnand %p270, %p271
    %p273 = pneg %p272
    // Predicated region
    $region9: #{decoder_forward.2} parent=5 // pred_check
      _
    $region10: #{decoder_forward.2} parent=5 // pred_check_branch
      %275 = sbr.rel (%p272) target = $region12
    $region11: #{decoder_forward.2} parent=5 // pred_region
      %s276 = ssub.s32 %s16, 1
      // Predicated region
      $region13: #{decoder_forward.2} parent=11 // pred_check
        %p277 = pneg %p89
      $region14: #{decoder_forward.2} parent=11 // pred_check_branch
        %279 = sbr.rel (%p277) target = $region16
      $region15: #{decoder_forward.2} parent=11 // pred_region
        _
      $region16: #{decoder_forward.2} parent=11 // pred_fallthru
        _
      // Predicated region
      $region17: #{decoder_forward.2} parent=11 // pred_check
        %p280 = pneg %p110
      $region18: #{decoder_forward.2} parent=11 // pred_check_branch
        %282 = sbr.rel (%p280) target = $region20
      $region19: #{decoder_forward.2} parent=11 // pred_region
        _
      $region20: #{decoder_forward.2} parent=11 // pred_fallthru
        _
      // Predicated region
      $region21: #{decoder_forward.2} parent=11 // pred_check
        %p283 = pneg %p131
      $region22: #{decoder_forward.2} parent=11 // pred_check_branch
        %285 = sbr.rel (%p283) target = $region24
      $region23: #{decoder_forward.2} parent=11 // pred_region
        _
      $region24: #{decoder_forward.2} parent=11 // pred_fallthru
        _
      // Predicated region
      $region25: #{decoder_forward.2} parent=11 // pred_check
        %p286 = pneg %p152
      $region26: #{decoder_forward.2} parent=11 // pred_check_branch
        %288 = sbr.rel (%p286) target = $region28
      $region27: #{decoder_forward.2} parent=11 // pred_region
        _
      $region28: #{decoder_forward.2} parent=11 // pred_fallthru
        _
      // Predicated region
      $region29: #{decoder_forward.2} parent=11 // pred_check
        %p289 = pneg %p173
      $region30: #{decoder_forward.2} parent=11 // pred_check_branch
        %291 = sbr.rel (%p289) target = $region32
      $region31: #{decoder_forward.2} parent=11 // pred_region
        _
      $region32: #{decoder_forward.2} parent=11 // pred_fallthru
        _
      // Predicated region
      $region33: #{decoder_forward.2} parent=11 // pred_check
        %p292 = pneg %p194
      $region34: #{decoder_forward.2} parent=11 // pred_check_branch
        %294 = sbr.rel (%p292) target = $region36
      $region35: #{decoder_forward.2} parent=11 // pred_region
        _
      $region36: #{decoder_forward.2} parent=11 // pred_fallthru
        _
      // Predicated region
      $region37: #{decoder_forward.2} parent=11 // pred_check
        %p295 = pneg %p215
      $region38: #{decoder_forward.2} parent=11 // pred_check_branch
        %297 = sbr.rel (%p295) target = $region40
      $region39: #{decoder_forward.2} parent=11 // pred_region
        _
      $region40: #{decoder_forward.2} parent=11 // pred_fallthru
        _
      // Predicated region
      $region41: #{decoder_forward.2} parent=11 // pred_check
        %p298 = pneg %p236
      $region42: #{decoder_forward.2} parent=11 // pred_check_branch
        %300 = sbr.rel (%p298) target = $region44
      $region43: #{decoder_forward.2} parent=11 // pred_region
        _
      $region44: #{decoder_forward.2} parent=11 // pred_fallthru
        _
    $region12: #{decoder_forward.2} parent=5 // pred_fallthru
      _
    %p301 = scmp.lt.s32.totalorder %s16, 2
    // Predicated region
    $region45: #{decoder_forward.2} parent=5 // pred_check
      %p302 = pneg %p301
    $region46: #{decoder_forward.2} parent=5 // pred_check_branch
      %304 = sbr.rel (%p302) target = $region48
    $region47: #{decoder_forward.2} parent=5 // pred_region
      // Predicated region
      $region49: #{decoder_forward.2} parent=47 // pred_check
        %p305 = pneg %p36
      $region50: #{decoder_forward.2} parent=47 // pred_check_branch
        %307 = sbr.rel (%p305) target = $region52
      $region51: #{decoder_forward.2} parent=47 // pred_region
        %p308 = scmp.lt.s32.totalorder %s16, 1
        %s309 = scalar_select %p308, %s16, 1
        %s310 = smul.addr %s309, 2
        %s311 = smul.addr %s310, 4
        %s312 = scalar_lea.vmem %s0, %s311
      $region52: #{decoder_forward.2} parent=47 // pred_fallthru
        _
      // Predicated region
      $region53: #{decoder_forward.2} parent=47 // pred_check
        %p313 = pneg %p62
      $region54: #{decoder_forward.2} parent=47 // pred_check_branch
        %315 = sbr.rel (%p313) target = $region56
      $region55: #{decoder_forward.2} parent=47 // pred_region
        %p316 = scmp.lt.s32.totalorder %s16, 1
        %s317 = scalar_select %p316, %s16, 1
        %s318 = smul.addr %s317, 8
        %s319 = smul.addr %s318, 4
        %s320 = scalar_lea.vmem %s1, %s319
      $region56: #{decoder_forward.2} parent=47 // pred_fallthru
        _
    $region48: #{decoder_forward.2} parent=5 // pred_fallthru
      _
    %p321 = scmp.le.s32.totalorder 1, %s16
    %p322 = scmp.lt.s32.totalorder %s16, 3
    %p323 = pnand %p321, %p322
    %p324 = pneg %p323
    // Predicated region
    $region57: #{decoder_forward.2} parent=5 // pred_check
      _
    $region58: #{decoder_forward.2} parent=5 // pred_check_branch
      %326 = sbr.rel (%p323) target = $region60
    $region59: #{decoder_forward.2} parent=5 // pred_region
      %s327 = ssub.s32 %s16, 1
      %p328 = scmp.lt.s32.totalorder %s21, 1
      %s329 = scalar_select %p328, %s21, 1
      %s330 = smul.addr %s329, 2
      %s331 = smul.addr %s330, 4
      %s332 = scalar_lea.vmem %s0, %s331
      %p333 = pneg %p42
      %p334 = pneg %p39
      %p335 = scmp.lt.s32.totalorder %s21, 1
      %s336 = scalar_select %p335, %s21, 1
      %s337 = smul.addr %s336, 8
      %s338 = smul.addr %s337, 4
      %s339 = scalar_lea.vmem %s1, %s338
      %p340 = pneg %p68
      %p341 = pneg %p65
      %p342 = pneg %p89
      %p343 = pneg %p86
      %p344 = pneg %p110
      %p345 = pneg %p107
      %p346 = pneg %p131
      %p347 = pneg %p128
      %p348 = pneg %p152
      %p349 = pneg %p149
      %p350 = pneg %p173
      %p351 = pneg %p170
      %p352 = pneg %p194
      %p353 = pneg %p191
      %p354 = pneg %p215
      %p355 = pneg %p212
      %p356 = pneg %p236
      %p357 = pneg %p233
      %p358 = pneg %p262
      %p359 = pneg %p259
      %p360 = scmp.lt.s32.totalorder %s21, 1
      %s361 = scalar_select %p360, %s21, 1
      %s362 = smul.addr %s361, 8
      %s363 = smul.addr %s362, 4
      %s364 = scalar_lea.vmem %s10, %s363
      %p365 = scmp.lt.s32.totalorder %s21, 1
      %s366 = scalar_select %p365, %s21, 1
      %s367 = smul.addr %s366, 2
      %s368 = smul.addr %s367, 4
      %s369 = scalar_lea.vmem %s0, %s368
      %p370 = scmp.lt.s32.totalorder %s21, 1
      %s371 = scalar_select %p370, %s21, 1
      %s372 = smul.addr %s371, 8
      %s373 = smul.addr %s372, 4
      %s374 = scalar_lea.vmem %s1, %s373
      %p375 = scmp.lt.s32.totalorder %s21, 1
      %s376 = scalar_select %p375, %s21, 1
      %s377 = smul.addr %s376, 8
      %s378 = smul.addr %s377, 4
      %s379 = scalar_lea.vmem %s10, %s378
      %v381 = vld [vmem:[%s369] sm:$0xf]
      %v382 = vld [vmem:[%s369 + $0x4] sm:$0xf]
      %v383 = vld [vmem:[%s3] sm:$0x1]
      %v384 = vld [vmem:[%s2] sm:$0xf]
      %v385 = vld [vmem:[%s2 + $0x4] sm:$0xf]
      %v386 = vld [vmem:[%s2 + $0x8] sm:$0xf]
      %v387 = vld [vmem:[%s2 + $0xc] sm:$0xf]
      %v388 = vld [vmem:[%s2 + $0x10] sm:$0xf]
      %v389 = vld [vmem:[%s2 + $0x14] sm:$0xf]
      %v390 = vld [vmem:[%s2 + $0x18] sm:$0xf]
      %v391 = vld [vmem:[%s2 + $0x1c] sm:$0xf]
      %v392 = vld [vmem:[%s2 + $0x20] sm:$0xf]
      %v393 = vld [vmem:[%s2 + $0x24] sm:$0xf]
      %v394 = vld [vmem:[%s2 + $0x28] sm:$0xf]
      %v395 = vld [vmem:[%s2 + $0x2c] sm:$0xf]
      %v396 = vld [vmem:[%s2 + $0x30] sm:$0xf]
      %v397 = vld [vmem:[%s2 + $0x34] sm:$0xf]
      %v398 = vld [vmem:[%s2 + $0x38] sm:$0xf]
      %v399 = vld [vmem:[%s2 + $0x3c] sm:$0xf]
      %v401 = vperm.slane %v383, 0
      %v405 = vunpack.c.l.b16 %v381
      %v406 = vunpack.c.l.b16 %v382
      %v407 = vpack.c.b16 %v406, %v405
      %v425 = vunpack.c.l.b16 %v384
      %v426 = vunpack.c.l.b16 %v385
      %v427 = vunpack.c.l.b16 %v386
      %v428 = vunpack.c.l.b16 %v387
      %v429 = vunpack.c.l.b16 %v388
      %v430 = vunpack.c.l.b16 %v389
      %v431 = vunpack.c.l.b16 %v390
      %v432 = vunpack.c.l.b16 %v391
      %v433 = vunpack.c.l.b16 %v392
      %v434 = vunpack.c.l.b16 %v393
      %v435 = vunpack.c.l.b16 %v394
      %v436 = vunpack.c.l.b16 %v395
      %v437 = vunpack.c.l.b16 %v396
      %v438 = vunpack.c.l.b16 %v397
      %v439 = vunpack.c.l.b16 %v398
      %v440 = vunpack.c.l.b16 %v399
      %v441 = vpack.c.b16 %v426, %v425
      %v442 = vpack.c.b16 %v428, %v427
      %v443 = vpack.c.b16 %v430, %v429
      %v444 = vpack.c.b16 %v432, %v431
      %v445 = vpack.c.b16 %v434, %v433
      %v446 = vpack.c.b16 %v436, %v435
      %v447 = vpack.c.b16 %v438, %v437
      %v448 = vpack.c.b16 %v440, %v439
      %457 = vmatpush.bf16.msra.mxu0 %v448
      %458 = vmatpush.bf16.msra.mxu0 %v447
      %459 = vmatpush.bf16.msra.mxu0 %v446
      %460 = vmatpush.bf16.msra.mxu0 %v445
      %461 = vmatpush.bf16.msra.mxu0 %v444
      %462 = vmatpush.bf16.msra.mxu0 %v443
      %463 = vmatpush.bf16.msra.mxu0 %v442
      %464 = vmatpush.bf16.msra.mxu0 %v441
      %465 = vmatmul.bf16.gmra.mxu0 %v407
      %v466 = vpop.f32.mrf.mxu0
      %v467 = vadd.f32 %v401, %v466
      %v468 = vpop.f32.mrf.mxu0
      %v469 = vadd.f32 %v401, %v468
      %470 = vdwg.mxu0
      %s471 = scalar_lea.vmem %s2, 64
      %v472 = vld [vmem:[%s471] sm:$0xf]
      %v473 = vld [vmem:[%s471 + $0x4] sm:$0xf]
      %v474 = vld [vmem:[%s471 + $0x8] sm:$0xf]
      %v475 = vld [vmem:[%s471 + $0xc] sm:$0xf]
      %v476 = vld [vmem:[%s471 + $0x10] sm:$0xf]
      %v477 = vld [vmem:[%s471 + $0x14] sm:$0xf]
      %v478 = vld [vmem:[%s471 + $0x18] sm:$0xf]
      %v479 = vld [vmem:[%s471 + $0x1c] sm:$0xf]
      %v480 = vld [vmem:[%s471 + $0x20] sm:$0xf]
      %v481 = vld [vmem:[%s471 + $0x24] sm:$0xf]
      %v482 = vld [vmem:[%s471 + $0x28] sm:$0xf]
      %v483 = vld [vmem:[%s471 + $0x2c] sm:$0xf]
      %v484 = vld [vmem:[%s471 + $0x30] sm:$0xf]
      %v485 = vld [vmem:[%s471 + $0x34] sm:$0xf]
      %v486 = vld [vmem:[%s471 + $0x38] sm:$0xf]
      %v487 = vld [vmem:[%s471 + $0x3c] sm:$0xf]
      %v504 = vunpack.c.l.b16 %v472
      %v505 = vunpack.c.l.b16 %v473
      %v506 = vunpack.c.l.b16 %v474
      %v507 = vunpack.c.l.b16 %v475
      %v508 = vunpack.c.l.b16 %v476
      %v509 = vunpack.c.l.b16 %v477
      %v510 = vunpack.c.l.b16 %v478
      %v511 = vunpack.c.l.b16 %v479
      %v512 = vunpack.c.l.b16 %v480
      %v513 = vunpack.c.l.b16 %v481
      %v514 = vunpack.c.l.b16 %v482
      %v515 = vunpack.c.l.b16 %v483
      %v516 = vunpack.c.l.b16 %v484
      %v517 = vunpack.c.l.b16 %v485
      %v518 = vunpack.c.l.b16 %v486
      %v519 = vunpack.c.l.b16 %v487
      %v520 = vpack.c.b16 %v505, %v504
      %v521 = vpack.c.b16 %v507, %v506
      %v522 = vpack.c.b16 %v509, %v508
      %v523 = vpack.c.b16 %v511, %v510
      %v524 = vpack.c.b16 %v513, %v512
      %v525 = vpack.c.b16 %v515, %v514
      %v526 = vpack.c.b16 %v517, %v516
      %v527 = vpack.c.b16 %v519, %v518
      %536 = vmatpush.bf16.msra.mxu0 %v527
      %537 = vmatpush.bf16.msra.mxu0 %v526
      %538 = vmatpush.bf16.msra.mxu0 %v525
      %539 = vmatpush.bf16.msra.mxu0 %v524
      %540 = vmatpush.bf16.msra.mxu0 %v523
      %541 = vmatpush.bf16.msra.mxu0 %v522
      %542 = vmatpush.bf16.msra.mxu0 %v521
      %543 = vmatpush.bf16.msra.mxu0 %v520
      %544 = vmatmul.bf16.gmra.mxu0 %v407
      %v545 = vpop.f32.mrf.mxu0
      %v546 = vadd.f32 %v401, %v545
      %v547 = vpop.f32.mrf.mxu0
      %v548 = vadd.f32 %v401, %v547
      %549 = vdwg.mxu0
      %s550 = scalar_lea.vmem %s2, 128
      %v551 = vld [vmem:[%s550] sm:$0xf]
      %v552 = vld [vmem:[%s550 + $0x4] sm:$0xf]
      %v553 = vld [vmem:[%s550 + $0x8] sm:$0xf]
      %v554 = vld [vmem:[%s550 + $0xc] sm:$0xf]
      %v555 = vld [vmem:[%s550 + $0x10] sm:$0xf]
      %v556 = vld [vmem:[%s550 + $0x14] sm:$0xf]
      %v557 = vld [vmem:[%s550 + $0x18] sm:$0xf]
      %v558 = vld [vmem:[%s550 + $0x1c] sm:$0xf]
      %v559 = vld [vmem:[%s550 + $0x20] sm:$0xf]
      %v560 = vld [vmem:[%s550 + $0x24] sm:$0xf]
      %v561 = vld [vmem:[%s550 + $0x28] sm:$0xf]
      %v562 = vld [vmem:[%s550 + $0x2c] sm:$0xf]
      %v563 = vld [vmem:[%s550 + $0x30] sm:$0xf]
      %v564 = vld [vmem:[%s550 + $0x34] sm:$0xf]
      %v565 = vld [vmem:[%s550 + $0x38] sm:$0xf]
      %v566 = vld [vmem:[%s550 + $0x3c] sm:$0xf]
      %v583 = vunpack.c.l.b16 %v551
      %v584 = vunpack.c.l.b16 %v552
      %v585 = vunpack.c.l.b16 %v553
      %v586 = vunpack.c.l.b16 %v554
      %v587 = vunpack.c.l.b16 %v555
      %v588 = vunpack.c.l.b16 %v556
      %v589 = vunpack.c.l.b16 %v557
      %v590 = vunpack.c.l.b16 %v558
      %v591 = vunpack.c.l.b16 %v559
      %v592 = vunpack.c.l.b16 %v560
      %v593 = vunpack.c.l.b16 %v561
      %v594 = vunpack.c.l.b16 %v562
      %v595 = vunpack.c.l.b16 %v563
      %v596 = vunpack.c.l.b16 %v564
      %v597 = vunpack.c.l.b16 %v565
      %v598 = vunpack.c.l.b16 %v566
      %v599 = vpack.c.b16 %v584, %v583
      %v600 = vpack.c.b16 %v586, %v585
      %v601 = vpack.c.b16 %v588, %v587
      %v602 = vpack.c.b16 %v590, %v589
      %v603 = vpack.c.b16 %v592, %v591
      %v604 = vpack.c.b16 %v594, %v593
      %v605 = vpack.c.b16 %v596, %v595
      %v606 = vpack.c.b16 %v598, %v597
      %615 = vmatpush.bf16.msra.mxu0 %v606
      %616 = vmatpush.bf16.msra.mxu0 %v605
      %617 = vmatpush.bf16.msra.mxu0 %v604
      %618 = vmatpush.bf16.msra.mxu0 %v603
      %619 = vmatpush.bf16.msra.mxu0 %v602
      %620 = vmatpush.bf16.msra.mxu0 %v601
      %621 = vmatpush.bf16.msra.mxu0 %v600
      %622 = vmatpush.bf16.msra.mxu0 %v599
      %623 = vmatmul.bf16.gmra.mxu0 %v407
      %v624 = vpop.f32.mrf.mxu0
      %v625 = vadd.f32 %v401, %v624
      %v626 = vpop.f32.mrf.mxu0
      %v627 = vadd.f32 %v401, %v626
      %628 = vdwg.mxu0
      %s629 = scalar_lea.vmem %s2, 192
      %v630 = vld [vmem:[%s629] sm:$0xf]
      %v631 = vld [vmem:[%s629 + $0x4] sm:$0xf]
      %v632 = vld [vmem:[%s629 + $0x8] sm:$0xf]
      %v633 = vld [vmem:[%s629 + $0xc] sm:$0xf]
      %v634 = vld [vmem:[%s629 + $0x10] sm:$0xf]
      %v635 = vld [vmem:[%s629 + $0x14] sm:$0xf]
      %v636 = vld [vmem:[%s629 + $0x18] sm:$0xf]
      %v637 = vld [vmem:[%s629 + $0x1c] sm:$0xf]
      %v638 = vld [vmem:[%s629 + $0x20] sm:$0xf]
      %v639 = vld [vmem:[%s629 + $0x24] sm:$0xf]
      %v640 = vld [vmem:[%s629 + $0x28] sm:$0xf]
      %v641 = vld [vmem:[%s629 + $0x2c] sm:$0xf]
      %v642 = vld [vmem:[%s629 + $0x30] sm:$0xf]
      %v643 = vld [vmem:[%s629 + $0x34] sm:$0xf]
      %v644 = vld [vmem:[%s629 + $0x38] sm:$0xf]
      %v645 = vld [vmem:[%s629 + $0x3c] sm:$0xf]
      %v662 = vunpack.c.l.b16 %v630
      %v663 = vunpack.c.l.b16 %v631
      %v664 = vunpack.c.l.b16 %v632
      %v665 = vunpack.c.l.b16 %v633
      %v666 = vunpack.c.l.b16 %v634
      %v667 = vunpack.c.l.b16 %v635
      %v668 = vunpack.c.l.b16 %v636
      %v669 = vunpack.c.l.b16 %v637
      %v670 = vunpack.c.l.b16 %v638
      %v671 = vunpack.c.l.b16 %v639
      %v672 = vunpack.c.l.b16 %v640
      %v673 = vunpack.c.l.b16 %v641
      %v674 = vunpack.c.l.b16 %v642
      %v675 = vunpack.c.l.b16 %v643
      %v676 = vunpack.c.l.b16 %v644
      %v677 = vunpack.c.l.b16 %v645
      %v678 = vpack.c.b16 %v663, %v662
      %v679 = vpack.c.b16 %v665, %v664
      %v680 = vpack.c.b16 %v667, %v666
      %v681 = vpack.c.b16 %v669, %v668
      %v682 = vpack.c.b16 %v671, %v670
      %v683 = vpack.c.b16 %v673, %v672
      %v684 = vpack.c.b16 %v675, %v674
      %v685 = vpack.c.b16 %v677, %v676
      %694 = vmatpush.bf16.msra.mxu0 %v685
      %695 = vmatpush.bf16.msra.mxu0 %v684
      %696 = vmatpush.bf16.msra.mxu0 %v683
      %697 = vmatpush.bf16.msra.mxu0 %v682
      %698 = vmatpush.bf16.msra.mxu0 %v681
      %699 = vmatpush.bf16.msra.mxu0 %v680
      %700 = vmatpush.bf16.msra.mxu0 %v679
      %701 = vmatpush.bf16.msra.mxu0 %v678
      %702 = vmatmul.bf16.gmra.mxu0 %v407
      %v703 = vpop.f32.mrf.mxu0
      %v704 = vadd.f32 %v401, %v703
      %v705 = vpop.f32.mrf.mxu0
      %v706 = vadd.f32 %v401, %v705
      %707 = vdwg.mxu0
      %v710 = vrot.slane %v467, 1
      %v711 = vrot.slane %v467, 2
      %v712 = vrot.slane %v467, 3
      %v713 = vrot.slane %v467, 4
      %v714 = vrot.slane %v467, 5
      %v715 = vrot.slane %v467, 6
      %v716 = vrot.slane %v467, 7
      %v717 = vrot.slane %v469, 1
      %v718 = vrot.slane %v469, 2
      %v719 = vrot.slane %v469, 3
      %v720 = vrot.slane %v469, 4
      %v721 = vrot.slane %v469, 5
      %v722 = vrot.slane %v469, 6
      %v723 = vrot.slane %v469, 7
      %v740 = vrot.slane %v546, 1
      %v741 = vrot.slane %v546, 2
      %v742 = vrot.slane %v546, 3
      %v743 = vrot.slane %v546, 4
      %v744 = vrot.slane %v546, 5
      %v745 = vrot.slane %v546, 6
      %v746 = vrot.slane %v546, 7
      %v747 = vrot.slane %v548, 1
      %v748 = vrot.slane %v548, 2
      %v749 = vrot.slane %v548, 3
      %v750 = vrot.slane %v548, 4
      %v751 = vrot.slane %v548, 5
      %v752 = vrot.slane %v548, 6
      %v753 = vrot.slane %v548, 7
      %v754 = vperm.slane %v546, 0
      %v755 = vperm.slane %v740, 0
      %v756 = vperm.slane %v741, 0
      %v757 = vperm.slane %v742, 0
      %v758 = vperm.slane %v743, 0
      %v759 = vperm.slane %v744, 0
      %v760 = vperm.slane %v745, 0
      %v761 = vperm.slane %v746, 0
      %v762 = vperm.slane %v548, 0
      %v763 = vperm.slane %v747, 0
      %v764 = vperm.slane %v748, 0
      %v765 = vperm.slane %v749, 0
      %v766 = vperm.slane %v750, 0
      %v767 = vperm.slane %v751, 0
      %v768 = vperm.slane %v752, 0
      %v769 = vperm.slane %v753, 0
      %vm786 = vcmask 1040384
      %v787 = vsel %vm786, %v467, %v754
      %v788 = vsel %vm786, %v710, %v755
      %v789 = vsel %vm786, %v711, %v756
      %v790 = vsel %vm786, %v712, %v757
      %v791 = vsel %vm786, %v713, %v758
      %v792 = vsel %vm786, %v714, %v759
      %v793 = vsel %vm786, %v715, %v760
      %v794 = vsel %vm786, %v716, %v761
      %v795 = vsel %vm786, %v469, %v762
      %v796 = vsel %vm786, %v717, %v763
      %v797 = vsel %vm786, %v718, %v764
      %v798 = vsel %vm786, %v719, %v765
      %v799 = vsel %vm786, %v720, %v766
      %v800 = vsel %vm786, %v721, %v767
      %v801 = vsel %vm786, %v722, %v768
      %v802 = vsel %vm786, %v723, %v769
      %v805 = vrot.slane %v625, 1
      %v806 = vrot.slane %v625, 2
      %v807 = vrot.slane %v625, 3
      %v808 = vrot.slane %v625, 4
      %v809 = vrot.slane %v625, 5
      %v810 = vrot.slane %v625, 6
      %v811 = vrot.slane %v625, 7
      %v812 = vrot.slane %v627, 1
      %v813 = vrot.slane %v627, 2
      %v814 = vrot.slane %v627, 3
      %v815 = vrot.slane %v627, 4
      %v816 = vrot.slane %v627, 5
      %v817 = vrot.slane %v627, 6
      %v818 = vrot.slane %v627, 7
      %v835 = vrot.slane %v704, 1
      %v836 = vrot.slane %v704, 2
      %v837 = vrot.slane %v704, 3
      %v838 = vrot.slane %v704, 4
      %v839 = vrot.slane %v704, 5
      %v840 = vrot.slane %v704, 6
      %v841 = vrot.slane %v704, 7
      %v842 = vrot.slane %v706, 1
      %v843 = vrot.slane %v706, 2
      %v844 = vrot.slane %v706, 3
      %v845 = vrot.slane %v706, 4
      %v846 = vrot.slane %v706, 5
      %v847 = vrot.slane %v706, 6
      %v848 = vrot.slane %v706, 7
      %v849 = vperm.slane %v704, 0
      %v850 = vperm.slane %v835, 0
      %v851 = vperm.slane %v836, 0
      %v852 = vperm.slane %v837, 0
      %v853 = vperm.slane %v838, 0
      %v854 = vperm.slane %v839, 0
      %v855 = vperm.slane %v840, 0
      %v856 = vperm.slane %v841, 0
      %v857 = vperm.slane %v706, 0
      %v858 = vperm.slane %v842, 0
      %v859 = vperm.slane %v843, 0
      %v860 = vperm.slane %v844, 0
      %v861 = vperm.slane %v845, 0
      %v862 = vperm.slane %v846, 0
      %v863 = vperm.slane %v847, 0
      %v864 = vperm.slane %v848, 0
      %v881 = vsel %vm786, %v625, %v849
      %v882 = vsel %vm786, %v805, %v850
      %v883 = vsel %vm786, %v806, %v851
      %v884 = vsel %vm786, %v807, %v852
      %v885 = vsel %vm786, %v808, %v853
      %v886 = vsel %vm786, %v809, %v854
      %v887 = vsel %vm786, %v810, %v855
      %v888 = vsel %vm786, %v811, %v856
      %v889 = vsel %vm786, %v627, %v857
      %v890 = vsel %vm786, %v812, %v858
      %v891 = vsel %vm786, %v813, %v859
      %v892 = vsel %vm786, %v814, %v860
      %v893 = vsel %vm786, %v815, %v861
      %v894 = vsel %vm786, %v816, %v862
      %v895 = vsel %vm786, %v817, %v863
      %v896 = vsel %vm786, %v818, %v864
      %897 = vst [vmem:[#allocation2] sm:$0xf] 0
      %898 = vst [vmem:[#allocation2 + $0x4] sm:$0x1] 0
      %s899 = scalar_lea.vmem [#allocation2], 72
      %900 = vst [vmem:[%s899] sm:$0xf] 0
      %901 = vst [vmem:[%s899 + $0x4] sm:$0x1] 0
      %vm902 = vcmask 1040384
      %vm903 = vsmask.f32 256
      %vm904 = vmand %vm902, %vm903
      %v905 = vld [vmem:[#allocation2] sm:$0x1]
      %v906 = vsel %vm904, 0, %v905
      %907 = vst [vmem:[#allocation2] sm:$0x1] %v906
      %v908 = vld [vmem:[#allocation2 + $0x8] sm:$0x1]
      %v909 = vsel %vm904, 0, %v908
      %910 = vst [vmem:[#allocation2 + $0x8] sm:$0x1] %v909
      %v911 = vld [vmem:[#allocation2 + $0x10] sm:$0x1]
      %v912 = vsel %vm904, 0, %v911
      %913 = vst [vmem:[#allocation2 + $0x10] sm:$0x1] %v912
      %v914 = vld [vmem:[#allocation2 + $0x18] sm:$0x1]
      %v915 = vsel %vm904, 0, %v914
      %916 = vst [vmem:[#allocation2 + $0x18] sm:$0x1] %v915
      %v917 = vld [vmem:[#allocation2 + $0x20] sm:$0x1]
      %v918 = vsel %vm904, 0, %v917
      %919 = vst [vmem:[#allocation2 + $0x20] sm:$0x1] %v918
      %v920 = vld [vmem:[#allocation2 + $0x28] sm:$0x1]
      %v921 = vsel %vm904, 0, %v920
      %922 = vst [vmem:[#allocation2 + $0x28] sm:$0x1] %v921
      %v923 = vld [vmem:[#allocation2 + $0x30] sm:$0x1]
      %v924 = vsel %vm904, 0, %v923
      %925 = vst [vmem:[#allocation2 + $0x30] sm:$0x1] %v924
      %v926 = vld [vmem:[#allocation2 + $0x38] sm:$0x1]
      %v927 = vsel %vm904, 0, %v926
      %928 = vst [vmem:[#allocation2 + $0x38] sm:$0x1] %v927
      %v929 = vld [vmem:[#allocation2 + $0x40] sm:$0x1]
      %v930 = vsel %vm904, 0, %v929
      %931 = vst [vmem:[#allocation2 + $0x40] sm:$0x1] %v930
      %v932 = vld [vmem:[#allocation2 + $0x48] sm:$0x1]
      %v933 = vsel %vm904, 0, %v932
      %934 = vst [vmem:[#allocation2 + $0x48] sm:$0x1] %v933
      %vm935 = vsmask.f32 7938
      %vm936 = vmand %vm902, %vm935
      %v937 = vld [vmem:[#allocation2 + $0x4] sm:$0x1]
      %v938 = vsel %vm936, 0, %v937
      %939 = vst [vmem:[#allocation2 + $0x4] sm:$0x1] %v938
      %v940 = vld [vmem:[#allocation2 + $0xc] sm:$0x1]
      %v941 = vsel %vm936, 0, %v940
      %942 = vst [vmem:[#allocation2 + $0xc] sm:$0x1] %v941
      %v943 = vld [vmem:[#allocation2 + $0x14] sm:$0x1]
      %v944 = vsel %vm936, 0, %v943
      %945 = vst [vmem:[#allocation2 + $0x14] sm:$0x1] %v944
      %v946 = vld [vmem:[#allocation2 + $0x1c] sm:$0x1]
      %v947 = vsel %vm936, 0, %v946
      %948 = vst [vmem:[#allocation2 + $0x1c] sm:$0x1] %v947
      %v949 = vld [vmem:[#allocation2 + $0x24] sm:$0x1]
      %v950 = vsel %vm936, 0, %v949
      %951 = vst [vmem:[#allocation2 + $0x24] sm:$0x1] %v950
      %v952 = vld [vmem:[#allocation2 + $0x2c] sm:$0x1]
      %v953 = vsel %vm936, 0, %v952
      %954 = vst [vmem:[#allocation2 + $0x2c] sm:$0x1] %v953
      %v955 = vld [vmem:[#allocation2 + $0x34] sm:$0x1]
      %v956 = vsel %vm936, 0, %v955
      %957 = vst [vmem:[#allocation2 + $0x34] sm:$0x1] %v956
      %v958 = vld [vmem:[#allocation2 + $0x3c] sm:$0x1]
      %v959 = vsel %vm936, 0, %v958
      %960 = vst [vmem:[#allocation2 + $0x3c] sm:$0x1] %v959
      %v961 = vld [vmem:[#allocation2 + $0x44] sm:$0x1]
      %v962 = vsel %vm936, 0, %v961
      %963 = vst [vmem:[#allocation2 + $0x44] sm:$0x1] %v962
      %v964 = vld [vmem:[#allocation2 + $0x4c] sm:$0x1]
      %v965 = vsel %vm936, 0, %v964
      %966 = vst [vmem:[#allocation2 + $0x4c] sm:$0x1] %v965
      %v967 = vld [vmem:[%s374] sm:$0xf]
      %v968 = vld [vmem:[%s374 + $0x4] sm:$0xf]
      %v969 = vld [vmem:[%s374 + $0x8] sm:$0xf]
      %v970 = vld [vmem:[%s374 + $0xc] sm:$0xf]
      %v971 = vld [vmem:[%s374 + $0x10] sm:$0xf]
      %v972 = vld [vmem:[%s374 + $0x14] sm:$0xf]
      %v973 = vld [vmem:[%s374 + $0x18] sm:$0xf]
      %v974 = vld [vmem:[%s374 + $0x1c] sm:$0xf]
      %1007 = vst [vmem:[#allocation1] ss:$4 sm:$0xff] %v787
      %s1008 = scalar_lea.vmem [#allocation1], 1
      %1009 = vst [vmem:[%s1008] ss:$4 sm:$0xff] %v788
      %s1010 = scalar_lea.vmem [#allocation1], 2
      %1011 = vst [vmem:[%s1010] ss:$4 sm:$0xff] %v789
      %s1012 = scalar_lea.vmem [#allocation1], 3
      %1013 = vst [vmem:[%s1012] ss:$4 sm:$0xff] %v790
      %v1014 = vld.sshfl [vmem:[#allocation1] sm:$0xff pattern:$0x73625140]
      %s1015 = scalar_lea.vmem [#allocation1], 32
      %1016 = vst [vmem:[%s1015] ss:$4 sm:$0xff] %v881
      %s1017 = scalar_lea.vmem [#allocation1], 33
      %1018 = vst [vmem:[%s1017] ss:$4 sm:$0xff] %v882
      %s1019 = scalar_lea.vmem [#allocation1], 34
      %1020 = vst [vmem:[%s1019] ss:$4 sm:$0xff] %v883
      %s1021 = scalar_lea.vmem [#allocation1], 35
      %1022 = vst [vmem:[%s1021] ss:$4 sm:$0xff] %v884
      %v1023 = vld.sshfl [vmem:[#allocation1 + $0x20] sm:$0xff pattern:$0x73625140]
      %1024 = vst [vmem:[#allocation1] ss:$4 sm:$0xff] %v791
      %1025 = vst [vmem:[%s1008] ss:$4 sm:$0xff] %v792
      %1026 = vst [vmem:[%s1010] ss:$4 sm:$0xff] %v793
      %1027 = vst [vmem:[%s1012] ss:$4 sm:$0xff] %v794
      %v1028 = vld.sshfl [vmem:[#allocation1] sm:$0xff pattern:$0x73625140]
      %1029 = vst [vmem:[%s1015] ss:$4 sm:$0xff] %v885
      %1030 = vst [vmem:[%s1017] ss:$4 sm:$0xff] %v886
      %1031 = vst [vmem:[%s1019] ss:$4 sm:$0xff] %v887
      %1032 = vst [vmem:[%s1021] ss:$4 sm:$0xff] %v888
      %v1033 = vld.sshfl [vmem:[#allocation1 + $0x20] sm:$0xff pattern:$0x73625140]
      %1034 = vst [vmem:[#allocation1] ss:$4 sm:$0xff] %v795
      %1035 = vst [vmem:[%s1008] ss:$4 sm:$0xff] %v796
      %1036 = vst [vmem:[%s1010] ss:$4 sm:$0xff] %v797
      %1037 = vst [vmem:[%s1012] ss:$4 sm:$0xff] %v798
      %v1038 = vld.sshfl [vmem:[#allocation1] sm:$0xff pattern:$0x73625140]
      %1039 = vst [vmem:[%s1015] ss:$4 sm:$0xff] %v889
      %1040 = vst [vmem:[%s1017] ss:$4 sm:$0xff] %v890
      %1041 = vst [vmem:[%s1019] ss:$4 sm:$0xff] %v891
      %1042 = vst [vmem:[%s1021] ss:$4 sm:$0xff] %v892
      %v1043 = vld.sshfl [vmem:[#allocation1 + $0x20] sm:$0xff pattern:$0x73625140]
      %1044 = vst [vmem:[#allocation1] ss:$4 sm:$0xff] %v799
      %1045 = vst [vmem:[%s1008] ss:$4 sm:$0xff] %v800
      %1046 = vst [vmem:[%s1010] ss:$4 sm:$0xff] %v801
      %1047 = vst [vmem:[%s1012] ss:$4 sm:$0xff] %v802
      %v1048 = vld.sshfl [vmem:[#allocation1] sm:$0xff pattern:$0x73625140]
      %1049 = vst [vmem:[%s1015] ss:$4 sm:$0xff] %v893
      %1050 = vst [vmem:[%s1017] ss:$4 sm:$0xff] %v894
      %1051 = vst [vmem:[%s1019] ss:$4 sm:$0xff] %v895
      %1052 = vst [vmem:[%s1021] ss:$4 sm:$0xff] %v896
      %v1053 = vld.sshfl [vmem:[#allocation1 + $0x20] sm:$0xff pattern:$0x73625140]
      %v1062 = vpack.c.bf16 %v1014, %v1014
      %v1063 = vpack.c.bf16 %v1023, %v1023
      %v1064 = vpack.c.bf16 %v1028, %v1028
      %v1065 = vpack.c.bf16 %v1033, %v1033
      %v1066 = vpack.c.bf16 %v1038, %v1038
      %v1067 = vpack.c.bf16 %v1043, %v1043
      %v1068 = vpack.c.bf16 %v1048, %v1048
      %v1069 = vpack.c.bf16 %v1053, %v1053
      %v1078 = vunpack.c.l.b16 %v1062
      %v1079 = vunpack.c.l.b16 %v1063
      %v1080 = vunpack.c.l.b16 %v1064
      %v1081 = vunpack.c.l.b16 %v1065
      %v1082 = vunpack.c.l.b16 %v1066
      %v1083 = vunpack.c.l.b16 %v1067
      %v1084 = vunpack.c.l.b16 %v1068
      %v1085 = vunpack.c.l.b16 %v1069
      %v1086 = vpack.c.b16 %v1078, %v1078
      %v1087 = vpack.c.b16 %v1079, %v1079
      %v1088 = vpack.c.b16 %v1080, %v1080
      %v1089 = vpack.c.b16 %v1081, %v1081
      %v1090 = vpack.c.b16 %v1082, %v1082
      %v1091 = vpack.c.b16 %v1083, %v1083
      %v1092 = vpack.c.b16 %v1084, %v1084
      %v1093 = vpack.c.b16 %v1085, %v1085
      %1094 = vrot.lane.b32.xlu0 %v1086, 64
      %v1095 = vpop.permute.xlu0 %1094
      %1096 = vrot.lane.b32.xlu0 %v1087, 64
      %v1097 = vpop.permute.xlu0 %1096
      %1098 = vrot.lane.b32.xlu0 %v1088, 64
      %v1099 = vpop.permute.xlu0 %1098
      %1100 = vrot.lane.b32.xlu0 %v1089, 64
      %v1101 = vpop.permute.xlu0 %1100
      %1102 = vrot.lane.b32.xlu0 %v1090, 64
      %v1103 = vpop.permute.xlu0 %1102
      %1104 = vrot.lane.b32.xlu0 %v1091, 64
      %v1105 = vpop.permute.xlu0 %1104
      %1106 = vrot.lane.b32.xlu0 %v1092, 64
      %v1107 = vpop.permute.xlu0 %1106
      %1108 = vrot.lane.b32.xlu0 %v1093, 64
      %v1109 = vpop.permute.xlu0 %1108
      %vm1110 = vcmask 523264
      %v1113 = vsel %vm1110, %v967, %v1095
      %v1116 = vsel %vm1110, %v968, %v1097
      %v1119 = vsel %vm1110, %v969, %v1099
      %v1122 = vsel %vm1110, %v970, %v1101
      %v1125 = vsel %vm1110, %v971, %v1103
      %v1128 = vsel %vm1110, %v972, %v1105
      %v1131 = vsel %vm1110, %v973, %v1107
      %v1134 = vsel %vm1110, %v974, %v1109
      %v1143 = vunpack.c.l.b16 %v1113
      %v1144 = vunpack.c.l.b16 %v1116
      %v1145 = vunpack.c.l.b16 %v1119
      %v1146 = vunpack.c.l.b16 %v1122
      %v1147 = vunpack.c.l.b16 %v1125
      %v1148 = vunpack.c.l.b16 %v1128
      %v1149 = vunpack.c.l.b16 %v1131
      %v1150 = vunpack.c.l.b16 %v1134
      %v1151 = vpack.c.b16 %v1143, %v1143
      %v1152 = vpack.c.b16 %v1144, %v1144
      %v1153 = vpack.c.b16 %v1145, %v1145
      %v1154 = vpack.c.b16 %v1146, %v1146
      %v1155 = vpack.c.b16 %v1147, %v1147
      %v1156 = vpack.c.b16 %v1148, %v1148
      %v1157 = vpack.c.b16 %v1149, %v1149
      %v1158 = vpack.c.b16 %v1150, %v1150
      %v1160 = vshrl.u32 %v1151, 16
      %v1162 = vrot.slane %v1160, 7
      %v1163 = vshll.u32 %v1151, 16
      %v1165 = vor.u32 %v1162, %v1163
      %v1166 = vrot.slane %v1162, 4
      %v1168 = vshrl.u32 %v1152, 16
      %v1170 = vrot.slane %v1168, 7
      %v1171 = vshll.u32 %v1152, 16
      %v1173 = vor.u32 %v1170, %v1171
      %v1174 = vrot.slane %v1170, 4
      %v1176 = vshrl.u32 %v1153, 16
      %v1178 = vrot.slane %v1176, 7
      %v1179 = vshll.u32 %v1153, 16
      %v1181 = vor.u32 %v1178, %v1179
      %v1182 = vrot.slane %v1178, 4
      %v1184 = vshrl.u32 %v1154, 16
      %v1186 = vrot.slane %v1184, 7
      %v1187 = vshll.u32 %v1154, 16
      %v1189 = vor.u32 %v1186, %v1187
      %v1190 = vrot.slane %v1186, 4
      %v1192 = vshrl.u32 %v1155, 16
      %v1194 = vrot.slane %v1192, 7
      %v1195 = vshll.u32 %v1155, 16
      %v1197 = vor.u32 %v1194, %v1195
      %v1198 = vrot.slane %v1194, 4
      %v1200 = vshrl.u32 %v1156, 16
      %v1202 = vrot.slane %v1200, 7
      %v1203 = vshll.u32 %v1156, 16
      %v1205 = vor.u32 %v1202, %v1203
      %v1206 = vrot.slane %v1202, 4
      %v1208 = vshrl.u32 %v1157, 16
      %v1210 = vrot.slane %v1208, 7
      %v1211 = vshll.u32 %v1157, 16
      %v1213 = vor.u32 %v1210, %v1211
      %v1214 = vrot.slane %v1210, 4
      %v1216 = vshrl.u32 %v1158, 16
      %v1218 = vrot.slane %v1216, 7
      %v1219 = vshll.u32 %v1158, 16
      %v1221 = vor.u32 %v1218, %v1219
      %v1222 = vrot.slane %v1218, 4
      %s1239 = scalar_lea.vmem [#allocation2], 8
      %vm1240 = vcmask 1043456
      %vm1241 = vmand %vm1240, %vm935
      %v1242 = vld [vmem:[%s1239] sm:$0xf]
      %v1243 = vsel %vm1241, %v1165, %v1242
      %1244 = vst [vmem:[%s1239] sm:$0xf] %v1243
      %v1245 = vld [vmem:[%s1239 + $0x4] sm:$0x1]
      %v1246 = vsel %vm904, %v1166, %v1245
      %1247 = vst [vmem:[%s1239 + $0x4] sm:$0x1] %v1246
      %v1248 = vld [vmem:[%s1239 + $0x8] sm:$0xf]
      %v1249 = vsel %vm1241, %v1173, %v1248
      %1250 = vst [vmem:[%s1239 + $0x8] sm:$0xf] %v1249
      %v1251 = vld [vmem:[%s1239 + $0xc] sm:$0x1]
      %v1252 = vsel %vm904, %v1174, %v1251
      %1253 = vst [vmem:[%s1239 + $0xc] sm:$0x1] %v1252
      %v1254 = vld [vmem:[%s1239 + $0x10] sm:$0xf]
      %v1255 = vsel %vm1241, %v1181, %v1254
      %1256 = vst [vmem:[%s1239 + $0x10] sm:$0xf] %v1255
      %v1257 = vld [vmem:[%s1239 + $0x14] sm:$0x1]
      %v1258 = vsel %vm904, %v1182, %v1257
      %1259 = vst [vmem:[%s1239 + $0x14] sm:$0x1] %v1258
      %v1260 = vld [vmem:[%s1239 + $0x18] sm:$0xf]
      %v1261 = vsel %vm1241, %v1189, %v1260
      %1262 = vst [vmem:[%s1239 + $0x18] sm:$0xf] %v1261
      %v1263 = vld [vmem:[%s1239 + $0x1c] sm:$0x1]
      %v1264 = vsel %vm904, %v1190, %v1263
      %1265 = vst [vmem:[%s1239 + $0x1c] sm:$0x1] %v1264
      %v1266 = vld [vmem:[%s1239 + $0x20] sm:$0xf]
      %v1267 = vsel %vm1241, %v1197, %v1266
      %1268 = vst [vmem:[%s1239 + $0x20] sm:$0xf] %v1267
      %v1269 = vld [vmem:[%s1239 + $0x24] sm:$0x1]
      %v1270 = vsel %vm904, %v1198, %v1269
      %1271 = vst [vmem:[%s1239 + $0x24] sm:$0x1] %v1270
      %v1272 = vld [vmem:[%s1239 + $0x28] sm:$0xf]
      %v1273 = vsel %vm1241, %v1205, %v1272
      %1274 = vst [vmem:[%s1239 + $0x28] sm:$0xf] %v1273
      %v1275 = vld [vmem:[%s1239 + $0x2c] sm:$0x1]
      %v1276 = vsel %vm904, %v1206, %v1275
      %1277 = vst [vmem:[%s1239 + $0x2c] sm:$0x1] %v1276
      %v1278 = vld [vmem:[%s1239 + $0x30] sm:$0xf]
      %v1279 = vsel %vm1241, %v1213, %v1278
      %1280 = vst [vmem:[%s1239 + $0x30] sm:$0xf] %v1279
      %v1281 = vld [vmem:[%s1239 + $0x34] sm:$0x1]
      %v1282 = vsel %vm904, %v1214, %v1281
      %1283 = vst [vmem:[%s1239 + $0x34] sm:$0x1] %v1282
      %v1284 = vld [vmem:[%s1239 + $0x38] sm:$0xf]
      %v1285 = vsel %vm1241, %v1221, %v1284
      %1286 = vst [vmem:[%s1239 + $0x38] sm:$0xf] %v1285
      %v1287 = vld [vmem:[%s1239 + $0x3c] sm:$0x1]
      %v1288 = vsel %vm904, %v1222, %v1287
      %1289 = vst [vmem:[%s1239 + $0x3c] sm:$0x1] %v1288
      %v1290 = vld [vmem:[#allocation2] sm:$0xf]
      %v1291 = vld [vmem:[#allocation2 + $0x8] sm:$0xf]
      %v1292 = vld [vmem:[#allocation2 + $0x10] sm:$0xf]
      %v1293 = vld [vmem:[#allocation2 + $0x18] sm:$0xf]
      %v1294 = vld [vmem:[#allocation2 + $0x20] sm:$0xf]
      %v1295 = vld [vmem:[#allocation2 + $0x28] sm:$0xf]
      %v1296 = vld [vmem:[#allocation2 + $0x30] sm:$0xf]
      %v1297 = vld [vmem:[#allocation2 + $0x38] sm:$0xf]
      %v1298 = vld [vmem:[#allocation2 + $0x4] sm:$0x1]
      %v1299 = vld [vmem:[#allocation2 + $0xc] sm:$0x1]
      %v1300 = vld [vmem:[#allocation2 + $0x14] sm:$0x1]
      %v1301 = vld [vmem:[#allocation2 + $0x1c] sm:$0x1]
      %v1302 = vld [vmem:[#allocation2 + $0x24] sm:$0x1]
      %v1303 = vld [vmem:[#allocation2 + $0x2c] sm:$0x1]
      %v1304 = vld [vmem:[#allocation2 + $0x34] sm:$0x1]
      %v1305 = vld [vmem:[#allocation2 + $0x3c] sm:$0x1]
      %v1306 = vld [vmem:[#allocation2] sm:$0xe]
      %v1307 = vld [vmem:[#allocation2 + $0x8] sm:$0xe]
      %v1308 = vld [vmem:[#allocation2 + $0x10] sm:$0xe]
      %v1309 = vld [vmem:[#allocation2 + $0x18] sm:$0xe]
      %v1310 = vld [vmem:[#allocation2 + $0x20] sm:$0xe]
      %v1311 = vld [vmem:[#allocation2 + $0x28] sm:$0xe]
      %v1312 = vld [vmem:[#allocation2 + $0x30] sm:$0xe]
      %v1313 = vld [vmem:[#allocation2 + $0x38] sm:$0xe]
      %v1330 = vunpack.c.l.b16 %v1290
      %v1331 = vunpack.c.l.b16 %v1298
      %v1332 = vunpack.c.l.b16 %v1291
      %v1333 = vunpack.c.l.b16 %v1299
      %v1334 = vunpack.c.l.b16 %v1292
      %v1335 = vunpack.c.l.b16 %v1300
      %v1336 = vunpack.c.l.b16 %v1293
      %v1337 = vunpack.c.l.b16 %v1301
      %v1338 = vunpack.c.l.b16 %v1294
      %v1339 = vunpack.c.l.b16 %v1302
      %v1340 = vunpack.c.l.b16 %v1295
      %v1341 = vunpack.c.l.b16 %v1303
      %v1342 = vunpack.c.l.b16 %v1296
      %v1343 = vunpack.c.l.b16 %v1304
      %v1344 = vunpack.c.l.b16 %v1297
      %v1345 = vunpack.c.l.b16 %v1305
      %v1346 = vpack.c.b16 %v1331, %v1330
      %v1347 = vpack.c.b16 %v1333, %v1332
      %v1348 = vpack.c.b16 %v1335, %v1334
      %v1349 = vpack.c.b16 %v1337, %v1336
      %v1350 = vpack.c.b16 %v1339, %v1338
      %v1351 = vpack.c.b16 %v1341, %v1340
      %v1352 = vpack.c.b16 %v1343, %v1342
      %v1353 = vpack.c.b16 %v1345, %v1344
      %v1355 = vshrl.u32 %v1346, 16
      %v1357 = vshll.u32 %v1346, 16
      %v1359 = vrot.slane %v1357, 1
      %v1360 = vor.u32 %v1355, %v1359
      %v1362 = vshrl.u32 %v1347, 16
      %v1364 = vshll.u32 %v1347, 16
      %v1366 = vrot.slane %v1364, 1
      %v1367 = vor.u32 %v1362, %v1366
      %v1369 = vshrl.u32 %v1348, 16
      %v1371 = vshll.u32 %v1348, 16
      %v1373 = vrot.slane %v1371, 1
      %v1374 = vor.u32 %v1369, %v1373
      %v1376 = vshrl.u32 %v1349, 16
      %v1378 = vshll.u32 %v1349, 16
      %v1380 = vrot.slane %v1378, 1
      %v1381 = vor.u32 %v1376, %v1380
      %v1383 = vshrl.u32 %v1350, 16
      %v1385 = vshll.u32 %v1350, 16
      %v1387 = vrot.slane %v1385, 1
      %v1388 = vor.u32 %v1383, %v1387
      %v1390 = vshrl.u32 %v1351, 16
      %v1392 = vshll.u32 %v1351, 16
      %v1394 = vrot.slane %v1392, 1
      %v1395 = vor.u32 %v1390, %v1394
      %v1397 = vshrl.u32 %v1352, 16
      %v1399 = vshll.u32 %v1352, 16
      %v1401 = vrot.slane %v1399, 1
      %v1402 = vor.u32 %v1397, %v1401
      %v1404 = vshrl.u32 %v1353, 16
      %v1406 = vshll.u32 %v1353, 16
      %v1408 = vrot.slane %v1406, 1
      %v1409 = vor.u32 %v1404, %v1408
      %v1418 = vunpack.c.l.b16 %v1306
      %v1419 = vunpack.c.l.b16 %v1307
      %v1420 = vunpack.c.l.b16 %v1308
      %v1421 = vunpack.c.l.b16 %v1309
      %v1422 = vunpack.c.l.b16 %v1310
      %v1423 = vunpack.c.l.b16 %v1311
      %v1424 = vunpack.c.l.b16 %v1312
      %v1425 = vunpack.c.l.b16 %v1313
      %v1426 = vpack.c.b16 %v1331, %v1418
      %v1427 = vpack.c.b16 %v1333, %v1419
      %v1428 = vpack.c.b16 %v1335, %v1420
      %v1429 = vpack.c.b16 %v1337, %v1421
      %v1430 = vpack.c.b16 %v1339, %v1422
      %v1431 = vpack.c.b16 %v1341, %v1423
      %v1432 = vpack.c.b16 %v1343, %v1424
      %v1433 = vpack.c.b16 %v1345, %v1425
      %v1434 = vrot.slane %v1426, 1
      %v1435 = vrot.slane %v1427, 1
      %v1436 = vrot.slane %v1428, 1
      %v1437 = vrot.slane %v1429, 1
      %v1438 = vrot.slane %v1430, 1
      %v1439 = vrot.slane %v1431, 1
      %v1440 = vrot.slane %v1432, 1
      %v1441 = vrot.slane %v1433, 1
      %v1442 = vunpack.c.l.b16 %v1360
      %v1443 = vunpack.c.l.b16 %v1434
      %v1444 = vunpack.c.l.b16 %v1367
      %v1445 = vunpack.c.l.b16 %v1435
      %v1446 = vunpack.c.l.b16 %v1374
      %v1447 = vunpack.c.l.b16 %v1436
      %v1448 = vunpack.c.l.b16 %v1381
      %v1449 = vunpack.c.l.b16 %v1437
      %v1450 = vunpack.c.l.b16 %v1388
      %v1451 = vunpack.c.l.b16 %v1438
      %v1452 = vunpack.c.l.b16 %v1395
      %v1453 = vunpack.c.l.b16 %v1439
      %v1454 = vunpack.c.l.b16 %v1402
      %v1455 = vunpack.c.l.b16 %v1440
      %v1456 = vunpack.c.l.b16 %v1409
      %v1457 = vunpack.c.l.b16 %v1441
      %v1458 = vld [vmem:[%s4] sm:$0xf]
      %v1459 = vld [vmem:[%s4 + $0x4] sm:$0xf]
      %v1460 = vld [vmem:[%s4 + $0x8] sm:$0xf]
      %v1461 = vld [vmem:[%s4 + $0xc] sm:$0xf]
      %v1462 = vld [vmem:[%s4 + $0x10] sm:$0xf]
      %v1463 = vld [vmem:[%s4 + $0x14] sm:$0xf]
      %v1464 = vld [vmem:[%s4 + $0x18] sm:$0xf]
      %v1465 = vld [vmem:[%s4 + $0x1c] sm:$0xf]
      %v1466 = vld [vmem:[%s4 + $0x20] sm:$0xf]
      %v1467 = vld [vmem:[%s4 + $0x24] sm:$0xf]
      %v1468 = vld [vmem:[%s4 + $0x28] sm:$0xf]
      %v1469 = vld [vmem:[%s4 + $0x2c] sm:$0xf]
      %v1470 = vld [vmem:[%s4 + $0x30] sm:$0xf]
      %v1471 = vld [vmem:[%s4 + $0x34] sm:$0xf]
      %v1472 = vld [vmem:[%s4 + $0x38] sm:$0xf]
      %v1473 = vld [vmem:[%s4 + $0x3c] sm:$0xf]
      %v1474 = vld [vmem:[%s4 + $0x40] sm:$0xf]
      %v1475 = vld [vmem:[%s4 + $0x44] sm:$0xf]
      %v1476 = vld [vmem:[%s4 + $0x48] sm:$0xf]
      %v1477 = vld [vmem:[%s4 + $0x4c] sm:$0xf]
      %v1478 = vld [vmem:[%s4 + $0x50] sm:$0xf]
      %v1479 = vld [vmem:[%s4 + $0x54] sm:$0xf]
      %v1480 = vld [vmem:[%s4 + $0x58] sm:$0xf]
      %v1481 = vld [vmem:[%s4 + $0x5c] sm:$0xf]
      %v1482 = vld [vmem:[%s4 + $0x60] sm:$0xf]
      %v1483 = vld [vmem:[%s4 + $0x64] sm:$0xf]
      %v1484 = vld [vmem:[%s4 + $0x68] sm:$0xf]
      %v1485 = vld [vmem:[%s4 + $0x6c] sm:$0xf]
      %v1486 = vld [vmem:[%s4 + $0x70] sm:$0xf]
      %v1487 = vld [vmem:[%s4 + $0x74] sm:$0xf]
      %v1488 = vld [vmem:[%s4 + $0x78] sm:$0xf]
      %v1489 = vld [vmem:[%s4 + $0x7c] sm:$0xf]
      %v1490 = vld [vmem:[%s4 + $0x80] sm:$0xf]
      %v1491 = vld [vmem:[%s4 + $0x84] sm:$0xf]
      %v1492 = vld [vmem:[%s4 + $0x88] sm:$0xf]
      %v1493 = vld [vmem:[%s4 + $0x8c] sm:$0xf]
      %v1494 = vld [vmem:[%s4 + $0x90] sm:$0xf]
      %v1495 = vld [vmem:[%s4 + $0x94] sm:$0xf]
      %v1496 = vld [vmem:[%s4 + $0x98] sm:$0xf]
      %v1497 = vld [vmem:[%s4 + $0x9c] sm:$0xf]
      %v1498 = vld [vmem:[%s4 + $0xa0] sm:$0xf]
      %v1499 = vld [vmem:[%s4 + $0xa4] sm:$0xf]
      %v1500 = vld [vmem:[%s4 + $0xa8] sm:$0xf]
      %v1501 = vld [vmem:[%s4 + $0xac] sm:$0xf]
      %v1502 = vld [vmem:[%s4 + $0xb0] sm:$0xf]
      %v1503 = vld [vmem:[%s4 + $0xb4] sm:$0xf]
      %v1504 = vld [vmem:[%s4 + $0xb8] sm:$0xf]
      %v1505 = vld [vmem:[%s4 + $0xbc] sm:$0xf]
      %v1506 = vld [vmem:[%s1239] sm:$0xf]
      %v1507 = vld [vmem:[%s1239 + $0x8] sm:$0xf]
      %v1508 = vld [vmem:[%s1239 + $0x10] sm:$0xf]
      %v1509 = vld [vmem:[%s1239 + $0x18] sm:$0xf]
      %v1510 = vld [vmem:[%s1239 + $0x20] sm:$0xf]
      %v1511 = vld [vmem:[%s1239 + $0x28] sm:$0xf]
      %v1512 = vld [vmem:[%s1239 + $0x30] sm:$0xf]
      %v1513 = vld [vmem:[%s1239 + $0x38] sm:$0xf]
      %v1514 = vld [vmem:[%s1239 + $0x4] sm:$0x1]
      %v1515 = vld [vmem:[%s1239 + $0xc] sm:$0x1]
      %v1516 = vld [vmem:[%s1239 + $0x14] sm:$0x1]
      %v1517 = vld [vmem:[%s1239 + $0x1c] sm:$0x1]
      %v1518 = vld [vmem:[%s1239 + $0x24] sm:$0x1]
      %v1519 = vld [vmem:[%s1239 + $0x2c] sm:$0x1]
      %v1520 = vld [vmem:[%s1239 + $0x34] sm:$0x1]
      %v1521 = vld [vmem:[%s1239 + $0x3c] sm:$0x1]
      %v1522 = vld [vmem:[%s1239] sm:$0xe]
      %v1523 = vld [vmem:[%s1239 + $0x8] sm:$0xe]
      %v1524 = vld [vmem:[%s1239 + $0x10] sm:$0xe]
      %v1525 = vld [vmem:[%s1239 + $0x18] sm:$0xe]
      %v1526 = vld [vmem:[%s1239 + $0x20] sm:$0xe]
      %v1527 = vld [vmem:[%s1239 + $0x28] sm:$0xe]
      %v1528 = vld [vmem:[%s1239 + $0x30] sm:$0xe]
      %v1529 = vld [vmem:[%s1239 + $0x38] sm:$0xe]
      %v1546 = vunpack.c.l.b16 %v1506
      %v1547 = vunpack.c.l.b16 %v1514
      %v1548 = vunpack.c.l.b16 %v1507
      %v1549 = vunpack.c.l.b16 %v1515
      %v1550 = vunpack.c.l.b16 %v1508
      %v1551 = vunpack.c.l.b16 %v1516
      %v1552 = vunpack.c.l.b16 %v1509
      %v1553 = vunpack.c.l.b16 %v1517
      %v1554 = vunpack.c.l.b16 %v1510
      %v1555 = vunpack.c.l.b16 %v1518
      %v1556 = vunpack.c.l.b16 %v1511
      %v1557 = vunpack.c.l.b16 %v1519
      %v1558 = vunpack.c.l.b16 %v1512
      %v1559 = vunpack.c.l.b16 %v1520
      %v1560 = vunpack.c.l.b16 %v1513
      %v1561 = vunpack.c.l.b16 %v1521
      %v1562 = vpack.c.b16 %v1547, %v1546
      %v1563 = vpack.c.b16 %v1549, %v1548
      %v1564 = vpack.c.b16 %v1551, %v1550
      %v1565 = vpack.c.b16 %v1553, %v1552
      %v1566 = vpack.c.b16 %v1555, %v1554
      %v1567 = vpack.c.b16 %v1557, %v1556
      %v1568 = vpack.c.b16 %v1559, %v1558
      %v1569 = vpack.c.b16 %v1561, %v1560
      %v1571 = vshrl.u32 %v1562, 16
      %v1573 = vshll.u32 %v1562, 16
      %v1575 = vrot.slane %v1573, 1
      %v1576 = vor.u32 %v1571, %v1575
      %v1578 = vshrl.u32 %v1563, 16
      %v1580 = vshll.u32 %v1563, 16
      %v1582 = vrot.slane %v1580, 1
      %v1583 = vor.u32 %v1578, %v1582
      %v1585 = vshrl.u32 %v1564, 16
      %v1587 = vshll.u32 %v1564, 16
      %v1589 = vrot.slane %v1587, 1
      %v1590 = vor.u32 %v1585, %v1589
      %v1592 = vshrl.u32 %v1565, 16
      %v1594 = vshll.u32 %v1565, 16
      %v1596 = vrot.slane %v1594, 1
      %v1597 = vor.u32 %v1592, %v1596
      %v1599 = vshrl.u32 %v1566, 16
      %v1601 = vshll.u32 %v1566, 16
      %v1603 = vrot.slane %v1601, 1
      %v1604 = vor.u32 %v1599, %v1603
      %v1606 = vshrl.u32 %v1567, 16
      %v1608 = vshll.u32 %v1567, 16
      %v1610 = vrot.slane %v1608, 1
      %v1611 = vor.u32 %v1606, %v1610
      %v1613 = vshrl.u32 %v1568, 16
      %v1615 = vshll.u32 %v1568, 16
      %v1617 = vrot.slane %v1615, 1
      %v1618 = vor.u32 %v1613, %v1617
      %v1620 = vshrl.u32 %v1569, 16
      %v1622 = vshll.u32 %v1569, 16
      %v1624 = vrot.slane %v1622, 1
      %v1625 = vor.u32 %v1620, %v1624
      %v1634 = vunpack.c.l.b16 %v1522
      %v1635 = vunpack.c.l.b16 %v1523
      %v1636 = vunpack.c.l.b16 %v1524
      %v1637 = vunpack.c.l.b16 %v1525
      %v1638 = vunpack.c.l.b16 %v1526
      %v1639 = vunpack.c.l.b16 %v1527
      %v1640 = vunpack.c.l.b16 %v1528
      %v1641 = vunpack.c.l.b16 %v1529
      %v1642 = vpack.c.b16 %v1547, %v1634
      %v1643 = vpack.c.b16 %v1549, %v1635
      %v1644 = vpack.c.b16 %v1551, %v1636
      %v1645 = vpack.c.b16 %v1553, %v1637
      %v1646 = vpack.c.b16 %v1555, %v1638
      %v1647 = vpack.c.b16 %v1557, %v1639
      %v1648 = vpack.c.b16 %v1559, %v1640
      %v1649 = vpack.c.b16 %v1561, %v1641
      %v1650 = vrot.slane %v1642, 1
      %v1651 = vrot.slane %v1643, 1
      %v1652 = vrot.slane %v1644, 1
      %v1653 = vrot.slane %v1645, 1
      %v1654 = vrot.slane %v1646, 1
      %v1655 = vrot.slane %v1647, 1
      %v1656 = vrot.slane %v1648, 1
      %v1657 = vrot.slane %v1649, 1
      %v1658 = vunpack.c.l.b16 %v1576
      %v1659 = vunpack.c.l.b16 %v1650
      %v1660 = vunpack.c.l.b16 %v1583
      %v1661 = vunpack.c.l.b16 %v1651
      %v1662 = vunpack.c.l.b16 %v1590
      %v1663 = vunpack.c.l.b16 %v1652
      %v1664 = vunpack.c.l.b16 %v1597
      %v1665 = vunpack.c.l.b16 %v1653
      %v1666 = vunpack.c.l.b16 %v1604
      %v1667 = vunpack.c.l.b16 %v1654
      %v1668 = vunpack.c.l.b16 %v1611
      %v1669 = vunpack.c.l.b16 %v1655
      %v1670 = vunpack.c.l.b16 %v1618
      %v1671 = vunpack.c.l.b16 %v1656
      %v1672 = vunpack.c.l.b16 %v1625
      %v1673 = vunpack.c.l.b16 %v1657
      %s1674 = scalar_lea.vmem %s4, 192
      %v1675 = vld [vmem:[%s1674] sm:$0xf]
      %v1676 = vld [vmem:[%s1674 + $0x4] sm:$0xf]
      %v1677 = vld [vmem:[%s1674 + $0x8] sm:$0xf]
      %v1678 = vld [vmem:[%s1674 + $0xc] sm:$0xf]
      %v1679 = vld [vmem:[%s1674 + $0x10] sm:$0xf]
      %v1680 = vld [vmem:[%s1674 + $0x14] sm:$0xf]
      %v1681 = vld [vmem:[%s1674 + $0x18] sm:$0xf]
      %v1682 = vld [vmem:[%s1674 + $0x1c] sm:$0xf]
      %v1683 = vld [vmem:[%s1674 + $0x20] sm:$0xf]
      %v1684 = vld [vmem:[%s1674 + $0x24] sm:$0xf]
      %v1685 = vld [vmem:[%s1674 + $0x28] sm:$0xf]
      %v1686 = vld [vmem:[%s1674 + $0x2c] sm:$0xf]
      %v1687 = vld [vmem:[%s1674 + $0x30] sm:$0xf]
      %v1688 = vld [vmem:[%s1674 + $0x34] sm:$0xf]
      %v1689 = vld [vmem:[%s1674 + $0x38] sm:$0xf]
      %v1690 = vld [vmem:[%s1674 + $0x3c] sm:$0xf]
      %v1691 = vld [vmem:[%s1674 + $0x40] sm:$0xf]
      %v1692 = vld [vmem:[%s1674 + $0x44] sm:$0xf]
      %v1693 = vld [vmem:[%s1674 + $0x48] sm:$0xf]
      %v1694 = vld [vmem:[%s1674 + $0x4c] sm:$0xf]
      %v1695 = vld [vmem:[%s1674 + $0x50] sm:$0xf]
      %v1696 = vld [vmem:[%s1674 + $0x54] sm:$0xf]
      %v1697 = vld [vmem:[%s1674 + $0x58] sm:$0xf]
      %v1698 = vld [vmem:[%s1674 + $0x5c] sm:$0xf]
      %v1699 = vld [vmem:[%s1674 + $0x60] sm:$0xf]
      %v1700 = vld [vmem:[%s1674 + $0x64] sm:$0xf]
      %v1701 = vld [vmem:[%s1674 + $0x68] sm:$0xf]
      %v1702 = vld [vmem:[%s1674 + $0x6c] sm:$0xf]
      %v1703 = vld [vmem:[%s1674 + $0x70] sm:$0xf]
      %v1704 = vld [vmem:[%s1674 + $0x74] sm:$0xf]
      %v1705 = vld [vmem:[%s1674 + $0x78] sm:$0xf]
      %v1706 = vld [vmem:[%s1674 + $0x7c] sm:$0xf]
      %v1707 = vld [vmem:[%s1674 + $0x80] sm:$0xf]
      %v1708 = vld [vmem:[%s1674 + $0x84] sm:$0xf]
      %v1709 = vld [vmem:[%s1674 + $0x88] sm:$0xf]
      %v1710 = vld [vmem:[%s1674 + $0x8c] sm:$0xf]
      %v1711 = vld [vmem:[%s1674 + $0x90] sm:$0xf]
      %v1712 = vld [vmem:[%s1674 + $0x94] sm:$0xf]
      %v1713 = vld [vmem:[%s1674 + $0x98] sm:$0xf]
      %v1714 = vld [vmem:[%s1674 + $0x9c] sm:$0xf]
      %v1715 = vld [vmem:[%s1674 + $0xa0] sm:$0xf]
      %v1716 = vld [vmem:[%s1674 + $0xa4] sm:$0xf]
      %v1717 = vld [vmem:[%s1674 + $0xa8] sm:$0xf]
      %v1718 = vld [vmem:[%s1674 + $0xac] sm:$0xf]
      %v1719 = vld [vmem:[%s1674 + $0xb0] sm:$0xf]
      %v1720 = vld [vmem:[%s1674 + $0xb4] sm:$0xf]
      %v1721 = vld [vmem:[%s1674 + $0xb8] sm:$0xf]
      %v1722 = vld [vmem:[%s1674 + $0xbc] sm:$0xf]
      %v1723 = vpack.c.b16 %v1548, %v1546
      %v1724 = vpack.c.b16 %v1660, %v1658
      %v1725 = vpack.c.b16 %v1661, %v1659
      %v1726 = vpack.c.b16 %v1552, %v1550
      %v1727 = vpack.c.b16 %v1664, %v1662
      %v1728 = vpack.c.b16 %v1665, %v1663
      %v1729 = vpack.c.b16 %v1556, %v1554
      %v1730 = vpack.c.b16 %v1668, %v1666
      %v1731 = vpack.c.b16 %v1669, %v1667
      %v1732 = vpack.c.b16 %v1560, %v1558
      %v1733 = vpack.c.b16 %v1672, %v1670
      %v1734 = vpack.c.b16 %v1673, %v1671
      %v1795 = vunpack.c.l.b16 %v1675
      %v1796 = vunpack.c.l.b16 %v1676
      %v1797 = vunpack.c.l.b16 %v1677
      %v1798 = vunpack.c.l.b16 %v1678
      %v1799 = vunpack.c.l.b16 %v1679
      %v1800 = vunpack.c.l.b16 %v1680
      %v1801 = vunpack.c.l.b16 %v1681
      %v1802 = vunpack.c.l.b16 %v1682
      %v1803 = vunpack.c.l.b16 %v1683
      %v1804 = vunpack.c.l.b16 %v1684
      %v1805 = vunpack.c.l.b16 %v1685
      %v1806 = vunpack.c.l.b16 %v1686
      %v1807 = vunpack.c.l.b16 %v1687
      %v1808 = vunpack.c.l.b16 %v1688
      %v1809 = vunpack.c.l.b16 %v1689
      %v1810 = vunpack.c.l.b16 %v1690
      %v1811 = vunpack.c.l.b16 %v1691
      %v1812 = vunpack.c.l.b16 %v1692
      %v1813 = vunpack.c.l.b16 %v1693
      %v1814 = vunpack.c.l.b16 %v1694
      %v1815 = vunpack.c.l.b16 %v1695
      %v1816 = vunpack.c.l.b16 %v1696
      %v1817 = vunpack.c.l.b16 %v1697
      %v1818 = vunpack.c.l.b16 %v1698
      %v1819 = vunpack.c.l.b16 %v1699
      %v1820 = vunpack.c.l.b16 %v1700
      %v1821 = vunpack.c.l.b16 %v1701
      %v1822 = vunpack.c.l.b16 %v1702
      %v1823 = vunpack.c.l.b16 %v1703
      %v1824 = vunpack.c.l.b16 %v1704
      %v1825 = vunpack.c.l.b16 %v1705
      %v1826 = vunpack.c.l.b16 %v1706
      %v1827 = vunpack.c.l.b16 %v1707
      %v1828 = vunpack.c.l.b16 %v1708
      %v1829 = vunpack.c.l.b16 %v1709
      %v1830 = vunpack.c.l.b16 %v1710
      %v1831 = vunpack.c.l.b16 %v1711
      %v1832 = vunpack.c.l.b16 %v1712
      %v1833 = vunpack.c.l.b16 %v1713
      %v1834 = vunpack.c.l.b16 %v1714
      %v1835 = vunpack.c.l.b16 %v1715
      %v1836 = vunpack.c.l.b16 %v1716
      %v1837 = vunpack.c.l.b16 %v1717
      %v1838 = vunpack.c.l.b16 %v1718
      %v1839 = vunpack.c.l.b16 %v1719
      %v1840 = vunpack.c.l.b16 %v1720
      %v1841 = vunpack.c.l.b16 %v1721
      %v1842 = vunpack.c.l.b16 %v1722
      %v1843 = vpack.c.b16 %v1796, %v1795
      %v1844 = vpack.c.b16 %v1798, %v1797
      %v1845 = vpack.c.b16 %v1800, %v1799
      %v1846 = vpack.c.b16 %v1802, %v1801
      %v1847 = vpack.c.b16 %v1804, %v1803
      %v1848 = vpack.c.b16 %v1806, %v1805
      %v1849 = vpack.c.b16 %v1808, %v1807
      %v1850 = vpack.c.b16 %v1810, %v1809
      %v1851 = vpack.c.b16 %v1812, %v1811
      %v1852 = vpack.c.b16 %v1814, %v1813
      %v1853 = vpack.c.b16 %v1816, %v1815
      %v1854 = vpack.c.b16 %v1818, %v1817
      %v1855 = vpack.c.b16 %v1820, %v1819
      %v1856 = vpack.c.b16 %v1822, %v1821
      %v1857 = vpack.c.b16 %v1824, %v1823
      %v1858 = vpack.c.b16 %v1826, %v1825
      %v1859 = vpack.c.b16 %v1828, %v1827
      %v1860 = vpack.c.b16 %v1830, %v1829
      %v1861 = vpack.c.b16 %v1832, %v1831
      %v1862 = vpack.c.b16 %v1834, %v1833
      %v1863 = vpack.c.b16 %v1836, %v1835
      %v1864 = vpack.c.b16 %v1838, %v1837
      %v1865 = vpack.c.b16 %v1840, %v1839
      %v1866 = vpack.c.b16 %v1842, %v1841
      %1891 = vmatpush.bf16.msra.mxu0 %v1850
      %1892 = vmatpush.bf16.msra.mxu0 %v1849
      %1893 = vmatpush.bf16.msra.mxu0 %v1848
      %1894 = vmatpush.bf16.msra.mxu0 %v1847
      %1895 = vmatpush.bf16.msra.mxu0 %v1846
      %1896 = vmatpush.bf16.msra.mxu0 %v1845
      %1897 = vmatpush.bf16.msra.mxu0 %v1844
      %1898 = vmatpush.bf16.msra.mxu0 %v1843
      %1899 = vmatmul.bf16.gmra.mxu0 %v1723
      %v1900 = vpop.f32.mrf.mxu0
      %v1901 = vadd.f32 0.0, %v1900
      %v1902 = vpop.f32.mrf.mxu0
      %v1903 = vadd.f32 0.0, %v1902
      %1904 = vmatmul.bf16.gmra.mxu0 %v1726
      %v1905 = vpop.f32.mrf.mxu0
      %v1906 = vadd.f32 0.0, %v1905
      %v1907 = vpop.f32.mrf.mxu0
      %v1908 = vadd.f32 0.0, %v1907
      %1909 = vmatmul.bf16.gmra.mxu0 %v1729
      %v1910 = vpop.f32.mrf.mxu0
      %v1911 = vadd.f32 0.0, %v1910
      %v1912 = vpop.f32.mrf.mxu0
      %v1913 = vadd.f32 0.0, %v1912
      %1914 = vmatmul.bf16.gmra.mxu0 %v1732
      %v1915 = vpop.f32.mrf.mxu0
      %v1916 = vadd.f32 0.0, %v1915
      %v1917 = vpop.f32.mrf.mxu0
      %v1918 = vadd.f32 0.0, %v1917
      %1919 = vdwg.mxu0
      %1920 = vmatpush.bf16.msra.mxu0 %v1858
      %1921 = vmatpush.bf16.msra.mxu0 %v1857
      %1922 = vmatpush.bf16.msra.mxu0 %v1856
      %1923 = vmatpush.bf16.msra.mxu0 %v1855
      %1924 = vmatpush.bf16.msra.mxu0 %v1854
      %1925 = vmatpush.bf16.msra.mxu0 %v1853
      %1926 = vmatpush.bf16.msra.mxu0 %v1852
      %1927 = vmatpush.bf16.msra.mxu0 %v1851
      %1928 = vmatmul.bf16.gmra.mxu0 %v1724
      %v1929 = vpop.f32.mrf.mxu0
      %v1930 = vadd.f32 %v1901, %v1929
      %v1931 = vpop.f32.mrf.mxu0
      %v1932 = vadd.f32 %v1903, %v1931
      %1933 = vmatmul.bf16.gmra.mxu0 %v1727
      %v1934 = vpop.f32.mrf.mxu0
      %v1935 = vadd.f32 %v1906, %v1934
      %v1936 = vpop.f32.mrf.mxu0
      %v1937 = vadd.f32 %v1908, %v1936
      %1938 = vmatmul.bf16.gmra.mxu0 %v1730
      %v1939 = vpop.f32.mrf.mxu0
      %v1940 = vadd.f32 %v1911, %v1939
      %v1941 = vpop.f32.mrf.mxu0
      %v1942 = vadd.f32 %v1913, %v1941
      %1943 = vmatmul.bf16.gmra.mxu0 %v1733
      %v1944 = vpop.f32.mrf.mxu0
      %v1945 = vadd.f32 %v1916, %v1944
      %v1946 = vpop.f32.mrf.mxu0
      %v1947 = vadd.f32 %v1918, %v1946
      %1948 = vdwg.mxu0
      %1949 = vmatpush.bf16.msra.mxu0 %v1866
      %1950 = vmatpush.bf16.msra.mxu0 %v1865
      %1951 = vmatpush.bf16.msra.mxu0 %v1864
      %1952 = vmatpush.bf16.msra.mxu0 %v1863
      %1953 = vmatpush.bf16.msra.mxu0 %v1862
      %1954 = vmatpush.bf16.msra.mxu0 %v1861
      %1955 = vmatpush.bf16.msra.mxu0 %v1860
      %1956 = vmatpush.bf16.msra.mxu0 %v1859
      %1957 = vmatmul.bf16.gmra.mxu0 %v1725
      %v1958 = vpop.f32.mrf.mxu0
      %v1959 = vadd.f32 %v1930, %v1958
      %v1960 = vpop.f32.mrf.mxu0
      %v1961 = vadd.f32 %v1932, %v1960
      %1962 = vmatmul.bf16.gmra.mxu0 %v1728
      %v1963 = vpop.f32.mrf.mxu0
      %v1964 = vadd.f32 %v1935, %v1963
      %v1965 = vpop.f32.mrf.mxu0
      %v1966 = vadd.f32 %v1937, %v1965
      %1967 = vmatmul.bf16.gmra.mxu0 %v1731
      %v1968 = vpop.f32.mrf.mxu0
      %v1969 = vadd.f32 %v1940, %v1968
      %v1970 = vpop.f32.mrf.mxu0
      %v1971 = vadd.f32 %v1942, %v1970
      %1972 = vmatmul.bf16.gmra.mxu0 %v1734
      %v1973 = vpop.f32.mrf.mxu0
      %v1974 = vadd.f32 %v1945, %v1973
      %v1975 = vpop.f32.mrf.mxu0
      %v1976 = vadd.f32 %v1947, %v1975
      %1977 = vdwg.mxu0
      %v1978 = vpack.c.b16 %v1332, %v1330
      %v1979 = vpack.c.b16 %v1444, %v1442
      %v1980 = vpack.c.b16 %v1445, %v1443
      %v1981 = vpack.c.b16 %v1336, %v1334
      %v1982 = vpack.c.b16 %v1448, %v1446
      %v1983 = vpack.c.b16 %v1449, %v1447
      %v1984 = vpack.c.b16 %v1340, %v1338
      %v1985 = vpack.c.b16 %v1452, %v1450
      %v1986 = vpack.c.b16 %v1453, %v1451
      %v1987 = vpack.c.b16 %v1344, %v1342
      %v1988 = vpack.c.b16 %v1456, %v1454
      %v1989 = vpack.c.b16 %v1457, %v1455
      %v2050 = vunpack.c.l.b16 %v1458
      %v2051 = vunpack.c.l.b16 %v1459
      %v2052 = vunpack.c.l.b16 %v1460
      %v2053 = vunpack.c.l.b16 %v1461
      %v2054 = vunpack.c.l.b16 %v1462
      %v2055 = vunpack.c.l.b16 %v1463
      %v2056 = vunpack.c.l.b16 %v1464
      %v2057 = vunpack.c.l.b16 %v1465
      %v2058 = vunpack.c.l.b16 %v1466
      %v2059 = vunpack.c.l.b16 %v1467
      %v2060 = vunpack.c.l.b16 %v1468
      %v2061 = vunpack.c.l.b16 %v1469
      %v2062 = vunpack.c.l.b16 %v1470
      %v2063 = vunpack.c.l.b16 %v1471
      %v2064 = vunpack.c.l.b16 %v1472
      %v2065 = vunpack.c.l.b16 %v1473
      %v2066 = vunpack.c.l.b16 %v1474
      %v2067 = vunpack.c.l.b16 %v1475
      %v2068 = vunpack.c.l.b16 %v1476
      %v2069 = vunpack.c.l.b16 %v1477
      %v2070 = vunpack.c.l.b16 %v1478
      %v2071 = vunpack.c.l.b16 %v1479
      %v2072 = vunpack.c.l.b16 %v1480
      %v2073 = vunpack.c.l.b16 %v1481
      %v2074 = vunpack.c.l.b16 %v1482
      %v2075 = vunpack.c.l.b16 %v1483
      %v2076 = vunpack.c.l.b16 %v1484
      %v2077 = vunpack.c.l.b16 %v1485
      %v2078 = vunpack.c.l.b16 %v1486
      %v2079 = vunpack.c.l.b16 %v1487
      %v2080 = vunpack.c.l.b16 %v1488
      %v2081 = vunpack.c.l.b16 %v1489
      %v2082 = vunpack.c.l.b16 %v1490
      %v2083 = vunpack.c.l.b16 %v1491
      %v2084 = vunpack.c.l.b16 %v1492
      %v2085 = vunpack.c.l.b16 %v1493
      %v2086 = vunpack.c.l.b16 %v1494
      %v2087 = vunpack.c.l.b16 %v1495
      %v2088 = vunpack.c.l.b16 %v1496
      %v2089 = vunpack.c.l.b16 %v1497
      %v2090 = vunpack.c.l.b16 %v1498
      %v2091 = vunpack.c.l.b16 %v1499
      %v2092 = vunpack.c.l.b16 %v1500
      %v2093 = vunpack.c.l.b16 %v1501
      %v2094 = vunpack.c.l.b16 %v1502
      %v2095 = vunpack.c.l.b16 %v1503
      %v2096 = vunpack.c.l.b16 %v1504
      %v2097 = vunpack.c.l.b16 %v1505
      %v2098 = vpack.c.b16 %v2051, %v2050
      %v2099 = vpack.c.b16 %v2053, %v2052
      %v2100 = vpack.c.b16 %v2055, %v2054
      %v2101 = vpack.c.b16 %v2057, %v2056
      %v2102 = vpack.c.b16 %v2059, %v2058
      %v2103 = vpack.c.b16 %v2061, %v2060
      %v2104 = vpack.c.b16 %v2063, %v2062
      %v2105 = vpack.c.b16 %v2065, %v2064
      %v2106 = vpack.c.b16 %v2067, %v2066
      %v2107 = vpack.c.b16 %v2069, %v2068
      %v2108 = vpack.c.b16 %v2071, %v2070
      %v2109 = vpack.c.b16 %v2073, %v2072
      %v2110 = vpack.c.b16 %v2075, %v2074
      %v2111 = vpack.c.b16 %v2077, %v2076
      %v2112 = vpack.c.b16 %v2079, %v2078
      %v2113 = vpack.c.b16 %v2081, %v2080
      %v2114 = vpack.c.b16 %v2083, %v2082
      %v2115 = vpack.c.b16 %v2085, %v2084
      %v2116 = vpack.c.b16 %v2087, %v2086
      %v2117 = vpack.c.b16 %v2089, %v2088
      %v2118 = vpack.c.b16 %v2091, %v2090
      %v2119 = vpack.c.b16 %v2093, %v2092
      %v2120 = vpack.c.b16 %v2095, %v2094
      %v2121 = vpack.c.b16 %v2097, %v2096
      %2146 = vmatpush.bf16.msra.mxu0 %v2105
      %2147 = vmatpush.bf16.msra.mxu0 %v2104
      %2148 = vmatpush.bf16.msra.mxu0 %v2103
      %2149 = vmatpush.bf16.msra.mxu0 %v2102
      %2150 = vmatpush.bf16.msra.mxu0 %v2101
      %2151 = vmatpush.bf16.msra.mxu0 %v2100
      %2152 = vmatpush.bf16.msra.mxu0 %v2099
      %2153 = vmatpush.bf16.msra.mxu0 %v2098
      %2154 = vmatmul.bf16.gmra.mxu0 %v1978
      %v2155 = vpop.f32.mrf.mxu0
      %v2156 = vadd.f32 %v1959, %v2155
      %v2157 = vpop.f32.mrf.mxu0
      %v2158 = vadd.f32 %v1961, %v2157
      %2159 = vmatmul.bf16.gmra.mxu0 %v1981
      %v2160 = vpop.f32.mrf.mxu0
      %v2161 = vadd.f32 %v1964, %v2160
      %v2162 = vpop.f32.mrf.mxu0
      %v2163 = vadd.f32 %v1966, %v2162
      %2164 = vmatmul.bf16.gmra.mxu0 %v1984
      %v2165 = vpop.f32.mrf.mxu0
      %v2166 = vadd.f32 %v1969, %v2165
      %v2167 = vpop.f32.mrf.mxu0
      %v2168 = vadd.f32 %v1971, %v2167
      %2169 = vmatmul.bf16.gmra.mxu0 %v1987
      %v2170 = vpop.f32.mrf.mxu0
      %v2171 = vadd.f32 %v1974, %v2170
      %v2172 = vpop.f32.mrf.mxu0
      %v2173 = vadd.f32 %v1976, %v2172
      %2174 = vdwg.mxu0
      %2175 = vmatpush.bf16.msra.mxu0 %v2113
      %2176 = vmatpush.bf16.msra.mxu0 %v2112
      %2177 = vmatpush.bf16.msra.mxu0 %v2111
      %2178 = vmatpush.bf16.msra.mxu0 %v2110
      %2179 = vmatpush.bf16.msra.mxu0 %v2109
      %2180 = vmatpush.bf16.msra.mxu0 %v2108
      %2181 = vmatpush.bf16.msra.mxu0 %v2107
      %2182 = vmatpush.bf16.msra.mxu0 %v2106
      %2183 = vmatmul.bf16.gmra.mxu0 %v1979
      %v2184 = vpop.f32.mrf.mxu0
      %v2185 = vadd.f32 %v2156, %v2184
      %v2186 = vpop.f32.mrf.mxu0
      %v2187 = vadd.f32 %v2158, %v2186
      %2188 = vmatmul.bf16.gmra.mxu0 %v1982
      %v2189 = vpop.f32.mrf.mxu0
      %v2190 = vadd.f32 %v2161, %v2189
      %v2191 = vpop.f32.mrf.mxu0
      %v2192 = vadd.f32 %v2163, %v2191
      %2193 = vmatmul.bf16.gmra.mxu0 %v1985
      %v2194 = vpop.f32.mrf.mxu0
      %v2195 = vadd.f32 %v2166, %v2194
      %v2196 = vpop.f32.mrf.mxu0
      %v2197 = vadd.f32 %v2168, %v2196
      %2198 = vmatmul.bf16.gmra.mxu0 %v1988
      %v2199 = vpop.f32.mrf.mxu0
      %v2200 = vadd.f32 %v2171, %v2199
      %v2201 = vpop.f32.mrf.mxu0
      %v2202 = vadd.f32 %v2173, %v2201
      %2203 = vdwg.mxu0
      %2204 = vmatpush.bf16.msra.mxu0 %v2121
      %2205 = vmatpush.bf16.msra.mxu0 %v2120
      %2206 = vmatpush.bf16.msra.mxu0 %v2119
      %2207 = vmatpush.bf16.msra.mxu0 %v2118
      %2208 = vmatpush.bf16.msra.mxu0 %v2117
      %2209 = vmatpush.bf16.msra.mxu0 %v2116
      %2210 = vmatpush.bf16.msra.mxu0 %v2115
      %2211 = vmatpush.bf16.msra.mxu0 %v2114
      %2212 = vmatmul.bf16.gmra.mxu0 %v1980
      %v2213 = vpop.f32.mrf.mxu0
      %v2214 = vadd.f32 %v2185, %v2213
      %v2215 = vpop.f32.mrf.mxu0
      %v2216 = vadd.f32 %v2187, %v2215
      %2217 = vmatmul.bf16.gmra.mxu0 %v1983
      %v2218 = vpop.f32.mrf.mxu0
      %v2219 = vadd.f32 %v2190, %v2218
      %v2220 = vpop.f32.mrf.mxu0
      %v2221 = vadd.f32 %v2192, %v2220
      %2222 = vmatmul.bf16.gmra.mxu0 %v1986
      %v2223 = vpop.f32.mrf.mxu0
      %v2224 = vadd.f32 %v2195, %v2223
      %v2225 = vpop.f32.mrf.mxu0
      %v2226 = vadd.f32 %v2197, %v2225
      %2227 = vmatmul.bf16.gmra.mxu0 %v1989
      %v2228 = vpop.f32.mrf.mxu0
      %v2229 = vadd.f32 %v2200, %v2228
      %v2230 = vpop.f32.mrf.mxu0
      %v2231 = vadd.f32 %v2202, %v2230
      %2232 = vdwg.mxu0
      %s2233 = scalar_lea.vmem [#allocation2], 16
      %v2234 = vld [vmem:[%s2233] sm:$0xf]
      %v2235 = vld [vmem:[%s2233 + $0x8] sm:$0xf]
      %v2236 = vld [vmem:[%s2233 + $0x10] sm:$0xf]
      %v2237 = vld [vmem:[%s2233 + $0x18] sm:$0xf]
      %v2238 = vld [vmem:[%s2233 + $0x20] sm:$0xf]
      %v2239 = vld [vmem:[%s2233 + $0x28] sm:$0xf]
      %v2240 = vld [vmem:[%s2233 + $0x30] sm:$0xf]
      %v2241 = vld [vmem:[%s2233 + $0x38] sm:$0xf]
      %v2242 = vld [vmem:[%s2233 + $0x4] sm:$0x1]
      %v2243 = vld [vmem:[%s2233 + $0xc] sm:$0x1]
      %v2244 = vld [vmem:[%s2233 + $0x14] sm:$0x1]
      %v2245 = vld [vmem:[%s2233 + $0x1c] sm:$0x1]
      %v2246 = vld [vmem:[%s2233 + $0x24] sm:$0x1]
      %v2247 = vld [vmem:[%s2233 + $0x2c] sm:$0x1]
      %v2248 = vld [vmem:[%s2233 + $0x34] sm:$0x1]
      %v2249 = vld [vmem:[%s2233 + $0x3c] sm:$0x1]
      %v2250 = vld [vmem:[%s2233] sm:$0xe]
      %v2251 = vld [vmem:[%s2233 + $0x8] sm:$0xe]
      %v2252 = vld [vmem:[%s2233 + $0x10] sm:$0xe]
      %v2253 = vld [vmem:[%s2233 + $0x18] sm:$0xe]
      %v2254 = vld [vmem:[%s2233 + $0x20] sm:$0xe]
      %v2255 = vld [vmem:[%s2233 + $0x28] sm:$0xe]
      %v2256 = vld [vmem:[%s2233 + $0x30] sm:$0xe]
      %v2257 = vld [vmem:[%s2233 + $0x38] sm:$0xe]
      %v2274 = vunpack.c.l.b16 %v2234
      %v2275 = vunpack.c.l.b16 %v2242
      %v2276 = vunpack.c.l.b16 %v2235
      %v2277 = vunpack.c.l.b16 %v2243
      %v2278 = vunpack.c.l.b16 %v2236
      %v2279 = vunpack.c.l.b16 %v2244
      %v2280 = vunpack.c.l.b16 %v2237
      %v2281 = vunpack.c.l.b16 %v2245
      %v2282 = vunpack.c.l.b16 %v2238
      %v2283 = vunpack.c.l.b16 %v2246
      %v2284 = vunpack.c.l.b16 %v2239
      %v2285 = vunpack.c.l.b16 %v2247
      %v2286 = vunpack.c.l.b16 %v2240
      %v2287 = vunpack.c.l.b16 %v2248
      %v2288 = vunpack.c.l.b16 %v2241
      %v2289 = vunpack.c.l.b16 %v2249
      %v2290 = vpack.c.b16 %v2275, %v2274
      %v2291 = vpack.c.b16 %v2277, %v2276
      %v2292 = vpack.c.b16 %v2279, %v2278
      %v2293 = vpack.c.b16 %v2281, %v2280
      %v2294 = vpack.c.b16 %v2283, %v2282
      %v2295 = vpack.c.b16 %v2285, %v2284
      %v2296 = vpack.c.b16 %v2287, %v2286
      %v2297 = vpack.c.b16 %v2289, %v2288
      %v2299 = vshrl.u32 %v2290, 16
      %v2301 = vshll.u32 %v2290, 16
      %v2303 = vrot.slane %v2301, 1
      %v2304 = vor.u32 %v2299, %v2303
      %v2306 = vshrl.u32 %v2291, 16
      %v2308 = vshll.u32 %v2291, 16
      %v2310 = vrot.slane %v2308, 1
      %v2311 = vor.u32 %v2306, %v2310
      %v2313 = vshrl.u32 %v2292, 16
      %v2315 = vshll.u32 %v2292, 16
      %v2317 = vrot.slane %v2315, 1
      %v2318 = vor.u32 %v2313, %v2317
      %v2320 = vshrl.u32 %v2293, 16
      %v2322 = vshll.u32 %v2293, 16
      %v2324 = vrot.slane %v2322, 1
      %v2325 = vor.u32 %v2320, %v2324
      %v2327 = vshrl.u32 %v2294, 16
      %v2329 = vshll.u32 %v2294, 16
      %v2331 = vrot.slane %v2329, 1
      %v2332 = vor.u32 %v2327, %v2331
      %v2334 = vshrl.u32 %v2295, 16
      %v2336 = vshll.u32 %v2295, 16
      %v2338 = vrot.slane %v2336, 1
      %v2339 = vor.u32 %v2334, %v2338
      %v2341 = vshrl.u32 %v2296, 16
      %v2343 = vshll.u32 %v2296, 16
      %v2345 = vrot.slane %v2343, 1
      %v2346 = vor.u32 %v2341, %v2345
      %v2348 = vshrl.u32 %v2297, 16
      %v2350 = vshll.u32 %v2297, 16
      %v2352 = vrot.slane %v2350, 1
      %v2353 = vor.u32 %v2348, %v2352
      %v2362 = vunpack.c.l.b16 %v2250
      %v2363 = vunpack.c.l.b16 %v2251
      %v2364 = vunpack.c.l.b16 %v2252
      %v2365 = vunpack.c.l.b16 %v2253
      %v2366 = vunpack.c.l.b16 %v2254
      %v2367 = vunpack.c.l.b16 %v2255
      %v2368 = vunpack.c.l.b16 %v2256
      %v2369 = vunpack.c.l.b16 %v2257
      %v2370 = vpack.c.b16 %v2275, %v2362
      %v2371 = vpack.c.b16 %v2277, %v2363
      %v2372 = vpack.c.b16 %v2279, %v2364
      %v2373 = vpack.c.b16 %v2281, %v2365
      %v2374 = vpack.c.b16 %v2283, %v2366
      %v2375 = vpack.c.b16 %v2285, %v2367
      %v2376 = vpack.c.b16 %v2287, %v2368
      %v2377 = vpack.c.b16 %v2289, %v2369
      %v2378 = vrot.slane %v2370, 1
      %v2379 = vrot.slane %v2371, 1
      %v2380 = vrot.slane %v2372, 1
      %v2381 = vrot.slane %v2373, 1
      %v2382 = vrot.slane %v2374, 1
      %v2383 = vrot.slane %v2375, 1
      %v2384 = vrot.slane %v2376, 1
      %v2385 = vrot.slane %v2377, 1
      %v2386 = vunpack.c.l.b16 %v2304
      %v2387 = vunpack.c.l.b16 %v2378
      %v2388 = vunpack.c.l.b16 %v2311
      %v2389 = vunpack.c.l.b16 %v2379
      %v2390 = vunpack.c.l.b16 %v2318
      %v2391 = vunpack.c.l.b16 %v2380
      %v2392 = vunpack.c.l.b16 %v2325
      %v2393 = vunpack.c.l.b16 %v2381
      %v2394 = vunpack.c.l.b16 %v2332
      %v2395 = vunpack.c.l.b16 %v2382
      %v2396 = vunpack.c.l.b16 %v2339
      %v2397 = vunpack.c.l.b16 %v2383
      %v2398 = vunpack.c.l.b16 %v2346
      %v2399 = vunpack.c.l.b16 %v2384
      %v2400 = vunpack.c.l.b16 %v2353
      %v2401 = vunpack.c.l.b16 %v2385
      %s2402 = scalar_lea.vmem %s4, 384
      %v2403 = vld [vmem:[%s2402] sm:$0xf]
      %v2404 = vld [vmem:[%s2402 + $0x4] sm:$0xf]
      %v2405 = vld [vmem:[%s2402 + $0x8] sm:$0xf]
      %v2406 = vld [vmem:[%s2402 + $0xc] sm:$0xf]
      %v2407 = vld [vmem:[%s2402 + $0x10] sm:$0xf]
      %v2408 = vld [vmem:[%s2402 + $0x14] sm:$0xf]
      %v2409 = vld [vmem:[%s2402 + $0x18] sm:$0xf]
      %v2410 = vld [vmem:[%s2402 + $0x1c] sm:$0xf]
      %v2411 = vld [vmem:[%s2402 + $0x20] sm:$0xf]
      %v2412 = vld [vmem:[%s2402 + $0x24] sm:$0xf]
      %v2413 = vld [vmem:[%s2402 + $0x28] sm:$0xf]
      %v2414 = vld [vmem:[%s2402 + $0x2c] sm:$0xf]
      %v2415 = vld [vmem:[%s2402 + $0x30] sm:$0xf]
      %v2416 = vld [vmem:[%s2402 + $0x34] sm:$0xf]
      %v2417 = vld [vmem:[%s2402 + $0x38] sm:$0xf]
      %v2418 = vld [vmem:[%s2402 + $0x3c] sm:$0xf]
      %v2419 = vld [vmem:[%s2402 + $0x40] sm:$0xf]
      %v2420 = vld [vmem:[%s2402 + $0x44] sm:$0xf]
      %v2421 = vld [vmem:[%s2402 + $0x48] sm:$0xf]
      %v2422 = vld [vmem:[%s2402 + $0x4c] sm:$0xf]
      %v2423 = vld [vmem:[%s2402 + $0x50] sm:$0xf]
      %v2424 = vld [vmem:[%s2402 + $0x54] sm:$0xf]
      %v2425 = vld [vmem:[%s2402 + $0x58] sm:$0xf]
      %v2426 = vld [vmem:[%s2402 + $0x5c] sm:$0xf]
      %v2427 = vld [vmem:[%s2402 + $0x60] sm:$0xf]
      %v2428 = vld [vmem:[%s2402 + $0x64] sm:$0xf]
      %v2429 = vld [vmem:[%s2402 + $0x68] sm:$0xf]
      %v2430 = vld [vmem:[%s2402 + $0x6c] sm:$0xf]
      %v2431 = vld [vmem:[%s2402 + $0x70] sm:$0xf]
      %v2432 = vld [vmem:[%s2402 + $0x74] sm:$0xf]
      %v2433 = vld [vmem:[%s2402 + $0x78] sm:$0xf]
      %v2434 = vld [vmem:[%s2402 + $0x7c] sm:$0xf]
      %v2435 = vld [vmem:[%s2402 + $0x80] sm:$0xf]
      %v2436 = vld [vmem:[%s2402 + $0x84] sm:$0xf]
      %v2437 = vld [vmem:[%s2402 + $0x88] sm:$0xf]
      %v2438 = vld [vmem:[%s2402 + $0x8c] sm:$0xf]
      %v2439 = vld [vmem:[%s2402 + $0x90] sm:$0xf]
      %v2440 = vld [vmem:[%s2402 + $0x94] sm:$0xf]
      %v2441 = vld [vmem:[%s2402 + $0x98] sm:$0xf]
      %v2442 = vld [vmem:[%s2402 + $0x9c] sm:$0xf]
      %v2443 = vld [vmem:[%s2402 + $0xa0] sm:$0xf]
      %v2444 = vld [vmem:[%s2402 + $0xa4] sm:$0xf]
      %v2445 = vld [vmem:[%s2402 + $0xa8] sm:$0xf]
      %v2446 = vld [vmem:[%s2402 + $0xac] sm:$0xf]
      %v2447 = vld [vmem:[%s2402 + $0xb0] sm:$0xf]
      %v2448 = vld [vmem:[%s2402 + $0xb4] sm:$0xf]
      %v2449 = vld [vmem:[%s2402 + $0xb8] sm:$0xf]
      %v2450 = vld [vmem:[%s2402 + $0xbc] sm:$0xf]
      %v2451 = vpack.c.b16 %v2276, %v2274
      %v2452 = vpack.c.b16 %v2388, %v2386
      %v2453 = vpack.c.b16 %v2389, %v2387
      %v2454 = vpack.c.b16 %v2280, %v2278
      %v2455 = vpack.c.b16 %v2392, %v2390
      %v2456 = vpack.c.b16 %v2393, %v2391
      %v2457 = vpack.c.b16 %v2284, %v2282
      %v2458 = vpack.c.b16 %v2396, %v2394
      %v2459 = vpack.c.b16 %v2397, %v2395
      %v2460 = vpack.c.b16 %v2288, %v2286
      %v2461 = vpack.c.b16 %v2400, %v2398
      %v2462 = vpack.c.b16 %v2401, %v2399
      %v2523 = vunpack.c.l.b16 %v2403
      %v2524 = vunpack.c.l.b16 %v2404
      %v2525 = vunpack.c.l.b16 %v2405
      %v2526 = vunpack.c.l.b16 %v2406
      %v2527 = vunpack.c.l.b16 %v2407
      %v2528 = vunpack.c.l.b16 %v2408
      %v2529 = vunpack.c.l.b16 %v2409
      %v2530 = vunpack.c.l.b16 %v2410
      %v2531 = vunpack.c.l.b16 %v2411
      %v2532 = vunpack.c.l.b16 %v2412
      %v2533 = vunpack.c.l.b16 %v2413
      %v2534 = vunpack.c.l.b16 %v2414
      %v2535 = vunpack.c.l.b16 %v2415
      %v2536 = vunpack.c.l.b16 %v2416
      %v2537 = vunpack.c.l.b16 %v2417
      %v2538 = vunpack.c.l.b16 %v2418
      %v2539 = vunpack.c.l.b16 %v2419
      %v2540 = vunpack.c.l.b16 %v2420
      %v2541 = vunpack.c.l.b16 %v2421
      %v2542 = vunpack.c.l.b16 %v2422
      %v2543 = vunpack.c.l.b16 %v2423
      %v2544 = vunpack.c.l.b16 %v2424
      %v2545 = vunpack.c.l.b16 %v2425
      %v2546 = vunpack.c.l.b16 %v2426
      %v2547 = vunpack.c.l.b16 %v2427
      %v2548 = vunpack.c.l.b16 %v2428
      %v2549 = vunpack.c.l.b16 %v2429
      %v2550 = vunpack.c.l.b16 %v2430
      %v2551 = vunpack.c.l.b16 %v2431
      %v2552 = vunpack.c.l.b16 %v2432
      %v2553 = vunpack.c.l.b16 %v2433
      %v2554 = vunpack.c.l.b16 %v2434
      %v2555 = vunpack.c.l.b16 %v2435
      %v2556 = vunpack.c.l.b16 %v2436
      %v2557 = vunpack.c.l.b16 %v2437
      %v2558 = vunpack.c.l.b16 %v2438
      %v2559 = vunpack.c.l.b16 %v2439
      %v2560 = vunpack.c.l.b16 %v2440
      %v2561 = vunpack.c.l.b16 %v2441
      %v2562 = vunpack.c.l.b16 %v2442
      %v2563 = vunpack.c.l.b16 %v2443
      %v2564 = vunpack.c.l.b16 %v2444
      %v2565 = vunpack.c.l.b16 %v2445
      %v2566 = vunpack.c.l.b16 %v2446
      %v2567 = vunpack.c.l.b16 %v2447
      %v2568 = vunpack.c.l.b16 %v2448
      %v2569 = vunpack.c.l.b16 %v2449
      %v2570 = vunpack.c.l.b16 %v2450
      %v2571 = vpack.c.b16 %v2524, %v2523
      %v2572 = vpack.c.b16 %v2526, %v2525
      %v2573 = vpack.c.b16 %v2528, %v2527
      %v2574 = vpack.c.b16 %v2530, %v2529
      %v2575 = vpack.c.b16 %v2532, %v2531
      %v2576 = vpack.c.b16 %v2534, %v2533
      %v2577 = vpack.c.b16 %v2536, %v2535
      %v2578 = vpack.c.b16 %v2538, %v2537
      %v2579 = vpack.c.b16 %v2540, %v2539
      %v2580 = vpack.c.b16 %v2542, %v2541
      %v2581 = vpack.c.b16 %v2544, %v2543
      %v2582 = vpack.c.b16 %v2546, %v2545
      %v2583 = vpack.c.b16 %v2548, %v2547
      %v2584 = vpack.c.b16 %v2550, %v2549
      %v2585 = vpack.c.b16 %v2552, %v2551
      %v2586 = vpack.c.b16 %v2554, %v2553
      %v2587 = vpack.c.b16 %v2556, %v2555
      %v2588 = vpack.c.b16 %v2558, %v2557
      %v2589 = vpack.c.b16 %v2560, %v2559
      %v2590 = vpack.c.b16 %v2562, %v2561
      %v2591 = vpack.c.b16 %v2564, %v2563
      %v2592 = vpack.c.b16 %v2566, %v2565
      %v2593 = vpack.c.b16 %v2568, %v2567
      %v2594 = vpack.c.b16 %v2570, %v2569
      %2619 = vmatpush.bf16.msra.mxu0 %v2578
      %2620 = vmatpush.bf16.msra.mxu0 %v2577
      %2621 = vmatpush.bf16.msra.mxu0 %v2576
      %2622 = vmatpush.bf16.msra.mxu0 %v2575
      %2623 = vmatpush.bf16.msra.mxu0 %v2574
      %2624 = vmatpush.bf16.msra.mxu0 %v2573
      %2625 = vmatpush.bf16.msra.mxu0 %v2572
      %2626 = vmatpush.bf16.msra.mxu0 %v2571
      %2627 = vmatmul.bf16.gmra.mxu0 %v2451
      %v2628 = vpop.f32.mrf.mxu0
      %v2629 = vadd.f32 0.0, %v2628
      %v2630 = vpop.f32.mrf.mxu0
      %v2631 = vadd.f32 0.0, %v2630
      %2632 = vmatmul.bf16.gmra.mxu0 %v2454
      %v2633 = vpop.f32.mrf.mxu0
      %v2634 = vadd.f32 0.0, %v2633
      %v2635 = vpop.f32.mrf.mxu0
      %v2636 = vadd.f32 0.0, %v2635
      %2637 = vmatmul.bf16.gmra.mxu0 %v2457
      %v2638 = vpop.f32.mrf.mxu0
      %v2639 = vadd.f32 0.0, %v2638
      %v2640 = vpop.f32.mrf.mxu0
      %v2641 = vadd.f32 0.0, %v2640
      %2642 = vmatmul.bf16.gmra.mxu0 %v2460
      %v2643 = vpop.f32.mrf.mxu0
      %v2644 = vadd.f32 0.0, %v2643
      %v2645 = vpop.f32.mrf.mxu0
      %v2646 = vadd.f32 0.0, %v2645
      %2647 = vdwg.mxu0
      %2648 = vmatpush.bf16.msra.mxu0 %v2586
      %2649 = vmatpush.bf16.msra.mxu0 %v2585
      %2650 = vmatpush.bf16.msra.mxu0 %v2584
      %2651 = vmatpush.bf16.msra.mxu0 %v2583
      %2652 = vmatpush.bf16.msra.mxu0 %v2582
      %2653 = vmatpush.bf16.msra.mxu0 %v2581
      %2654 = vmatpush.bf16.msra.mxu0 %v2580
      %2655 = vmatpush.bf16.msra.mxu0 %v2579
      %2656 = vmatmul.bf16.gmra.mxu0 %v2452
      %v2657 = vpop.f32.mrf.mxu0
      %v2658 = vadd.f32 %v2629, %v2657
      %v2659 = vpop.f32.mrf.mxu0
      %v2660 = vadd.f32 %v2631, %v2659
      %2661 = vmatmul.bf16.gmra.mxu0 %v2455
      %v2662 = vpop.f32.mrf.mxu0
      %v2663 = vadd.f32 %v2634, %v2662
      %v2664 = vpop.f32.mrf.mxu0
      %v2665 = vadd.f32 %v2636, %v2664
      %2666 = vmatmul.bf16.gmra.mxu0 %v2458
      %v2667 = vpop.f32.mrf.mxu0
      %v2668 = vadd.f32 %v2639, %v2667
      %v2669 = vpop.f32.mrf.mxu0
      %v2670 = vadd.f32 %v2641, %v2669
      %2671 = vmatmul.bf16.gmra.mxu0 %v2461
      %v2672 = vpop.f32.mrf.mxu0
      %v2673 = vadd.f32 %v2644, %v2672
      %v2674 = vpop.f32.mrf.mxu0
      %v2675 = vadd.f32 %v2646, %v2674
      %2676 = vdwg.mxu0
      %2677 = vmatpush.bf16.msra.mxu0 %v2594
      %2678 = vmatpush.bf16.msra.mxu0 %v2593
      %2679 = vmatpush.bf16.msra.mxu0 %v2592
      %2680 = vmatpush.bf16.msra.mxu0 %v2591
      %2681 = vmatpush.bf16.msra.mxu0 %v2590
      %2682 = vmatpush.bf16.msra.mxu0 %v2589
      %2683 = vmatpush.bf16.msra.mxu0 %v2588
      %2684 = vmatpush.bf16.msra.mxu0 %v2587
      %2685 = vmatmul.bf16.gmra.mxu0 %v2453
      %v2686 = vpop.f32.mrf.mxu0
      %v2687 = vadd.f32 %v2658, %v2686
      %v2688 = vpop.f32.mrf.mxu0
      %v2689 = vadd.f32 %v2660, %v2688
      %2690 = vmatmul.bf16.gmra.mxu0 %v2456
      %v2691 = vpop.f32.mrf.mxu0
      %v2692 = vadd.f32 %v2663, %v2691
      %v2693 = vpop.f32.mrf.mxu0
      %v2694 = vadd.f32 %v2665, %v2693
      %2695 = vmatmul.bf16.gmra.mxu0 %v2459
      %v2696 = vpop.f32.mrf.mxu0
      %v2697 = vadd.f32 %v2668, %v2696
      %v2698 = vpop.f32.mrf.mxu0
      %v2699 = vadd.f32 %v2670, %v2698
      %2700 = vmatmul.bf16.gmra.mxu0 %v2462
      %v2701 = vpop.f32.mrf.mxu0
      %v2702 = vadd.f32 %v2673, %v2701
      %v2703 = vpop.f32.mrf.mxu0
      %v2704 = vadd.f32 %v2675, %v2703
      %2705 = vdwg.mxu0
      %v2706 = vadd.f32 %v2214, %v2687
      %v2707 = vadd.f32 %v2216, %v2689
      %v2708 = vadd.f32 %v2219, %v2692
      %v2709 = vadd.f32 %v2221, %v2694
      %v2710 = vadd.f32 %v2224, %v2697
      %v2711 = vadd.f32 %v2226, %v2699
      %v2712 = vadd.f32 %v2229, %v2702
      %v2713 = vadd.f32 %v2231, %v2704
      %v2714 = vld [vmem:[%s5] sm:$0x1]
      %v2716 = vperm.slane %v2714, 0
      %v2718 = vmul.f32 %v2706, %v2716
      %v2719 = vmul.f32 %v2707, %v2716
      %v2720 = vmul.f32 %v2708, %v2716
      %v2721 = vmul.f32 %v2709, %v2716
      %v2722 = vmul.f32 %v2710, %v2716
      %v2723 = vmul.f32 %v2711, %v2716
      %v2724 = vmul.f32 %v2712, %v2716
      %v2725 = vmul.f32 %v2713, %v2716
      %v2726 = vld [vmem:[%s6] sm:$0x1]
      %v2728 = vperm.slane %v2726, 0
      %v2730 = vadd.f32 %v2718, %v2728
      %v2731 = vadd.f32 %v2719, %v2728
      %v2732 = vadd.f32 %v2720, %v2728
      %v2733 = vadd.f32 %v2721, %v2728
      %v2734 = vadd.f32 %v2722, %v2728
      %v2735 = vadd.f32 %v2723, %v2728
      %v2736 = vadd.f32 %v2724, %v2728
      %v2737 = vadd.f32 %v2725, %v2728
      %v2738 = vmax.f32 %v2730, 0.0
      %v2739 = vmax.f32 %v2731, 0.0
      %v2740 = vmax.f32 %v2732, 0.0
      %v2741 = vmax.f32 %v2733, 0.0
      %v2742 = vmax.f32 %v2734, 0.0
      %v2743 = vmax.f32 %v2735, 0.0
      %v2744 = vmax.f32 %v2736, 0.0
      %v2745 = vmax.f32 %v2737, 0.0
      %vm2746 = vcmask 519168
      %2747 = vst.msk [vmem:[#allocation3] sm:$0xf] %vm2746, 0
      %vm2748 = vcmask 516096
      %2749 = vst.msk [vmem:[#allocation3 + $0x4] sm:$0x1] %vm2748, 0
      %s2750 = scalar_lea.vmem [#allocation3], 72
      %2751 = vst.msk [vmem:[%s2750] sm:$0xf] %vm2746, 0
      %2752 = vst.msk [vmem:[%s2750 + $0x4] sm:$0x1] %vm2748, 0
      %vm2753 = vcmask 516096
      %vm2754 = vmand %vm2753, %vm903
      %v2755 = vld [vmem:[#allocation3] sm:$0x1]
      %v2756 = vsel %vm2754, 0, %v2755
      %2757 = vst [vmem:[#allocation3] sm:$0x1] %v2756
      %v2758 = vld [vmem:[#allocation3 + $0x8] sm:$0x1]
      %v2759 = vsel %vm2754, 0, %v2758
      %2760 = vst [vmem:[#allocation3 + $0x8] sm:$0x1] %v2759
      %v2761 = vld [vmem:[#allocation3 + $0x10] sm:$0x1]
      %v2762 = vsel %vm2754, 0, %v2761
      %2763 = vst [vmem:[#allocation3 + $0x10] sm:$0x1] %v2762
      %v2764 = vld [vmem:[#allocation3 + $0x18] sm:$0x1]
      %v2765 = vsel %vm2754, 0, %v2764
      %2766 = vst [vmem:[#allocation3 + $0x18] sm:$0x1] %v2765
      %v2767 = vld [vmem:[#allocation3 + $0x20] sm:$0x1]
      %v2768 = vsel %vm2754, 0, %v2767
      %2769 = vst [vmem:[#allocation3 + $0x20] sm:$0x1] %v2768
      %v2770 = vld [vmem:[#allocation3 + $0x28] sm:$0x1]
      %v2771 = vsel %vm2754, 0, %v2770
      %2772 = vst [vmem:[#allocation3 + $0x28] sm:$0x1] %v2771
      %v2773 = vld [vmem:[#allocation3 + $0x30] sm:$0x1]
      %v2774 = vsel %vm2754, 0, %v2773
      %2775 = vst [vmem:[#allocation3 + $0x30] sm:$0x1] %v2774
      %v2776 = vld [vmem:[#allocation3 + $0x38] sm:$0x1]
      %v2777 = vsel %vm2754, 0, %v2776
      %2778 = vst [vmem:[#allocation3 + $0x38] sm:$0x1] %v2777
      %v2779 = vld [vmem:[#allocation3 + $0x40] sm:$0x1]
      %v2780 = vsel %vm2754, 0, %v2779
      %2781 = vst [vmem:[#allocation3 + $0x40] sm:$0x1] %v2780
      %v2782 = vld [vmem:[#allocation3 + $0x48] sm:$0x1]
      %v2783 = vsel %vm2754, 0, %v2782
      %2784 = vst [vmem:[#allocation3 + $0x48] sm:$0x1] %v2783
      %vm2785 = vmand %vm2753, %vm935
      %v2786 = vld [vmem:[#allocation3 + $0x4] sm:$0x1]
      %v2787 = vsel %vm2785, 0, %v2786
      %2788 = vst [vmem:[#allocation3 + $0x4] sm:$0x1] %v2787
      %v2789 = vld [vmem:[#allocation3 + $0xc] sm:$0x1]
      %v2790 = vsel %vm2785, 0, %v2789
      %2791 = vst [vmem:[#allocation3 + $0xc] sm:$0x1] %v2790
      %v2792 = vld [vmem:[#allocation3 + $0x14] sm:$0x1]
      %v2793 = vsel %vm2785, 0, %v2792
      %2794 = vst [vmem:[#allocation3 + $0x14] sm:$0x1] %v2793
      %v2795 = vld [vmem:[#allocation3 + $0x1c] sm:$0x1]
      %v2796 = vsel %vm2785, 0, %v2795
      %2797 = vst [vmem:[#allocation3 + $0x1c] sm:$0x1] %v2796
      %v2798 = vld [vmem:[#allocation3 + $0x24] sm:$0x1]
      %v2799 = vsel %vm2785, 0, %v2798
      %2800 = vst [vmem:[#allocation3 + $0x24] sm:$0x1] %v2799
      %v2801 = vld [vmem:[#allocation3 + $0x2c] sm:$0x1]
      %v2802 = vsel %vm2785, 0, %v2801
      %2803 = vst [vmem:[#allocation3 + $0x2c] sm:$0x1] %v2802
      %v2804 = vld [vmem:[#allocation3 + $0x34] sm:$0x1]
      %v2805 = vsel %vm2785, 0, %v2804
      %2806 = vst [vmem:[#allocation3 + $0x34] sm:$0x1] %v2805
      %v2807 = vld [vmem:[#allocation3 + $0x3c] sm:$0x1]
      %v2808 = vsel %vm2785, 0, %v2807
      %2809 = vst [vmem:[#allocation3 + $0x3c] sm:$0x1] %v2808
      %v2810 = vld [vmem:[#allocation3 + $0x44] sm:$0x1]
      %v2811 = vsel %vm2785, 0, %v2810
      %2812 = vst [vmem:[#allocation3 + $0x44] sm:$0x1] %v2811
      %v2813 = vld [vmem:[#allocation3 + $0x4c] sm:$0x1]
      %v2814 = vsel %vm2785, 0, %v2813
      %2815 = vst [vmem:[#allocation3 + $0x4c] sm:$0x1] %v2814
      %v2816 = vpack.c.bf16 %v2738, %v2738
      %v2817 = vpack.c.bf16 %v2739, %v2739
      %v2818 = vpack.c.bf16 %v2740, %v2740
      %v2819 = vpack.c.bf16 %v2741, %v2741
      %v2820 = vpack.c.bf16 %v2742, %v2742
      %v2821 = vpack.c.bf16 %v2743, %v2743
      %v2822 = vpack.c.bf16 %v2744, %v2744
      %v2823 = vpack.c.bf16 %v2745, %v2745
      %v2825 = vshrl.u32 %v2816, 16
      %v2827 = vrot.slane %v2825, 7
      %v2828 = vshll.u32 %v2816, 16
      %v2830 = vor.u32 %v2827, %v2828
      %v2831 = vrot.slane %v2827, 4
      %v2833 = vshrl.u32 %v2817, 16
      %v2835 = vrot.slane %v2833, 7
      %v2836 = vshll.u32 %v2817, 16
      %v2838 = vor.u32 %v2835, %v2836
      %v2839 = vrot.slane %v2835, 4
      %v2841 = vshrl.u32 %v2818, 16
      %v2843 = vrot.slane %v2841, 7
      %v2844 = vshll.u32 %v2818, 16
      %v2846 = vor.u32 %v2843, %v2844
      %v2847 = vrot.slane %v2843, 4
      %v2849 = vshrl.u32 %v2819, 16
      %v2851 = vrot.slane %v2849, 7
      %v2852 = vshll.u32 %v2819, 16
      %v2854 = vor.u32 %v2851, %v2852
      %v2855 = vrot.slane %v2851, 4
      %v2857 = vshrl.u32 %v2820, 16
      %v2859 = vrot.slane %v2857, 7
      %v2860 = vshll.u32 %v2820, 16
      %v2862 = vor.u32 %v2859, %v2860
      %v2863 = vrot.slane %v2859, 4
      %v2865 = vshrl.u32 %v2821, 16
      %v2867 = vrot.slane %v2865, 7
      %v2868 = vshll.u32 %v2821, 16
      %v2870 = vor.u32 %v2867, %v2868
      %v2871 = vrot.slane %v2867, 4
      %v2873 = vshrl.u32 %v2822, 16
      %v2875 = vrot.slane %v2873, 7
      %v2876 = vshll.u32 %v2822, 16
      %v2878 = vor.u32 %v2875, %v2876
      %v2879 = vrot.slane %v2875, 4
      %v2881 = vshrl.u32 %v2823, 16
      %v2883 = vrot.slane %v2881, 7
      %v2884 = vshll.u32 %v2823, 16
      %v2886 = vor.u32 %v2883, %v2884
      %v2887 = vrot.slane %v2883, 4
      %s2904 = scalar_lea.vmem [#allocation3], 8
      %vm2905 = vcmask 519168
      %vm2906 = vmand %vm2905, %vm935
      %v2907 = vld [vmem:[%s2904] sm:$0xf]
      %v2908 = vsel %vm2906, %v2830, %v2907
      %2909 = vst [vmem:[%s2904] sm:$0xf] %v2908
      %v2910 = vld [vmem:[%s2904 + $0x4] sm:$0x1]
      %v2911 = vsel %vm2754, %v2831, %v2910
      %2912 = vst [vmem:[%s2904 + $0x4] sm:$0x1] %v2911
      %v2913 = vld [vmem:[%s2904 + $0x8] sm:$0xf]
      %v2914 = vsel %vm2906, %v2838, %v2913
      %2915 = vst [vmem:[%s2904 + $0x8] sm:$0xf] %v2914
      %v2916 = vld [vmem:[%s2904 + $0xc] sm:$0x1]
      %v2917 = vsel %vm2754, %v2839, %v2916
      %2918 = vst [vmem:[%s2904 + $0xc] sm:$0x1] %v2917
      %v2919 = vld [vmem:[%s2904 + $0x10] sm:$0xf]
      %v2920 = vsel %vm2906, %v2846, %v2919
      %2921 = vst [vmem:[%s2904 + $0x10] sm:$0xf] %v2920
      %v2922 = vld [vmem:[%s2904 + $0x14] sm:$0x1]
      %v2923 = vsel %vm2754, %v2847, %v2922
      %2924 = vst [vmem:[%s2904 + $0x14] sm:$0x1] %v2923
      %v2925 = vld [vmem:[%s2904 + $0x18] sm:$0xf]
      %v2926 = vsel %vm2906, %v2854, %v2925
      %2927 = vst [vmem:[%s2904 + $0x18] sm:$0xf] %v2926
      %v2928 = vld [vmem:[%s2904 + $0x1c] sm:$0x1]
      %v2929 = vsel %vm2754, %v2855, %v2928
      %2930 = vst [vmem:[%s2904 + $0x1c] sm:$0x1] %v2929
      %v2931 = vld [vmem:[%s2904 + $0x20] sm:$0xf]
      %v2932 = vsel %vm2906, %v2862, %v2931
      %2933 = vst [vmem:[%s2904 + $0x20] sm:$0xf] %v2932
      %v2934 = vld [vmem:[%s2904 + $0x24] sm:$0x1]
      %v2935 = vsel %vm2754, %v2863, %v2934
      %2936 = vst [vmem:[%s2904 + $0x24] sm:$0x1] %v2935
      %v2937 = vld [vmem:[%s2904 + $0x28] sm:$0xf]
      %v2938 = vsel %vm2906, %v2870, %v2937
      %2939 = vst [vmem:[%s2904 + $0x28] sm:$0xf] %v2938
      %v2940 = vld [vmem:[%s2904 + $0x2c] sm:$0x1]
      %v2941 = vsel %vm2754, %v2871, %v2940
      %2942 = vst [vmem:[%s2904 + $0x2c] sm:$0x1] %v2941
      %v2943 = vld [vmem:[%s2904 + $0x30] sm:$0xf]
      %v2944 = vsel %vm2906, %v2878, %v2943
      %2945 = vst [vmem:[%s2904 + $0x30] sm:$0xf] %v2944
      %v2946 = vld [vmem:[%s2904 + $0x34] sm:$0x1]
      %v2947 = vsel %vm2754, %v2879, %v2946
      %2948 = vst [vmem:[%s2904 + $0x34] sm:$0x1] %v2947
      %v2949 = vld [vmem:[%s2904 + $0x38] sm:$0xf]
      %v2950 = vsel %vm2906, %v2886, %v2949
      %2951 = vst [vmem:[%s2904 + $0x38] sm:$0xf] %v2950
      %v2952 = vld [vmem:[%s2904 + $0x3c] sm:$0x1]
      %v2953 = vsel %vm2754, %v2887, %v2952
      %2954 = vst [vmem:[%s2904 + $0x3c] sm:$0x1] %v2953
      %v2955 = vld [vmem:[#allocation3] sm:$0xf]
      %v2956 = vld [vmem:[#allocation3 + $0x8] sm:$0xf]
      %v2957 = vld [vmem:[#allocation3 + $0x10] sm:$0xf]
      %v2958 = vld [vmem:[#allocation3 + $0x18] sm:$0xf]
      %v2959 = vld [vmem:[#allocation3 + $0x20] sm:$0xf]
      %v2960 = vld [vmem:[#allocation3 + $0x28] sm:$0xf]
      %v2961 = vld [vmem:[#allocation3 + $0x30] sm:$0xf]
      %v2962 = vld [vmem:[#allocation3 + $0x38] sm:$0xf]
      %v2963 = vld [vmem:[#allocation3 + $0x4] sm:$0x1]
      %v2964 = vld [vmem:[#allocation3 + $0xc] sm:$0x1]
      %v2965 = vld [vmem:[#allocation3 + $0x14] sm:$0x1]
      %v2966 = vld [vmem:[#allocation3 + $0x1c] sm:$0x1]
      %v2967 = vld [vmem:[#allocation3 + $0x24] sm:$0x1]
      %v2968 = vld [vmem:[#allocation3 + $0x2c] sm:$0x1]
      %v2969 = vld [vmem:[#allocation3 + $0x34] sm:$0x1]
      %v2970 = vld [vmem:[#allocation3 + $0x3c] sm:$0x1]
      %v2971 = vld [vmem:[#allocation3] sm:$0xe]
      %v2972 = vld [vmem:[#allocation3 + $0x8] sm:$0xe]
      %v2973 = vld [vmem:[#allocation3 + $0x10] sm:$0xe]
      %v2974 = vld [vmem:[#allocation3 + $0x18] sm:$0xe]
      %v2975 = vld [vmem:[#allocation3 + $0x20] sm:$0xe]
      %v2976 = vld [vmem:[#allocation3 + $0x28] sm:$0xe]
      %v2977 = vld [vmem:[#allocation3 + $0x30] sm:$0xe]
      %v2978 = vld [vmem:[#allocation3 + $0x38] sm:$0xe]
      %v2995 = vunpack.c.l.b16 %v2955
      %v2996 = vunpack.c.l.b16 %v2963
      %v2997 = vunpack.c.l.b16 %v2956
      %v2998 = vunpack.c.l.b16 %v2964
      %v2999 = vunpack.c.l.b16 %v2957
      %v3000 = vunpack.c.l.b16 %v2965
      %v3001 = vunpack.c.l.b16 %v2958
      %v3002 = vunpack.c.l.b16 %v2966
      %v3003 = vunpack.c.l.b16 %v2959
      %v3004 = vunpack.c.l.b16 %v2967
      %v3005 = vunpack.c.l.b16 %v2960
      %v3006 = vunpack.c.l.b16 %v2968
      %v3007 = vunpack.c.l.b16 %v2961
      %v3008 = vunpack.c.l.b16 %v2969
      %v3009 = vunpack.c.l.b16 %v2962
      %v3010 = vunpack.c.l.b16 %v2970
      %v3011 = vpack.c.b16 %v2996, %v2995
      %v3012 = vpack.c.b16 %v2998, %v2997
      %v3013 = vpack.c.b16 %v3000, %v2999
      %v3014 = vpack.c.b16 %v3002, %v3001
      %v3015 = vpack.c.b16 %v3004, %v3003
      %v3016 = vpack.c.b16 %v3006, %v3005
      %v3017 = vpack.c.b16 %v3008, %v3007
      %v3018 = vpack.c.b16 %v3010, %v3009
      %v3020 = vshrl.u32 %v3011, 16
      %v3022 = vshll.u32 %v3011, 16
      %v3024 = vrot.slane %v3022, 1
      %v3025 = vor.u32 %v3020, %v3024
      %v3027 = vshrl.u32 %v3012, 16
      %v3029 = vshll.u32 %v3012, 16
      %v3031 = vrot.slane %v3029, 1
      %v3032 = vor.u32 %v3027, %v3031
      %v3034 = vshrl.u32 %v3013, 16
      %v3036 = vshll.u32 %v3013, 16
      %v3038 = vrot.slane %v3036, 1
      %v3039 = vor.u32 %v3034, %v3038
      %v3041 = vshrl.u32 %v3014, 16
      %v3043 = vshll.u32 %v3014, 16
      %v3045 = vrot.slane %v3043, 1
      %v3046 = vor.u32 %v3041, %v3045
      %v3048 = vshrl.u32 %v3015, 16
      %v3050 = vshll.u32 %v3015, 16
      %v3052 = vrot.slane %v3050, 1
      %v3053 = vor.u32 %v3048, %v3052
      %v3055 = vshrl.u32 %v3016, 16
      %v3057 = vshll.u32 %v3016, 16
      %v3059 = vrot.slane %v3057, 1
      %v3060 = vor.u32 %v3055, %v3059
      %v3062 = vshrl.u32 %v3017, 16
      %v3064 = vshll.u32 %v3017, 16
      %v3066 = vrot.slane %v3064, 1
      %v3067 = vor.u32 %v3062, %v3066
      %v3069 = vshrl.u32 %v3018, 16
      %v3071 = vshll.u32 %v3018, 16
      %v3073 = vrot.slane %v3071, 1
      %v3074 = vor.u32 %v3069, %v3073
      %3075 = vrot.lane.b32.xlu0 %v3025, 64
      %v3076 = vpop.permute.xlu0 %3075
      %3077 = vrot.lane.b32.xlu0 %v3032, 64
      %v3078 = vpop.permute.xlu0 %3077
      %3079 = vrot.lane.b32.xlu0 %v3039, 64
      %v3080 = vpop.permute.xlu0 %3079
      %3081 = vrot.lane.b32.xlu0 %v3046, 64
      %v3082 = vpop.permute.xlu0 %3081
      %3083 = vrot.lane.b32.xlu0 %v3053, 64
      %v3084 = vpop.permute.xlu0 %3083
      %3085 = vrot.lane.b32.xlu0 %v3060, 64
      %v3086 = vpop.permute.xlu0 %3085
      %3087 = vrot.lane.b32.xlu0 %v3067, 64
      %v3088 = vpop.permute.xlu0 %3087
      %3089 = vrot.lane.b32.xlu0 %v3074, 64
      %v3090 = vpop.permute.xlu0 %3089
      %v3099 = vunpack.c.l.b16 %v2971
      %v3100 = vunpack.c.l.b16 %v2972
      %v3101 = vunpack.c.l.b16 %v2973
      %v3102 = vunpack.c.l.b16 %v2974
      %v3103 = vunpack.c.l.b16 %v2975
      %v3104 = vunpack.c.l.b16 %v2976
      %v3105 = vunpack.c.l.b16 %v2977
      %v3106 = vunpack.c.l.b16 %v2978
      %v3107 = vpack.c.b16 %v2996, %v3099
      %v3108 = vpack.c.b16 %v2998, %v3100
      %v3109 = vpack.c.b16 %v3000, %v3101
      %v3110 = vpack.c.b16 %v3002, %v3102
      %v3111 = vpack.c.b16 %v3004, %v3103
      %v3112 = vpack.c.b16 %v3006, %v3104
      %v3113 = vpack.c.b16 %v3008, %v3105
      %v3114 = vpack.c.b16 %v3010, %v3106
      %v3115 = vrot.slane %v3107, 1
      %v3116 = vrot.slane %v3108, 1
      %v3117 = vrot.slane %v3109, 1
      %v3118 = vrot.slane %v3110, 1
      %v3119 = vrot.slane %v3111, 1
      %v3120 = vrot.slane %v3112, 1
      %v3121 = vrot.slane %v3113, 1
      %v3122 = vrot.slane %v3114, 1
      %v3125 = vsel %vm1110, %v2955, %v3076
      %v3128 = vsel %vm1110, %v2956, %v3078
      %v3131 = vsel %vm1110, %v2957, %v3080
      %v3134 = vsel %vm1110, %v2958, %v3082
      %v3137 = vsel %vm1110, %v2959, %v3084
      %v3140 = vsel %vm1110, %v2960, %v3086
      %v3143 = vsel %vm1110, %v2961, %v3088
      %v3146 = vsel %vm1110, %v2962, %v3090
      %v3155 = vunpack.c.l.b16 %v3125
      %v3156 = vunpack.c.l.b16 %v3115
      %v3157 = vunpack.c.l.b16 %v3128
      %v3158 = vunpack.c.l.b16 %v3116
      %v3159 = vunpack.c.l.b16 %v3131
      %v3160 = vunpack.c.l.b16 %v3117
      %v3161 = vunpack.c.l.b16 %v3134
      %v3162 = vunpack.c.l.b16 %v3118
      %v3163 = vunpack.c.l.b16 %v3137
      %v3164 = vunpack.c.l.b16 %v3119
      %v3165 = vunpack.c.l.b16 %v3140
      %v3166 = vunpack.c.l.b16 %v3120
      %v3167 = vunpack.c.l.b16 %v3143
      %v3168 = vunpack.c.l.b16 %v3121
      %v3169 = vunpack.c.l.b16 %v3146
      %v3170 = vunpack.c.l.b16 %v3122
      %v3171 = vld [vmem:[%s7] sm:$0xf]
      %v3172 = vld [vmem:[%s7 + $0x4] sm:$0xf]
      %v3173 = vld [vmem:[%s7 + $0x8] sm:$0xf]
      %v3174 = vld [vmem:[%s7 + $0xc] sm:$0xf]
      %v3175 = vld [vmem:[%s7 + $0x10] sm:$0xf]
      %v3176 = vld [vmem:[%s7 + $0x14] sm:$0xf]
      %v3177 = vld [vmem:[%s7 + $0x18] sm:$0xf]
      %v3178 = vld [vmem:[%s7 + $0x1c] sm:$0xf]
      %v3179 = vld [vmem:[%s7 + $0x20] sm:$0xf]
      %v3180 = vld [vmem:[%s7 + $0x24] sm:$0xf]
      %v3181 = vld [vmem:[%s7 + $0x28] sm:$0xf]
      %v3182 = vld [vmem:[%s7 + $0x2c] sm:$0xf]
      %v3183 = vld [vmem:[%s7 + $0x30] sm:$0xf]
      %v3184 = vld [vmem:[%s7 + $0x34] sm:$0xf]
      %v3185 = vld [vmem:[%s7 + $0x38] sm:$0xf]
      %v3186 = vld [vmem:[%s7 + $0x3c] sm:$0xf]
      %v3187 = vld [vmem:[%s7 + $0x40] sm:$0xf]
      %v3188 = vld [vmem:[%s7 + $0x44] sm:$0xf]
      %v3189 = vld [vmem:[%s7 + $0x48] sm:$0xf]
      %v3190 = vld [vmem:[%s7 + $0x4c] sm:$0xf]
      %v3191 = vld [vmem:[%s7 + $0x50] sm:$0xf]
      %v3192 = vld [vmem:[%s7 + $0x54] sm:$0xf]
      %v3193 = vld [vmem:[%s7 + $0x58] sm:$0xf]
      %v3194 = vld [vmem:[%s7 + $0x5c] sm:$0xf]
      %v3195 = vld [vmem:[%s2904] sm:$0xf]
      %v3196 = vld [vmem:[%s2904 + $0x8] sm:$0xf]
      %v3197 = vld [vmem:[%s2904 + $0x10] sm:$0xf]
      %v3198 = vld [vmem:[%s2904 + $0x18] sm:$0xf]
      %v3199 = vld [vmem:[%s2904 + $0x20] sm:$0xf]
      %v3200 = vld [vmem:[%s2904 + $0x28] sm:$0xf]
      %v3201 = vld [vmem:[%s2904 + $0x30] sm:$0xf]
      %v3202 = vld [vmem:[%s2904 + $0x38] sm:$0xf]
      %v3203 = vld [vmem:[%s2904 + $0x4] sm:$0x1]
      %v3204 = vld [vmem:[%s2904 + $0xc] sm:$0x1]
      %v3205 = vld [vmem:[%s2904 + $0x14] sm:$0x1]
      %v3206 = vld [vmem:[%s2904 + $0x1c] sm:$0x1]
      %v3207 = vld [vmem:[%s2904 + $0x24] sm:$0x1]
      %v3208 = vld [vmem:[%s2904 + $0x2c] sm:$0x1]
      %v3209 = vld [vmem:[%s2904 + $0x34] sm:$0x1]
      %v3210 = vld [vmem:[%s2904 + $0x3c] sm:$0x1]
      %v3211 = vld [vmem:[%s2904] sm:$0xe]
      %v3212 = vld [vmem:[%s2904 + $0x8] sm:$0xe]
      %v3213 = vld [vmem:[%s2904 + $0x10] sm:$0xe]
      %v3214 = vld [vmem:[%s2904 + $0x18] sm:$0xe]
      %v3215 = vld [vmem:[%s2904 + $0x20] sm:$0xe]
      %v3216 = vld [vmem:[%s2904 + $0x28] sm:$0xe]
      %v3217 = vld [vmem:[%s2904 + $0x30] sm:$0xe]
      %v3218 = vld [vmem:[%s2904 + $0x38] sm:$0xe]
      %v3235 = vunpack.c.l.b16 %v3195
      %v3236 = vunpack.c.l.b16 %v3203
      %v3237 = vunpack.c.l.b16 %v3196
      %v3238 = vunpack.c.l.b16 %v3204
      %v3239 = vunpack.c.l.b16 %v3197
      %v3240 = vunpack.c.l.b16 %v3205
      %v3241 = vunpack.c.l.b16 %v3198
      %v3242 = vunpack.c.l.b16 %v3206
      %v3243 = vunpack.c.l.b16 %v3199
      %v3244 = vunpack.c.l.b16 %v3207
      %v3245 = vunpack.c.l.b16 %v3200
      %v3246 = vunpack.c.l.b16 %v3208
      %v3247 = vunpack.c.l.b16 %v3201
      %v3248 = vunpack.c.l.b16 %v3209
      %v3249 = vunpack.c.l.b16 %v3202
      %v3250 = vunpack.c.l.b16 %v3210
      %v3251 = vpack.c.b16 %v3236, %v3235
      %v3252 = vpack.c.b16 %v3238, %v3237
      %v3253 = vpack.c.b16 %v3240, %v3239
      %v3254 = vpack.c.b16 %v3242, %v3241
      %v3255 = vpack.c.b16 %v3244, %v3243
      %v3256 = vpack.c.b16 %v3246, %v3245
      %v3257 = vpack.c.b16 %v3248, %v3247
      %v3258 = vpack.c.b16 %v3250, %v3249
      %v3260 = vshrl.u32 %v3251, 16
      %v3262 = vshll.u32 %v3251, 16
      %v3264 = vrot.slane %v3262, 1
      %v3265 = vor.u32 %v3260, %v3264
      %v3267 = vshrl.u32 %v3252, 16
      %v3269 = vshll.u32 %v3252, 16
      %v3271 = vrot.slane %v3269, 1
      %v3272 = vor.u32 %v3267, %v3271
      %v3274 = vshrl.u32 %v3253, 16
      %v3276 = vshll.u32 %v3253, 16
      %v3278 = vrot.slane %v3276, 1
      %v3279 = vor.u32 %v3274, %v3278
      %v3281 = vshrl.u32 %v3254, 16
      %v3283 = vshll.u32 %v3254, 16
      %v3285 = vrot.slane %v3283, 1
      %v3286 = vor.u32 %v3281, %v3285
      %v3288 = vshrl.u32 %v3255, 16
      %v3290 = vshll.u32 %v3255, 16
      %v3292 = vrot.slane %v3290, 1
      %v3293 = vor.u32 %v3288, %v3292
      %v3295 = vshrl.u32 %v3256, 16
      %v3297 = vshll.u32 %v3256, 16
      %v3299 = vrot.slane %v3297, 1
      %v3300 = vor.u32 %v3295, %v3299
      %v3302 = vshrl.u32 %v3257, 16
      %v3304 = vshll.u32 %v3257, 16
      %v3306 = vrot.slane %v3304, 1
      %v3307 = vor.u32 %v3302, %v3306
      %v3309 = vshrl.u32 %v3258, 16
      %v3311 = vshll.u32 %v3258, 16
      %v3313 = vrot.slane %v3311, 1
      %v3314 = vor.u32 %v3309, %v3313
      %3315 = vrot.lane.b32.xlu0 %v3265, 64
      %v3316 = vpop.permute.xlu0 %3315
      %3317 = vrot.lane.b32.xlu0 %v3272, 64
      %v3318 = vpop.permute.xlu0 %3317
      %3319 = vrot.lane.b32.xlu0 %v3279, 64
      %v3320 = vpop.permute.xlu0 %3319
      %3321 = vrot.lane.b32.xlu0 %v3286, 64
      %v3322 = vpop.permute.xlu0 %3321
      %3323 = vrot.lane.b32.xlu0 %v3293, 64
      %v3324 = vpop.permute.xlu0 %3323
      %3325 = vrot.lane.b32.xlu0 %v3300, 64
      %v3326 = vpop.permute.xlu0 %3325
      %3327 = vrot.lane.b32.xlu0 %v3307, 64
      %v3328 = vpop.permute.xlu0 %3327
      %3329 = vrot.lane.b32.xlu0 %v3314, 64
      %v3330 = vpop.permute.xlu0 %3329
      %v3339 = vunpack.c.l.b16 %v3211
      %v3340 = vunpack.c.l.b16 %v3212
      %v3341 = vunpack.c.l.b16 %v3213
      %v3342 = vunpack.c.l.b16 %v3214
      %v3343 = vunpack.c.l.b16 %v3215
      %v3344 = vunpack.c.l.b16 %v3216
      %v3345 = vunpack.c.l.b16 %v3217
      %v3346 = vunpack.c.l.b16 %v3218
      %v3347 = vpack.c.b16 %v3236, %v3339
      %v3348 = vpack.c.b16 %v3238, %v3340
      %v3349 = vpack.c.b16 %v3240, %v3341
      %v3350 = vpack.c.b16 %v3242, %v3342
      %v3351 = vpack.c.b16 %v3244, %v3343
      %v3352 = vpack.c.b16 %v3246, %v3344
      %v3353 = vpack.c.b16 %v3248, %v3345
      %v3354 = vpack.c.b16 %v3250, %v3346
      %v3355 = vrot.slane %v3347, 1
      %v3356 = vrot.slane %v3348, 1
      %v3357 = vrot.slane %v3349, 1
      %v3358 = vrot.slane %v3350, 1
      %v3359 = vrot.slane %v3351, 1
      %v3360 = vrot.slane %v3352, 1
      %v3361 = vrot.slane %v3353, 1
      %v3362 = vrot.slane %v3354, 1
      %v3365 = vsel %vm1110, %v3195, %v3316
      %v3368 = vsel %vm1110, %v3196, %v3318
      %v3371 = vsel %vm1110, %v3197, %v3320
      %v3374 = vsel %vm1110, %v3198, %v3322
      %v3377 = vsel %vm1110, %v3199, %v3324
      %v3380 = vsel %vm1110, %v3200, %v3326
      %v3383 = vsel %vm1110, %v3201, %v3328
      %v3386 = vsel %vm1110, %v3202, %v3330
      %v3395 = vunpack.c.l.b16 %v3365
      %v3396 = vunpack.c.l.b16 %v3355
      %v3397 = vunpack.c.l.b16 %v3368
      %v3398 = vunpack.c.l.b16 %v3356
      %v3399 = vunpack.c.l.b16 %v3371
      %v3400 = vunpack.c.l.b16 %v3357
      %v3401 = vunpack.c.l.b16 %v3374
      %v3402 = vunpack.c.l.b16 %v3358
      %v3403 = vunpack.c.l.b16 %v3377
      %v3404 = vunpack.c.l.b16 %v3359
      %v3405 = vunpack.c.l.b16 %v3380
      %v3406 = vunpack.c.l.b16 %v3360
      %v3407 = vunpack.c.l.b16 %v3383
      %v3408 = vunpack.c.l.b16 %v3361
      %v3409 = vunpack.c.l.b16 %v3386
      %v3410 = vunpack.c.l.b16 %v3362
      %s3411 = scalar_lea.vmem %s7, 96
      %v3412 = vld [vmem:[%s3411] sm:$0xf]
      %v3413 = vld [vmem:[%s3411 + $0x4] sm:$0xf]
      %v3414 = vld [vmem:[%s3411 + $0x8] sm:$0xf]
      %v3415 = vld [vmem:[%s3411 + $0xc] sm:$0xf]
      %v3416 = vld [vmem:[%s3411 + $0x10] sm:$0xf]
      %v3417 = vld [vmem:[%s3411 + $0x14] sm:$0xf]
      %v3418 = vld [vmem:[%s3411 + $0x18] sm:$0xf]
      %v3419 = vld [vmem:[%s3411 + $0x1c] sm:$0xf]
      %v3420 = vld [vmem:[%s3411 + $0x20] sm:$0xf]
      %v3421 = vld [vmem:[%s3411 + $0x24] sm:$0xf]
      %v3422 = vld [vmem:[%s3411 + $0x28] sm:$0xf]
      %v3423 = vld [vmem:[%s3411 + $0x2c] sm:$0xf]
      %v3424 = vld [vmem:[%s3411 + $0x30] sm:$0xf]
      %v3425 = vld [vmem:[%s3411 + $0x34] sm:$0xf]
      %v3426 = vld [vmem:[%s3411 + $0x38] sm:$0xf]
      %v3427 = vld [vmem:[%s3411 + $0x3c] sm:$0xf]
      %v3428 = vld [vmem:[%s3411 + $0x40] sm:$0xf]
      %v3429 = vld [vmem:[%s3411 + $0x44] sm:$0xf]
      %v3430 = vld [vmem:[%s3411 + $0x48] sm:$0xf]
      %v3431 = vld [vmem:[%s3411 + $0x4c] sm:$0xf]
      %v3432 = vld [vmem:[%s3411 + $0x50] sm:$0xf]
      %v3433 = vld [vmem:[%s3411 + $0x54] sm:$0xf]
      %v3434 = vld [vmem:[%s3411 + $0x58] sm:$0xf]
      %v3435 = vld [vmem:[%s3411 + $0x5c] sm:$0xf]
      %v3436 = vpack.c.b16 %v3397, %v3395
      %v3437 = vpack.c.b16 %v3398, %v3396
      %v3438 = vpack.c.b16 %v3401, %v3399
      %v3439 = vpack.c.b16 %v3402, %v3400
      %v3440 = vpack.c.b16 %v3405, %v3403
      %v3441 = vpack.c.b16 %v3406, %v3404
      %v3442 = vpack.c.b16 %v3409, %v3407
      %v3443 = vpack.c.b16 %v3410, %v3408
      %v3472 = vunpack.c.l.b16 %v3412
      %v3473 = vunpack.c.l.b16 %v3413
      %v3474 = vunpack.c.l.b16 %v3414
      %v3475 = vunpack.c.l.b16 %v3415
      %v3476 = vunpack.c.l.b16 %v3416
      %v3477 = vunpack.c.l.b16 %v3417
      %v3478 = vunpack.c.l.b16 %v3418
      %v3479 = vunpack.c.l.b16 %v3419
      %v3480 = vunpack.c.l.b16 %v3420
      %v3481 = vunpack.c.l.b16 %v3421
      %v3482 = vunpack.c.l.b16 %v3422
      %v3483 = vunpack.c.l.b16 %v3423
      %v3484 = vunpack.c.l.b16 %v3424
      %v3485 = vunpack.c.l.b16 %v3425
      %v3486 = vunpack.c.l.b16 %v3426
      %v3487 = vunpack.c.l.b16 %v3427
      %v3488 = vunpack.c.l.b16 %v3428
      %v3489 = vunpack.c.l.b16 %v3429
      %v3490 = vunpack.c.l.b16 %v3430
      %v3491 = vunpack.c.l.b16 %v3431
      %v3492 = vunpack.c.l.b16 %v3432
      %v3493 = vunpack.c.l.b16 %v3433
      %v3494 = vunpack.c.l.b16 %v3434
      %v3495 = vunpack.c.l.b16 %v3435
      %v3496 = vpack.c.b16 %v3473, %v3472
      %v3497 = vpack.c.b16 %v3475, %v3474
      %v3498 = vpack.c.b16 %v3477, %v3476
      %v3499 = vpack.c.b16 %v3479, %v3478
      %v3500 = vpack.c.b16 %v3481, %v3480
      %v3501 = vpack.c.b16 %v3483, %v3482
      %v3502 = vpack.c.b16 %v3485, %v3484
      %v3503 = vpack.c.b16 %v3487, %v3486
      %v3504 = vpack.c.b16 %v3489, %v3488
      %v3505 = vpack.c.b16 %v3491, %v3490
      %v3506 = vpack.c.b16 %v3493, %v3492
      %v3507 = vpack.c.b16 %v3495, %v3494
      %v3521 = vsel %vm1110, %v3437, 0
      %v3524 = vsel %vm1110, %v3439, 0
      %v3527 = vsel %vm1110, %v3441, 0
      %v3530 = vsel %vm1110, %v3443, 0
      %3532 = vmatpush.bf16.msra.mxu0 %v3503
      %3533 = vmatpush.bf16.msra.mxu0 %v3502
      %3534 = vmatpush.bf16.msra.mxu0 %v3501
      %3535 = vmatpush.bf16.msra.mxu0 %v3500
      %3536 = vmatpush.bf16.msra.mxu0 %v3499
      %3537 = vmatpush.bf16.msra.mxu0 %v3498
      %3538 = vmatpush.bf16.msra.mxu0 %v3497
      %3539 = vmatpush.bf16.msra.mxu0 %v3496
      %3540 = vmatmul.bf16.gmra.mxu0 %v3436
      %v3541 = vpop.f32.mrf.mxu0
      %v3542 = vadd.f32 0.0, %v3541
      %v3543 = vpop.f32.mrf.mxu0
      %v3544 = vadd.f32 0.0, %v3543
      %3545 = vmatmul.bf16.gmra.mxu0 %v3438
      %v3546 = vpop.f32.mrf.mxu0
      %v3547 = vadd.f32 0.0, %v3546
      %v3548 = vpop.f32.mrf.mxu0
      %v3549 = vadd.f32 0.0, %v3548
      %3550 = vmatmul.bf16.gmra.mxu0 %v3440
      %v3551 = vpop.f32.mrf.mxu0
      %v3552 = vadd.f32 0.0, %v3551
      %v3553 = vpop.f32.mrf.mxu0
      %v3554 = vadd.f32 0.0, %v3553
      %3555 = vmatmul.bf16.gmra.mxu0 %v3442
      %v3556 = vpop.f32.mrf.mxu0
      %v3557 = vadd.f32 0.0, %v3556
      %v3558 = vpop.f32.mrf.mxu0
      %v3559 = vadd.f32 0.0, %v3558
      %3560 = vdwg.mxu0
      %3561 = vmatpush.bf16.msra.mxu0 0
      %3562 = vmatpush.bf16.msra.mxu0 0
      %3563 = vmatpush.bf16.msra.mxu0 0
      %3564 = vmatpush.bf16.msra.mxu0 0
      %3565 = vmatpush.bf16.msra.mxu0 %v3507
      %3566 = vmatpush.bf16.msra.mxu0 %v3506
      %3567 = vmatpush.bf16.msra.mxu0 %v3505
      %3568 = vmatpush.bf16.msra.mxu0 %v3504
      %3569 = vmatmul.bf16.gmra.mxu0 %v3521
      %v3570 = vpop.f32.mrf.mxu0
      %v3571 = vadd.f32 %v3542, %v3570
      %v3572 = vpop.f32.mrf.mxu0
      %v3573 = vadd.f32 %v3544, %v3572
      %3574 = vmatmul.bf16.gmra.mxu0 %v3524
      %v3575 = vpop.f32.mrf.mxu0
      %v3576 = vadd.f32 %v3547, %v3575
      %v3577 = vpop.f32.mrf.mxu0
      %v3578 = vadd.f32 %v3549, %v3577
      %3579 = vmatmul.bf16.gmra.mxu0 %v3527
      %v3580 = vpop.f32.mrf.mxu0
      %v3581 = vadd.f32 %v3552, %v3580
      %v3582 = vpop.f32.mrf.mxu0
      %v3583 = vadd.f32 %v3554, %v3582
      %3584 = vmatmul.bf16.gmra.mxu0 %v3530
      %v3585 = vpop.f32.mrf.mxu0
      %v3586 = vadd.f32 %v3557, %v3585
      %v3587 = vpop.f32.mrf.mxu0
      %v3588 = vadd.f32 %v3559, %v3587
      %3589 = vdwg.mxu0
      %v3590 = vpack.c.b16 %v3157, %v3155
      %v3591 = vpack.c.b16 %v3158, %v3156
      %v3592 = vpack.c.b16 %v3161, %v3159
      %v3593 = vpack.c.b16 %v3162, %v3160
      %v3594 = vpack.c.b16 %v3165, %v3163
      %v3595 = vpack.c.b16 %v3166, %v3164
      %v3596 = vpack.c.b16 %v3169, %v3167
      %v3597 = vpack.c.b16 %v3170, %v3168
      %v3626 = vunpack.c.l.b16 %v3171
      %v3627 = vunpack.c.l.b16 %v3172
      %v3628 = vunpack.c.l.b16 %v3173
      %v3629 = vunpack.c.l.b16 %v3174
      %v3630 = vunpack.c.l.b16 %v3175
      %v3631 = vunpack.c.l.b16 %v3176
      %v3632 = vunpack.c.l.b16 %v3177
      %v3633 = vunpack.c.l.b16 %v3178
      %v3634 = vunpack.c.l.b16 %v3179
      %v3635 = vunpack.c.l.b16 %v3180
      %v3636 = vunpack.c.l.b16 %v3181
      %v3637 = vunpack.c.l.b16 %v3182
      %v3638 = vunpack.c.l.b16 %v3183
      %v3639 = vunpack.c.l.b16 %v3184
      %v3640 = vunpack.c.l.b16 %v3185
      %v3641 = vunpack.c.l.b16 %v3186
      %v3642 = vunpack.c.l.b16 %v3187
      %v3643 = vunpack.c.l.b16 %v3188
      %v3644 = vunpack.c.l.b16 %v3189
      %v3645 = vunpack.c.l.b16 %v3190
      %v3646 = vunpack.c.l.b16 %v3191
      %v3647 = vunpack.c.l.b16 %v3192
      %v3648 = vunpack.c.l.b16 %v3193
      %v3649 = vunpack.c.l.b16 %v3194
      %v3650 = vpack.c.b16 %v3627, %v3626
      %v3651 = vpack.c.b16 %v3629, %v3628
      %v3652 = vpack.c.b16 %v3631, %v3630
      %v3653 = vpack.c.b16 %v3633, %v3632
      %v3654 = vpack.c.b16 %v3635, %v3634
      %v3655 = vpack.c.b16 %v3637, %v3636
      %v3656 = vpack.c.b16 %v3639, %v3638
      %v3657 = vpack.c.b16 %v3641, %v3640
      %v3658 = vpack.c.b16 %v3643, %v3642
      %v3659 = vpack.c.b16 %v3645, %v3644
      %v3660 = vpack.c.b16 %v3647, %v3646
      %v3661 = vpack.c.b16 %v3649, %v3648
      %v3675 = vsel %vm1110, %v3591, 0
      %v3678 = vsel %vm1110, %v3593, 0
      %v3681 = vsel %vm1110, %v3595, 0
      %v3684 = vsel %vm1110, %v3597, 0
      %3686 = vmatpush.bf16.msra.mxu0 %v3657
      %3687 = vmatpush.bf16.msra.mxu0 %v3656
      %3688 = vmatpush.bf16.msra.mxu0 %v3655
      %3689 = vmatpush.bf16.msra.mxu0 %v3654
      %3690 = vmatpush.bf16.msra.mxu0 %v3653
      %3691 = vmatpush.bf16.msra.mxu0 %v3652
      %3692 = vmatpush.bf16.msra.mxu0 %v3651
      %3693 = vmatpush.bf16.msra.mxu0 %v3650
      %3694 = vmatmul.bf16.gmra.mxu0 %v3590
      %v3695 = vpop.f32.mrf.mxu0
      %v3696 = vadd.f32 %v3571, %v3695
      %v3697 = vpop.f32.mrf.mxu0
      %v3698 = vadd.f32 %v3573, %v3697
      %3699 = vmatmul.bf16.gmra.mxu0 %v3592
      %v3700 = vpop.f32.mrf.mxu0
      %v3701 = vadd.f32 %v3576, %v3700
      %v3702 = vpop.f32.mrf.mxu0
      %v3703 = vadd.f32 %v3578, %v3702
      %3704 = vmatmul.bf16.gmra.mxu0 %v3594
      %v3705 = vpop.f32.mrf.mxu0
      %v3706 = vadd.f32 %v3581, %v3705
      %v3707 = vpop.f32.mrf.mxu0
      %v3708 = vadd.f32 %v3583, %v3707
      %3709 = vmatmul.bf16.gmra.mxu0 %v3596
      %v3710 = vpop.f32.mrf.mxu0
      %v3711 = vadd.f32 %v3586, %v3710
      %v3712 = vpop.f32.mrf.mxu0
      %v3713 = vadd.f32 %v3588, %v3712
      %3714 = vdwg.mxu0
      %3715 = vmatpush.bf16.msra.mxu0 0
      %3716 = vmatpush.bf16.msra.mxu0 0
      %3717 = vmatpush.bf16.msra.mxu0 0
      %3718 = vmatpush.bf16.msra.mxu0 0
      %3719 = vmatpush.bf16.msra.mxu0 %v3661
      %3720 = vmatpush.bf16.msra.mxu0 %v3660
      %3721 = vmatpush.bf16.msra.mxu0 %v3659
      %3722 = vmatpush.bf16.msra.mxu0 %v3658
      %3723 = vmatmul.bf16.gmra.mxu0 %v3675
      %v3724 = vpop.f32.mrf.mxu0
      %v3725 = vadd.f32 %v3696, %v3724
      %v3726 = vpop.f32.mrf.mxu0
      %v3727 = vadd.f32 %v3698, %v3726
      %3728 = vmatmul.bf16.gmra.mxu0 %v3678
      %v3729 = vpop.f32.mrf.mxu0
      %v3730 = vadd.f32 %v3701, %v3729
      %v3731 = vpop.f32.mrf.mxu0
      %v3732 = vadd.f32 %v3703, %v3731
      %3733 = vmatmul.bf16.gmra.mxu0 %v3681
      %v3734 = vpop.f32.mrf.mxu0
      %v3735 = vadd.f32 %v3706, %v3734
      %v3736 = vpop.f32.mrf.mxu0
      %v3737 = vadd.f32 %v3708, %v3736
      %3738 = vmatmul.bf16.gmra.mxu0 %v3684
      %v3739 = vpop.f32.mrf.mxu0
      %v3740 = vadd.f32 %v3711, %v3739
      %v3741 = vpop.f32.mrf.mxu0
      %v3742 = vadd.f32 %v3713, %v3741
      %3743 = vdwg.mxu0
      %s3744 = scalar_lea.vmem [#allocation3], 16
      %v3745 = vld [vmem:[%s3744] sm:$0xf]
      %v3746 = vld [vmem:[%s3744 + $0x8] sm:$0xf]
      %v3747 = vld [vmem:[%s3744 + $0x10] sm:$0xf]
      %v3748 = vld [vmem:[%s3744 + $0x18] sm:$0xf]
      %v3749 = vld [vmem:[%s3744 + $0x20] sm:$0xf]
      %v3750 = vld [vmem:[%s3744 + $0x28] sm:$0xf]
      %v3751 = vld [vmem:[%s3744 + $0x30] sm:$0xf]
      %v3752 = vld [vmem:[%s3744 + $0x38] sm:$0xf]
      %v3753 = vld [vmem:[%s3744 + $0x4] sm:$0x1]
      %v3754 = vld [vmem:[%s3744 + $0xc] sm:$0x1]
      %v3755 = vld [vmem:[%s3744 + $0x14] sm:$0x1]
      %v3756 = vld [vmem:[%s3744 + $0x1c] sm:$0x1]
      %v3757 = vld [vmem:[%s3744 + $0x24] sm:$0x1]
      %v3758 = vld [vmem:[%s3744 + $0x2c] sm:$0x1]
      %v3759 = vld [vmem:[%s3744 + $0x34] sm:$0x1]
      %v3760 = vld [vmem:[%s3744 + $0x3c] sm:$0x1]
      %v3761 = vld [vmem:[%s3744] sm:$0xe]
      %v3762 = vld [vmem:[%s3744 + $0x8] sm:$0xe]
      %v3763 = vld [vmem:[%s3744 + $0x10] sm:$0xe]
      %v3764 = vld [vmem:[%s3744 + $0x18] sm:$0xe]
      %v3765 = vld [vmem:[%s3744 + $0x20] sm:$0xe]
      %v3766 = vld [vmem:[%s3744 + $0x28] sm:$0xe]
      %v3767 = vld [vmem:[%s3744 + $0x30] sm:$0xe]
      %v3768 = vld [vmem:[%s3744 + $0x38] sm:$0xe]
      %v3785 = vunpack.c.l.b16 %v3745
      %v3786 = vunpack.c.l.b16 %v3753
      %v3787 = vunpack.c.l.b16 %v3746
      %v3788 = vunpack.c.l.b16 %v3754
      %v3789 = vunpack.c.l.b16 %v3747
      %v3790 = vunpack.c.l.b16 %v3755
      %v3791 = vunpack.c.l.b16 %v3748
      %v3792 = vunpack.c.l.b16 %v3756
      %v3793 = vunpack.c.l.b16 %v3749
      %v3794 = vunpack.c.l.b16 %v3757
      %v3795 = vunpack.c.l.b16 %v3750
      %v3796 = vunpack.c.l.b16 %v3758
      %v3797 = vunpack.c.l.b16 %v3751
      %v3798 = vunpack.c.l.b16 %v3759
      %v3799 = vunpack.c.l.b16 %v3752
      %v3800 = vunpack.c.l.b16 %v3760
      %v3801 = vpack.c.b16 %v3786, %v3785
      %v3802 = vpack.c.b16 %v3788, %v3787
      %v3803 = vpack.c.b16 %v3790, %v3789
      %v3804 = vpack.c.b16 %v3792, %v3791
      %v3805 = vpack.c.b16 %v3794, %v3793
      %v3806 = vpack.c.b16 %v3796, %v3795
      %v3807 = vpack.c.b16 %v3798, %v3797
      %v3808 = vpack.c.b16 %v3800, %v3799
      %v3810 = vshrl.u32 %v3801, 16
      %v3812 = vshll.u32 %v3801, 16
      %v3814 = vrot.slane %v3812, 1
      %v3815 = vor.u32 %v3810, %v3814
      %v3817 = vshrl.u32 %v3802, 16
      %v3819 = vshll.u32 %v3802, 16
      %v3821 = vrot.slane %v3819, 1
      %v3822 = vor.u32 %v3817, %v3821
      %v3824 = vshrl.u32 %v3803, 16
      %v3826 = vshll.u32 %v3803, 16
      %v3828 = vrot.slane %v3826, 1
      %v3829 = vor.u32 %v3824, %v3828
      %v3831 = vshrl.u32 %v3804, 16
      %v3833 = vshll.u32 %v3804, 16
      %v3835 = vrot.slane %v3833, 1
      %v3836 = vor.u32 %v3831, %v3835
      %v3838 = vshrl.u32 %v3805, 16
      %v3840 = vshll.u32 %v3805, 16
      %v3842 = vrot.slane %v3840, 1
      %v3843 = vor.u32 %v3838, %v3842
      %v3845 = vshrl.u32 %v3806, 16
      %v3847 = vshll.u32 %v3806, 16
      %v3849 = vrot.slane %v3847, 1
      %v3850 = vor.u32 %v3845, %v3849
      %v3852 = vshrl.u32 %v3807, 16
      %v3854 = vshll.u32 %v3807, 16
      %v3856 = vrot.slane %v3854, 1
      %v3857 = vor.u32 %v3852, %v3856
      %v3859 = vshrl.u32 %v3808, 16
      %v3861 = vshll.u32 %v3808, 16
      %v3863 = vrot.slane %v3861, 1
      %v3864 = vor.u32 %v3859, %v3863
      %3865 = vrot.lane.b32.xlu0 %v3815, 64
      %v3866 = vpop.permute.xlu0 %3865
      %3867 = vrot.lane.b32.xlu0 %v3822, 64
      %v3868 = vpop.permute.xlu0 %3867
      %3869 = vrot.lane.b32.xlu0 %v3829, 64
      %v3870 = vpop.permute.xlu0 %3869
      %3871 = vrot.lane.b32.xlu0 %v3836, 64
      %v3872 = vpop.permute.xlu0 %3871
      %3873 = vrot.lane.b32.xlu0 %v3843, 64
      %v3874 = vpop.permute.xlu0 %3873
      %3875 = vrot.lane.b32.xlu0 %v3850, 64
      %v3876 = vpop.permute.xlu0 %3875
      %3877 = vrot.lane.b32.xlu0 %v3857, 64
      %v3878 = vpop.permute.xlu0 %3877
      %3879 = vrot.lane.b32.xlu0 %v3864, 64
      %v3880 = vpop.permute.xlu0 %3879
      %v3889 = vunpack.c.l.b16 %v3761
      %v3890 = vunpack.c.l.b16 %v3762
      %v3891 = vunpack.c.l.b16 %v3763
      %v3892 = vunpack.c.l.b16 %v3764
      %v3893 = vunpack.c.l.b16 %v3765
      %v3894 = vunpack.c.l.b16 %v3766
      %v3895 = vunpack.c.l.b16 %v3767
      %v3896 = vunpack.c.l.b16 %v3768
      %v3897 = vpack.c.b16 %v3786, %v3889
      %v3898 = vpack.c.b16 %v3788, %v3890
      %v3899 = vpack.c.b16 %v3790, %v3891
      %v3900 = vpack.c.b16 %v3792, %v3892
      %v3901 = vpack.c.b16 %v3794, %v3893
      %v3902 = vpack.c.b16 %v3796, %v3894
      %v3903 = vpack.c.b16 %v3798, %v3895
      %v3904 = vpack.c.b16 %v3800, %v3896
      %v3905 = vrot.slane %v3897, 1
      %v3906 = vrot.slane %v3898, 1
      %v3907 = vrot.slane %v3899, 1
      %v3908 = vrot.slane %v3900, 1
      %v3909 = vrot.slane %v3901, 1
      %v3910 = vrot.slane %v3902, 1
      %v3911 = vrot.slane %v3903, 1
      %v3912 = vrot.slane %v3904, 1
      %v3915 = vsel %vm1110, %v3745, %v3866
      %v3918 = vsel %vm1110, %v3746, %v3868
      %v3921 = vsel %vm1110, %v3747, %v3870
      %v3924 = vsel %vm1110, %v3748, %v3872
      %v3927 = vsel %vm1110, %v3749, %v3874
      %v3930 = vsel %vm1110, %v3750, %v3876
      %v3933 = vsel %vm1110, %v3751, %v3878
      %v3936 = vsel %vm1110, %v3752, %v3880
      %v3945 = vunpack.c.l.b16 %v3915
      %v3946 = vunpack.c.l.b16 %v3905
      %v3947 = vunpack.c.l.b16 %v3918
      %v3948 = vunpack.c.l.b16 %v3906
      %v3949 = vunpack.c.l.b16 %v3921
      %v3950 = vunpack.c.l.b16 %v3907
      %v3951 = vunpack.c.l.b16 %v3924
      %v3952 = vunpack.c.l.b16 %v3908
      %v3953 = vunpack.c.l.b16 %v3927
      %v3954 = vunpack.c.l.b16 %v3909
      %v3955 = vunpack.c.l.b16 %v3930
      %v3956 = vunpack.c.l.b16 %v3910
      %v3957 = vunpack.c.l.b16 %v3933
      %v3958 = vunpack.c.l.b16 %v3911
      %v3959 = vunpack.c.l.b16 %v3936
      %v3960 = vunpack.c.l.b16 %v3912
      %s3961 = scalar_lea.vmem %s7, 192
      %v3962 = vld [vmem:[%s3961] sm:$0xf]
      %v3963 = vld [vmem:[%s3961 + $0x4] sm:$0xf]
      %v3964 = vld [vmem:[%s3961 + $0x8] sm:$0xf]
      %v3965 = vld [vmem:[%s3961 + $0xc] sm:$0xf]
      %v3966 = vld [vmem:[%s3961 + $0x10] sm:$0xf]
      %v3967 = vld [vmem:[%s3961 + $0x14] sm:$0xf]
      %v3968 = vld [vmem:[%s3961 + $0x18] sm:$0xf]
      %v3969 = vld [vmem:[%s3961 + $0x1c] sm:$0xf]
      %v3970 = vld [vmem:[%s3961 + $0x20] sm:$0xf]
      %v3971 = vld [vmem:[%s3961 + $0x24] sm:$0xf]
      %v3972 = vld [vmem:[%s3961 + $0x28] sm:$0xf]
      %v3973 = vld [vmem:[%s3961 + $0x2c] sm:$0xf]
      %v3974 = vld [vmem:[%s3961 + $0x30] sm:$0xf]
      %v3975 = vld [vmem:[%s3961 + $0x34] sm:$0xf]
      %v3976 = vld [vmem:[%s3961 + $0x38] sm:$0xf]
      %v3977 = vld [vmem:[%s3961 + $0x3c] sm:$0xf]
      %v3978 = vld [vmem:[%s3961 + $0x40] sm:$0xf]
      %v3979 = vld [vmem:[%s3961 + $0x44] sm:$0xf]
      %v3980 = vld [vmem:[%s3961 + $0x48] sm:$0xf]
      %v3981 = vld [vmem:[%s3961 + $0x4c] sm:$0xf]
      %v3982 = vld [vmem:[%s3961 + $0x50] sm:$0xf]
      %v3983 = vld [vmem:[%s3961 + $0x54] sm:$0xf]
      %v3984 = vld [vmem:[%s3961 + $0x58] sm:$0xf]
      %v3985 = vld [vmem:[%s3961 + $0x5c] sm:$0xf]
      %v3986 = vpack.c.b16 %v3947, %v3945
      %v3987 = vpack.c.b16 %v3948, %v3946
      %v3988 = vpack.c.b16 %v3951, %v3949
      %v3989 = vpack.c.b16 %v3952, %v3950
      %v3990 = vpack.c.b16 %v3955, %v3953
      %v3991 = vpack.c.b16 %v3956, %v3954
      %v3992 = vpack.c.b16 %v3959, %v3957
      %v3993 = vpack.c.b16 %v3960, %v3958
      %v4022 = vunpack.c.l.b16 %v3962
      %v4023 = vunpack.c.l.b16 %v3963
      %v4024 = vunpack.c.l.b16 %v3964
      %v4025 = vunpack.c.l.b16 %v3965
      %v4026 = vunpack.c.l.b16 %v3966
      %v4027 = vunpack.c.l.b16 %v3967
      %v4028 = vunpack.c.l.b16 %v3968
      %v4029 = vunpack.c.l.b16 %v3969
      %v4030 = vunpack.c.l.b16 %v3970
      %v4031 = vunpack.c.l.b16 %v3971
      %v4032 = vunpack.c.l.b16 %v3972
      %v4033 = vunpack.c.l.b16 %v3973
      %v4034 = vunpack.c.l.b16 %v3974
      %v4035 = vunpack.c.l.b16 %v3975
      %v4036 = vunpack.c.l.b16 %v3976
      %v4037 = vunpack.c.l.b16 %v3977
      %v4038 = vunpack.c.l.b16 %v3978
      %v4039 = vunpack.c.l.b16 %v3979
      %v4040 = vunpack.c.l.b16 %v3980
      %v4041 = vunpack.c.l.b16 %v3981
      %v4042 = vunpack.c.l.b16 %v3982
      %v4043 = vunpack.c.l.b16 %v3983
      %v4044 = vunpack.c.l.b16 %v3984
      %v4045 = vunpack.c.l.b16 %v3985
      %v4046 = vpack.c.b16 %v4023, %v4022
      %v4047 = vpack.c.b16 %v4025, %v4024
      %v4048 = vpack.c.b16 %v4027, %v4026
      %v4049 = vpack.c.b16 %v4029, %v4028
      %v4050 = vpack.c.b16 %v4031, %v4030
      %v4051 = vpack.c.b16 %v4033, %v4032
      %v4052 = vpack.c.b16 %v4035, %v4034
      %v4053 = vpack.c.b16 %v4037, %v4036
      %v4054 = vpack.c.b16 %v4039, %v4038
      %v4055 = vpack.c.b16 %v4041, %v4040
      %v4056 = vpack.c.b16 %v4043, %v4042
      %v4057 = vpack.c.b16 %v4045, %v4044
      %v4071 = vsel %vm1110, %v3987, 0
      %v4074 = vsel %vm1110, %v3989, 0
      %v4077 = vsel %vm1110, %v3991, 0
      %v4080 = vsel %vm1110, %v3993, 0
      %4082 = vmatpush.bf16.msra.mxu0 %v4053
      %4083 = vmatpush.bf16.msra.mxu0 %v4052
      %4084 = vmatpush.bf16.msra.mxu0 %v4051
      %4085 = vmatpush.bf16.msra.mxu0 %v4050
      %4086 = vmatpush.bf16.msra.mxu0 %v4049
      %4087 = vmatpush.bf16.msra.mxu0 %v4048
      %4088 = vmatpush.bf16.msra.mxu0 %v4047
      %4089 = vmatpush.bf16.msra.mxu0 %v4046
      %4090 = vmatmul.bf16.gmra.mxu0 %v3986
      %v4091 = vpop.f32.mrf.mxu0
      %v4092 = vadd.f32 0.0, %v4091
      %v4093 = vpop.f32.mrf.mxu0
      %v4094 = vadd.f32 0.0, %v4093
      %4095 = vmatmul.bf16.gmra.mxu0 %v3988
      %v4096 = vpop.f32.mrf.mxu0
      %v4097 = vadd.f32 0.0, %v4096
      %v4098 = vpop.f32.mrf.mxu0
      %v4099 = vadd.f32 0.0, %v4098
      %4100 = vmatmul.bf16.gmra.mxu0 %v3990
      %v4101 = vpop.f32.mrf.mxu0
      %v4102 = vadd.f32 0.0, %v4101
      %v4103 = vpop.f32.mrf.mxu0
      %v4104 = vadd.f32 0.0, %v4103
      %4105 = vmatmul.bf16.gmra.mxu0 %v3992
      %v4106 = vpop.f32.mrf.mxu0
      %v4107 = vadd.f32 0.0, %v4106
      %v4108 = vpop.f32.mrf.mxu0
      %v4109 = vadd.f32 0.0, %v4108
      %4110 = vdwg.mxu0
      %4111 = vmatpush.bf16.msra.mxu0 0
      %4112 = vmatpush.bf16.msra.mxu0 0
      %4113 = vmatpush.bf16.msra.mxu0 0
      %4114 = vmatpush.bf16.msra.mxu0 0
      %4115 = vmatpush.bf16.msra.mxu0 %v4057
      %4116 = vmatpush.bf16.msra.mxu0 %v4056
      %4117 = vmatpush.bf16.msra.mxu0 %v4055
      %4118 = vmatpush.bf16.msra.mxu0 %v4054
      %4119 = vmatmul.bf16.gmra.mxu0 %v4071
      %v4120 = vpop.f32.mrf.mxu0
      %v4121 = vadd.f32 %v4092, %v4120
      %v4122 = vpop.f32.mrf.mxu0
      %v4123 = vadd.f32 %v4094, %v4122
      %4124 = vmatmul.bf16.gmra.mxu0 %v4074
      %v4125 = vpop.f32.mrf.mxu0
      %v4126 = vadd.f32 %v4097, %v4125
      %v4127 = vpop.f32.mrf.mxu0
      %v4128 = vadd.f32 %v4099, %v4127
      %4129 = vmatmul.bf16.gmra.mxu0 %v4077
      %v4130 = vpop.f32.mrf.mxu0
      %v4131 = vadd.f32 %v4102, %v4130
      %v4132 = vpop.f32.mrf.mxu0
      %v4133 = vadd.f32 %v4104, %v4132
      %4134 = vmatmul.bf16.gmra.mxu0 %v4080
      %v4135 = vpop.f32.mrf.mxu0
      %v4136 = vadd.f32 %v4107, %v4135
      %v4137 = vpop.f32.mrf.mxu0
      %v4138 = vadd.f32 %v4109, %v4137
      %4139 = vdwg.mxu0
      %v4140 = vadd.f32 %v3725, %v4121
      %v4141 = vadd.f32 %v3727, %v4123
      %v4142 = vadd.f32 %v3730, %v4126
      %v4143 = vadd.f32 %v3732, %v4128
      %v4144 = vadd.f32 %v3735, %v4131
      %v4145 = vadd.f32 %v3737, %v4133
      %v4146 = vadd.f32 %v3740, %v4136
      %v4147 = vadd.f32 %v3742, %v4138
      %v4148 = vld [vmem:[%s8] sm:$0x1]
      %v4150 = vperm.slane %v4148, 0
      %v4152 = vmul.f32 %v4140, %v4150
      %v4153 = vmul.f32 %v4141, %v4150
      %v4154 = vmul.f32 %v4142, %v4150
      %v4155 = vmul.f32 %v4143, %v4150
      %v4156 = vmul.f32 %v4144, %v4150
      %v4157 = vmul.f32 %v4145, %v4150
      %v4158 = vmul.f32 %v4146, %v4150
      %v4159 = vmul.f32 %v4147, %v4150
      %v4160 = vld [vmem:[%s9] sm:$0x1]
      %v4162 = vperm.slane %v4160, 0
      %v4164 = vadd.f32 %v4152, %v4162
      %v4165 = vadd.f32 %v4153, %v4162
      %v4166 = vadd.f32 %v4154, %v4162
      %v4167 = vadd.f32 %v4155, %v4162
      %v4168 = vadd.f32 %v4156, %v4162
      %v4169 = vadd.f32 %v4157, %v4162
      %v4170 = vadd.f32 %v4158, %v4162
      %v4171 = vadd.f32 %v4159, %v4162
      %v4172 = vmax.f32 %v4164, 0.0
      %v4173 = vmax.f32 %v4165, 0.0
      %v4174 = vmax.f32 %v4166, 0.0
      %v4175 = vmax.f32 %v4167, 0.0
      %v4176 = vmax.f32 %v4168, 0.0
      %v4177 = vmax.f32 %v4169, 0.0
      %v4178 = vmax.f32 %v4170, 0.0
      %v4179 = vmax.f32 %v4171, 0.0
      %v4180 = vpack.c.bf16 %v4172, %v4172
      %v4181 = vpack.c.bf16 %v4173, %v4173
      %v4182 = vpack.c.bf16 %v4174, %v4174
      %v4183 = vpack.c.bf16 %v4175, %v4175
      %v4184 = vpack.c.bf16 %v4176, %v4176
      %v4185 = vpack.c.bf16 %v4177, %v4177
      %v4186 = vpack.c.bf16 %v4178, %v4178
      %v4187 = vpack.c.bf16 %v4179, %v4179
      %4188 = vst.msk [vmem:[%s379] sm:$0xf] %vm2746, %v4180
      %4189 = vst.msk [vmem:[%s379 + $0x4] sm:$0xf] %vm2746, %v4181
      %4190 = vst.msk [vmem:[%s379 + $0x8] sm:$0xf] %vm2746, %v4182
      %4191 = vst.msk [vmem:[%s379 + $0xc] sm:$0xf] %vm2746, %v4183
      %4192 = vst.msk [vmem:[%s379 + $0x10] sm:$0xf] %vm2746, %v4184
      %4193 = vst.msk [vmem:[%s379 + $0x14] sm:$0xf] %vm2746, %v4185
      %4194 = vst.msk [vmem:[%s379 + $0x18] sm:$0xf] %vm2746, %v4186
      %4195 = vst.msk [vmem:[%s379 + $0x1c] sm:$0xf] %vm2746, %v4187
      %p4196 = scmp.lt.s32.totalorder %s21, 1
      %s4197 = scalar_select %p4196, %s21, 1
      %s4198 = smul.addr %s4197, 8
      %s4199 = smul.addr %s4198, 4
      %s4200 = scalar_lea.vmem %s10, %s4199
      // Predicated region
      $region61: #{decoder_forward.2} parent=59 // pred_check
        %p4201 = pneg %p259
      $region62: #{decoder_forward.2} parent=59 // pred_check_branch
        %4203 = sbr.rel (%p4201) target = $region64
      $region63: #{decoder_forward.2} parent=59 // pred_region
        _
      $region64: #{decoder_forward.2} parent=59 // pred_fallthru
        _
    $region60: #{decoder_forward.2} parent=5 // pred_fallthru
      _
    %p4204 = scmp.le.s32.totalorder 2, %s16
    // Predicated region
    $region65: #{decoder_forward.2} parent=5 // pred_check
      %p4205 = pneg %p4204
    $region66: #{decoder_forward.2} parent=5 // pred_check_branch
      %4207 = sbr.rel (%p4205) target = $region68
    $region67: #{decoder_forward.2} parent=5 // pred_region
      %s4208 = ssub.s32 %s16, 2
      // Predicated region
      $region69: #{decoder_forward.2} parent=67 // pred_check
        %p4209 = pneg %p265
      $region70: #{decoder_forward.2} parent=67 // pred_check_branch
        %4211 = sbr.rel (%p4209) target = $region72
      $region71: #{decoder_forward.2} parent=67 // pred_region
        %p4212 = scmp.lt.s32.totalorder %s22, 1
        %s4213 = scalar_select %p4212, %s22, 1
        %s4214 = smul.addr %s4213, 8
        %s4215 = smul.addr %s4214, 4
        %s4216 = scalar_lea.vmem %s10, %s4215
      $region72: #{decoder_forward.2} parent=67 // pred_fallthru
        _
    $region68: #{decoder_forward.2} parent=5 // pred_fallthru
      _
  $region6: #{decoder_forward.2} parent=0 // loop_footer
    %s20 = sadd.s32 1, %s16
  $region7: #{decoder_forward.2} parent=0 // loop_footer_branch
    %15 = sbr.rel target = $region3
  $region8: #{decoder_forward.2} parent=0 // loop_exit
    _

// kernel: decoder_forward.3
$region0: #{decoder_forward.3}
  #allocation0 [shape = 'u32[]', space=smem, size = 0x4, offset = 0x4, fixed_abs, tag = 'smem constant byte address 0x4 - core index']
  #allocation1 [shape = 'u32[72,128]{1,0:T(1,128)}', space=vmem, size = 0x9000, scoped, tag = 'internal scratch']
  #allocation2 [shape = 'bf16[18,18,64]{2,1,0:T(8,128)(2,1)}', space=vmem, size = 0x1b000, scoped, tag = 'scratch operand']
  #allocation3 [shape = 'bf16[18,18,32]{2,1,0:T(8,128)(2,1)}', space=vmem, size = 0x1b000, scoped, tag = 'scratch operand']
  %s0 = inlined_call_operand.vmem [shape: bf16[2,64,64], index: 0, kind: input, shape index: {}]
  %s1 = inlined_call_operand.vmem [shape: bf16[2,16,16,32], index: 1, kind: input, shape index: {}]
  %s2 = inlined_call_operand.vmem [shape: bf16[4,64,32], index: 2, kind: input, shape index: {}]
  %s3 = inlined_call_operand.vmem [shape: f32[1,32], index: 3, kind: input, shape index: {}]
  %s4 = inlined_call_operand.vmem [shape: bf16[3,192,32], index: 4, kind: input, shape index: {}]
  %s5 = inlined_call_operand.vmem [shape: f32[1,32], index: 5, kind: input, shape index: {}]
  %s6 = inlined_call_operand.vmem [shape: f32[1,32], index: 6, kind: input, shape index: {}]
  %s7 = inlined_call_operand.vmem [shape: bf16[3,96,32], index: 7, kind: input, shape index: {}]
  %s8 = inlined_call_operand.vmem [shape: f32[1,32], index: 8, kind: input, shape index: {}]
  %s9 = inlined_call_operand.vmem [shape: f32[1,32], index: 9, kind: input, shape index: {}]
  %s10 = inlined_call_operand.vmem [shape: bf16[32,3], index: 10, kind: input, shape index: {}]
  %s11 = inlined_call_operand.vmem [shape: f32[1,3], index: 11, kind: input, shape index: {}]
  %s12 = inlined_call_operand.vmem [shape: f32[2,256,3], index: 12, kind: output, shape index: {}]
  %s13 = sld [smem:[#allocation0]]
  $region81: #{decoder_forward.3} parent=0
    _
  %s15 = ssub.s32 1, %s13
  %s16 = scalar_select 0, %s15, %s13
  loop: start=0, step=1, limit=4
  $region2: #{decoder_forward.3} parent=0 // loop_pre_header
    _
  $region3: #{decoder_forward.3} parent=0 // loop_header
    %s18 = sphi 0, %s22
    %p19 = scmp.ge.s32.totalorder %s18, 4
    %s28 = sphi 0, %s30
    %s31 = sphi 0, %s28
    %s32 = sphi 0, %s31
    %s48 = sphi 0, %s32
    %s54 = sphi 0, %s56
    %s57 = sphi 0, %s54
    %s58 = sphi 0, %s57
    %s74 = sphi 0, %s58
    %s78 = sphi 0, %s78
    %s80 = sphi 0, %s78
    %s81 = sphi 0, %s80
    %s95 = sphi 0, %s81
    %s99 = sphi 0, %s99
    %s101 = sphi 0, %s99
    %s102 = sphi 0, %s101
    %s116 = sphi 0, %s102
    %s120 = sphi 0, %s120
    %s122 = sphi 0, %s120
    %s123 = sphi 0, %s122
    %s137 = sphi 0, %s123
    %s141 = sphi 0, %s141
    %s143 = sphi 0, %s141
    %s144 = sphi 0, %s143
    %s158 = sphi 0, %s144
    %s162 = sphi 0, %s162
    %s164 = sphi 0, %s162
    %s165 = sphi 0, %s164
    %s179 = sphi 0, %s165
    %s183 = sphi 0, %s183
    %s185 = sphi 0, %s183
    %s186 = sphi 0, %s185
    %s200 = sphi 0, %s186
    %s204 = sphi 0, %s204
    %s206 = sphi 0, %s204
    %s207 = sphi 0, %s206
    %s221 = sphi 0, %s207
    %s225 = sphi 0, %s225
    %s227 = sphi 0, %s225
    %s228 = sphi 0, %s227
    %s242 = sphi 0, %s228
    %s246 = sphi 0, %s246
    %s248 = sphi 0, %s246
    %s249 = sphi 0, %s248
    %s263 = sphi 0, %s249
    %s267 = sphi 0, %s267
    %s269 = sphi 0, %s267
    %s270 = sphi 0, %s269
    %s284 = sphi 0, %s270
    %s290 = sphi 0, %s292
    %s293 = sphi 0, %s290
    %s294 = sphi 0, %s293
    %s310 = sphi 0, %s294
  $region4: #{decoder_forward.3} parent=0 // loop_header_branch
    %21 = sbr.rel (%p19) target = $region8
  $region5: #{decoder_forward.3} parent=0 // loop_body
    %s23 = ssub.s32 %s18, 1
    %s24 = ssub.s32 %s18, 2
    %s25 = sadd.s32 %s18, 1
    %s26 = ssub.s32 %s18, %s25
    %p27 = scmp.eq.s32.totalorder %s26, 0
    %s29 = sadd.s32 %s28, 1
    %s30 = scalar_select %p27, %s28, %s29
    %p33 = pneg %p27
    %p34 = scmp.eq.s32.totalorder %s18, 1
    %p35 = por %p33, %p34
    %p36 = scmp.ne.s32.totalorder %s28, %s31
    %p37 = scmp.eq.s32.totalorder %s18, 0
    %p38 = por %p36, %p37
    %p39 = scmp.ne.s32.totalorder %s28, %s31
    %p40 = scmp.eq.s32.totalorder %s23, 1
    %p41 = por %p39, %p40
    %p42 = scmp.ne.s32.totalorder %s31, %s32
    %p43 = scmp.eq.s32.totalorder %s23, 0
    %p44 = por %p42, %p43
    %p45 = scmp.ne.s32.totalorder %s31, %s32
    %p46 = scmp.eq.s32.totalorder %s24, 1
    %p47 = por %p45, %p46
    %p49 = scmp.ne.s32.totalorder %s32, %s48
    %p50 = scmp.eq.s32.totalorder %s24, 0
    %p51 = por %p49, %p50
    %s52 = ssub.s32 %s18, %s25
    %p53 = scmp.eq.s32.totalorder %s52, 0
    %s55 = sadd.s32 %s54, 1
    %s56 = scalar_select %p53, %s54, %s55
    %p59 = pneg %p53
    %p60 = scmp.eq.s32.totalorder %s18, 1
    %p61 = por %p59, %p60
    %p62 = scmp.ne.s32.totalorder %s54, %s57
    %p63 = scmp.eq.s32.totalorder %s18, 0
    %p64 = por %p62, %p63
    %p65 = scmp.ne.s32.totalorder %s54, %s57
    %p66 = scmp.eq.s32.totalorder %s23, 1
    %p67 = por %p65, %p66
    %p68 = scmp.ne.s32.totalorder %s57, %s58
    %p69 = scmp.eq.s32.totalorder %s23, 0
    %p70 = por %p68, %p69
    %p71 = scmp.ne.s32.totalorder %s57, %s58
    %p72 = scmp.eq.s32.totalorder %s24, 1
    %p73 = por %p71, %p72
    %p75 = scmp.ne.s32.totalorder %s58, %s74
    %p76 = scmp.eq.s32.totalorder %s24, 0
    %p77 = por %p75, %p76
    %s79 = sadd.s32 %s78, 1
    %p82 = scmp.eq.s32.totalorder %s18, 1
    %p83 = scmp.ne.s32.totalorder %s78, %s80
    %p84 = scmp.eq.s32.totalorder %s18, 0
    %p85 = por %p83, %p84
    %p86 = scmp.ne.s32.totalorder %s78, %s80
    %p87 = scmp.eq.s32.totalorder %s23, 1
    %p88 = por %p86, %p87
    %p89 = scmp.ne.s32.totalorder %s80, %s81
    %p90 = scmp.eq.s32.totalorder %s23, 0
    %p91 = por %p89, %p90
    %p92 = scmp.ne.s32.totalorder %s80, %s81
    %p93 = scmp.eq.s32.totalorder %s24, 1
    %p94 = por %p92, %p93
    %p96 = scmp.ne.s32.totalorder %s81, %s95
    %p97 = scmp.eq.s32.totalorder %s24, 0
    %p98 = por %p96, %p97
    %s100 = sadd.s32 %s99, 1
    %p103 = scmp.eq.s32.totalorder %s18, 1
    %p104 = scmp.ne.s32.totalorder %s99, %s101
    %p105 = scmp.eq.s32.totalorder %s18, 0
    %p106 = por %p104, %p105
    %p107 = scmp.ne.s32.totalorder %s99, %s101
    %p108 = scmp.eq.s32.totalorder %s23, 1
    %p109 = por %p107, %p108
    %p110 = scmp.ne.s32.totalorder %s101, %s102
    %p111 = scmp.eq.s32.totalorder %s23, 0
    %p112 = por %p110, %p111
    %p113 = scmp.ne.s32.totalorder %s101, %s102
    %p114 = scmp.eq.s32.totalorder %s24, 1
    %p115 = por %p113, %p114
    %p117 = scmp.ne.s32.totalorder %s102, %s116
    %p118 = scmp.eq.s32.totalorder %s24, 0
    %p119 = por %p117, %p118
    %s121 = sadd.s32 %s120, 1
    %p124 = scmp.eq.s32.totalorder %s18, 1
    %p125 = scmp.ne.s32.totalorder %s120, %s122
    %p126 = scmp.eq.s32.totalorder %s18, 0
    %p127 = por %p125, %p126
    %p128 = scmp.ne.s32.totalorder %s120, %s122
    %p129 = scmp.eq.s32.totalorder %s23, 1
    %p130 = por %p128, %p129
    %p131 = scmp.ne.s32.totalorder %s122, %s123
    %p132 = scmp.eq.s32.totalorder %s23, 0
    %p133 = por %p131, %p132
    %p134 = scmp.ne.s32.totalorder %s122, %s123
    %p135 = scmp.eq.s32.totalorder %s24, 1
    %p136 = por %p134, %p135
    %p138 = scmp.ne.s32.totalorder %s123, %s137
    %p139 = scmp.eq.s32.totalorder %s24, 0
    %p140 = por %p138, %p139
    %s142 = sadd.s32 %s141, 1
    %p145 = scmp.eq.s32.totalorder %s18, 1
    %p146 = scmp.ne.s32.totalorder %s141, %s143
    %p147 = scmp.eq.s32.totalorder %s18, 0
    %p148 = por %p146, %p147
    %p149 = scmp.ne.s32.totalorder %s141, %s143
    %p150 = scmp.eq.s32.totalorder %s23, 1
    %p151 = por %p149, %p150
    %p152 = scmp.ne.s32.totalorder %s143, %s144
    %p153 = scmp.eq.s32.totalorder %s23, 0
    %p154 = por %p152, %p153
    %p155 = scmp.ne.s32.totalorder %s143, %s144
    %p156 = scmp.eq.s32.totalorder %s24, 1
    %p157 = por %p155, %p156
    %p159 = scmp.ne.s32.totalorder %s144, %s158
    %p160 = scmp.eq.s32.totalorder %s24, 0
    %p161 = por %p159, %p160
    %s163 = sadd.s32 %s162, 1
    %p166 = scmp.eq.s32.totalorder %s18, 1
    %p167 = scmp.ne.s32.totalorder %s162, %s164
    %p168 = scmp.eq.s32.totalorder %s18, 0
    %p169 = por %p167, %p168
    %p170 = scmp.ne.s32.totalorder %s162, %s164
    %p171 = scmp.eq.s32.totalorder %s23, 1
    %p172 = por %p170, %p171
    %p173 = scmp.ne.s32.totalorder %s164, %s165
    %p174 = scmp.eq.s32.totalorder %s23, 0
    %p175 = por %p173, %p174
    %p176 = scmp.ne.s32.totalorder %s164, %s165
    %p177 = scmp.eq.s32.totalorder %s24, 1
    %p178 = por %p176, %p177
    %p180 = scmp.ne.s32.totalorder %s165, %s179
    %p181 = scmp.eq.s32.totalorder %s24, 0
    %p182 = por %p180, %p181
    %s184 = sadd.s32 %s183, 1
    %p187 = scmp.eq.s32.totalorder %s18, 1
    %p188 = scmp.ne.s32.totalorder %s183, %s185
    %p189 = scmp.eq.s32.totalorder %s18, 0
    %p190 = por %p188, %p189
    %p191 = scmp.ne.s32.totalorder %s183, %s185
    %p192 = scmp.eq.s32.totalorder %s23, 1
    %p193 = por %p191, %p192
    %p194 = scmp.ne.s32.totalorder %s185, %s186
    %p195 = scmp.eq.s32.totalorder %s23, 0
    %p196 = por %p194, %p195
    %p197 = scmp.ne.s32.totalorder %s185, %s186
    %p198 = scmp.eq.s32.totalorder %s24, 1
    %p199 = por %p197, %p198
    %p201 = scmp.ne.s32.totalorder %s186, %s200
    %p202 = scmp.eq.s32.totalorder %s24, 0
    %p203 = por %p201, %p202
    %s205 = sadd.s32 %s204, 1
    %p208 = scmp.eq.s32.totalorder %s18, 1
    %p209 = scmp.ne.s32.totalorder %s204, %s206
    %p210 = scmp.eq.s32.totalorder %s18, 0
    %p211 = por %p209, %p210
    %p212 = scmp.ne.s32.totalorder %s204, %s206
    %p213 = scmp.eq.s32.totalorder %s23, 1
    %p214 = por %p212, %p213
    %p215 = scmp.ne.s32.totalorder %s206, %s207
    %p216 = scmp.eq.s32.totalorder %s23, 0
    %p217 = por %p215, %p216
    %p218 = scmp.ne.s32.totalorder %s206, %s207
    %p219 = scmp.eq.s32.totalorder %s24, 1
    %p220 = por %p218, %p219
    %p222 = scmp.ne.s32.totalorder %s207, %s221
    %p223 = scmp.eq.s32.totalorder %s24, 0
    %p224 = por %p222, %p223
    %s226 = sadd.s32 %s225, 1
    %p229 = scmp.eq.s32.totalorder %s18, 1
    %p230 = scmp.ne.s32.totalorder %s225, %s227
    %p231 = scmp.eq.s32.totalorder %s18, 0
    %p232 = por %p230, %p231
    %p233 = scmp.ne.s32.totalorder %s225, %s227
    %p234 = scmp.eq.s32.totalorder %s23, 1
    %p235 = por %p233, %p234
    %p236 = scmp.ne.s32.totalorder %s227, %s228
    %p237 = scmp.eq.s32.totalorder %s23, 0
    %p238 = por %p236, %p237
    %p239 = scmp.ne.s32.totalorder %s227, %s228
    %p240 = scmp.eq.s32.totalorder %s24, 1
    %p241 = por %p239, %p240
    %p243 = scmp.ne.s32.totalorder %s228, %s242
    %p244 = scmp.eq.s32.totalorder %s24, 0
    %p245 = por %p243, %p244
    %s247 = sadd.s32 %s246, 1
    %p250 = scmp.eq.s32.totalorder %s18, 1
    %p251 = scmp.ne.s32.totalorder %s246, %s248
    %p252 = scmp.eq.s32.totalorder %s18, 0
    %p253 = por %p251, %p252
    %p254 = scmp.ne.s32.totalorder %s246, %s248
    %p255 = scmp.eq.s32.totalorder %s23, 1
    %p256 = por %p254, %p255
    %p257 = scmp.ne.s32.totalorder %s248, %s249
    %p258 = scmp.eq.s32.totalorder %s23, 0
    %p259 = por %p257, %p258
    %p260 = scmp.ne.s32.totalorder %s248, %s249
    %p261 = scmp.eq.s32.totalorder %s24, 1
    %p262 = por %p260, %p261
    %p264 = scmp.ne.s32.totalorder %s249, %s263
    %p265 = scmp.eq.s32.totalorder %s24, 0
    %p266 = por %p264, %p265
    %s268 = sadd.s32 %s267, 1
    %p271 = scmp.eq.s32.totalorder %s18, 1
    %p272 = scmp.ne.s32.totalorder %s267, %s269
    %p273 = scmp.eq.s32.totalorder %s18, 0
    %p274 = por %p272, %p273
    %p275 = scmp.ne.s32.totalorder %s267, %s269
    %p276 = scmp.eq.s32.totalorder %s23, 1
    %p277 = por %p275, %p276
    %p278 = scmp.ne.s32.totalorder %s269, %s270
    %p279 = scmp.eq.s32.totalorder %s23, 0
    %p280 = por %p278, %p279
    %p281 = scmp.ne.s32.totalorder %s269, %s270
    %p282 = scmp.eq.s32.totalorder %s24, 1
    %p283 = por %p281, %p282
    %p285 = scmp.ne.s32.totalorder %s270, %s284
    %p286 = scmp.eq.s32.totalorder %s24, 0
    %p287 = por %p285, %p286
    %s288 = ssub.s32 %s18, %s25
    %p289 = scmp.eq.s32.totalorder %s288, 0
    %s291 = sadd.s32 %s290, 1
    %s292 = scalar_select %p289, %s290, %s291
    %p295 = pneg %p289
    %p296 = scmp.eq.s32.totalorder %s18, 1
    %p297 = por %p295, %p296
    %p298 = scmp.ne.s32.totalorder %s290, %s293
    %p299 = scmp.eq.s32.totalorder %s18, 0
    %p300 = por %p298, %p299
    %p301 = scmp.ne.s32.totalorder %s290, %s293
    %p302 = scmp.eq.s32.totalorder %s23, 1
    %p303 = por %p301, %p302
    %p304 = scmp.ne.s32.totalorder %s293, %s294
    %p305 = scmp.eq.s32.totalorder %s23, 0
    %p306 = por %p304, %p305
    %p307 = scmp.ne.s32.totalorder %s293, %s294
    %p308 = scmp.eq.s32.totalorder %s24, 1
    %p309 = por %p307, %p308
    %p311 = scmp.ne.s32.totalorder %s294, %s310
    %p312 = scmp.eq.s32.totalorder %s24, 0
    %p313 = por %p311, %p312
    %p314 = scmp.le.s32.totalorder 1, %s18
    %p315 = scmp.lt.s32.totalorder %s18, 3
    %p316 = pnand %p314, %p315
    %p317 = pneg %p316
    // Predicated region
    $region9: #{decoder_forward.3} parent=5 // pred_check
      _
    $region10: #{decoder_forward.3} parent=5 // pred_check_branch
      %319 = sbr.rel (%p316) target = $region12
    $region11: #{decoder_forward.3} parent=5 // pred_region
      %s320 = ssub.s32 %s18, 1
      // Predicated region
      $region13: #{decoder_forward.3} parent=11 // pred_check
        %p321 = pneg %p91
      $region14: #{decoder_forward.3} parent=11 // pred_check_branch
        %323 = sbr.rel (%p321) target = $region16
      $region15: #{decoder_forward.3} parent=11 // pred_region
        _
      $region16: #{decoder_forward.3} parent=11 // pred_fallthru
        _
      // Predicated region
      $region17: #{decoder_forward.3} parent=11 // pred_check
        %p324 = pneg %p112
      $region18: #{decoder_forward.3} parent=11 // pred_check_branch
        %326 = sbr.rel (%p324) target = $region20
      $region19: #{decoder_forward.3} parent=11 // pred_region
        _
      $region20: #{decoder_forward.3} parent=11 // pred_fallthru
        _
      // Predicated region
      $region21: #{decoder_forward.3} parent=11 // pred_check
        %p327 = pneg %p133
      $region22: #{decoder_forward.3} parent=11 // pred_check_branch
        %329 = sbr.rel (%p327) target = $region24
      $region23: #{decoder_forward.3} parent=11 // pred_region
        _
      $region24: #{decoder_forward.3} parent=11 // pred_fallthru
        _
      // Predicated region
      $region25: #{decoder_forward.3} parent=11 // pred_check
        %p330 = pneg %p154
      $region26: #{decoder_forward.3} parent=11 // pred_check_branch
        %332 = sbr.rel (%p330) target = $region28
      $region27: #{decoder_forward.3} parent=11 // pred_region
        _
      $region28: #{decoder_forward.3} parent=11 // pred_fallthru
        _
      // Predicated region
      $region29: #{decoder_forward.3} parent=11 // pred_check
        %p333 = pneg %p175
      $region30: #{decoder_forward.3} parent=11 // pred_check_branch
        %335 = sbr.rel (%p333) target = $region32
      $region31: #{decoder_forward.3} parent=11 // pred_region
        _
      $region32: #{decoder_forward.3} parent=11 // pred_fallthru
        _
      // Predicated region
      $region33: #{decoder_forward.3} parent=11 // pred_check
        %p336 = pneg %p196
      $region34: #{decoder_forward.3} parent=11 // pred_check_branch
        %338 = sbr.rel (%p336) target = $region36
      $region35: #{decoder_forward.3} parent=11 // pred_region
        _
      $region36: #{decoder_forward.3} parent=11 // pred_fallthru
        _
      // Predicated region
      $region37: #{decoder_forward.3} parent=11 // pred_check
        %p339 = pneg %p217
      $region38: #{decoder_forward.3} parent=11 // pred_check_branch
        %341 = sbr.rel (%p339) target = $region40
      $region39: #{decoder_forward.3} parent=11 // pred_region
        _
      $region40: #{decoder_forward.3} parent=11 // pred_fallthru
        _
      // Predicated region
      $region41: #{decoder_forward.3} parent=11 // pred_check
        %p342 = pneg %p238
      $region42: #{decoder_forward.3} parent=11 // pred_check_branch
        %344 = sbr.rel (%p342) target = $region44
      $region43: #{decoder_forward.3} parent=11 // pred_region
        _
      $region44: #{decoder_forward.3} parent=11 // pred_fallthru
        _
      // Predicated region
      $region45: #{decoder_forward.3} parent=11 // pred_check
        %p345 = pneg %p259
      $region46: #{decoder_forward.3} parent=11 // pred_check_branch
        %347 = sbr.rel (%p345) target = $region48
      $region47: #{decoder_forward.3} parent=11 // pred_region
        _
      $region48: #{decoder_forward.3} parent=11 // pred_fallthru
        _
      // Predicated region
      $region49: #{decoder_forward.3} parent=11 // pred_check
        %p348 = pneg %p280
      $region50: #{decoder_forward.3} parent=11 // pred_check_branch
        %350 = sbr.rel (%p348) target = $region52
      $region51: #{decoder_forward.3} parent=11 // pred_region
        _
      $region52: #{decoder_forward.3} parent=11 // pred_fallthru
        _
    $region12: #{decoder_forward.3} parent=5 // pred_fallthru
      _
    %p351 = scmp.lt.s32.totalorder %s18, 2
    // Predicated region
    $region53: #{decoder_forward.3} parent=5 // pred_check
      %p352 = pneg %p351
    $region54: #{decoder_forward.3} parent=5 // pred_check_branch
      %354 = sbr.rel (%p352) target = $region56
    $region55: #{decoder_forward.3} parent=5 // pred_region
      // Predicated region
      $region57: #{decoder_forward.3} parent=55 // pred_check
        %p355 = pneg %p38
      $region58: #{decoder_forward.3} parent=55 // pred_check_branch
        %357 = sbr.rel (%p355) target = $region60
      $region59: #{decoder_forward.3} parent=55 // pred_region
        %p358 = scmp.lt.s32.totalorder %s18, 1
        %s359 = scalar_select %p358, %s18, 1
        %s360 = smul.addr %s359, 8
        %s361 = smul.addr %s360, 4
        %s362 = scalar_lea.vmem %s0, %s361
      $region60: #{decoder_forward.3} parent=55 // pred_fallthru
        _
      // Predicated region
      $region61: #{decoder_forward.3} parent=55 // pred_check
        %p363 = pneg %p64
      $region62: #{decoder_forward.3} parent=55 // pred_check_branch
        %365 = sbr.rel (%p363) target = $region64
      $region63: #{decoder_forward.3} parent=55 // pred_region
        %p366 = scmp.lt.s32.totalorder %s18, 1
        %s367 = scalar_select %p366, %s18, 1
        %s368 = smul.addr %s367, 32
        %s369 = smul.addr %s368, 4
        %s370 = scalar_lea.vmem %s1, %s369
      $region64: #{decoder_forward.3} parent=55 // pred_fallthru
        _
    $region56: #{decoder_forward.3} parent=5 // pred_fallthru
      _
    %p371 = scmp.le.s32.totalorder 1, %s18
    %p372 = scmp.lt.s32.totalorder %s18, 3
    %p373 = pnand %p371, %p372
    %p374 = pneg %p373
    // Predicated region
    $region65: #{decoder_forward.3} parent=5 // pred_check
      _
    $region66: #{decoder_forward.3} parent=5 // pred_check_branch
      %376 = sbr.rel (%p373) target = $region68
    $region67: #{decoder_forward.3} parent=5 // pred_region
      %s377 = ssub.s32 %s18, 1
      %p378 = scmp.lt.s32.totalorder %s23, 1
      %s379 = scalar_select %p378, %s23, 1
      %s380 = smul.addr %s379, 8
      %s381 = smul.addr %s380, 4
      %s382 = scalar_lea.vmem %s0, %s381
      %p383 = pneg %p44
      %p384 = pneg %p41
      %p385 = scmp.lt.s32.totalorder %s23, 1
      %s386 = scalar_select %p385, %s23, 1
      %s387 = smul.addr %s386, 32
      %s388 = smul.addr %s387, 4
      %s389 = scalar_lea.vmem %s1, %s388
      %p390 = pneg %p70
      %p391 = pneg %p67
      %p392 = pneg %p91
      %p393 = pneg %p88
      %p394 = pneg %p112
      %p395 = pneg %p109
      %p396 = pneg %p133
      %p397 = pneg %p130
      %p398 = pneg %p154
      %p399 = pneg %p151
      %p400 = pneg %p175
      %p401 = pneg %p172
      %p402 = pneg %p196
      %p403 = pneg %p193
      %p404 = pneg %p217
      %p405 = pneg %p214
      %p406 = pneg %p238
      %p407 = pneg %p235
      %p408 = pneg %p259
      %p409 = pneg %p256
      %p410 = pneg %p280
      %p411 = pneg %p277
      %p412 = pneg %p306
      %p413 = pneg %p303
      %p414 = scmp.lt.s32.totalorder %s23, 1
      %s415 = scalar_select %p414, %s23, 1
      %s416 = smul.addr %s415, 32
      %s417 = smul.addr %s416, 8
      %s418 = scalar_lea.vmem %s12, %s417
      %p419 = scmp.lt.s32.totalorder %s23, 1
      %s420 = scalar_select %p419, %s23, 1
      %s421 = smul.addr %s420, 8
      %s422 = smul.addr %s421, 4
      %s423 = scalar_lea.vmem %s0, %s422
      %p424 = scmp.lt.s32.totalorder %s23, 1
      %s425 = scalar_select %p424, %s23, 1
      %s426 = smul.addr %s425, 32
      %s427 = smul.addr %s426, 4
      %s428 = scalar_lea.vmem %s1, %s427
      %p429 = scmp.lt.s32.totalorder %s23, 1
      %s430 = scalar_select %p429, %s23, 1
      %s431 = smul.addr %s430, 32
      %s432 = smul.addr %s431, 8
      %s433 = scalar_lea.vmem %s12, %s432
      %v435 = vld [vmem:[%s423] sm:$0xf]
      %v436 = vld [vmem:[%s423 + $0x4] sm:$0xf]
      %v437 = vld [vmem:[%s423 + $0x8] sm:$0xf]
      %v438 = vld [vmem:[%s423 + $0xc] sm:$0xf]
      %v439 = vld [vmem:[%s423 + $0x10] sm:$0xf]
      %v440 = vld [vmem:[%s423 + $0x14] sm:$0xf]
      %v441 = vld [vmem:[%s423 + $0x18] sm:$0xf]
      %v442 = vld [vmem:[%s423 + $0x1c] sm:$0xf]
      %v443 = vld [vmem:[%s3] sm:$0x1]
      %v444 = vld [vmem:[%s2] sm:$0xf]
      %v445 = vld [vmem:[%s2 + $0x4] sm:$0xf]
      %v446 = vld [vmem:[%s2 + $0x8] sm:$0xf]
      %v447 = vld [vmem:[%s2 + $0xc] sm:$0xf]
      %v448 = vld [vmem:[%s2 + $0x10] sm:$0xf]
      %v449 = vld [vmem:[%s2 + $0x14] sm:$0xf]
      %v450 = vld [vmem:[%s2 + $0x18] sm:$0xf]
      %v451 = vld [vmem:[%s2 + $0x1c] sm:$0xf]
      %v453 = vperm.slane %v443, 0
      %v463 = vunpack.c.l.b16 %v435
      %v464 = vunpack.c.l.b16 %v436
      %v465 = vunpack.c.l.b16 %v437
      %v466 = vunpack.c.l.b16 %v438
      %v467 = vunpack.c.l.b16 %v439
      %v468 = vunpack.c.l.b16 %v440
      %v469 = vunpack.c.l.b16 %v441
      %v470 = vunpack.c.l.b16 %v442
      %v471 = vpack.c.b16 %v464, %v463
      %v472 = vpack.c.b16 %v466, %v465
      %v473 = vpack.c.b16 %v468, %v467
      %v474 = vpack.c.b16 %v470, %v469
      %v483 = vunpack.c.l.b16 %v444
      %v484 = vunpack.c.l.b16 %v445
      %v485 = vunpack.c.l.b16 %v446
      %v486 = vunpack.c.l.b16 %v447
      %v487 = vunpack.c.l.b16 %v448
      %v488 = vunpack.c.l.b16 %v449
      %v489 = vunpack.c.l.b16 %v450
      %v490 = vunpack.c.l.b16 %v451
      %v491 = vpack.c.b16 %v484, %v483
      %v492 = vpack.c.b16 %v486, %v485
      %v493 = vpack.c.b16 %v488, %v487
      %v494 = vpack.c.b16 %v490, %v489
      %vm499 = vcmask 523264
      %v501 = vsel %vm499, %v471, 0
      %v504 = vsel %vm499, %v472, 0
      %v507 = vsel %vm499, %v473, 0
      %v510 = vsel %vm499, %v474, 0
      %512 = vmatpush.bf16.msra.mxu0 0
      %513 = vmatpush.bf16.msra.mxu0 0
      %514 = vmatpush.bf16.msra.mxu0 0
      %515 = vmatpush.bf16.msra.mxu0 0
      %516 = vmatpush.bf16.msra.mxu0 %v494
      %517 = vmatpush.bf16.msra.mxu0 %v493
      %518 = vmatpush.bf16.msra.mxu0 %v492
      %519 = vmatpush.bf16.msra.mxu0 %v491
      %520 = vmatmul.bf16.gmra.mxu0 %v501
      %v521 = vpop.f32.mrf.mxu0
      %v522 = vadd.f32 %v453, %v521
      %v523 = vpop.f32.mrf.mxu0
      %v524 = vadd.f32 %v453, %v523
      %525 = vmatmul.bf16.gmra.mxu0 %v504
      %v526 = vpop.f32.mrf.mxu0
      %v527 = vadd.f32 %v453, %v526
      %v528 = vpop.f32.mrf.mxu0
      %v529 = vadd.f32 %v453, %v528
      %530 = vmatmul.bf16.gmra.mxu0 %v507
      %v531 = vpop.f32.mrf.mxu0
      %v532 = vadd.f32 %v453, %v531
      %v533 = vpop.f32.mrf.mxu0
      %v534 = vadd.f32 %v453, %v533
      %535 = vmatmul.bf16.gmra.mxu0 %v510
      %v536 = vpop.f32.mrf.mxu0
      %v537 = vadd.f32 %v453, %v536
      %v538 = vpop.f32.mrf.mxu0
      %v539 = vadd.f32 %v453, %v538
      %540 = vdwg.mxu0
      %s541 = scalar_lea.vmem %s2, 32
      %v542 = vld [vmem:[%s541] sm:$0xf]
      %v543 = vld [vmem:[%s541 + $0x4] sm:$0xf]
      %v544 = vld [vmem:[%s541 + $0x8] sm:$0xf]
      %v545 = vld [vmem:[%s541 + $0xc] sm:$0xf]
      %v546 = vld [vmem:[%s541 + $0x10] sm:$0xf]
      %v547 = vld [vmem:[%s541 + $0x14] sm:$0xf]
      %v548 = vld [vmem:[%s541 + $0x18] sm:$0xf]
      %v549 = vld [vmem:[%s541 + $0x1c] sm:$0xf]
      %v558 = vunpack.c.l.b16 %v542
      %v559 = vunpack.c.l.b16 %v543
      %v560 = vunpack.c.l.b16 %v544
      %v561 = vunpack.c.l.b16 %v545
      %v562 = vunpack.c.l.b16 %v546
      %v563 = vunpack.c.l.b16 %v547
      %v564 = vunpack.c.l.b16 %v548
      %v565 = vunpack.c.l.b16 %v549
      %v566 = vpack.c.b16 %v559, %v558
      %v567 = vpack.c.b16 %v561, %v560
      %v568 = vpack.c.b16 %v563, %v562
      %v569 = vpack.c.b16 %v565, %v564
      %574 = vmatpush.bf16.msra.mxu0 0
      %575 = vmatpush.bf16.msra.mxu0 0
      %576 = vmatpush.bf16.msra.mxu0 0
      %577 = vmatpush.bf16.msra.mxu0 0
      %578 = vmatpush.bf16.msra.mxu0 %v569
      %579 = vmatpush.bf16.msra.mxu0 %v568
      %580 = vmatpush.bf16.msra.mxu0 %v567
      %581 = vmatpush.bf16.msra.mxu0 %v566
      %582 = vmatmul.bf16.gmra.mxu0 %v501
      %v583 = vpop.f32.mrf.mxu0
      %v584 = vadd.f32 %v453, %v583
      %v585 = vpop.f32.mrf.mxu0
      %v586 = vadd.f32 %v453, %v585
      %587 = vmatmul.bf16.gmra.mxu0 %v504
      %v588 = vpop.f32.mrf.mxu0
      %v589 = vadd.f32 %v453, %v588
      %v590 = vpop.f32.mrf.mxu0
      %v591 = vadd.f32 %v453, %v590
      %592 = vmatmul.bf16.gmra.mxu0 %v507
      %v593 = vpop.f32.mrf.mxu0
      %v594 = vadd.f32 %v453, %v593
      %v595 = vpop.f32.mrf.mxu0
      %v596 = vadd.f32 %v453, %v595
      %597 = vmatmul.bf16.gmra.mxu0 %v510
      %v598 = vpop.f32.mrf.mxu0
      %v599 = vadd.f32 %v453, %v598
      %v600 = vpop.f32.mrf.mxu0
      %v601 = vadd.f32 %v453, %v600
      %602 = vdwg.mxu0
      %s603 = scalar_lea.vmem %s2, 64
      %v604 = vld [vmem:[%s603] sm:$0xf]
      %v605 = vld [vmem:[%s603 + $0x4] sm:$0xf]
      %v606 = vld [vmem:[%s603 + $0x8] sm:$0xf]
      %v607 = vld [vmem:[%s603 + $0xc] sm:$0xf]
      %v608 = vld [vmem:[%s603 + $0x10] sm:$0xf]
      %v609 = vld [vmem:[%s603 + $0x14] sm:$0xf]
      %v610 = vld [vmem:[%s603 + $0x18] sm:$0xf]
      %v611 = vld [vmem:[%s603 + $0x1c] sm:$0xf]
      %v620 = vunpack.c.l.b16 %v604
      %v621 = vunpack.c.l.b16 %v605
      %v622 = vunpack.c.l.b16 %v606
      %v623 = vunpack.c.l.b16 %v607
      %v624 = vunpack.c.l.b16 %v608
      %v625 = vunpack.c.l.b16 %v609
      %v626 = vunpack.c.l.b16 %v610
      %v627 = vunpack.c.l.b16 %v611
      %v628 = vpack.c.b16 %v621, %v620
      %v629 = vpack.c.b16 %v623, %v622
      %v630 = vpack.c.b16 %v625, %v624
      %v631 = vpack.c.b16 %v627, %v626
      %636 = vmatpush.bf16.msra.mxu0 0
      %637 = vmatpush.bf16.msra.mxu0 0
      %638 = vmatpush.bf16.msra.mxu0 0
      %639 = vmatpush.bf16.msra.mxu0 0
      %640 = vmatpush.bf16.msra.mxu0 %v631
      %641 = vmatpush.bf16.msra.mxu0 %v630
      %642 = vmatpush.bf16.msra.mxu0 %v629
      %643 = vmatpush.bf16.msra.mxu0 %v628
      %644 = vmatmul.bf16.gmra.mxu0 %v501
      %v645 = vpop.f32.mrf.mxu0
      %v646 = vadd.f32 %v453, %v645
      %v647 = vpop.f32.mrf.mxu0
      %v648 = vadd.f32 %v453, %v647
      %649 = vmatmul.bf16.gmra.mxu0 %v504
      %v650 = vpop.f32.mrf.mxu0
      %v651 = vadd.f32 %v453, %v650
      %v652 = vpop.f32.mrf.mxu0
      %v653 = vadd.f32 %v453, %v652
      %654 = vmatmul.bf16.gmra.mxu0 %v507
      %v655 = vpop.f32.mrf.mxu0
      %v656 = vadd.f32 %v453, %v655
      %v657 = vpop.f32.mrf.mxu0
      %v658 = vadd.f32 %v453, %v657
      %659 = vmatmul.bf16.gmra.mxu0 %v510
      %v660 = vpop.f32.mrf.mxu0
      %v661 = vadd.f32 %v453, %v660
      %v662 = vpop.f32.mrf.mxu0
      %v663 = vadd.f32 %v453, %v662
      %664 = vdwg.mxu0
      %s665 = scalar_lea.vmem %s2, 96
      %v666 = vld [vmem:[%s665] sm:$0xf]
      %v667 = vld [vmem:[%s665 + $0x4] sm:$0xf]
      %v668 = vld [vmem:[%s665 + $0x8] sm:$0xf]
      %v669 = vld [vmem:[%s665 + $0xc] sm:$0xf]
      %v670 = vld [vmem:[%s665 + $0x10] sm:$0xf]
      %v671 = vld [vmem:[%s665 + $0x14] sm:$0xf]
      %v672 = vld [vmem:[%s665 + $0x18] sm:$0xf]
      %v673 = vld [vmem:[%s665 + $0x1c] sm:$0xf]
      %v682 = vunpack.c.l.b16 %v666
      %v683 = vunpack.c.l.b16 %v667
      %v684 = vunpack.c.l.b16 %v668
      %v685 = vunpack.c.l.b16 %v669
      %v686 = vunpack.c.l.b16 %v670
      %v687 = vunpack.c.l.b16 %v671
      %v688 = vunpack.c.l.b16 %v672
      %v689 = vunpack.c.l.b16 %v673
      %v690 = vpack.c.b16 %v683, %v682
      %v691 = vpack.c.b16 %v685, %v684
      %v692 = vpack.c.b16 %v687, %v686
      %v693 = vpack.c.b16 %v689, %v688
      %698 = vmatpush.bf16.msra.mxu0 0
      %699 = vmatpush.bf16.msra.mxu0 0
      %700 = vmatpush.bf16.msra.mxu0 0
      %701 = vmatpush.bf16.msra.mxu0 0
      %702 = vmatpush.bf16.msra.mxu0 %v693
      %703 = vmatpush.bf16.msra.mxu0 %v692
      %704 = vmatpush.bf16.msra.mxu0 %v691
      %705 = vmatpush.bf16.msra.mxu0 %v690
      %706 = vmatmul.bf16.gmra.mxu0 %v501
      %v707 = vpop.f32.mrf.mxu0
      %v708 = vadd.f32 %v453, %v707
      %v709 = vpop.f32.mrf.mxu0
      %v710 = vadd.f32 %v453, %v709
      %711 = vmatmul.bf16.gmra.mxu0 %v504
      %v712 = vpop.f32.mrf.mxu0
      %v713 = vadd.f32 %v453, %v712
      %v714 = vpop.f32.mrf.mxu0
      %v715 = vadd.f32 %v453, %v714
      %716 = vmatmul.bf16.gmra.mxu0 %v507
      %v717 = vpop.f32.mrf.mxu0
      %v718 = vadd.f32 %v453, %v717
      %v719 = vpop.f32.mrf.mxu0
      %v720 = vadd.f32 %v453, %v719
      %721 = vmatmul.bf16.gmra.mxu0 %v510
      %v722 = vpop.f32.mrf.mxu0
      %v723 = vadd.f32 %v453, %v722
      %v724 = vpop.f32.mrf.mxu0
      %v725 = vadd.f32 %v453, %v724
      %726 = vdwg.mxu0
      %v735 = vrot.slane %v522, 1
      %v736 = vrot.slane %v522, 2
      %v737 = vrot.slane %v522, 3
      %v738 = vrot.slane %v522, 4
      %v739 = vrot.slane %v522, 5
      %v740 = vrot.slane %v522, 6
      %v741 = vrot.slane %v522, 7
      %v742 = vrot.slane %v524, 1
      %v743 = vrot.slane %v524, 2
      %v744 = vrot.slane %v524, 3
      %v745 = vrot.slane %v524, 4
      %v746 = vrot.slane %v524, 5
      %v747 = vrot.slane %v524, 6
      %v748 = vrot.slane %v524, 7
      %v749 = vrot.slane %v527, 1
      %v750 = vrot.slane %v527, 2
      %v751 = vrot.slane %v527, 3
      %v752 = vrot.slane %v527, 4
      %v753 = vrot.slane %v527, 5
      %v754 = vrot.slane %v527, 6
      %v755 = vrot.slane %v527, 7
      %v756 = vrot.slane %v529, 1
      %v757 = vrot.slane %v529, 2
      %v758 = vrot.slane %v529, 3
      %v759 = vrot.slane %v529, 4
      %v760 = vrot.slane %v529, 5
      %v761 = vrot.slane %v529, 6
      %v762 = vrot.slane %v529, 7
      %v763 = vrot.slane %v532, 1
      %v764 = vrot.slane %v532, 2
      %v765 = vrot.slane %v532, 3
      %v766 = vrot.slane %v532, 4
      %v767 = vrot.slane %v532, 5
      %v768 = vrot.slane %v532, 6
      %v769 = vrot.slane %v532, 7
      %v770 = vrot.slane %v534, 1
      %v771 = vrot.slane %v534, 2
      %v772 = vrot.slane %v534, 3
      %v773 = vrot.slane %v534, 4
      %v774 = vrot.slane %v534, 5
      %v775 = vrot.slane %v534, 6
      %v776 = vrot.slane %v534, 7
      %v777 = vrot.slane %v537, 1
      %v778 = vrot.slane %v537, 2
      %v779 = vrot.slane %v537, 3
      %v780 = vrot.slane %v537, 4
      %v781 = vrot.slane %v537, 5
      %v782 = vrot.slane %v537, 6
      %v783 = vrot.slane %v537, 7
      %v784 = vrot.slane %v539, 1
      %v785 = vrot.slane %v539, 2
      %v786 = vrot.slane %v539, 3
      %v787 = vrot.slane %v539, 4
      %v788 = vrot.slane %v539, 5
      %v789 = vrot.slane %v539, 6
      %v790 = vrot.slane %v539, 7
      %v855 = vrot.slane %v584, 1
      %v856 = vrot.slane %v584, 2
      %v857 = vrot.slane %v584, 3
      %v858 = vrot.slane %v584, 4
      %v859 = vrot.slane %v584, 5
      %v860 = vrot.slane %v584, 6
      %v861 = vrot.slane %v584, 7
      %v862 = vrot.slane %v586, 1
      %v863 = vrot.slane %v586, 2
      %v864 = vrot.slane %v586, 3
      %v865 = vrot.slane %v586, 4
      %v866 = vrot.slane %v586, 5
      %v867 = vrot.slane %v586, 6
      %v868 = vrot.slane %v586, 7
      %v869 = vrot.slane %v589, 1
      %v870 = vrot.slane %v589, 2
      %v871 = vrot.slane %v589, 3
      %v872 = vrot.slane %v589, 4
      %v873 = vrot.slane %v589, 5
      %v874 = vrot.slane %v589, 6
      %v875 = vrot.slane %v589, 7
      %v876 = vrot.slane %v591, 1
      %v877 = vrot.slane %v591, 2
      %v878 = vrot.slane %v591, 3
      %v879 = vrot.slane %v591, 4
      %v880 = vrot.slane %v591, 5
      %v881 = vrot.slane %v591, 6
      %v882 = vrot.slane %v591, 7
      %v883 = vrot.slane %v594, 1
      %v884 = vrot.slane %v594, 2
      %v885 = vrot.slane %v594, 3
      %v886 = vrot.slane %v594, 4
      %v887 = vrot.slane %v594, 5
      %v888 = vrot.slane %v594, 6
      %v889 = vrot.slane %v594, 7
      %v890 = vrot.slane %v596, 1
      %v891 = vrot.slane %v596, 2
      %v892 = vrot.slane %v596, 3
      %v893 = vrot.slane %v596, 4
      %v894 = vrot.slane %v596, 5
      %v895 = vrot.slane %v596, 6
      %v896 = vrot.slane %v596, 7
      %v897 = vrot.slane %v599, 1
      %v898 = vrot.slane %v599, 2
      %v899 = vrot.slane %v599, 3
      %v900 = vrot.slane %v599, 4
      %v901 = vrot.slane %v599, 5
      %v902 = vrot.slane %v599, 6
      %v903 = vrot.slane %v599, 7
      %v904 = vrot.slane %v601, 1
      %v905 = vrot.slane %v601, 2
      %v906 = vrot.slane %v601, 3
      %v907 = vrot.slane %v601, 4
      %v908 = vrot.slane %v601, 5
      %v909 = vrot.slane %v601, 6
      %v910 = vrot.slane %v601, 7
      %v911 = vperm.slane %v584, 0
      %v912 = vperm.slane %v855, 0
      %v913 = vperm.slane %v856, 0
      %v914 = vperm.slane %v857, 0
      %v915 = vperm.slane %v858, 0
      %v916 = vperm.slane %v859, 0
      %v917 = vperm.slane %v860, 0
      %v918 = vperm.slane %v861, 0
      %v919 = vperm.slane %v586, 0
      %v920 = vperm.slane %v862, 0
      %v921 = vperm.slane %v863, 0
      %v922 = vperm.slane %v864, 0
      %v923 = vperm.slane %v865, 0
      %v924 = vperm.slane %v866, 0
      %v925 = vperm.slane %v867, 0
      %v926 = vperm.slane %v868, 0
      %v927 = vperm.slane %v589, 0
      %v928 = vperm.slane %v869, 0
      %v929 = vperm.slane %v870, 0
      %v930 = vperm.slane %v871, 0
      %v931 = vperm.slane %v872, 0
      %v932 = vperm.slane %v873, 0
      %v933 = vperm.slane %v874, 0
      %v934 = vperm.slane %v875, 0
      %v935 = vperm.slane %v591, 0
      %v936 = vperm.slane %v876, 0
      %v937 = vperm.slane %v877, 0
      %v938 = vperm.slane %v878, 0
      %v939 = vperm.slane %v879, 0
      %v940 = vperm.slane %v880, 0
      %v941 = vperm.slane %v881, 0
      %v942 = vperm.slane %v882, 0
      %v943 = vperm.slane %v594, 0
      %v944 = vperm.slane %v883, 0
      %v945 = vperm.slane %v884, 0
      %v946 = vperm.slane %v885, 0
      %v947 = vperm.slane %v886, 0
      %v948 = vperm.slane %v887, 0
      %v949 = vperm.slane %v888, 0
      %v950 = vperm.slane %v889, 0
      %v951 = vperm.slane %v596, 0
      %v952 = vperm.slane %v890, 0
      %v953 = vperm.slane %v891, 0
      %v954 = vperm.slane %v892, 0
      %v955 = vperm.slane %v893, 0
      %v956 = vperm.slane %v894, 0
      %v957 = vperm.slane %v895, 0
      %v958 = vperm.slane %v896, 0
      %v959 = vperm.slane %v599, 0
      %v960 = vperm.slane %v897, 0
      %v961 = vperm.slane %v898, 0
      %v962 = vperm.slane %v899, 0
      %v963 = vperm.slane %v900, 0
      %v964 = vperm.slane %v901, 0
      %v965 = vperm.slane %v902, 0
      %v966 = vperm.slane %v903, 0
      %v967 = vperm.slane %v601, 0
      %v968 = vperm.slane %v904, 0
      %v969 = vperm.slane %v905, 0
      %v970 = vperm.slane %v906, 0
      %v971 = vperm.slane %v907, 0
      %v972 = vperm.slane %v908, 0
      %v973 = vperm.slane %v909, 0
      %v974 = vperm.slane %v910, 0
      %vm1039 = vcmask 1040384
      %v1040 = vsel %vm1039, %v522, %v911
      %v1041 = vsel %vm1039, %v735, %v912
      %v1042 = vsel %vm1039, %v736, %v913
      %v1043 = vsel %vm1039, %v737, %v914
      %v1044 = vsel %vm1039, %v738, %v915
      %v1045 = vsel %vm1039, %v739, %v916
      %v1046 = vsel %vm1039, %v740, %v917
      %v1047 = vsel %vm1039, %v741, %v918
      %v1048 = vsel %vm1039, %v524, %v919
      %v1049 = vsel %vm1039, %v742, %v920
      %v1050 = vsel %vm1039, %v743, %v921
      %v1051 = vsel %vm1039, %v744, %v922
      %v1052 = vsel %vm1039, %v745, %v923
      %v1053 = vsel %vm1039, %v746, %v924
      %v1054 = vsel %vm1039, %v747, %v925
      %v1055 = vsel %vm1039, %v748, %v926
      %v1056 = vsel %vm1039, %v527, %v927
      %v1057 = vsel %vm1039, %v749, %v928
      %v1058 = vsel %vm1039, %v750, %v929
      %v1059 = vsel %vm1039, %v751, %v930
      %v1060 = vsel %vm1039, %v752, %v931
      %v1061 = vsel %vm1039, %v753, %v932
      %v1062 = vsel %vm1039, %v754, %v933
      %v1063 = vsel %vm1039, %v755, %v934
      %v1064 = vsel %vm1039, %v529, %v935
      %v1065 = vsel %vm1039, %v756, %v936
      %v1066 = vsel %vm1039, %v757, %v937
      %v1067 = vsel %vm1039, %v758, %v938
      %v1068 = vsel %vm1039, %v759, %v939
      %v1069 = vsel %vm1039, %v760, %v940
      %v1070 = vsel %vm1039, %v761, %v941
      %v1071 = vsel %vm1039, %v762, %v942
      %v1072 = vsel %vm1039, %v532, %v943
      %v1073 = vsel %vm1039, %v763, %v944
      %v1074 = vsel %vm1039, %v764, %v945
      %v1075 = vsel %vm1039, %v765, %v946
      %v1076 = vsel %vm1039, %v766, %v947
      %v1077 = vsel %vm1039, %v767, %v948
      %v1078 = vsel %vm1039, %v768, %v949
      %v1079 = vsel %vm1039, %v769, %v950
      %v1080 = vsel %vm1039, %v534, %v951
      %v1081 = vsel %vm1039, %v770, %v952
      %v1082 = vsel %vm1039, %v771, %v953
      %v1083 = vsel %vm1039, %v772, %v954
      %v1084 = vsel %vm1039, %v773, %v955
      %v1085 = vsel %vm1039, %v774, %v956
      %v1086 = vsel %vm1039, %v775, %v957
      %v1087 = vsel %vm1039, %v776, %v958
      %v1088 = vsel %vm1039, %v537, %v959
      %v1089 = vsel %vm1039, %v777, %v960
      %v1090 = vsel %vm1039, %v778, %v961
      %v1091 = vsel %vm1039, %v779, %v962
      %v1092 = vsel %vm1039, %v780, %v963
      %v1093 = vsel %vm1039, %v781, %v964
      %v1094 = vsel %vm1039, %v782, %v965
      %v1095 = vsel %vm1039, %v783, %v966
      %v1096 = vsel %vm1039, %v539, %v967
      %v1097 = vsel %vm1039, %v784, %v968
      %v1098 = vsel %vm1039, %v785, %v969
      %v1099 = vsel %vm1039, %v786, %v970
      %v1100 = vsel %vm1039, %v787, %v971
      %v1101 = vsel %vm1039, %v788, %v972
      %v1102 = vsel %vm1039, %v789, %v973
      %v1103 = vsel %vm1039, %v790, %v974
      %v1112 = vrot.slane %v646, 1
      %v1113 = vrot.slane %v646, 2
      %v1114 = vrot.slane %v646, 3
      %v1115 = vrot.slane %v646, 4
      %v1116 = vrot.slane %v646, 5
      %v1117 = vrot.slane %v646, 6
      %v1118 = vrot.slane %v646, 7
      %v1119 = vrot.slane %v648, 1
      %v1120 = vrot.slane %v648, 2
      %v1121 = vrot.slane %v648, 3
      %v1122 = vrot.slane %v648, 4
      %v1123 = vrot.slane %v648, 5
      %v1124 = vrot.slane %v648, 6
      %v1125 = vrot.slane %v648, 7
      %v1126 = vrot.slane %v651, 1
      %v1127 = vrot.slane %v651, 2
      %v1128 = vrot.slane %v651, 3
      %v1129 = vrot.slane %v651, 4
      %v1130 = vrot.slane %v651, 5
      %v1131 = vrot.slane %v651, 6
      %v1132 = vrot.slane %v651, 7
      %v1133 = vrot.slane %v653, 1
      %v1134 = vrot.slane %v653, 2
      %v1135 = vrot.slane %v653, 3
      %v1136 = vrot.slane %v653, 4
      %v1137 = vrot.slane %v653, 5
      %v1138 = vrot.slane %v653, 6
      %v1139 = vrot.slane %v653, 7
      %v1140 = vrot.slane %v656, 1
      %v1141 = vrot.slane %v656, 2
      %v1142 = vrot.slane %v656, 3
      %v1143 = vrot.slane %v656, 4
      %v1144 = vrot.slane %v656, 5
      %v1145 = vrot.slane %v656, 6
      %v1146 = vrot.slane %v656, 7
      %v1147 = vrot.slane %v658, 1
      %v1148 = vrot.slane %v658, 2
      %v1149 = vrot.slane %v658, 3
      %v1150 = vrot.slane %v658, 4
      %v1151 = vrot.slane %v658, 5
      %v1152 = vrot.slane %v658, 6
      %v1153 = vrot.slane %v658, 7
      %v1154 = vrot.slane %v661, 1
      %v1155 = vrot.slane %v661, 2
      %v1156 = vrot.slane %v661, 3
      %v1157 = vrot.slane %v661, 4
      %v1158 = vrot.slane %v661, 5
      %v1159 = vrot.slane %v661, 6
      %v1160 = vrot.slane %v661, 7
      %v1161 = vrot.slane %v663, 1
      %v1162 = vrot.slane %v663, 2
      %v1163 = vrot.slane %v663, 3
      %v1164 = vrot.slane %v663, 4
      %v1165 = vrot.slane %v663, 5
      %v1166 = vrot.slane %v663, 6
      %v1167 = vrot.slane %v663, 7
      %v1232 = vrot.slane %v708, 1
      %v1233 = vrot.slane %v708, 2
      %v1234 = vrot.slane %v708, 3
      %v1235 = vrot.slane %v708, 4
      %v1236 = vrot.slane %v708, 5
      %v1237 = vrot.slane %v708, 6
      %v1238 = vrot.slane %v708, 7
      %v1239 = vrot.slane %v710, 1
      %v1240 = vrot.slane %v710, 2
      %v1241 = vrot.slane %v710, 3
      %v1242 = vrot.slane %v710, 4
      %v1243 = vrot.slane %v710, 5
      %v1244 = vrot.slane %v710, 6
      %v1245 = vrot.slane %v710, 7
      %v1246 = vrot.slane %v713, 1
      %v1247 = vrot.slane %v713, 2
      %v1248 = vrot.slane %v713, 3
      %v1249 = vrot.slane %v713, 4
      %v1250 = vrot.slane %v713, 5
      %v1251 = vrot.slane %v713, 6
      %v1252 = vrot.slane %v713, 7
      %v1253 = vrot.slane %v715, 1
      %v1254 = vrot.slane %v715, 2
      %v1255 = vrot.slane %v715, 3
      %v1256 = vrot.slane %v715, 4
      %v1257 = vrot.slane %v715, 5
      %v1258 = vrot.slane %v715, 6
      %v1259 = vrot.slane %v715, 7
      %v1260 = vrot.slane %v718, 1
      %v1261 = vrot.slane %v718, 2
      %v1262 = vrot.slane %v718, 3
      %v1263 = vrot.slane %v718, 4
      %v1264 = vrot.slane %v718, 5
      %v1265 = vrot.slane %v718, 6
      %v1266 = vrot.slane %v718, 7
      %v1267 = vrot.slane %v720, 1
      %v1268 = vrot.slane %v720, 2
      %v1269 = vrot.slane %v720, 3
      %v1270 = vrot.slane %v720, 4
      %v1271 = vrot.slane %v720, 5
      %v1272 = vrot.slane %v720, 6
      %v1273 = vrot.slane %v720, 7
      %v1274 = vrot.slane %v723, 1
      %v1275 = vrot.slane %v723, 2
      %v1276 = vrot.slane %v723, 3
      %v1277 = vrot.slane %v723, 4
      %v1278 = vrot.slane %v723, 5
      %v1279 = vrot.slane %v723, 6
      %v1280 = vrot.slane %v723, 7
      %v1281 = vrot.slane %v725, 1
      %v1282 = vrot.slane %v725, 2
      %v1283 = vrot.slane %v725, 3
      %v1284 = vrot.slane %v725, 4
      %v1285 = vrot.slane %v725, 5
      %v1286 = vrot.slane %v725, 6
      %v1287 = vrot.slane %v725, 7
      %v1288 = vperm.slane %v708, 0
      %v1289 = vperm.slane %v1232, 0
      %v1290 = vperm.slane %v1233, 0
      %v1291 = vperm.slane %v1234, 0
      %v1292 = vperm.slane %v1235, 0
      %v1293 = vperm.slane %v1236, 0
      %v1294 = vperm.slane %v1237, 0
      %v1295 = vperm.slane %v1238, 0
      %v1296 = vperm.slane %v710, 0
      %v1297 = vperm.slane %v1239, 0
      %v1298 = vperm.slane %v1240, 0
      %v1299 = vperm.slane %v1241, 0
      %v1300 = vperm.slane %v1242, 0
      %v1301 = vperm.slane %v1243, 0
      %v1302 = vperm.slane %v1244, 0
      %v1303 = vperm.slane %v1245, 0
      %v1304 = vperm.slane %v713, 0
      %v1305 = vperm.slane %v1246, 0
      %v1306 = vperm.slane %v1247, 0
      %v1307 = vperm.slane %v1248, 0
      %v1308 = vperm.slane %v1249, 0
      %v1309 = vperm.slane %v1250, 0
      %v1310 = vperm.slane %v1251, 0
      %v1311 = vperm.slane %v1252, 0
      %v1312 = vperm.slane %v715, 0
      %v1313 = vperm.slane %v1253, 0
      %v1314 = vperm.slane %v1254, 0
      %v1315 = vperm.slane %v1255, 0
      %v1316 = vperm.slane %v1256, 0
      %v1317 = vperm.slane %v1257, 0
      %v1318 = vperm.slane %v1258, 0
      %v1319 = vperm.slane %v1259, 0
      %v1320 = vperm.slane %v718, 0
      %v1321 = vperm.slane %v1260, 0
      %v1322 = vperm.slane %v1261, 0
      %v1323 = vperm.slane %v1262, 0
      %v1324 = vperm.slane %v1263, 0
      %v1325 = vperm.slane %v1264, 0
      %v1326 = vperm.slane %v1265, 0
      %v1327 = vperm.slane %v1266, 0
      %v1328 = vperm.slane %v720, 0
      %v1329 = vperm.slane %v1267, 0
      %v1330 = vperm.slane %v1268, 0
      %v1331 = vperm.slane %v1269, 0
      %v1332 = vperm.slane %v1270, 0
      %v1333 = vperm.slane %v1271, 0
      %v1334 = vperm.slane %v1272, 0
      %v1335 = vperm.slane %v1273, 0
      %v1336 = vperm.slane %v723, 0
      %v1337 = vperm.slane %v1274, 0
      %v1338 = vperm.slane %v1275, 0
      %v1339 = vperm.slane %v1276, 0
      %v1340 = vperm.slane %v1277, 0
      %v1341 = vperm.slane %v1278, 0
      %v1342 = vperm.slane %v1279, 0
      %v1343 = vperm.slane %v1280, 0
      %v1344 = vperm.slane %v725, 0
      %v1345 = vperm.slane %v1281, 0
      %v1346 = vperm.slane %v1282, 0
      %v1347 = vperm.slane %v1283, 0
      %v1348 = vperm.slane %v1284, 0
      %v1349 = vperm.slane %v1285, 0
      %v1350 = vperm.slane %v1286, 0
      %v1351 = vperm.slane %v1287, 0
      %v1416 = vsel %vm1039, %v646, %v1288
      %v1417 = vsel %vm1039, %v1112, %v1289
      %v1418 = vsel %vm1039, %v1113, %v1290
      %v1419 = vsel %vm1039, %v1114, %v1291
      %v1420 = vsel %vm1039, %v1115, %v1292
      %v1421 = vsel %vm1039, %v1116, %v1293
      %v1422 = vsel %vm1039, %v1117, %v1294
      %v1423 = vsel %vm1039, %v1118, %v1295
      %v1424 = vsel %vm1039, %v648, %v1296
      %v1425 = vsel %vm1039, %v1119, %v1297
      %v1426 = vsel %vm1039, %v1120, %v1298
      %v1427 = vsel %vm1039, %v1121, %v1299
      %v1428 = vsel %vm1039, %v1122, %v1300
      %v1429 = vsel %vm1039, %v1123, %v1301
      %v1430 = vsel %vm1039, %v1124, %v1302
      %v1431 = vsel %vm1039, %v1125, %v1303
      %v1432 = vsel %vm1039, %v651, %v1304
      %v1433 = vsel %vm1039, %v1126, %v1305
      %v1434 = vsel %vm1039, %v1127, %v1306
      %v1435 = vsel %vm1039, %v1128, %v1307
      %v1436 = vsel %vm1039, %v1129, %v1308
      %v1437 = vsel %vm1039, %v1130, %v1309
      %v1438 = vsel %vm1039, %v1131, %v1310
      %v1439 = vsel %vm1039, %v1132, %v1311
      %v1440 = vsel %vm1039, %v653, %v1312
      %v1441 = vsel %vm1039, %v1133, %v1313
      %v1442 = vsel %vm1039, %v1134, %v1314
      %v1443 = vsel %vm1039, %v1135, %v1315
      %v1444 = vsel %vm1039, %v1136, %v1316
      %v1445 = vsel %vm1039, %v1137, %v1317
      %v1446 = vsel %vm1039, %v1138, %v1318
      %v1447 = vsel %vm1039, %v1139, %v1319
      %v1448 = vsel %vm1039, %v656, %v1320
      %v1449 = vsel %vm1039, %v1140, %v1321
      %v1450 = vsel %vm1039, %v1141, %v1322
      %v1451 = vsel %vm1039, %v1142, %v1323
      %v1452 = vsel %vm1039, %v1143, %v1324
      %v1453 = vsel %vm1039, %v1144, %v1325
      %v1454 = vsel %vm1039, %v1145, %v1326
      %v1455 = vsel %vm1039, %v1146, %v1327
      %v1456 = vsel %vm1039, %v658, %v1328
      %v1457 = vsel %vm1039, %v1147, %v1329
      %v1458 = vsel %vm1039, %v1148, %v1330
      %v1459 = vsel %vm1039, %v1149, %v1331
      %v1460 = vsel %vm1039, %v1150, %v1332
      %v1461 = vsel %vm1039, %v1151, %v1333
      %v1462 = vsel %vm1039, %v1152, %v1334
      %v1463 = vsel %vm1039, %v1153, %v1335
      %v1464 = vsel %vm1039, %v661, %v1336
      %v1465 = vsel %vm1039, %v1154, %v1337
      %v1466 = vsel %vm1039, %v1155, %v1338
      %v1467 = vsel %vm1039, %v1156, %v1339
      %v1468 = vsel %vm1039, %v1157, %v1340
      %v1469 = vsel %vm1039, %v1158, %v1341
      %v1470 = vsel %vm1039, %v1159, %v1342
      %v1471 = vsel %vm1039, %v1160, %v1343
      %v1472 = vsel %vm1039, %v663, %v1344
      %v1473 = vsel %vm1039, %v1161, %v1345
      %v1474 = vsel %vm1039, %v1162, %v1346
      %v1475 = vsel %vm1039, %v1163, %v1347
      %v1476 = vsel %vm1039, %v1164, %v1348
      %v1477 = vsel %vm1039, %v1165, %v1349
      %v1478 = vsel %vm1039, %v1166, %v1350
      %v1479 = vsel %vm1039, %v1167, %v1351
      %vm1480 = vcmask 519168
      %1481 = vst.msk [vmem:[#allocation2] sm:$0xf] %vm1480, 0
      %1482 = vst.msk [vmem:[#allocation2 + $0x4] sm:$0xf] %vm1480, 0
      %vm1483 = vcmask 516096
      %1484 = vst.msk [vmem:[#allocation2 + $0x8] sm:$0x1] %vm1483, 0
      %s1485 = scalar_lea.vmem [#allocation2], 204
      %1486 = vst.msk [vmem:[%s1485] sm:$0xf] %vm1480, 0
      %1487 = vst.msk [vmem:[%s1485 + $0x4] sm:$0xf] %vm1480, 0
      %1488 = vst.msk [vmem:[%s1485 + $0x8] sm:$0x1] %vm1483, 0
      %vm1489 = vcmask 516096
      %vm1490 = vsmask.f32 256
      %vm1491 = vmand %vm1489, %vm1490
      %v1492 = vld [vmem:[#allocation2] sm:$0x1]
      %v1493 = vsel %vm1491, 0, %v1492
      %1494 = vst [vmem:[#allocation2] sm:$0x1] %v1493
      %v1495 = vld [vmem:[#allocation2 + $0xc] sm:$0x1]
      %v1496 = vsel %vm1491, 0, %v1495
      %1497 = vst [vmem:[#allocation2 + $0xc] sm:$0x1] %v1496
      %v1498 = vld [vmem:[#allocation2 + $0x18] sm:$0x1]
      %v1499 = vsel %vm1491, 0, %v1498
      %1500 = vst [vmem:[#allocation2 + $0x18] sm:$0x1] %v1499
      %v1501 = vld [vmem:[#allocation2 + $0x24] sm:$0x1]
      %v1502 = vsel %vm1491, 0, %v1501
      %1503 = vst [vmem:[#allocation2 + $0x24] sm:$0x1] %v1502
      %v1504 = vld [vmem:[#allocation2 + $0x30] sm:$0x1]
      %v1505 = vsel %vm1491, 0, %v1504
      %1506 = vst [vmem:[#allocation2 + $0x30] sm:$0x1] %v1505
      %v1507 = vld [vmem:[#allocation2 + $0x3c] sm:$0x1]
      %v1508 = vsel %vm1491, 0, %v1507
      %1509 = vst [vmem:[#allocation2 + $0x3c] sm:$0x1] %v1508
      %v1510 = vld [vmem:[#allocation2 + $0x48] sm:$0x1]
      %v1511 = vsel %vm1491, 0, %v1510
      %1512 = vst [vmem:[#allocation2 + $0x48] sm:$0x1] %v1511
      %v1513 = vld [vmem:[#allocation2 + $0x54] sm:$0x1]
      %v1514 = vsel %vm1491, 0, %v1513
      %1515 = vst [vmem:[#allocation2 + $0x54] sm:$0x1] %v1514
      %v1516 = vld [vmem:[#allocation2 + $0x60] sm:$0x1]
      %v1517 = vsel %vm1491, 0, %v1516
      %1518 = vst [vmem:[#allocation2 + $0x60] sm:$0x1] %v1517
      %v1519 = vld [vmem:[#allocation2 + $0x6c] sm:$0x1]
      %v1520 = vsel %vm1491, 0, %v1519
      %1521 = vst [vmem:[#allocation2 + $0x6c] sm:$0x1] %v1520
      %v1522 = vld [vmem:[#allocation2 + $0x78] sm:$0x1]
      %v1523 = vsel %vm1491, 0, %v1522
      %1524 = vst [vmem:[#allocation2 + $0x78] sm:$0x1] %v1523
      %v1525 = vld [vmem:[#allocation2 + $0x84] sm:$0x1]
      %v1526 = vsel %vm1491, 0, %v1525
      %1527 = vst [vmem:[#allocation2 + $0x84] sm:$0x1] %v1526
      %v1528 = vld [vmem:[#allocation2 + $0x90] sm:$0x1]
      %v1529 = vsel %vm1491, 0, %v1528
      %1530 = vst [vmem:[#allocation2 + $0x90] sm:$0x1] %v1529
      %v1531 = vld [vmem:[#allocation2 + $0x9c] sm:$0x1]
      %v1532 = vsel %vm1491, 0, %v1531
      %1533 = vst [vmem:[#allocation2 + $0x9c] sm:$0x1] %v1532
      %v1534 = vld [vmem:[#allocation2 + $0xa8] sm:$0x1]
      %v1535 = vsel %vm1491, 0, %v1534
      %1536 = vst [vmem:[#allocation2 + $0xa8] sm:$0x1] %v1535
      %v1537 = vld [vmem:[#allocation2 + $0xb4] sm:$0x1]
      %v1538 = vsel %vm1491, 0, %v1537
      %1539 = vst [vmem:[#allocation2 + $0xb4] sm:$0x1] %v1538
      %v1540 = vld [vmem:[#allocation2 + $0xc0] sm:$0x1]
      %v1541 = vsel %vm1491, 0, %v1540
      %1542 = vst [vmem:[#allocation2 + $0xc0] sm:$0x1] %v1541
      %v1543 = vld [vmem:[#allocation2 + $0xcc] sm:$0x1]
      %v1544 = vsel %vm1491, 0, %v1543
      %1545 = vst [vmem:[#allocation2 + $0xcc] sm:$0x1] %v1544
      %vm1546 = vsmask.f32 7938
      %vm1547 = vmand %vm1489, %vm1546
      %v1548 = vld [vmem:[#allocation2 + $0x8] sm:$0x1]
      %v1549 = vsel %vm1547, 0, %v1548
      %1550 = vst [vmem:[#allocation2 + $0x8] sm:$0x1] %v1549
      %v1551 = vld [vmem:[#allocation2 + $0x14] sm:$0x1]
      %v1552 = vsel %vm1547, 0, %v1551
      %1553 = vst [vmem:[#allocation2 + $0x14] sm:$0x1] %v1552
      %v1554 = vld [vmem:[#allocation2 + $0x20] sm:$0x1]
      %v1555 = vsel %vm1547, 0, %v1554
      %1556 = vst [vmem:[#allocation2 + $0x20] sm:$0x1] %v1555
      %v1557 = vld [vmem:[#allocation2 + $0x2c] sm:$0x1]
      %v1558 = vsel %vm1547, 0, %v1557
      %1559 = vst [vmem:[#allocation2 + $0x2c] sm:$0x1] %v1558
      %v1560 = vld [vmem:[#allocation2 + $0x38] sm:$0x1]
      %v1561 = vsel %vm1547, 0, %v1560
      %1562 = vst [vmem:[#allocation2 + $0x38] sm:$0x1] %v1561
      %v1563 = vld [vmem:[#allocation2 + $0x44] sm:$0x1]
      %v1564 = vsel %vm1547, 0, %v1563
      %1565 = vst [vmem:[#allocation2 + $0x44] sm:$0x1] %v1564
      %v1566 = vld [vmem:[#allocation2 + $0x50] sm:$0x1]
      %v1567 = vsel %vm1547, 0, %v1566
      %1568 = vst [vmem:[#allocation2 + $0x50] sm:$0x1] %v1567
      %v1569 = vld [vmem:[#allocation2 + $0x5c] sm:$0x1]
      %v1570 = vsel %vm1547, 0, %v1569
      %1571 = vst [vmem:[#allocation2 + $0x5c] sm:$0x1] %v1570
      %v1572 = vld [vmem:[#allocation2 + $0x68] sm:$0x1]
      %v1573 = vsel %vm1547, 0, %v1572
      %1574 = vst [vmem:[#allocation2 + $0x68] sm:$0x1] %v1573
      %v1575 = vld [vmem:[#allocation2 + $0x74] sm:$0x1]
      %v1576 = vsel %vm1547, 0, %v1575
      %1577 = vst [vmem:[#allocation2 + $0x74] sm:$0x1] %v1576
      %v1578 = vld [vmem:[#allocation2 + $0x80] sm:$0x1]
      %v1579 = vsel %vm1547, 0, %v1578
      %1580 = vst [vmem:[#allocation2 + $0x80] sm:$0x1] %v1579
      %v1581 = vld [vmem:[#allocation2 + $0x8c] sm:$0x1]
      %v1582 = vsel %vm1547, 0, %v1581
      %1583 = vst [vmem:[#allocation2 + $0x8c] sm:$0x1] %v1582
      %v1584 = vld [vmem:[#allocation2 + $0x98] sm:$0x1]
      %v1585 = vsel %vm1547, 0, %v1584
      %1586 = vst [vmem:[#allocation2 + $0x98] sm:$0x1] %v1585
      %v1587 = vld [vmem:[#allocation2 + $0xa4] sm:$0x1]
      %v1588 = vsel %vm1547, 0, %v1587
      %1589 = vst [vmem:[#allocation2 + $0xa4] sm:$0x1] %v1588
      %v1590 = vld [vmem:[#allocation2 + $0xb0] sm:$0x1]
      %v1591 = vsel %vm1547, 0, %v1590
      %1592 = vst [vmem:[#allocation2 + $0xb0] sm:$0x1] %v1591
      %v1593 = vld [vmem:[#allocation2 + $0xbc] sm:$0x1]
      %v1594 = vsel %vm1547, 0, %v1593
      %1595 = vst [vmem:[#allocation2 + $0xbc] sm:$0x1] %v1594
      %v1596 = vld [vmem:[#allocation2 + $0xc8] sm:$0x1]
      %v1597 = vsel %vm1547, 0, %v1596
      %1598 = vst [vmem:[#allocation2 + $0xc8] sm:$0x1] %v1597
      %v1599 = vld [vmem:[#allocation2 + $0xd4] sm:$0x1]
      %v1600 = vsel %vm1547, 0, %v1599
      %1601 = vst [vmem:[#allocation2 + $0xd4] sm:$0x1] %v1600
      %v1602 = vld [vmem:[%s428] sm:$0xf]
      %v1603 = vld [vmem:[%s428 + $0x4] sm:$0xf]
      %v1604 = vld [vmem:[%s428 + $0x8] sm:$0xf]
      %v1605 = vld [vmem:[%s428 + $0xc] sm:$0xf]
      %v1606 = vld [vmem:[%s428 + $0x10] sm:$0xf]
      %v1607 = vld [vmem:[%s428 + $0x14] sm:$0xf]
      %v1608 = vld [vmem:[%s428 + $0x18] sm:$0xf]
      %v1609 = vld [vmem:[%s428 + $0x1c] sm:$0xf]
      %v1610 = vld [vmem:[%s428 + $0x20] sm:$0xf]
      %v1611 = vld [vmem:[%s428 + $0x24] sm:$0xf]
      %v1612 = vld [vmem:[%s428 + $0x28] sm:$0xf]
      %v1613 = vld [vmem:[%s428 + $0x2c] sm:$0xf]
      %v1614 = vld [vmem:[%s428 + $0x30] sm:$0xf]
      %v1615 = vld [vmem:[%s428 + $0x34] sm:$0xf]
      %v1616 = vld [vmem:[%s428 + $0x38] sm:$0xf]
      %v1617 = vld [vmem:[%s428 + $0x3c] sm:$0xf]
      %v1618 = vld [vmem:[%s428 + $0x40] sm:$0xf]
      %v1619 = vld [vmem:[%s428 + $0x44] sm:$0xf]
      %v1620 = vld [vmem:[%s428 + $0x48] sm:$0xf]
      %v1621 = vld [vmem:[%s428 + $0x4c] sm:$0xf]
      %v1622 = vld [vmem:[%s428 + $0x50] sm:$0xf]
      %v1623 = vld [vmem:[%s428 + $0x54] sm:$0xf]
      %v1624 = vld [vmem:[%s428 + $0x58] sm:$0xf]
      %v1625 = vld [vmem:[%s428 + $0x5c] sm:$0xf]
      %v1626 = vld [vmem:[%s428 + $0x60] sm:$0xf]
      %v1627 = vld [vmem:[%s428 + $0x64] sm:$0xf]
      %v1628 = vld [vmem:[%s428 + $0x68] sm:$0xf]
      %v1629 = vld [vmem:[%s428 + $0x6c] sm:$0xf]
      %v1630 = vld [vmem:[%s428 + $0x70] sm:$0xf]
      %v1631 = vld [vmem:[%s428 + $0x74] sm:$0xf]
      %v1632 = vld [vmem:[%s428 + $0x78] sm:$0xf]
      %v1633 = vld [vmem:[%s428 + $0x7c] sm:$0xf]
      %1762 = vst [vmem:[#allocation1] ss:$4 sm:$0xff] %v1040
      %s1763 = scalar_lea.vmem [#allocation1], 1
      %1764 = vst [vmem:[%s1763] ss:$4 sm:$0xff] %v1041
      %s1765 = scalar_lea.vmem [#allocation1], 2
      %1766 = vst [vmem:[%s1765] ss:$4 sm:$0xff] %v1042
      %s1767 = scalar_lea.vmem [#allocation1], 3
      %1768 = vst [vmem:[%s1767] ss:$4 sm:$0xff] %v1043
      %s1769 = scalar_lea.vmem [#allocation1], 32
      %1770 = vst [vmem:[%s1769] ss:$4 sm:$0xff] %v1044
      %s1771 = scalar_lea.vmem [#allocation1], 33
      %1772 = vst [vmem:[%s1771] ss:$4 sm:$0xff] %v1045
      %s1773 = scalar_lea.vmem [#allocation1], 34
      %1774 = vst [vmem:[%s1773] ss:$4 sm:$0xff] %v1046
      %s1775 = scalar_lea.vmem [#allocation1], 35
      %1776 = vst [vmem:[%s1775] ss:$4 sm:$0xff] %v1047
      %v1777 = vld.sshfl [vmem:[#allocation1] sm:$0xff pattern:$0x73625140]
      %v1778 = vld.sshfl [vmem:[#allocation1 + $0x20] sm:$0xff pattern:$0x73625140]
      %1779 = vst [vmem:[#allocation1] ss:$4 sm:$0xff] %v1416
      %1780 = vst [vmem:[%s1763] ss:$4 sm:$0xff] %v1417
      %1781 = vst [vmem:[%s1765] ss:$4 sm:$0xff] %v1418
      %1782 = vst [vmem:[%s1767] ss:$4 sm:$0xff] %v1419
      %1783 = vst [vmem:[%s1769] ss:$4 sm:$0xff] %v1420
      %1784 = vst [vmem:[%s1771] ss:$4 sm:$0xff] %v1421
      %1785 = vst [vmem:[%s1773] ss:$4 sm:$0xff] %v1422
      %1786 = vst [vmem:[%s1775] ss:$4 sm:$0xff] %v1423
      %v1787 = vld.sshfl [vmem:[#allocation1] sm:$0xff pattern:$0x73625140]
      %v1788 = vld.sshfl [vmem:[#allocation1 + $0x20] sm:$0xff pattern:$0x73625140]
      %1789 = vst [vmem:[#allocation1] ss:$4 sm:$0xff] %v1048
      %1790 = vst [vmem:[%s1763] ss:$4 sm:$0xff] %v1049
      %1791 = vst [vmem:[%s1765] ss:$4 sm:$0xff] %v1050
      %1792 = vst [vmem:[%s1767] ss:$4 sm:$0xff] %v1051
      %1793 = vst [vmem:[%s1769] ss:$4 sm:$0xff] %v1052
      %1794 = vst [vmem:[%s1771] ss:$4 sm:$0xff] %v1053
      %1795 = vst [vmem:[%s1773] ss:$4 sm:$0xff] %v1054
      %1796 = vst [vmem:[%s1775] ss:$4 sm:$0xff] %v1055
      %v1797 = vld.sshfl [vmem:[#allocation1] sm:$0xff pattern:$0x73625140]
      %v1798 = vld.sshfl [vmem:[#allocation1 + $0x20] sm:$0xff pattern:$0x73625140]
      %1799 = vst [vmem:[#allocation1] ss:$4 sm:$0xff] %v1424
      %1800 = vst [vmem:[%s1763] ss:$4 sm:$0xff] %v1425
      %1801 = vst [vmem:[%s1765] ss:$4 sm:$0xff] %v1426
      %1802 = vst [vmem:[%s1767] ss:$4 sm:$0xff] %v1427
      %1803 = vst [vmem:[%s1769] ss:$4 sm:$0xff] %v1428
      %1804 = vst [vmem:[%s1771] ss:$4 sm:$0xff] %v1429
      %1805 = vst [vmem:[%s1773] ss:$4 sm:$0xff] %v1430
      %1806 = vst [vmem:[%s1775] ss:$4 sm:$0xff] %v1431
      %v1807 = vld.sshfl [vmem:[#allocation1] sm:$0xff pattern:$0x73625140]
      %v1808 = vld.sshfl [vmem:[#allocation1 + $0x20] sm:$0xff pattern:$0x73625140]
      %1809 = vst [vmem:[#allocation1] ss:$4 sm:$0xff] %v1056
      %1810 = vst [vmem:[%s1763] ss:$4 sm:$0xff] %v1057
      %1811 = vst [vmem:[%s1765] ss:$4 sm:$0xff] %v1058
      %1812 = vst [vmem:[%s1767] ss:$4 sm:$0xff] %v1059
      %1813 = vst [vmem:[%s1769] ss:$4 sm:$0xff] %v1060
      %1814 = vst [vmem:[%s1771] ss:$4 sm:$0xff] %v1061
      %1815 = vst [vmem:[%s1773] ss:$4 sm:$0xff] %v1062
      %1816 = vst [vmem:[%s1775] ss:$4 sm:$0xff] %v1063
      %v1817 = vld.sshfl [vmem:[#allocation1] sm:$0xff pattern:$0x73625140]
      %v1818 = vld.sshfl [vmem:[#allocation1 + $0x20] sm:$0xff pattern:$0x73625140]
      %1819 = vst [vmem:[#allocation1] ss:$4 sm:$0xff] %v1432
      %1820 = vst [vmem:[%s1763] ss:$4 sm:$0xff] %v1433
      %1821 = vst [vmem:[%s1765] ss:$4 sm:$0xff] %v1434
      %1822 = vst [vmem:[%s1767] ss:$4 sm:$0xff] %v1435
      %1823 = vst [vmem:[%s1769] ss:$4 sm:$0xff] %v1436
      %1824 = vst [vmem:[%s1771] ss:$4 sm:$0xff] %v1437
      %1825 = vst [vmem:[%s1773] ss:$4 sm:$0xff] %v1438
      %1826 = vst [vmem:[%s1775] ss:$4 sm:$0xff] %v1439
      %v1827 = vld.sshfl [vmem:[#allocation1] sm:$0xff pattern:$0x73625140]
      %v1828 = vld.sshfl [vmem:[#allocation1 + $0x20] sm:$0xff pattern:$0x73625140]
      %1829 = vst [vmem:[#allocation1] ss:$4 sm:$0xff] %v1064
      %1830 = vst [vmem:[%s1763] ss:$4 sm:$0xff] %v1065
      %1831 = vst [vmem:[%s1765] ss:$4 sm:$0xff] %v1066
      %1832 = vst [vmem:[%s1767] ss:$4 sm:$0xff] %v1067
      %1833 = vst [vmem:[%s1769] ss:$4 sm:$0xff] %v1068
      %1834 = vst [vmem:[%s1771] ss:$4 sm:$0xff] %v1069
      %1835 = vst [vmem:[%s1773] ss:$4 sm:$0xff] %v1070
      %1836 = vst [vmem:[%s1775] ss:$4 sm:$0xff] %v1071
      %v1837 = vld.sshfl [vmem:[#allocation1] sm:$0xff pattern:$0x73625140]
      %v1838 = vld.sshfl [vmem:[#allocation1 + $0x20] sm:$0xff pattern:$0x73625140]
      %1839 = vst [vmem:[#allocation1] ss:$4 sm:$0xff] %v1440
      %1840 = vst [vmem:[%s1763] ss:$4 sm:$0xff] %v1441
      %1841 = vst [vmem:[%s1765] ss:$4 sm:$0xff] %v1442
      %1842 = vst [vmem:[%s1767] ss:$4 sm:$0xff] %v1443
      %1843 = vst [vmem:[%s1769] ss:$4 sm:$0xff] %v1444
      %1844 = vst [vmem:[%s1771] ss:$4 sm:$0xff] %v1445
      %1845 = vst [vmem:[%s1773] ss:$4 sm:$0xff] %v1446
      %1846 = vst [vmem:[%s1775] ss:$4 sm:$0xff] %v1447
      %v1847 = vld.sshfl [vmem:[#allocation1] sm:$0xff pattern:$0x73625140]
      %v1848 = vld.sshfl [vmem:[#allocation1 + $0x20] sm:$0xff pattern:$0x73625140]
      %1849 = vst [vmem:[#allocation1] ss:$4 sm:$0xff] %v1072
      %1850 = vst [vmem:[%s1763] ss:$4 sm:$0xff] %v1073
      %1851 = vst [vmem:[%s1765] ss:$4 sm:$0xff] %v1074
      %1852 = vst [vmem:[%s1767] ss:$4 sm:$0xff] %v1075
      %1853 = vst [vmem:[%s1769] ss:$4 sm:$0xff] %v1076
      %1854 = vst [vmem:[%s1771] ss:$4 sm:$0xff] %v1077
      %1855 = vst [vmem:[%s1773] ss:$4 sm:$0xff] %v1078
      %1856 = vst [vmem:[%s1775] ss:$4 sm:$0xff] %v1079
      %v1857 = vld.sshfl [vmem:[#allocation1] sm:$0xff pattern:$0x73625140]
      %v1858 = vld.sshfl [vmem:[#allocation1 + $0x20] sm:$0xff pattern:$0x73625140]
      %1859 = vst [vmem:[#allocation1] ss:$4 sm:$0xff] %v1448
      %1860 = vst [vmem:[%s1763] ss:$4 sm:$0xff] %v1449
      %1861 = vst [vmem:[%s1765] ss:$4 sm:$0xff] %v1450
      %1862 = vst [vmem:[%s1767] ss:$4 sm:$0xff] %v1451
      %1863 = vst [vmem:[%s1769] ss:$4 sm:$0xff] %v1452
      %1864 = vst [vmem:[%s1771] ss:$4 sm:$0xff] %v1453
      %1865 = vst [vmem:[%s1773] ss:$4 sm:$0xff] %v1454
      %1866 = vst [vmem:[%s1775] ss:$4 sm:$0xff] %v1455
      %v1867 = vld.sshfl [vmem:[#allocation1] sm:$0xff pattern:$0x73625140]
      %v1868 = vld.sshfl [vmem:[#allocation1 + $0x20] sm:$0xff pattern:$0x73625140]
      %1869 = vst [vmem:[#allocation1] ss:$4 sm:$0xff] %v1080
      %1870 = vst [vmem:[%s1763] ss:$4 sm:$0xff] %v1081
      %1871 = vst [vmem:[%s1765] ss:$4 sm:$0xff] %v1082
      %1872 = vst [vmem:[%s1767] ss:$4 sm:$0xff] %v1083
      %1873 = vst [vmem:[%s1769] ss:$4 sm:$0xff] %v1084
      %1874 = vst [vmem:[%s1771] ss:$4 sm:$0xff] %v1085
      %1875 = vst [vmem:[%s1773] ss:$4 sm:$0xff] %v1086
      %1876 = vst [vmem:[%s1775] ss:$4 sm:$0xff] %v1087
      %v1877 = vld.sshfl [vmem:[#allocation1] sm:$0xff pattern:$0x73625140]
      %v1878 = vld.sshfl [vmem:[#allocation1 + $0x20] sm:$0xff pattern:$0x73625140]
      %1879 = vst [vmem:[#allocation1] ss:$4 sm:$0xff] %v1456
      %1880 = vst [vmem:[%s1763] ss:$4 sm:$0xff] %v1457
      %1881 = vst [vmem:[%s1765] ss:$4 sm:$0xff] %v1458
      %1882 = vst [vmem:[%s1767] ss:$4 sm:$0xff] %v1459
      %1883 = vst [vmem:[%s1769] ss:$4 sm:$0xff] %v1460
      %1884 = vst [vmem:[%s1771] ss:$4 sm:$0xff] %v1461
      %1885 = vst [vmem:[%s1773] ss:$4 sm:$0xff] %v1462
      %1886 = vst [vmem:[%s1775] ss:$4 sm:$0xff] %v1463
      %v1887 = vld.sshfl [vmem:[#allocation1] sm:$0xff pattern:$0x73625140]
      %v1888 = vld.sshfl [vmem:[#allocation1 + $0x20] sm:$0xff pattern:$0x73625140]
      %1889 = vst [vmem:[#allocation1] ss:$4 sm:$0xff] %v1088
      %1890 = vst [vmem:[%s1763] ss:$4 sm:$0xff] %v1089
      %1891 = vst [vmem:[%s1765] ss:$4 sm:$0xff] %v1090
      %1892 = vst [vmem:[%s1767] ss:$4 sm:$0xff] %v1091
      %1893 = vst [vmem:[%s1769] ss:$4 sm:$0xff] %v1092
      %1894 = vst [vmem:[%s1771] ss:$4 sm:$0xff] %v1093
      %1895 = vst [vmem:[%s1773] ss:$4 sm:$0xff] %v1094
      %1896 = vst [vmem:[%s1775] ss:$4 sm:$0xff] %v1095
      %v1897 = vld.sshfl [vmem:[#allocation1] sm:$0xff pattern:$0x73625140]
      %v1898 = vld.sshfl [vmem:[#allocation1 + $0x20] sm:$0xff pattern:$0x73625140]
      %1899 = vst [vmem:[#allocation1] ss:$4 sm:$0xff] %v1464
      %1900 = vst [vmem:[%s1763] ss:$4 sm:$0xff] %v1465
      %1901 = vst [vmem:[%s1765] ss:$4 sm:$0xff] %v1466
      %1902 = vst [vmem:[%s1767] ss:$4 sm:$0xff] %v1467
      %1903 = vst [vmem:[%s1769] ss:$4 sm:$0xff] %v1468
      %1904 = vst [vmem:[%s1771] ss:$4 sm:$0xff] %v1469
      %1905 = vst [vmem:[%s1773] ss:$4 sm:$0xff] %v1470
      %1906 = vst [vmem:[%s1775] ss:$4 sm:$0xff] %v1471
      %v1907 = vld.sshfl [vmem:[#allocation1] sm:$0xff pattern:$0x73625140]
      %v1908 = vld.sshfl [vmem:[#allocation1 + $0x20] sm:$0xff pattern:$0x73625140]
      %1909 = vst [vmem:[#allocation1] ss:$4 sm:$0xff] %v1096
      %1910 = vst [vmem:[%s1763] ss:$4 sm:$0xff] %v1097
      %1911 = vst [vmem:[%s1765] ss:$4 sm:$0xff] %v1098
      %1912 = vst [vmem:[%s1767] ss:$4 sm:$0xff] %v1099
      %1913 = vst [vmem:[%s1769] ss:$4 sm:$0xff] %v1100
      %1914 = vst [vmem:[%s1771] ss:$4 sm:$0xff] %v1101
      %1915 = vst [vmem:[%s1773] ss:$4 sm:$0xff] %v1102
      %1916 = vst [vmem:[%s1775] ss:$4 sm:$0xff] %v1103
      %v1917 = vld.sshfl [vmem:[#allocation1] sm:$0xff pattern:$0x73625140]
      %v1918 = vld.sshfl [vmem:[#allocation1 + $0x20] sm:$0xff pattern:$0x73625140]
      %1919 = vst [vmem:[#allocation1] ss:$4 sm:$0xff] %v1472
      %1920 = vst [vmem:[%s1763] ss:$4 sm:$0xff] %v1473
      %1921 = vst [vmem:[%s1765] ss:$4 sm:$0xff] %v1474
      %1922 = vst [vmem:[%s1767] ss:$4 sm:$0xff] %v1475
      %1923 = vst [vmem:[%s1769] ss:$4 sm:$0xff] %v1476
      %1924 = vst [vmem:[%s1771] ss:$4 sm:$0xff] %v1477
      %1925 = vst [vmem:[%s1773] ss:$4 sm:$0xff] %v1478
      %1926 = vst [vmem:[%s1775] ss:$4 sm:$0xff] %v1479
      %v1927 = vld.sshfl [vmem:[#allocation1] sm:$0xff pattern:$0x73625140]
      %v1928 = vld.sshfl [vmem:[#allocation1 + $0x20] sm:$0xff pattern:$0x73625140]
      %v1961 = vpack.c.bf16 %v1777, %v1777
      %v1962 = vpack.c.bf16 %v1778, %v1778
      %v1963 = vpack.c.bf16 %v1787, %v1787
      %v1964 = vpack.c.bf16 %v1788, %v1788
      %v1965 = vpack.c.bf16 %v1797, %v1797
      %v1966 = vpack.c.bf16 %v1798, %v1798
      %v1967 = vpack.c.bf16 %v1807, %v1807
      %v1968 = vpack.c.bf16 %v1808, %v1808
      %v1969 = vpack.c.bf16 %v1817, %v1817
      %v1970 = vpack.c.bf16 %v1818, %v1818
      %v1971 = vpack.c.bf16 %v1827, %v1827
      %v1972 = vpack.c.bf16 %v1828, %v1828
      %v1973 = vpack.c.bf16 %v1837, %v1837
      %v1974 = vpack.c.bf16 %v1838, %v1838
      %v1975 = vpack.c.bf16 %v1847, %v1847
      %v1976 = vpack.c.bf16 %v1848, %v1848
      %v1977 = vpack.c.bf16 %v1857, %v1857
      %v1978 = vpack.c.bf16 %v1858, %v1858
      %v1979 = vpack.c.bf16 %v1867, %v1867
      %v1980 = vpack.c.bf16 %v1868, %v1868
      %v1981 = vpack.c.bf16 %v1877, %v1877
      %v1982 = vpack.c.bf16 %v1878, %v1878
      %v1983 = vpack.c.bf16 %v1887, %v1887
      %v1984 = vpack.c.bf16 %v1888, %v1888
      %v1985 = vpack.c.bf16 %v1897, %v1897
      %v1986 = vpack.c.bf16 %v1898, %v1898
      %v1987 = vpack.c.bf16 %v1907, %v1907
      %v1988 = vpack.c.bf16 %v1908, %v1908
      %v1989 = vpack.c.bf16 %v1917, %v1917
      %v1990 = vpack.c.bf16 %v1918, %v1918
      %v1991 = vpack.c.bf16 %v1927, %v1927
      %v1992 = vpack.c.bf16 %v1928, %v1928
      %v2025 = vunpack.c.l.b16 %v1602
      %v2026 = vunpack.c.l.b16 %v1603
      %v2027 = vunpack.c.l.b16 %v1604
      %v2028 = vunpack.c.l.b16 %v1605
      %v2029 = vunpack.c.l.b16 %v1606
      %v2030 = vunpack.c.l.b16 %v1607
      %v2031 = vunpack.c.l.b16 %v1608
      %v2032 = vunpack.c.l.b16 %v1609
      %v2033 = vunpack.c.l.b16 %v1610
      %v2034 = vunpack.c.l.b16 %v1611
      %v2035 = vunpack.c.l.b16 %v1612
      %v2036 = vunpack.c.l.b16 %v1613
      %v2037 = vunpack.c.l.b16 %v1614
      %v2038 = vunpack.c.l.b16 %v1615
      %v2039 = vunpack.c.l.b16 %v1616
      %v2040 = vunpack.c.l.b16 %v1617
      %v2041 = vunpack.c.l.b16 %v1618
      %v2042 = vunpack.c.l.b16 %v1619
      %v2043 = vunpack.c.l.b16 %v1620
      %v2044 = vunpack.c.l.b16 %v1621
      %v2045 = vunpack.c.l.b16 %v1622
      %v2046 = vunpack.c.l.b16 %v1623
      %v2047 = vunpack.c.l.b16 %v1624
      %v2048 = vunpack.c.l.b16 %v1625
      %v2049 = vunpack.c.l.b16 %v1626
      %v2050 = vunpack.c.l.b16 %v1627
      %v2051 = vunpack.c.l.b16 %v1628
      %v2052 = vunpack.c.l.b16 %v1629
      %v2053 = vunpack.c.l.b16 %v1630
      %v2054 = vunpack.c.l.b16 %v1631
      %v2055 = vunpack.c.l.b16 %v1632
      %v2056 = vunpack.c.l.b16 %v1633
      %v2057 = vpack.c.b16 %v2026, %v2025
      %v2058 = vpack.c.b16 %v2028, %v2027
      %v2059 = vpack.c.b16 %v2030, %v2029
      %v2060 = vpack.c.b16 %v2032, %v2031
      %v2061 = vpack.c.b16 %v2034, %v2033
      %v2062 = vpack.c.b16 %v2036, %v2035
      %v2063 = vpack.c.b16 %v2038, %v2037
      %v2064 = vpack.c.b16 %v2040, %v2039
      %v2065 = vpack.c.b16 %v2042, %v2041
      %v2066 = vpack.c.b16 %v2044, %v2043
      %v2067 = vpack.c.b16 %v2046, %v2045
      %v2068 = vpack.c.b16 %v2048, %v2047
      %v2069 = vpack.c.b16 %v2050, %v2049
      %v2070 = vpack.c.b16 %v2052, %v2051
      %v2071 = vpack.c.b16 %v2054, %v2053
      %v2072 = vpack.c.b16 %v2056, %v2055
      %v2105 = vunpack.c.l.b16 %v1961
      %v2106 = vunpack.c.l.b16 %v1962
      %v2107 = vunpack.c.l.b16 %v1963
      %v2108 = vunpack.c.l.b16 %v1964
      %v2109 = vunpack.c.l.b16 %v1965
      %v2110 = vunpack.c.l.b16 %v1966
      %v2111 = vunpack.c.l.b16 %v1967
      %v2112 = vunpack.c.l.b16 %v1968
      %v2113 = vunpack.c.l.b16 %v1969
      %v2114 = vunpack.c.l.b16 %v1970
      %v2115 = vunpack.c.l.b16 %v1971
      %v2116 = vunpack.c.l.b16 %v1972
      %v2117 = vunpack.c.l.b16 %v1973
      %v2118 = vunpack.c.l.b16 %v1974
      %v2119 = vunpack.c.l.b16 %v1975
      %v2120 = vunpack.c.l.b16 %v1976
      %v2121 = vunpack.c.l.b16 %v1977
      %v2122 = vunpack.c.l.b16 %v1978
      %v2123 = vunpack.c.l.b16 %v1979
      %v2124 = vunpack.c.l.b16 %v1980
      %v2125 = vunpack.c.l.b16 %v1981
      %v2126 = vunpack.c.l.b16 %v1982
      %v2127 = vunpack.c.l.b16 %v1983
      %v2128 = vunpack.c.l.b16 %v1984
      %v2129 = vunpack.c.l.b16 %v1985
      %v2130 = vunpack.c.l.b16 %v1986
      %v2131 = vunpack.c.l.b16 %v1987
      %v2132 = vunpack.c.l.b16 %v1988
      %v2133 = vunpack.c.l.b16 %v1989
      %v2134 = vunpack.c.l.b16 %v1990
      %v2135 = vunpack.c.l.b16 %v1991
      %v2136 = vunpack.c.l.b16 %v1992
      %v2137 = vpack.c.b16 %v2106, %v2105
      %v2138 = vpack.c.b16 %v2108, %v2107
      %v2139 = vpack.c.b16 %v2110, %v2109
      %v2140 = vpack.c.b16 %v2112, %v2111
      %v2141 = vpack.c.b16 %v2114, %v2113
      %v2142 = vpack.c.b16 %v2116, %v2115
      %v2143 = vpack.c.b16 %v2118, %v2117
      %v2144 = vpack.c.b16 %v2120, %v2119
      %v2145 = vpack.c.b16 %v2122, %v2121
      %v2146 = vpack.c.b16 %v2124, %v2123
      %v2147 = vpack.c.b16 %v2126, %v2125
      %v2148 = vpack.c.b16 %v2128, %v2127
      %v2149 = vpack.c.b16 %v2130, %v2129
      %v2150 = vpack.c.b16 %v2132, %v2131
      %v2151 = vpack.c.b16 %v2134, %v2133
      %v2152 = vpack.c.b16 %v2136, %v2135
      %2153 = vrot.lane.b32.xlu0 %v2137, 32
      %v2154 = vpop.permute.xlu0 %2153
      %2155 = vrot.lane.b32.xlu0 %v2138, 32
      %v2156 = vpop.permute.xlu0 %2155
      %2157 = vrot.lane.b32.xlu0 %v2139, 32
      %v2158 = vpop.permute.xlu0 %2157
      %2159 = vrot.lane.b32.xlu0 %v2140, 32
      %v2160 = vpop.permute.xlu0 %2159
      %2161 = vrot.lane.b32.xlu0 %v2141, 32
      %v2162 = vpop.permute.xlu0 %2161
      %2163 = vrot.lane.b32.xlu0 %v2142, 32
      %v2164 = vpop.permute.xlu0 %2163
      %2165 = vrot.lane.b32.xlu0 %v2143, 32
      %v2166 = vpop.permute.xlu0 %2165
      %2167 = vrot.lane.b32.xlu0 %v2144, 32
      %v2168 = vpop.permute.xlu0 %2167
      %2169 = vrot.lane.b32.xlu0 %v2145, 32
      %v2170 = vpop.permute.xlu0 %2169
      %2171 = vrot.lane.b32.xlu0 %v2146, 32
      %v2172 = vpop.permute.xlu0 %2171
      %2173 = vrot.lane.b32.xlu0 %v2147, 32
      %v2174 = vpop.permute.xlu0 %2173
      %2175 = vrot.lane.b32.xlu0 %v2148, 32
      %v2176 = vpop.permute.xlu0 %2175
      %2177 = vrot.lane.b32.xlu0 %v2149, 32
      %v2178 = vpop.permute.xlu0 %2177
      %2179 = vrot.lane.b32.xlu0 %v2150, 32
      %v2180 = vpop.permute.xlu0 %2179
      %2181 = vrot.lane.b32.xlu0 %v2151, 32
      %v2182 = vpop.permute.xlu0 %2181
      %2183 = vrot.lane.b32.xlu0 %v2152, 32
      %v2184 = vpop.permute.xlu0 %2183
      %vm2185 = vcmask 261120
      %v2188 = vsel %vm2185, %v2057, %v2154
      %v2191 = vsel %vm2185, %v2058, %v2156
      %v2194 = vsel %vm2185, %v2059, %v2158
      %v2197 = vsel %vm2185, %v2060, %v2160
      %v2200 = vsel %vm2185, %v2061, %v2162
      %v2203 = vsel %vm2185, %v2062, %v2164
      %v2206 = vsel %vm2185, %v2063, %v2166
      %v2209 = vsel %vm2185, %v2064, %v2168
      %v2212 = vsel %vm2185, %v2065, %v2170
      %v2215 = vsel %vm2185, %v2066, %v2172
      %v2218 = vsel %vm2185, %v2067, %v2174
      %v2221 = vsel %vm2185, %v2068, %v2176
      %v2224 = vsel %vm2185, %v2069, %v2178
      %v2227 = vsel %vm2185, %v2070, %v2180
      %v2230 = vsel %vm2185, %v2071, %v2182
      %v2233 = vsel %vm2185, %v2072, %v2184
      %v2250 = vunpack.c.l.b16 %v2188
      %v2251 = vunpack.c.h.b16 %v2188
      %v2252 = vunpack.c.l.b16 %v2191
      %v2253 = vunpack.c.h.b16 %v2191
      %v2254 = vunpack.c.l.b16 %v2194
      %v2255 = vunpack.c.h.b16 %v2194
      %v2256 = vunpack.c.l.b16 %v2197
      %v2257 = vunpack.c.h.b16 %v2197
      %v2258 = vunpack.c.l.b16 %v2200
      %v2259 = vunpack.c.h.b16 %v2200
      %v2260 = vunpack.c.l.b16 %v2203
      %v2261 = vunpack.c.h.b16 %v2203
      %v2262 = vunpack.c.l.b16 %v2206
      %v2263 = vunpack.c.h.b16 %v2206
      %v2264 = vunpack.c.l.b16 %v2209
      %v2265 = vunpack.c.h.b16 %v2209
      %v2266 = vunpack.c.l.b16 %v2212
      %v2267 = vunpack.c.h.b16 %v2212
      %v2268 = vunpack.c.l.b16 %v2215
      %v2269 = vunpack.c.h.b16 %v2215
      %v2270 = vunpack.c.l.b16 %v2218
      %v2271 = vunpack.c.h.b16 %v2218
      %v2272 = vunpack.c.l.b16 %v2221
      %v2273 = vunpack.c.h.b16 %v2221
      %v2274 = vunpack.c.l.b16 %v2224
      %v2275 = vunpack.c.h.b16 %v2224
      %v2276 = vunpack.c.l.b16 %v2227
      %v2277 = vunpack.c.h.b16 %v2227
      %v2278 = vunpack.c.l.b16 %v2230
      %v2279 = vunpack.c.h.b16 %v2230
      %v2280 = vunpack.c.l.b16 %v2233
      %v2281 = vunpack.c.h.b16 %v2233
      %v2282 = vpack.c.b16 %v2250, %v2250
      %v2283 = vpack.c.b16 %v2251, %v2251
      %v2284 = vpack.c.b16 %v2252, %v2252
      %v2285 = vpack.c.b16 %v2253, %v2253
      %v2286 = vpack.c.b16 %v2254, %v2254
      %v2287 = vpack.c.b16 %v2255, %v2255
      %v2288 = vpack.c.b16 %v2256, %v2256
      %v2289 = vpack.c.b16 %v2257, %v2257
      %v2290 = vpack.c.b16 %v2258, %v2258
      %v2291 = vpack.c.b16 %v2259, %v2259
      %v2292 = vpack.c.b16 %v2260, %v2260
      %v2293 = vpack.c.b16 %v2261, %v2261
      %v2294 = vpack.c.b16 %v2262, %v2262
      %v2295 = vpack.c.b16 %v2263, %v2263
      %v2296 = vpack.c.b16 %v2264, %v2264
      %v2297 = vpack.c.b16 %v2265, %v2265
      %v2298 = vpack.c.b16 %v2266, %v2266
      %v2299 = vpack.c.b16 %v2267, %v2267
      %v2300 = vpack.c.b16 %v2268, %v2268
      %v2301 = vpack.c.b16 %v2269, %v2269
      %v2302 = vpack.c.b16 %v2270, %v2270
      %v2303 = vpack.c.b16 %v2271, %v2271
      %v2304 = vpack.c.b16 %v2272, %v2272
      %v2305 = vpack.c.b16 %v2273, %v2273
      %v2306 = vpack.c.b16 %v2274, %v2274
      %v2307 = vpack.c.b16 %v2275, %v2275
      %v2308 = vpack.c.b16 %v2276, %v2276
      %v2309 = vpack.c.b16 %v2277, %v2277
      %v2310 = vpack.c.b16 %v2278, %v2278
      %v2311 = vpack.c.b16 %v2279, %v2279
      %v2312 = vpack.c.b16 %v2280, %v2280
      %v2313 = vpack.c.b16 %v2281, %v2281
      %vm2314 = vsmask.f32 4368
      %vm2315 = vmor %vm1490, %vm2314
      %v2317 = vshrl.u32 %v2282, 16
      %v2319 = vrot.slane %v2317, 7
      %v2320 = vshll.u32 %v2282, 16
      %v2322 = vor.u32 %v2319, %v2320
      %v2323 = vrot.slane %v2319, 4
      %v2325 = vshrl.u32 %v2283, 16
      %v2327 = vrot.slane %v2325, 7
      %v2328 = vshll.u32 %v2283, 16
      %v2330 = vor.u32 %v2327, %v2328
      %v2331 = vsel %vm2315, %v2323, %v2330
      %v2332 = vrot.slane %v2327, 4
      %v2334 = vshrl.u32 %v2284, 16
      %v2336 = vrot.slane %v2334, 7
      %v2337 = vshll.u32 %v2284, 16
      %v2339 = vor.u32 %v2336, %v2337
      %v2340 = vrot.slane %v2336, 4
      %v2342 = vshrl.u32 %v2285, 16
      %v2344 = vrot.slane %v2342, 7
      %v2345 = vshll.u32 %v2285, 16
      %v2347 = vor.u32 %v2344, %v2345
      %v2348 = vsel %vm2315, %v2340, %v2347
      %v2349 = vrot.slane %v2344, 4
      %v2351 = vshrl.u32 %v2286, 16
      %v2353 = vrot.slane %v2351, 7
      %v2354 = vshll.u32 %v2286, 16
      %v2356 = vor.u32 %v2353, %v2354
      %v2357 = vrot.slane %v2353, 4
      %v2359 = vshrl.u32 %v2287, 16
      %v2361 = vrot.slane %v2359, 7
      %v2362 = vshll.u32 %v2287, 16
      %v2364 = vor.u32 %v2361, %v2362
      %v2365 = vsel %vm2315, %v2357, %v2364
      %v2366 = vrot.slane %v2361, 4
      %v2368 = vshrl.u32 %v2288, 16
      %v2370 = vrot.slane %v2368, 7
      %v2371 = vshll.u32 %v2288, 16
      %v2373 = vor.u32 %v2370, %v2371
      %v2374 = vrot.slane %v2370, 4
      %v2376 = vshrl.u32 %v2289, 16
      %v2378 = vrot.slane %v2376, 7
      %v2379 = vshll.u32 %v2289, 16
      %v2381 = vor.u32 %v2378, %v2379
      %v2382 = vsel %vm2315, %v2374, %v2381
      %v2383 = vrot.slane %v2378, 4
      %v2385 = vshrl.u32 %v2290, 16
      %v2387 = vrot.slane %v2385, 7
      %v2388 = vshll.u32 %v2290, 16
      %v2390 = vor.u32 %v2387, %v2388
      %v2391 = vrot.slane %v2387, 4
      %v2393 = vshrl.u32 %v2291, 16
      %v2395 = vrot.slane %v2393, 7
      %v2396 = vshll.u32 %v2291, 16
      %v2398 = vor.u32 %v2395, %v2396
      %v2399 = vsel %vm2315, %v2391, %v2398
      %v2400 = vrot.slane %v2395, 4
      %v2402 = vshrl.u32 %v2292, 16
      %v2404 = vrot.slane %v2402, 7
      %v2405 = vshll.u32 %v2292, 16
      %v2407 = vor.u32 %v2404, %v2405
      %v2408 = vrot.slane %v2404, 4
      %v2410 = vshrl.u32 %v2293, 16
      %v2412 = vrot.slane %v2410, 7
      %v2413 = vshll.u32 %v2293, 16
      %v2415 = vor.u32 %v2412, %v2413
      %v2416 = vsel %vm2315, %v2408, %v2415
      %v2417 = vrot.slane %v2412, 4
      %v2419 = vshrl.u32 %v2294, 16
      %v2421 = vrot.slane %v2419, 7
      %v2422 = vshll.u32 %v2294, 16
      %v2424 = vor.u32 %v2421, %v2422
      %v2425 = vrot.slane %v2421, 4
      %v2427 = vshrl.u32 %v2295, 16
      %v2429 = vrot.slane %v2427, 7
      %v2430 = vshll.u32 %v2295, 16
      %v2432 = vor.u32 %v2429, %v2430
      %v2433 = vsel %vm2315, %v2425, %v2432
      %v2434 = vrot.slane %v2429, 4
      %v2436 = vshrl.u32 %v2296, 16
      %v2438 = vrot.slane %v2436, 7
      %v2439 = vshll.u32 %v2296, 16
      %v2441 = vor.u32 %v2438, %v2439
      %v2442 = vrot.slane %v2438, 4
      %v2444 = vshrl.u32 %v2297, 16
      %v2446 = vrot.slane %v2444, 7
      %v2447 = vshll.u32 %v2297, 16
      %v2449 = vor.u32 %v2446, %v2447
      %v2450 = vsel %vm2315, %v2442, %v2449
      %v2451 = vrot.slane %v2446, 4
      %v2453 = vshrl.u32 %v2298, 16
      %v2455 = vrot.slane %v2453, 7
      %v2456 = vshll.u32 %v2298, 16
      %v2458 = vor.u32 %v2455, %v2456
      %v2459 = vrot.slane %v2455, 4
      %v2461 = vshrl.u32 %v2299, 16
      %v2463 = vrot.slane %v2461, 7
      %v2464 = vshll.u32 %v2299, 16
      %v2466 = vor.u32 %v2463, %v2464
      %v2467 = vsel %vm2315, %v2459, %v2466
      %v2468 = vrot.slane %v2463, 4
      %v2470 = vshrl.u32 %v2300, 16
      %v2472 = vrot.slane %v2470, 7
      %v2473 = vshll.u32 %v2300, 16
      %v2475 = vor.u32 %v2472, %v2473
      %v2476 = vrot.slane %v2472, 4
      %v2478 = vshrl.u32 %v2301, 16
      %v2480 = vrot.slane %v2478, 7
      %v2481 = vshll.u32 %v2301, 16
      %v2483 = vor.u32 %v2480, %v2481
      %v2484 = vsel %vm2315, %v2476, %v2483
      %v2485 = vrot.slane %v2480, 4
      %v2487 = vshrl.u32 %v2302, 16
      %v2489 = vrot.slane %v2487, 7
      %v2490 = vshll.u32 %v2302, 16
      %v2492 = vor.u32 %v2489, %v2490
      %v2493 = vrot.slane %v2489, 4
      %v2495 = vshrl.u32 %v2303, 16
      %v2497 = vrot.slane %v2495, 7
      %v2498 = vshll.u32 %v2303, 16
      %v2500 = vor.u32 %v2497, %v2498
      %v2501 = vsel %vm2315, %v2493, %v2500
      %v2502 = vrot.slane %v2497, 4
      %v2504 = vshrl.u32 %v2304, 16
      %v2506 = vrot.slane %v2504, 7
      %v2507 = vshll.u32 %v2304, 16
      %v2509 = vor.u32 %v2506, %v2507
      %v2510 = vrot.slane %v2506, 4
      %v2512 = vshrl.u32 %v2305, 16
      %v2514 = vrot.slane %v2512, 7
      %v2515 = vshll.u32 %v2305, 16
      %v2517 = vor.u32 %v2514, %v2515
      %v2518 = vsel %vm2315, %v2510, %v2517
      %v2519 = vrot.slane %v2514, 4
      %v2521 = vshrl.u32 %v2306, 16
      %v2523 = vrot.slane %v2521, 7
      %v2524 = vshll.u32 %v2306, 16
      %v2526 = vor.u32 %v2523, %v2524
      %v2527 = vrot.slane %v2523, 4
      %v2529 = vshrl.u32 %v2307, 16
      %v2531 = vrot.slane %v2529, 7
      %v2532 = vshll.u32 %v2307, 16
      %v2534 = vor.u32 %v2531, %v2532
      %v2535 = vsel %vm2315, %v2527, %v2534
      %v2536 = vrot.slane %v2531, 4
      %v2538 = vshrl.u32 %v2308, 16
      %v2540 = vrot.slane %v2538, 7
      %v2541 = vshll.u32 %v2308, 16
      %v2543 = vor.u32 %v2540, %v2541
      %v2544 = vrot.slane %v2540, 4
      %v2546 = vshrl.u32 %v2309, 16
      %v2548 = vrot.slane %v2546, 7
      %v2549 = vshll.u32 %v2309, 16
      %v2551 = vor.u32 %v2548, %v2549
      %v2552 = vsel %vm2315, %v2544, %v2551
      %v2553 = vrot.slane %v2548, 4
      %v2555 = vshrl.u32 %v2310, 16
      %v2557 = vrot.slane %v2555, 7
      %v2558 = vshll.u32 %v2310, 16
      %v2560 = vor.u32 %v2557, %v2558
      %v2561 = vrot.slane %v2557, 4
      %v2563 = vshrl.u32 %v2311, 16
      %v2565 = vrot.slane %v2563, 7
      %v2566 = vshll.u32 %v2311, 16
      %v2568 = vor.u32 %v2565, %v2566
      %v2569 = vsel %vm2315, %v2561, %v2568
      %v2570 = vrot.slane %v2565, 4
      %v2572 = vshrl.u32 %v2312, 16
      %v2574 = vrot.slane %v2572, 7
      %v2575 = vshll.u32 %v2312, 16
      %v2577 = vor.u32 %v2574, %v2575
      %v2578 = vrot.slane %v2574, 4
      %v2580 = vshrl.u32 %v2313, 16
      %v2582 = vrot.slane %v2580, 7
      %v2583 = vshll.u32 %v2313, 16
      %v2585 = vor.u32 %v2582, %v2583
      %v2586 = vsel %vm2315, %v2578, %v2585
      %v2587 = vrot.slane %v2582, 4
      %s2636 = scalar_lea.vmem [#allocation2], 12
      %vm2637 = vcmask 519168
      %vm2638 = vmand %vm2637, %vm1546
      %v2639 = vld [vmem:[%s2636] sm:$0xf]
      %v2640 = vsel %vm2638, %v2322, %v2639
      %2641 = vst [vmem:[%s2636] sm:$0xf] %v2640
      %2642 = vst.msk [vmem:[%s2636 + $0x4] sm:$0xf] %vm1480, %v2331
      %v2643 = vld [vmem:[%s2636 + $0x8] sm:$0x1]
      %v2644 = vsel %vm1491, %v2332, %v2643
      %2645 = vst [vmem:[%s2636 + $0x8] sm:$0x1] %v2644
      %v2646 = vld [vmem:[%s2636 + $0xc] sm:$0xf]
      %v2647 = vsel %vm2638, %v2339, %v2646
      %2648 = vst [vmem:[%s2636 + $0xc] sm:$0xf] %v2647
      %2649 = vst.msk [vmem:[%s2636 + $0x10] sm:$0xf] %vm1480, %v2348
      %v2650 = vld [vmem:[%s2636 + $0x14] sm:$0x1]
      %v2651 = vsel %vm1491, %v2349, %v2650
      %2652 = vst [vmem:[%s2636 + $0x14] sm:$0x1] %v2651
      %v2653 = vld [vmem:[%s2636 + $0x18] sm:$0xf]
      %v2654 = vsel %vm2638, %v2356, %v2653
      %2655 = vst [vmem:[%s2636 + $0x18] sm:$0xf] %v2654
      %2656 = vst.msk [vmem:[%s2636 + $0x1c] sm:$0xf] %vm1480, %v2365
      %v2657 = vld [vmem:[%s2636 + $0x20] sm:$0x1]
      %v2658 = vsel %vm1491, %v2366, %v2657
      %2659 = vst [vmem:[%s2636 + $0x20] sm:$0x1] %v2658
      %v2660 = vld [vmem:[%s2636 + $0x24] sm:$0xf]
      %v2661 = vsel %vm2638, %v2373, %v2660
      %2662 = vst [vmem:[%s2636 + $0x24] sm:$0xf] %v2661
      %2663 = vst.msk [vmem:[%s2636 + $0x28] sm:$0xf] %vm1480, %v2382
      %v2664 = vld [vmem:[%s2636 + $0x2c] sm:$0x1]
      %v2665 = vsel %vm1491, %v2383, %v2664
      %2666 = vst [vmem:[%s2636 + $0x2c] sm:$0x1] %v2665
      %v2667 = vld [vmem:[%s2636 + $0x30] sm:$0xf]
      %v2668 = vsel %vm2638, %v2390, %v2667
      %2669 = vst [vmem:[%s2636 + $0x30] sm:$0xf] %v2668
      %2670 = vst.msk [vmem:[%s2636 + $0x34] sm:$0xf] %vm1480, %v2399
      %v2671 = vld [vmem:[%s2636 + $0x38] sm:$0x1]
      %v2672 = vsel %vm1491, %v2400, %v2671
      %2673 = vst [vmem:[%s2636 + $0x38] sm:$0x1] %v2672
      %v2674 = vld [vmem:[%s2636 + $0x3c] sm:$0xf]
      %v2675 = vsel %vm2638, %v2407, %v2674
      %2676 = vst [vmem:[%s2636 + $0x3c] sm:$0xf] %v2675
      %2677 = vst.msk [vmem:[%s2636 + $0x40] sm:$0xf] %vm1480, %v2416
      %v2678 = vld [vmem:[%s2636 + $0x44] sm:$0x1]
      %v2679 = vsel %vm1491, %v2417, %v2678
      %2680 = vst [vmem:[%s2636 + $0x44] sm:$0x1] %v2679
      %v2681 = vld [vmem:[%s2636 + $0x48] sm:$0xf]
      %v2682 = vsel %vm2638, %v2424, %v2681
      %2683 = vst [vmem:[%s2636 + $0x48] sm:$0xf] %v2682
      %2684 = vst.msk [vmem:[%s2636 + $0x4c] sm:$0xf] %vm1480, %v2433
      %v2685 = vld [vmem:[%s2636 + $0x50] sm:$0x1]
      %v2686 = vsel %vm1491, %v2434, %v2685
      %2687 = vst [vmem:[%s2636 + $0x50] sm:$0x1] %v2686
      %v2688 = vld [vmem:[%s2636 + $0x54] sm:$0xf]
      %v2689 = vsel %vm2638, %v2441, %v2688
      %2690 = vst [vmem:[%s2636 + $0x54] sm:$0xf] %v2689
      %2691 = vst.msk [vmem:[%s2636 + $0x58] sm:$0xf] %vm1480, %v2450
      %v2692 = vld [vmem:[%s2636 + $0x5c] sm:$0x1]
      %v2693 = vsel %vm1491, %v2451, %v2692
      %2694 = vst [vmem:[%s2636 + $0x5c] sm:$0x1] %v2693
      %v2695 = vld [vmem:[%s2636 + $0x60] sm:$0xf]
      %v2696 = vsel %vm2638, %v2458, %v2695
      %2697 = vst [vmem:[%s2636 + $0x60] sm:$0xf] %v2696
      %2698 = vst.msk [vmem:[%s2636 + $0x64] sm:$0xf] %vm1480, %v2467
      %v2699 = vld [vmem:[%s2636 + $0x68] sm:$0x1]
      %v2700 = vsel %vm1491, %v2468, %v2699
      %2701 = vst [vmem:[%s2636 + $0x68] sm:$0x1] %v2700
      %v2702 = vld [vmem:[%s2636 + $0x6c] sm:$0xf]
      %v2703 = vsel %vm2638, %v2475, %v2702
      %2704 = vst [vmem:[%s2636 + $0x6c] sm:$0xf] %v2703
      %2705 = vst.msk [vmem:[%s2636 + $0x70] sm:$0xf] %vm1480, %v2484
      %v2706 = vld [vmem:[%s2636 + $0x74] sm:$0x1]
      %v2707 = vsel %vm1491, %v2485, %v2706
      %2708 = vst [vmem:[%s2636 + $0x74] sm:$0x1] %v2707
      %v2709 = vld [vmem:[%s2636 + $0x78] sm:$0xf]
      %v2710 = vsel %vm2638, %v2492, %v2709
      %2711 = vst [vmem:[%s2636 + $0x78] sm:$0xf] %v2710
      %2712 = vst.msk [vmem:[%s2636 + $0x7c] sm:$0xf] %vm1480, %v2501
      %v2713 = vld [vmem:[%s2636 + $0x80] sm:$0x1]
      %v2714 = vsel %vm1491, %v2502, %v2713
      %2715 = vst [vmem:[%s2636 + $0x80] sm:$0x1] %v2714
      %v2716 = vld [vmem:[%s2636 + $0x84] sm:$0xf]
      %v2717 = vsel %vm2638, %v2509, %v2716
      %2718 = vst [vmem:[%s2636 + $0x84] sm:$0xf] %v2717
      %2719 = vst.msk [vmem:[%s2636 + $0x88] sm:$0xf] %vm1480, %v2518
      %v2720 = vld [vmem:[%s2636 + $0x8c] sm:$0x1]
      %v2721 = vsel %vm1491, %v2519, %v2720
      %2722 = vst [vmem:[%s2636 + $0x8c] sm:$0x1] %v2721
      %v2723 = vld [vmem:[%s2636 + $0x90] sm:$0xf]
      %v2724 = vsel %vm2638, %v2526, %v2723
      %2725 = vst [vmem:[%s2636 + $0x90] sm:$0xf] %v2724
      %2726 = vst.msk [vmem:[%s2636 + $0x94] sm:$0xf] %vm1480, %v2535
      %v2727 = vld [vmem:[%s2636 + $0x98] sm:$0x1]
      %v2728 = vsel %vm1491, %v2536, %v2727
      %2729 = vst [vmem:[%s2636 + $0x98] sm:$0x1] %v2728
      %v2730 = vld [vmem:[%s2636 + $0x9c] sm:$0xf]
      %v2731 = vsel %vm2638, %v2543, %v2730
      %2732 = vst [vmem:[%s2636 + $0x9c] sm:$0xf] %v2731
      %2733 = vst.msk [vmem:[%s2636 + $0xa0] sm:$0xf] %vm1480, %v2552
      %v2734 = vld [vmem:[%s2636 + $0xa4] sm:$0x1]
      %v2735 = vsel %vm1491, %v2553, %v2734
      %2736 = vst [vmem:[%s2636 + $0xa4] sm:$0x1] %v2735
      %v2737 = vld [vmem:[%s2636 + $0xa8] sm:$0xf]
      %v2738 = vsel %vm2638, %v2560, %v2737
      %2739 = vst [vmem:[%s2636 + $0xa8] sm:$0xf] %v2738
      %2740 = vst.msk [vmem:[%s2636 + $0xac] sm:$0xf] %vm1480, %v2569
      %v2741 = vld [vmem:[%s2636 + $0xb0] sm:$0x1]
      %v2742 = vsel %vm1491, %v2570, %v2741
      %2743 = vst [vmem:[%s2636 + $0xb0] sm:$0x1] %v2742
      %v2744 = vld [vmem:[%s2636 + $0xb4] sm:$0xf]
      %v2745 = vsel %vm2638, %v2577, %v2744
      %2746 = vst [vmem:[%s2636 + $0xb4] sm:$0xf] %v2745
      %2747 = vst.msk [vmem:[%s2636 + $0xb8] sm:$0xf] %vm1480, %v2586
      %v2748 = vld [vmem:[%s2636 + $0xbc] sm:$0x1]
      %v2749 = vsel %vm1491, %v2587, %v2748
      %2750 = vst [vmem:[%s2636 + $0xbc] sm:$0x1] %v2749
      %v2751 = vld [vmem:[#allocation2] sm:$0xf]
      %v2752 = vld [vmem:[#allocation2 + $0x4] sm:$0xf]
      %v2753 = vld [vmem:[#allocation2 + $0xc] sm:$0xf]
      %v2754 = vld [vmem:[#allocation2 + $0x10] sm:$0xf]
      %v2755 = vld [vmem:[#allocation2 + $0x18] sm:$0xf]
      %v2756 = vld [vmem:[#allocation2 + $0x1c] sm:$0xf]
      %v2757 = vld [vmem:[#allocation2 + $0x24] sm:$0xf]
      %v2758 = vld [vmem:[#allocation2 + $0x28] sm:$0xf]
      %v2759 = vld [vmem:[#allocation2 + $0x30] sm:$0xf]
      %v2760 = vld [vmem:[#allocation2 + $0x34] sm:$0xf]
      %v2761 = vld [vmem:[#allocation2 + $0x3c] sm:$0xf]
      %v2762 = vld [vmem:[#allocation2 + $0x40] sm:$0xf]
      %v2763 = vld [vmem:[#allocation2 + $0x48] sm:$0xf]
      %v2764 = vld [vmem:[#allocation2 + $0x4c] sm:$0xf]
      %v2765 = vld [vmem:[#allocation2 + $0x54] sm:$0xf]
      %v2766 = vld [vmem:[#allocation2 + $0x58] sm:$0xf]
      %v2767 = vld [vmem:[#allocation2 + $0x60] sm:$0xf]
      %v2768 = vld [vmem:[#allocation2 + $0x64] sm:$0xf]
      %v2769 = vld [vmem:[#allocation2 + $0x6c] sm:$0xf]
      %v2770 = vld [vmem:[#allocation2 + $0x70] sm:$0xf]
      %v2771 = vld [vmem:[#allocation2 + $0x78] sm:$0xf]
      %v2772 = vld [vmem:[#allocation2 + $0x7c] sm:$0xf]
      %v2773 = vld [vmem:[#allocation2 + $0x84] sm:$0xf]
      %v2774 = vld [vmem:[#allocation2 + $0x88] sm:$0xf]
      %v2775 = vld [vmem:[#allocation2 + $0x90] sm:$0xf]
      %v2776 = vld [vmem:[#allocation2 + $0x94] sm:$0xf]
      %v2777 = vld [vmem:[#allocation2 + $0x9c] sm:$0xf]
      %v2778 = vld [vmem:[#allocation2 + $0xa0] sm:$0xf]
      %v2779 = vld [vmem:[#allocation2 + $0xa8] sm:$0xf]
      %v2780 = vld [vmem:[#allocation2 + $0xac] sm:$0xf]
      %v2781 = vld [vmem:[#allocation2 + $0xb4] sm:$0xf]
      %v2782 = vld [vmem:[#allocation2 + $0xb8] sm:$0xf]
      %v2783 = vld [vmem:[#allocation2 + $0x8] sm:$0x1]
      %v2784 = vld [vmem:[#allocation2 + $0x14] sm:$0x1]
      %v2785 = vld [vmem:[#allocation2 + $0x20] sm:$0x1]
      %v2786 = vld [vmem:[#allocation2 + $0x2c] sm:$0x1]
      %v2787 = vld [vmem:[#allocation2 + $0x38] sm:$0x1]
      %v2788 = vld [vmem:[#allocation2 + $0x44] sm:$0x1]
      %v2789 = vld [vmem:[#allocation2 + $0x50] sm:$0x1]
      %v2790 = vld [vmem:[#allocation2 + $0x5c] sm:$0x1]
      %v2791 = vld [vmem:[#allocation2 + $0x68] sm:$0x1]
      %v2792 = vld [vmem:[#allocation2 + $0x74] sm:$0x1]
      %v2793 = vld [vmem:[#allocation2 + $0x80] sm:$0x1]
      %v2794 = vld [vmem:[#allocation2 + $0x8c] sm:$0x1]
      %v2795 = vld [vmem:[#allocation2 + $0x98] sm:$0x1]
      %v2796 = vld [vmem:[#allocation2 + $0xa4] sm:$0x1]
      %v2797 = vld [vmem:[#allocation2 + $0xb0] sm:$0x1]
      %v2798 = vld [vmem:[#allocation2 + $0xbc] sm:$0x1]
      %v2799 = vld [vmem:[#allocation2] sm:$0xe]
      %v2800 = vld [vmem:[#allocation2 + $0xc] sm:$0xe]
      %v2801 = vld [vmem:[#allocation2 + $0x18] sm:$0xe]
      %v2802 = vld [vmem:[#allocation2 + $0x24] sm:$0xe]
      %v2803 = vld [vmem:[#allocation2 + $0x30] sm:$0xe]
      %v2804 = vld [vmem:[#allocation2 + $0x3c] sm:$0xe]
      %v2805 = vld [vmem:[#allocation2 + $0x48] sm:$0xe]
      %v2806 = vld [vmem:[#allocation2 + $0x54] sm:$0xe]
      %v2807 = vld [vmem:[#allocation2 + $0x60] sm:$0xe]
      %v2808 = vld [vmem:[#allocation2 + $0x6c] sm:$0xe]
      %v2809 = vld [vmem:[#allocation2 + $0x78] sm:$0xe]
      %v2810 = vld [vmem:[#allocation2 + $0x84] sm:$0xe]
      %v2811 = vld [vmem:[#allocation2 + $0x90] sm:$0xe]
      %v2812 = vld [vmem:[#allocation2 + $0x9c] sm:$0xe]
      %v2813 = vld [vmem:[#allocation2 + $0xa8] sm:$0xe]
      %v2814 = vld [vmem:[#allocation2 + $0xb4] sm:$0xe]
      %v2847 = vunpack.c.l.b16 %v2751
      %v2848 = vunpack.c.l.b16 %v2752
      %v2849 = vunpack.c.l.b16 %v2753
      %v2850 = vunpack.c.l.b16 %v2754
      %v2851 = vunpack.c.l.b16 %v2755
      %v2852 = vunpack.c.l.b16 %v2756
      %v2853 = vunpack.c.l.b16 %v2757
      %v2854 = vunpack.c.l.b16 %v2758
      %v2855 = vunpack.c.l.b16 %v2759
      %v2856 = vunpack.c.l.b16 %v2760
      %v2857 = vunpack.c.l.b16 %v2761
      %v2858 = vunpack.c.l.b16 %v2762
      %v2859 = vunpack.c.l.b16 %v2763
      %v2860 = vunpack.c.l.b16 %v2764
      %v2861 = vunpack.c.l.b16 %v2765
      %v2862 = vunpack.c.l.b16 %v2766
      %v2863 = vunpack.c.l.b16 %v2767
      %v2864 = vunpack.c.l.b16 %v2768
      %v2865 = vunpack.c.l.b16 %v2769
      %v2866 = vunpack.c.l.b16 %v2770
      %v2867 = vunpack.c.l.b16 %v2771
      %v2868 = vunpack.c.l.b16 %v2772
      %v2869 = vunpack.c.l.b16 %v2773
      %v2870 = vunpack.c.l.b16 %v2774
      %v2871 = vunpack.c.l.b16 %v2775
      %v2872 = vunpack.c.l.b16 %v2776
      %v2873 = vunpack.c.l.b16 %v2777
      %v2874 = vunpack.c.l.b16 %v2778
      %v2875 = vunpack.c.l.b16 %v2779
      %v2876 = vunpack.c.l.b16 %v2780
      %v2877 = vunpack.c.l.b16 %v2781
      %v2878 = vunpack.c.l.b16 %v2782
      %v2879 = vpack.c.b16 %v2848, %v2847
      %v2880 = vpack.c.b16 %v2850, %v2849
      %v2881 = vpack.c.b16 %v2852, %v2851
      %v2882 = vpack.c.b16 %v2854, %v2853
      %v2883 = vpack.c.b16 %v2856, %v2855
      %v2884 = vpack.c.b16 %v2858, %v2857
      %v2885 = vpack.c.b16 %v2860, %v2859
      %v2886 = vpack.c.b16 %v2862, %v2861
      %v2887 = vpack.c.b16 %v2864, %v2863
      %v2888 = vpack.c.b16 %v2866, %v2865
      %v2889 = vpack.c.b16 %v2868, %v2867
      %v2890 = vpack.c.b16 %v2870, %v2869
      %v2891 = vpack.c.b16 %v2872, %v2871
      %v2892 = vpack.c.b16 %v2874, %v2873
      %v2893 = vpack.c.b16 %v2876, %v2875
      %v2894 = vpack.c.b16 %v2878, %v2877
      %v2911 = vunpack.c.l.b16 %v2783
      %v2912 = vunpack.c.l.b16 %v2784
      %v2913 = vunpack.c.l.b16 %v2785
      %v2914 = vunpack.c.l.b16 %v2786
      %v2915 = vunpack.c.l.b16 %v2787
      %v2916 = vunpack.c.l.b16 %v2788
      %v2917 = vunpack.c.l.b16 %v2789
      %v2918 = vunpack.c.l.b16 %v2790
      %v2919 = vunpack.c.l.b16 %v2791
      %v2920 = vunpack.c.l.b16 %v2792
      %v2921 = vunpack.c.l.b16 %v2793
      %v2922 = vunpack.c.l.b16 %v2794
      %v2923 = vunpack.c.l.b16 %v2795
      %v2924 = vunpack.c.l.b16 %v2796
      %v2925 = vunpack.c.l.b16 %v2797
      %v2926 = vunpack.c.l.b16 %v2798
      %v2927 = vpack.c.b16 %v2911, %v2911
      %v2928 = vpack.c.b16 %v2912, %v2912
      %v2929 = vpack.c.b16 %v2913, %v2913
      %v2930 = vpack.c.b16 %v2914, %v2914
      %v2931 = vpack.c.b16 %v2915, %v2915
      %v2932 = vpack.c.b16 %v2916, %v2916
      %v2933 = vpack.c.b16 %v2917, %v2917
      %v2934 = vpack.c.b16 %v2918, %v2918
      %v2935 = vpack.c.b16 %v2919, %v2919
      %v2936 = vpack.c.b16 %v2920, %v2920
      %v2937 = vpack.c.b16 %v2921, %v2921
      %v2938 = vpack.c.b16 %v2922, %v2922
      %v2939 = vpack.c.b16 %v2923, %v2923
      %v2940 = vpack.c.b16 %v2924, %v2924
      %v2941 = vpack.c.b16 %v2925, %v2925
      %v2942 = vpack.c.b16 %v2926, %v2926
      %vm2943 = vsmask.f32 7424
      %v2945 = vshrl.u32 %v2879, 16
      %v2947 = vshll.u32 %v2879, 16
      %v2949 = vrot.slane %v2947, 1
      %v2950 = vor.u32 %v2945, %v2949
      %v2952 = vshll.u32 %v2927, 16
      %v2954 = vrot.slane %v2952, 1
      %v2955 = vsel %vm2943, %v2950, %v2954
      %v2957 = vshrl.u32 %v2880, 16
      %v2959 = vshll.u32 %v2880, 16
      %v2961 = vrot.slane %v2959, 1
      %v2962 = vor.u32 %v2957, %v2961
      %v2964 = vshll.u32 %v2928, 16
      %v2966 = vrot.slane %v2964, 1
      %v2967 = vsel %vm2943, %v2962, %v2966
      %v2969 = vshrl.u32 %v2881, 16
      %v2971 = vshll.u32 %v2881, 16
      %v2973 = vrot.slane %v2971, 1
      %v2974 = vor.u32 %v2969, %v2973
      %v2976 = vshll.u32 %v2929, 16
      %v2978 = vrot.slane %v2976, 1
      %v2979 = vsel %vm2943, %v2974, %v2978
      %v2981 = vshrl.u32 %v2882, 16
      %v2983 = vshll.u32 %v2882, 16
      %v2985 = vrot.slane %v2983, 1
      %v2986 = vor.u32 %v2981, %v2985
      %v2988 = vshll.u32 %v2930, 16
      %v2990 = vrot.slane %v2988, 1
      %v2991 = vsel %vm2943, %v2986, %v2990
      %v2993 = vshrl.u32 %v2883, 16
      %v2995 = vshll.u32 %v2883, 16
      %v2997 = vrot.slane %v2995, 1
      %v2998 = vor.u32 %v2993, %v2997
      %v3000 = vshll.u32 %v2931, 16
      %v3002 = vrot.slane %v3000, 1
      %v3003 = vsel %vm2943, %v2998, %v3002
      %v3005 = vshrl.u32 %v2884, 16
      %v3007 = vshll.u32 %v2884, 16
      %v3009 = vrot.slane %v3007, 1
      %v3010 = vor.u32 %v3005, %v3009
      %v3012 = vshll.u32 %v2932, 16
      %v3014 = vrot.slane %v3012, 1
      %v3015 = vsel %vm2943, %v3010, %v3014
      %v3017 = vshrl.u32 %v2885, 16
      %v3019 = vshll.u32 %v2885, 16
      %v3021 = vrot.slane %v3019, 1
      %v3022 = vor.u32 %v3017, %v3021
      %v3024 = vshll.u32 %v2933, 16
      %v3026 = vrot.slane %v3024, 1
      %v3027 = vsel %vm2943, %v3022, %v3026
      %v3029 = vshrl.u32 %v2886, 16
      %v3031 = vshll.u32 %v2886, 16
      %v3033 = vrot.slane %v3031, 1
      %v3034 = vor.u32 %v3029, %v3033
      %v3036 = vshll.u32 %v2934, 16
      %v3038 = vrot.slane %v3036, 1
      %v3039 = vsel %vm2943, %v3034, %v3038
      %v3041 = vshrl.u32 %v2887, 16
      %v3043 = vshll.u32 %v2887, 16
      %v3045 = vrot.slane %v3043, 1
      %v3046 = vor.u32 %v3041, %v3045
      %v3048 = vshll.u32 %v2935, 16
      %v3050 = vrot.slane %v3048, 1
      %v3051 = vsel %vm2943, %v3046, %v3050
      %v3053 = vshrl.u32 %v2888, 16
      %v3055 = vshll.u32 %v2888, 16
      %v3057 = vrot.slane %v3055, 1
      %v3058 = vor.u32 %v3053, %v3057
      %v3060 = vshll.u32 %v2936, 16
      %v3062 = vrot.slane %v3060, 1
      %v3063 = vsel %vm2943, %v3058, %v3062
      %v3065 = vshrl.u32 %v2889, 16
      %v3067 = vshll.u32 %v2889, 16
      %v3069 = vrot.slane %v3067, 1
      %v3070 = vor.u32 %v3065, %v3069
      %v3072 = vshll.u32 %v2937, 16
      %v3074 = vrot.slane %v3072, 1
      %v3075 = vsel %vm2943, %v3070, %v3074
      %v3077 = vshrl.u32 %v2890, 16
      %v3079 = vshll.u32 %v2890, 16
      %v3081 = vrot.slane %v3079, 1
      %v3082 = vor.u32 %v3077, %v3081
      %v3084 = vshll.u32 %v2938, 16
      %v3086 = vrot.slane %v3084, 1
      %v3087 = vsel %vm2943, %v3082, %v3086
      %v3089 = vshrl.u32 %v2891, 16
      %v3091 = vshll.u32 %v2891, 16
      %v3093 = vrot.slane %v3091, 1
      %v3094 = vor.u32 %v3089, %v3093
      %v3096 = vshll.u32 %v2939, 16
      %v3098 = vrot.slane %v3096, 1
      %v3099 = vsel %vm2943, %v3094, %v3098
      %v3101 = vshrl.u32 %v2892, 16
      %v3103 = vshll.u32 %v2892, 16
      %v3105 = vrot.slane %v3103, 1
      %v3106 = vor.u32 %v3101, %v3105
      %v3108 = vshll.u32 %v2940, 16
      %v3110 = vrot.slane %v3108, 1
      %v3111 = vsel %vm2943, %v3106, %v3110
      %v3113 = vshrl.u32 %v2893, 16
      %v3115 = vshll.u32 %v2893, 16
      %v3117 = vrot.slane %v3115, 1
      %v3118 = vor.u32 %v3113, %v3117
      %v3120 = vshll.u32 %v2941, 16
      %v3122 = vrot.slane %v3120, 1
      %v3123 = vsel %vm2943, %v3118, %v3122
      %v3125 = vshrl.u32 %v2894, 16
      %v3127 = vshll.u32 %v2894, 16
      %v3129 = vrot.slane %v3127, 1
      %v3130 = vor.u32 %v3125, %v3129
      %v3132 = vshll.u32 %v2942, 16
      %v3134 = vrot.slane %v3132, 1
      %v3135 = vsel %vm2943, %v3130, %v3134
      %3136 = vrot.lane.b32.xlu0 %v2955, 64
      %v3137 = vpop.permute.xlu0 %3136
      %3138 = vrot.lane.b32.xlu0 %v2967, 64
      %v3139 = vpop.permute.xlu0 %3138
      %3140 = vrot.lane.b32.xlu0 %v2979, 64
      %v3141 = vpop.permute.xlu0 %3140
      %3142 = vrot.lane.b32.xlu0 %v2991, 64
      %v3143 = vpop.permute.xlu0 %3142
      %3144 = vrot.lane.b32.xlu0 %v3003, 64
      %v3145 = vpop.permute.xlu0 %3144
      %3146 = vrot.lane.b32.xlu0 %v3015, 64
      %v3147 = vpop.permute.xlu0 %3146
      %3148 = vrot.lane.b32.xlu0 %v3027, 64
      %v3149 = vpop.permute.xlu0 %3148
      %3150 = vrot.lane.b32.xlu0 %v3039, 64
      %v3151 = vpop.permute.xlu0 %3150
      %3152 = vrot.lane.b32.xlu0 %v3051, 64
      %v3153 = vpop.permute.xlu0 %3152
      %3154 = vrot.lane.b32.xlu0 %v3063, 64
      %v3155 = vpop.permute.xlu0 %3154
      %3156 = vrot.lane.b32.xlu0 %v3075, 64
      %v3157 = vpop.permute.xlu0 %3156
      %3158 = vrot.lane.b32.xlu0 %v3087, 64
      %v3159 = vpop.permute.xlu0 %3158
      %3160 = vrot.lane.b32.xlu0 %v3099, 64
      %v3161 = vpop.permute.xlu0 %3160
      %3162 = vrot.lane.b32.xlu0 %v3111, 64
      %v3163 = vpop.permute.xlu0 %3162
      %3164 = vrot.lane.b32.xlu0 %v3123, 64
      %v3165 = vpop.permute.xlu0 %3164
      %3166 = vrot.lane.b32.xlu0 %v3135, 64
      %v3167 = vpop.permute.xlu0 %3166
      %v3184 = vunpack.c.l.b16 %v2799
      %v3185 = vunpack.c.l.b16 %v2800
      %v3186 = vunpack.c.l.b16 %v2801
      %v3187 = vunpack.c.l.b16 %v2802
      %v3188 = vunpack.c.l.b16 %v2803
      %v3189 = vunpack.c.l.b16 %v2804
      %v3190 = vunpack.c.l.b16 %v2805
      %v3191 = vunpack.c.l.b16 %v2806
      %v3192 = vunpack.c.l.b16 %v2807
      %v3193 = vunpack.c.l.b16 %v2808
      %v3194 = vunpack.c.l.b16 %v2809
      %v3195 = vunpack.c.l.b16 %v2810
      %v3196 = vunpack.c.l.b16 %v2811
      %v3197 = vunpack.c.l.b16 %v2812
      %v3198 = vunpack.c.l.b16 %v2813
      %v3199 = vunpack.c.l.b16 %v2814
      %v3200 = vpack.c.b16 %v2848, %v3184
      %v3201 = vpack.c.b16 %v2850, %v3185
      %v3202 = vpack.c.b16 %v2852, %v3186
      %v3203 = vpack.c.b16 %v2854, %v3187
      %v3204 = vpack.c.b16 %v2856, %v3188
      %v3205 = vpack.c.b16 %v2858, %v3189
      %v3206 = vpack.c.b16 %v2860, %v3190
      %v3207 = vpack.c.b16 %v2862, %v3191
      %v3208 = vpack.c.b16 %v2864, %v3192
      %v3209 = vpack.c.b16 %v2866, %v3193
      %v3210 = vpack.c.b16 %v2868, %v3194
      %v3211 = vpack.c.b16 %v2870, %v3195
      %v3212 = vpack.c.b16 %v2872, %v3196
      %v3213 = vpack.c.b16 %v2874, %v3197
      %v3214 = vpack.c.b16 %v2876, %v3198
      %v3215 = vpack.c.b16 %v2878, %v3199
      %vm3216 = vcmask 1046528
      %v3217 = vrot.slane %v3200, 1
      %v3218 = vrot.slane %v2927, 1
      %v3219 = vsel %vm3216, %v3217, %v3218
      %v3220 = vrot.slane %v3201, 1
      %v3221 = vrot.slane %v2928, 1
      %v3222 = vsel %vm3216, %v3220, %v3221
      %v3223 = vrot.slane %v3202, 1
      %v3224 = vrot.slane %v2929, 1
      %v3225 = vsel %vm3216, %v3223, %v3224
      %v3226 = vrot.slane %v3203, 1
      %v3227 = vrot.slane %v2930, 1
      %v3228 = vsel %vm3216, %v3226, %v3227
      %v3229 = vrot.slane %v3204, 1
      %v3230 = vrot.slane %v2931, 1
      %v3231 = vsel %vm3216, %v3229, %v3230
      %v3232 = vrot.slane %v3205, 1
      %v3233 = vrot.slane %v2932, 1
      %v3234 = vsel %vm3216, %v3232, %v3233
      %v3235 = vrot.slane %v3206, 1
      %v3236 = vrot.slane %v2933, 1
      %v3237 = vsel %vm3216, %v3235, %v3236
      %v3238 = vrot.slane %v3207, 1
      %v3239 = vrot.slane %v2934, 1
      %v3240 = vsel %vm3216, %v3238, %v3239
      %v3241 = vrot.slane %v3208, 1
      %v3242 = vrot.slane %v2935, 1
      %v3243 = vsel %vm3216, %v3241, %v3242
      %v3244 = vrot.slane %v3209, 1
      %v3245 = vrot.slane %v2936, 1
      %v3246 = vsel %vm3216, %v3244, %v3245
      %v3247 = vrot.slane %v3210, 1
      %v3248 = vrot.slane %v2937, 1
      %v3249 = vsel %vm3216, %v3247, %v3248
      %v3250 = vrot.slane %v3211, 1
      %v3251 = vrot.slane %v2938, 1
      %v3252 = vsel %vm3216, %v3250, %v3251
      %v3253 = vrot.slane %v3212, 1
      %v3254 = vrot.slane %v2939, 1
      %v3255 = vsel %vm3216, %v3253, %v3254
      %v3256 = vrot.slane %v3213, 1
      %v3257 = vrot.slane %v2940, 1
      %v3258 = vsel %vm3216, %v3256, %v3257
      %v3259 = vrot.slane %v3214, 1
      %v3260 = vrot.slane %v2941, 1
      %v3261 = vsel %vm3216, %v3259, %v3260
      %v3262 = vrot.slane %v3215, 1
      %v3263 = vrot.slane %v2942, 1
      %v3264 = vsel %vm3216, %v3262, %v3263
      %v3266 = vsel %vm499, %v2879, %v3137
      %v3269 = vsel %vm499, %v2880, %v3139
      %v3272 = vsel %vm499, %v2881, %v3141
      %v3275 = vsel %vm499, %v2882, %v3143
      %v3278 = vsel %vm499, %v2883, %v3145
      %v3281 = vsel %vm499, %v2884, %v3147
      %v3284 = vsel %vm499, %v2885, %v3149
      %v3287 = vsel %vm499, %v2886, %v3151
      %v3290 = vsel %vm499, %v2887, %v3153
      %v3293 = vsel %vm499, %v2888, %v3155
      %v3296 = vsel %vm499, %v2889, %v3157
      %v3299 = vsel %vm499, %v2890, %v3159
      %v3302 = vsel %vm499, %v2891, %v3161
      %v3305 = vsel %vm499, %v2892, %v3163
      %v3308 = vsel %vm499, %v2893, %v3165
      %v3311 = vsel %vm499, %v2894, %v3167
      %v3313 = vld [vmem:[%s4] sm:$0xf]
      %v3314 = vld [vmem:[%s4 + $0x4] sm:$0xf]
      %v3315 = vld [vmem:[%s4 + $0x8] sm:$0xf]
      %v3316 = vld [vmem:[%s4 + $0xc] sm:$0xf]
      %v3317 = vld [vmem:[%s4 + $0x10] sm:$0xf]
      %v3318 = vld [vmem:[%s4 + $0x14] sm:$0xf]
      %v3319 = vld [vmem:[%s4 + $0x18] sm:$0xf]
      %v3320 = vld [vmem:[%s4 + $0x1c] sm:$0xf]
      %v3321 = vld [vmem:[%s4 + $0x20] sm:$0xf]
      %v3322 = vld [vmem:[%s4 + $0x24] sm:$0xf]
      %v3323 = vld [vmem:[%s4 + $0x28] sm:$0xf]
      %v3324 = vld [vmem:[%s4 + $0x2c] sm:$0xf]
      %v3325 = vld [vmem:[%s4 + $0x30] sm:$0xf]
      %v3326 = vld [vmem:[%s4 + $0x34] sm:$0xf]
      %v3327 = vld [vmem:[%s4 + $0x38] sm:$0xf]
      %v3328 = vld [vmem:[%s4 + $0x3c] sm:$0xf]
      %v3329 = vld [vmem:[%s4 + $0x40] sm:$0xf]
      %v3330 = vld [vmem:[%s4 + $0x44] sm:$0xf]
      %v3331 = vld [vmem:[%s4 + $0x48] sm:$0xf]
      %v3332 = vld [vmem:[%s4 + $0x4c] sm:$0xf]
      %v3333 = vld [vmem:[%s4 + $0x50] sm:$0xf]
      %v3334 = vld [vmem:[%s4 + $0x54] sm:$0xf]
      %v3335 = vld [vmem:[%s4 + $0x58] sm:$0xf]
      %v3336 = vld [vmem:[%s4 + $0x5c] sm:$0xf]
      %v3337 = vld [vmem:[%s2636] sm:$0xf]
      %v3338 = vld [vmem:[%s2636 + $0x4] sm:$0xf]
      %v3339 = vld [vmem:[%s2636 + $0xc] sm:$0xf]
      %v3340 = vld [vmem:[%s2636 + $0x10] sm:$0xf]
      %v3341 = vld [vmem:[%s2636 + $0x18] sm:$0xf]
      %v3342 = vld [vmem:[%s2636 + $0x1c] sm:$0xf]
      %v3343 = vld [vmem:[%s2636 + $0x24] sm:$0xf]
      %v3344 = vld [vmem:[%s2636 + $0x28] sm:$0xf]
      %v3345 = vld [vmem:[%s2636 + $0x30] sm:$0xf]
      %v3346 = vld [vmem:[%s2636 + $0x34] sm:$0xf]
      %v3347 = vld [vmem:[%s2636 + $0x3c] sm:$0xf]
      %v3348 = vld [vmem:[%s2636 + $0x40] sm:$0xf]
      %v3349 = vld [vmem:[%s2636 + $0x48] sm:$0xf]
      %v3350 = vld [vmem:[%s2636 + $0x4c] sm:$0xf]
      %v3351 = vld [vmem:[%s2636 + $0x54] sm:$0xf]
      %v3352 = vld [vmem:[%s2636 + $0x58] sm:$0xf]
      %v3353 = vld [vmem:[%s2636 + $0x60] sm:$0xf]
      %v3354 = vld [vmem:[%s2636 + $0x64] sm:$0xf]
      %v3355 = vld [vmem:[%s2636 + $0x6c] sm:$0xf]
      %v3356 = vld [vmem:[%s2636 + $0x70] sm:$0xf]
      %v3357 = vld [vmem:[%s2636 + $0x78] sm:$0xf]
      %v3358 = vld [vmem:[%s2636 + $0x7c] sm:$0xf]
      %v3359 = vld [vmem:[%s2636 + $0x84] sm:$0xf]
      %v3360 = vld [vmem:[%s2636 + $0x88] sm:$0xf]
      %v3361 = vld [vmem:[%s2636 + $0x90] sm:$0xf]
      %v3362 = vld [vmem:[%s2636 + $0x94] sm:$0xf]
      %v3363 = vld [vmem:[%s2636 + $0x9c] sm:$0xf]
      %v3364 = vld [vmem:[%s2636 + $0xa0] sm:$0xf]
      %v3365 = vld [vmem:[%s2636 + $0xa8] sm:$0xf]
      %v3366 = vld [vmem:[%s2636 + $0xac] sm:$0xf]
      %v3367 = vld [vmem:[%s2636 + $0xb4] sm:$0xf]
      %v3368 = vld [vmem:[%s2636 + $0xb8] sm:$0xf]
      %v3369 = vld [vmem:[%s2636 + $0x8] sm:$0x1]
      %v3370 = vld [vmem:[%s2636 + $0x14] sm:$0x1]
      %v3371 = vld [vmem:[%s2636 + $0x20] sm:$0x1]
      %v3372 = vld [vmem:[%s2636 + $0x2c] sm:$0x1]
      %v3373 = vld [vmem:[%s2636 + $0x38] sm:$0x1]
      %v3374 = vld [vmem:[%s2636 + $0x44] sm:$0x1]
      %v3375 = vld [vmem:[%s2636 + $0x50] sm:$0x1]
      %v3376 = vld [vmem:[%s2636 + $0x5c] sm:$0x1]
      %v3377 = vld [vmem:[%s2636 + $0x68] sm:$0x1]
      %v3378 = vld [vmem:[%s2636 + $0x74] sm:$0x1]
      %v3379 = vld [vmem:[%s2636 + $0x80] sm:$0x1]
      %v3380 = vld [vmem:[%s2636 + $0x8c] sm:$0x1]
      %v3381 = vld [vmem:[%s2636 + $0x98] sm:$0x1]
      %v3382 = vld [vmem:[%s2636 + $0xa4] sm:$0x1]
      %v3383 = vld [vmem:[%s2636 + $0xb0] sm:$0x1]
      %v3384 = vld [vmem:[%s2636 + $0xbc] sm:$0x1]
      %v3385 = vld [vmem:[%s2636] sm:$0xe]
      %v3386 = vld [vmem:[%s2636 + $0xc] sm:$0xe]
      %v3387 = vld [vmem:[%s2636 + $0x18] sm:$0xe]
      %v3388 = vld [vmem:[%s2636 + $0x24] sm:$0xe]
      %v3389 = vld [vmem:[%s2636 + $0x30] sm:$0xe]
      %v3390 = vld [vmem:[%s2636 + $0x3c] sm:$0xe]
      %v3391 = vld [vmem:[%s2636 + $0x48] sm:$0xe]
      %v3392 = vld [vmem:[%s2636 + $0x54] sm:$0xe]
      %v3393 = vld [vmem:[%s2636 + $0x60] sm:$0xe]
      %v3394 = vld [vmem:[%s2636 + $0x6c] sm:$0xe]
      %v3395 = vld [vmem:[%s2636 + $0x78] sm:$0xe]
      %v3396 = vld [vmem:[%s2636 + $0x84] sm:$0xe]
      %v3397 = vld [vmem:[%s2636 + $0x90] sm:$0xe]
      %v3398 = vld [vmem:[%s2636 + $0x9c] sm:$0xe]
      %v3399 = vld [vmem:[%s2636 + $0xa8] sm:$0xe]
      %v3400 = vld [vmem:[%s2636 + $0xb4] sm:$0xe]
      %v3433 = vunpack.c.l.b16 %v3337
      %v3434 = vunpack.c.l.b16 %v3338
      %v3435 = vunpack.c.l.b16 %v3339
      %v3436 = vunpack.c.l.b16 %v3340
      %v3437 = vunpack.c.l.b16 %v3341
      %v3438 = vunpack.c.l.b16 %v3342
      %v3439 = vunpack.c.l.b16 %v3343
      %v3440 = vunpack.c.l.b16 %v3344
      %v3441 = vunpack.c.l.b16 %v3345
      %v3442 = vunpack.c.l.b16 %v3346
      %v3443 = vunpack.c.l.b16 %v3347
      %v3444 = vunpack.c.l.b16 %v3348
      %v3445 = vunpack.c.l.b16 %v3349
      %v3446 = vunpack.c.l.b16 %v3350
      %v3447 = vunpack.c.l.b16 %v3351
      %v3448 = vunpack.c.l.b16 %v3352
      %v3449 = vunpack.c.l.b16 %v3353
      %v3450 = vunpack.c.l.b16 %v3354
      %v3451 = vunpack.c.l.b16 %v3355
      %v3452 = vunpack.c.l.b16 %v3356
      %v3453 = vunpack.c.l.b16 %v3357
      %v3454 = vunpack.c.l.b16 %v3358
      %v3455 = vunpack.c.l.b16 %v3359
      %v3456 = vunpack.c.l.b16 %v3360
      %v3457 = vunpack.c.l.b16 %v3361
      %v3458 = vunpack.c.l.b16 %v3362
      %v3459 = vunpack.c.l.b16 %v3363
      %v3460 = vunpack.c.l.b16 %v3364
      %v3461 = vunpack.c.l.b16 %v3365
      %v3462 = vunpack.c.l.b16 %v3366
      %v3463 = vunpack.c.l.b16 %v3367
      %v3464 = vunpack.c.l.b16 %v3368
      %v3465 = vpack.c.b16 %v3434, %v3433
      %v3466 = vpack.c.b16 %v3436, %v3435
      %v3467 = vpack.c.b16 %v3438, %v3437
      %v3468 = vpack.c.b16 %v3440, %v3439
      %v3469 = vpack.c.b16 %v3442, %v3441
      %v3470 = vpack.c.b16 %v3444, %v3443
      %v3471 = vpack.c.b16 %v3446, %v3445
      %v3472 = vpack.c.b16 %v3448, %v3447
      %v3473 = vpack.c.b16 %v3450, %v3449
      %v3474 = vpack.c.b16 %v3452, %v3451
      %v3475 = vpack.c.b16 %v3454, %v3453
      %v3476 = vpack.c.b16 %v3456, %v3455
      %v3477 = vpack.c.b16 %v3458, %v3457
      %v3478 = vpack.c.b16 %v3460, %v3459
      %v3479 = vpack.c.b16 %v3462, %v3461
      %v3480 = vpack.c.b16 %v3464, %v3463
      %v3497 = vunpack.c.l.b16 %v3369
      %v3498 = vunpack.c.l.b16 %v3370
      %v3499 = vunpack.c.l.b16 %v3371
      %v3500 = vunpack.c.l.b16 %v3372
      %v3501 = vunpack.c.l.b16 %v3373
      %v3502 = vunpack.c.l.b16 %v3374
      %v3503 = vunpack.c.l.b16 %v3375
      %v3504 = vunpack.c.l.b16 %v3376
      %v3505 = vunpack.c.l.b16 %v3377
      %v3506 = vunpack.c.l.b16 %v3378
      %v3507 = vunpack.c.l.b16 %v3379
      %v3508 = vunpack.c.l.b16 %v3380
      %v3509 = vunpack.c.l.b16 %v3381
      %v3510 = vunpack.c.l.b16 %v3382
      %v3511 = vunpack.c.l.b16 %v3383
      %v3512 = vunpack.c.l.b16 %v3384
      %v3513 = vpack.c.b16 %v3497, %v3497
      %v3514 = vpack.c.b16 %v3498, %v3498
      %v3515 = vpack.c.b16 %v3499, %v3499
      %v3516 = vpack.c.b16 %v3500, %v3500
      %v3517 = vpack.c.b16 %v3501, %v3501
      %v3518 = vpack.c.b16 %v3502, %v3502
      %v3519 = vpack.c.b16 %v3503, %v3503
      %v3520 = vpack.c.b16 %v3504, %v3504
      %v3521 = vpack.c.b16 %v3505, %v3505
      %v3522 = vpack.c.b16 %v3506, %v3506
      %v3523 = vpack.c.b16 %v3507, %v3507
      %v3524 = vpack.c.b16 %v3508, %v3508
      %v3525 = vpack.c.b16 %v3509, %v3509
      %v3526 = vpack.c.b16 %v3510, %v3510
      %v3527 = vpack.c.b16 %v3511, %v3511
      %v3528 = vpack.c.b16 %v3512, %v3512
      %v3530 = vshrl.u32 %v3465, 16
      %v3532 = vshll.u32 %v3465, 16
      %v3534 = vrot.slane %v3532, 1
      %v3535 = vor.u32 %v3530, %v3534
      %v3537 = vshll.u32 %v3513, 16
      %v3539 = vrot.slane %v3537, 1
      %v3540 = vsel %vm2943, %v3535, %v3539
      %v3542 = vshrl.u32 %v3466, 16
      %v3544 = vshll.u32 %v3466, 16
      %v3546 = vrot.slane %v3544, 1
      %v3547 = vor.u32 %v3542, %v3546
      %v3549 = vshll.u32 %v3514, 16
      %v3551 = vrot.slane %v3549, 1
      %v3552 = vsel %vm2943, %v3547, %v3551
      %v3554 = vshrl.u32 %v3467, 16
      %v3556 = vshll.u32 %v3467, 16
      %v3558 = vrot.slane %v3556, 1
      %v3559 = vor.u32 %v3554, %v3558
      %v3561 = vshll.u32 %v3515, 16
      %v3563 = vrot.slane %v3561, 1
      %v3564 = vsel %vm2943, %v3559, %v3563
      %v3566 = vshrl.u32 %v3468, 16
      %v3568 = vshll.u32 %v3468, 16
      %v3570 = vrot.slane %v3568, 1
      %v3571 = vor.u32 %v3566, %v3570
      %v3573 = vshll.u32 %v3516, 16
      %v3575 = vrot.slane %v3573, 1
      %v3576 = vsel %vm2943, %v3571, %v3575
      %v3578 = vshrl.u32 %v3469, 16
      %v3580 = vshll.u32 %v3469, 16
      %v3582 = vrot.slane %v3580, 1
      %v3583 = vor.u32 %v3578, %v3582
      %v3585 = vshll.u32 %v3517, 16
      %v3587 = vrot.slane %v3585, 1
      %v3588 = vsel %vm2943, %v3583, %v3587
      %v3590 = vshrl.u32 %v3470, 16
      %v3592 = vshll.u32 %v3470, 16
      %v3594 = vrot.slane %v3592, 1
      %v3595 = vor.u32 %v3590, %v3594
      %v3597 = vshll.u32 %v3518, 16
      %v3599 = vrot.slane %v3597, 1
      %v3600 = vsel %vm2943, %v3595, %v3599
      %v3602 = vshrl.u32 %v3471, 16
      %v3604 = vshll.u32 %v3471, 16
      %v3606 = vrot.slane %v3604, 1
      %v3607 = vor.u32 %v3602, %v3606
      %v3609 = vshll.u32 %v3519, 16
      %v3611 = vrot.slane %v3609, 1
      %v3612 = vsel %vm2943, %v3607, %v3611
      %v3614 = vshrl.u32 %v3472, 16
      %v3616 = vshll.u32 %v3472, 16
      %v3618 = vrot.slane %v3616, 1
      %v3619 = vor.u32 %v3614, %v3618
      %v3621 = vshll.u32 %v3520, 16
      %v3623 = vrot.slane %v3621, 1
      %v3624 = vsel %vm2943, %v3619, %v3623
      %v3626 = vshrl.u32 %v3473, 16
      %v3628 = vshll.u32 %v3473, 16
      %v3630 = vrot.slane %v3628, 1
      %v3631 = vor.u32 %v3626, %v3630
      %v3633 = vshll.u32 %v3521, 16
      %v3635 = vrot.slane %v3633, 1
      %v3636 = vsel %vm2943, %v3631, %v3635
      %v3638 = vshrl.u32 %v3474, 16
      %v3640 = vshll.u32 %v3474, 16
      %v3642 = vrot.slane %v3640, 1
      %v3643 = vor.u32 %v3638, %v3642
      %v3645 = vshll.u32 %v3522, 16
      %v3647 = vrot.slane %v3645, 1
      %v3648 = vsel %vm2943, %v3643, %v3647
      %v3650 = vshrl.u32 %v3475, 16
      %v3652 = vshll.u32 %v3475, 16
      %v3654 = vrot.slane %v3652, 1
      %v3655 = vor.u32 %v3650, %v3654
      %v3657 = vshll.u32 %v3523, 16
      %v3659 = vrot.slane %v3657, 1
      %v3660 = vsel %vm2943, %v3655, %v3659
      %v3662 = vshrl.u32 %v3476, 16
      %v3664 = vshll.u32 %v3476, 16
      %v3666 = vrot.slane %v3664, 1
      %v3667 = vor.u32 %v3662, %v3666
      %v3669 = vshll.u32 %v3524, 16
      %v3671 = vrot.slane %v3669, 1
      %v3672 = vsel %vm2943, %v3667, %v3671
      %v3674 = vshrl.u32 %v3477, 16
      %v3676 = vshll.u32 %v3477, 16
      %v3678 = vrot.slane %v3676, 1
      %v3679 = vor.u32 %v3674, %v3678
      %v3681 = vshll.u32 %v3525, 16
      %v3683 = vrot.slane %v3681, 1
      %v3684 = vsel %vm2943, %v3679, %v3683
      %v3686 = vshrl.u32 %v3478, 16
      %v3688 = vshll.u32 %v3478, 16
      %v3690 = vrot.slane %v3688, 1
      %v3691 = vor.u32 %v3686, %v3690
      %v3693 = vshll.u32 %v3526, 16
      %v3695 = vrot.slane %v3693, 1
      %v3696 = vsel %vm2943, %v3691, %v3695
      %v3698 = vshrl.u32 %v3479, 16
      %v3700 = vshll.u32 %v3479, 16
      %v3702 = vrot.slane %v3700, 1
      %v3703 = vor.u32 %v3698, %v3702
      %v3705 = vshll.u32 %v3527, 16
      %v3707 = vrot.slane %v3705, 1
      %v3708 = vsel %vm2943, %v3703, %v3707
      %v3710 = vshrl.u32 %v3480, 16
      %v3712 = vshll.u32 %v3480, 16
      %v3714 = vrot.slane %v3712, 1
      %v3715 = vor.u32 %v3710, %v3714
      %v3717 = vshll.u32 %v3528, 16
      %v3719 = vrot.slane %v3717, 1
      %v3720 = vsel %vm2943, %v3715, %v3719
      %3721 = vrot.lane.b32.xlu0 %v3540, 64
      %v3722 = vpop.permute.xlu0 %3721
      %3723 = vrot.lane.b32.xlu0 %v3552, 64
      %v3724 = vpop.permute.xlu0 %3723
      %3725 = vrot.lane.b32.xlu0 %v3564, 64
      %v3726 = vpop.permute.xlu0 %3725
      %3727 = vrot.lane.b32.xlu0 %v3576, 64
      %v3728 = vpop.permute.xlu0 %3727
      %3729 = vrot.lane.b32.xlu0 %v3588, 64
      %v3730 = vpop.permute.xlu0 %3729
      %3731 = vrot.lane.b32.xlu0 %v3600, 64
      %v3732 = vpop.permute.xlu0 %3731
      %3733 = vrot.lane.b32.xlu0 %v3612, 64
      %v3734 = vpop.permute.xlu0 %3733
      %3735 = vrot.lane.b32.xlu0 %v3624, 64
      %v3736 = vpop.permute.xlu0 %3735
      %3737 = vrot.lane.b32.xlu0 %v3636, 64
      %v3738 = vpop.permute.xlu0 %3737
      %3739 = vrot.lane.b32.xlu0 %v3648, 64
      %v3740 = vpop.permute.xlu0 %3739
      %3741 = vrot.lane.b32.xlu0 %v3660, 64
      %v3742 = vpop.permute.xlu0 %3741
      %3743 = vrot.lane.b32.xlu0 %v3672, 64
      %v3744 = vpop.permute.xlu0 %3743
      %3745 = vrot.lane.b32.xlu0 %v3684, 64
      %v3746 = vpop.permute.xlu0 %3745
      %3747 = vrot.lane.b32.xlu0 %v3696, 64
      %v3748 = vpop.permute.xlu0 %3747
      %3749 = vrot.lane.b32.xlu0 %v3708, 64
      %v3750 = vpop.permute.xlu0 %3749
      %3751 = vrot.lane.b32.xlu0 %v3720, 64
      %v3752 = vpop.permute.xlu0 %3751
      %v3769 = vunpack.c.l.b16 %v3385
      %v3770 = vunpack.c.l.b16 %v3386
      %v3771 = vunpack.c.l.b16 %v3387
      %v3772 = vunpack.c.l.b16 %v3388
      %v3773 = vunpack.c.l.b16 %v3389
      %v3774 = vunpack.c.l.b16 %v3390
      %v3775 = vunpack.c.l.b16 %v3391
      %v3776 = vunpack.c.l.b16 %v3392
      %v3777 = vunpack.c.l.b16 %v3393
      %v3778 = vunpack.c.l.b16 %v3394
      %v3779 = vunpack.c.l.b16 %v3395
      %v3780 = vunpack.c.l.b16 %v3396
      %v3781 = vunpack.c.l.b16 %v3397
      %v3782 = vunpack.c.l.b16 %v3398
      %v3783 = vunpack.c.l.b16 %v3399
      %v3784 = vunpack.c.l.b16 %v3400
      %v3785 = vpack.c.b16 %v3434, %v3769
      %v3786 = vpack.c.b16 %v3436, %v3770
      %v3787 = vpack.c.b16 %v3438, %v3771
      %v3788 = vpack.c.b16 %v3440, %v3772
      %v3789 = vpack.c.b16 %v3442, %v3773
      %v3790 = vpack.c.b16 %v3444, %v3774
      %v3791 = vpack.c.b16 %v3446, %v3775
      %v3792 = vpack.c.b16 %v3448, %v3776
      %v3793 = vpack.c.b16 %v3450, %v3777
      %v3794 = vpack.c.b16 %v3452, %v3778
      %v3795 = vpack.c.b16 %v3454, %v3779
      %v3796 = vpack.c.b16 %v3456, %v3780
      %v3797 = vpack.c.b16 %v3458, %v3781
      %v3798 = vpack.c.b16 %v3460, %v3782
      %v3799 = vpack.c.b16 %v3462, %v3783
      %v3800 = vpack.c.b16 %v3464, %v3784
      %v3801 = vrot.slane %v3785, 1
      %v3802 = vrot.slane %v3513, 1
      %v3803 = vsel %vm3216, %v3801, %v3802
      %v3804 = vrot.slane %v3786, 1
      %v3805 = vrot.slane %v3514, 1
      %v3806 = vsel %vm3216, %v3804, %v3805
      %v3807 = vrot.slane %v3787, 1
      %v3808 = vrot.slane %v3515, 1
      %v3809 = vsel %vm3216, %v3807, %v3808
      %v3810 = vrot.slane %v3788, 1
      %v3811 = vrot.slane %v3516, 1
      %v3812 = vsel %vm3216, %v3810, %v3811
      %v3813 = vrot.slane %v3789, 1
      %v3814 = vrot.slane %v3517, 1
      %v3815 = vsel %vm3216, %v3813, %v3814
      %v3816 = vrot.slane %v3790, 1
      %v3817 = vrot.slane %v3518, 1
      %v3818 = vsel %vm3216, %v3816, %v3817
      %v3819 = vrot.slane %v3791, 1
      %v3820 = vrot.slane %v3519, 1
      %v3821 = vsel %vm3216, %v3819, %v3820
      %v3822 = vrot.slane %v3792, 1
      %v3823 = vrot.slane %v3520, 1
      %v3824 = vsel %vm3216, %v3822, %v3823
      %v3825 = vrot.slane %v3793, 1
      %v3826 = vrot.slane %v3521, 1
      %v3827 = vsel %vm3216, %v3825, %v3826
      %v3828 = vrot.slane %v3794, 1
      %v3829 = vrot.slane %v3522, 1
      %v3830 = vsel %vm3216, %v3828, %v3829
      %v3831 = vrot.slane %v3795, 1
      %v3832 = vrot.slane %v3523, 1
      %v3833 = vsel %vm3216, %v3831, %v3832
      %v3834 = vrot.slane %v3796, 1
      %v3835 = vrot.slane %v3524, 1
      %v3836 = vsel %vm3216, %v3834, %v3835
      %v3837 = vrot.slane %v3797, 1
      %v3838 = vrot.slane %v3525, 1
      %v3839 = vsel %vm3216, %v3837, %v3838
      %v3840 = vrot.slane %v3798, 1
      %v3841 = vrot.slane %v3526, 1
      %v3842 = vsel %vm3216, %v3840, %v3841
      %v3843 = vrot.slane %v3799, 1
      %v3844 = vrot.slane %v3527, 1
      %v3845 = vsel %vm3216, %v3843, %v3844
      %v3846 = vrot.slane %v3800, 1
      %v3847 = vrot.slane %v3528, 1
      %v3848 = vsel %vm3216, %v3846, %v3847
      %v3850 = vsel %vm499, %v3465, %v3722
      %v3853 = vsel %vm499, %v3466, %v3724
      %v3856 = vsel %vm499, %v3467, %v3726
      %v3859 = vsel %vm499, %v3468, %v3728
      %v3862 = vsel %vm499, %v3469, %v3730
      %v3865 = vsel %vm499, %v3470, %v3732
      %v3868 = vsel %vm499, %v3471, %v3734
      %v3871 = vsel %vm499, %v3472, %v3736
      %v3874 = vsel %vm499, %v3473, %v3738
      %v3877 = vsel %vm499, %v3474, %v3740
      %v3880 = vsel %vm499, %v3475, %v3742
      %v3883 = vsel %vm499, %v3476, %v3744
      %v3886 = vsel %vm499, %v3477, %v3746
      %v3889 = vsel %vm499, %v3478, %v3748
      %v3892 = vsel %vm499, %v3479, %v3750
      %v3895 = vsel %vm499, %v3480, %v3752
      %s3897 = scalar_lea.vmem %s4, 96
      %v3898 = vld [vmem:[%s3897] sm:$0xf]
      %v3899 = vld [vmem:[%s3897 + $0x4] sm:$0xf]
      %v3900 = vld [vmem:[%s3897 + $0x8] sm:$0xf]
      %v3901 = vld [vmem:[%s3897 + $0xc] sm:$0xf]
      %v3902 = vld [vmem:[%s3897 + $0x10] sm:$0xf]
      %v3903 = vld [vmem:[%s3897 + $0x14] sm:$0xf]
      %v3904 = vld [vmem:[%s3897 + $0x18] sm:$0xf]
      %v3905 = vld [vmem:[%s3897 + $0x1c] sm:$0xf]
      %v3906 = vld [vmem:[%s3897 + $0x20] sm:$0xf]
      %v3907 = vld [vmem:[%s3897 + $0x24] sm:$0xf]
      %v3908 = vld [vmem:[%s3897 + $0x28] sm:$0xf]
      %v3909 = vld [vmem:[%s3897 + $0x2c] sm:$0xf]
      %v3910 = vld [vmem:[%s3897 + $0x30] sm:$0xf]
      %v3911 = vld [vmem:[%s3897 + $0x34] sm:$0xf]
      %v3912 = vld [vmem:[%s3897 + $0x38] sm:$0xf]
      %v3913 = vld [vmem:[%s3897 + $0x3c] sm:$0xf]
      %v3914 = vld [vmem:[%s3897 + $0x40] sm:$0xf]
      %v3915 = vld [vmem:[%s3897 + $0x44] sm:$0xf]
      %v3916 = vld [vmem:[%s3897 + $0x48] sm:$0xf]
      %v3917 = vld [vmem:[%s3897 + $0x4c] sm:$0xf]
      %v3918 = vld [vmem:[%s3897 + $0x50] sm:$0xf]
      %v3919 = vld [vmem:[%s3897 + $0x54] sm:$0xf]
      %v3920 = vld [vmem:[%s3897 + $0x58] sm:$0xf]
      %v3921 = vld [vmem:[%s3897 + $0x5c] sm:$0xf]
      %v3946 = vunpack.c.l.b16 %v3898
      %v3947 = vunpack.c.l.b16 %v3899
      %v3948 = vunpack.c.l.b16 %v3900
      %v3949 = vunpack.c.l.b16 %v3901
      %v3950 = vunpack.c.l.b16 %v3902
      %v3951 = vunpack.c.l.b16 %v3903
      %v3952 = vunpack.c.l.b16 %v3904
      %v3953 = vunpack.c.l.b16 %v3905
      %v3954 = vunpack.c.l.b16 %v3906
      %v3955 = vunpack.c.l.b16 %v3907
      %v3956 = vunpack.c.l.b16 %v3908
      %v3957 = vunpack.c.l.b16 %v3909
      %v3958 = vunpack.c.l.b16 %v3910
      %v3959 = vunpack.c.l.b16 %v3911
      %v3960 = vunpack.c.l.b16 %v3912
      %v3961 = vunpack.c.l.b16 %v3913
      %v3962 = vunpack.c.l.b16 %v3914
      %v3963 = vunpack.c.l.b16 %v3915
      %v3964 = vunpack.c.l.b16 %v3916
      %v3965 = vunpack.c.l.b16 %v3917
      %v3966 = vunpack.c.l.b16 %v3918
      %v3967 = vunpack.c.l.b16 %v3919
      %v3968 = vunpack.c.l.b16 %v3920
      %v3969 = vunpack.c.l.b16 %v3921
      %v3970 = vpack.c.b16 %v3947, %v3946
      %v3971 = vpack.c.b16 %v3949, %v3948
      %v3972 = vpack.c.b16 %v3951, %v3950
      %v3973 = vpack.c.b16 %v3953, %v3952
      %v3974 = vpack.c.b16 %v3955, %v3954
      %v3975 = vpack.c.b16 %v3957, %v3956
      %v3976 = vpack.c.b16 %v3959, %v3958
      %v3977 = vpack.c.b16 %v3961, %v3960
      %v3978 = vpack.c.b16 %v3963, %v3962
      %v3979 = vpack.c.b16 %v3965, %v3964
      %v3980 = vpack.c.b16 %v3967, %v3966
      %v3981 = vpack.c.b16 %v3969, %v3968
      %v3995 = vsel %vm499, %v3803, 0
      %v3998 = vsel %vm499, %v3806, 0
      %v4001 = vsel %vm499, %v3809, 0
      %v4004 = vsel %vm499, %v3812, 0
      %v4007 = vsel %vm499, %v3815, 0
      %v4010 = vsel %vm499, %v3818, 0
      %v4013 = vsel %vm499, %v3821, 0
      %v4016 = vsel %vm499, %v3824, 0
      %v4019 = vsel %vm499, %v3827, 0
      %v4022 = vsel %vm499, %v3830, 0
      %v4025 = vsel %vm499, %v3833, 0
      %v4028 = vsel %vm499, %v3836, 0
      %v4031 = vsel %vm499, %v3839, 0
      %v4034 = vsel %vm499, %v3842, 0
      %v4037 = vsel %vm499, %v3845, 0
      %v4040 = vsel %vm499, %v3848, 0
      %4042 = vmatpush.bf16.msra.mxu0 %v3977
      %4043 = vmatpush.bf16.msra.mxu0 %v3976
      %4044 = vmatpush.bf16.msra.mxu0 %v3975
      %4045 = vmatpush.bf16.msra.mxu0 %v3974
      %4046 = vmatpush.bf16.msra.mxu0 %v3973
      %4047 = vmatpush.bf16.msra.mxu0 %v3972
      %4048 = vmatpush.bf16.msra.mxu0 %v3971
      %4049 = vmatpush.bf16.msra.mxu0 %v3970
      %4050 = vmatmul.bf16.gmra.mxu0 %v3850
      %v4051 = vpop.f32.mrf.mxu0
      %v4052 = vadd.f32 0.0, %v4051
      %v4053 = vpop.f32.mrf.mxu0
      %v4054 = vadd.f32 0.0, %v4053
      %4055 = vmatmul.bf16.gmra.mxu0 %v3853
      %v4056 = vpop.f32.mrf.mxu0
      %v4057 = vadd.f32 0.0, %v4056
      %v4058 = vpop.f32.mrf.mxu0
      %v4059 = vadd.f32 0.0, %v4058
      %4060 = vmatmul.bf16.gmra.mxu0 %v3856
      %v4061 = vpop.f32.mrf.mxu0
      %v4062 = vadd.f32 0.0, %v4061
      %v4063 = vpop.f32.mrf.mxu0
      %v4064 = vadd.f32 0.0, %v4063
      %4065 = vmatmul.bf16.gmra.mxu0 %v3859
      %v4066 = vpop.f32.mrf.mxu0
      %v4067 = vadd.f32 0.0, %v4066
      %v4068 = vpop.f32.mrf.mxu0
      %v4069 = vadd.f32 0.0, %v4068
      %4070 = vmatmul.bf16.gmra.mxu0 %v3862
      %v4071 = vpop.f32.mrf.mxu0
      %v4072 = vadd.f32 0.0, %v4071
      %v4073 = vpop.f32.mrf.mxu0
      %v4074 = vadd.f32 0.0, %v4073
      %4075 = vmatmul.bf16.gmra.mxu0 %v3865
      %v4076 = vpop.f32.mrf.mxu0
      %v4077 = vadd.f32 0.0, %v4076
      %v4078 = vpop.f32.mrf.mxu0
      %v4079 = vadd.f32 0.0, %v4078
      %4080 = vmatmul.bf16.gmra.mxu0 %v3868
      %v4081 = vpop.f32.mrf.mxu0
      %v4082 = vadd.f32 0.0, %v4081
      %v4083 = vpop.f32.mrf.mxu0
      %v4084 = vadd.f32 0.0, %v4083
      %4085 = vmatmul.bf16.gmra.mxu0 %v3871
      %v4086 = vpop.f32.mrf.mxu0
      %v4087 = vadd.f32 0.0, %v4086
      %v4088 = vpop.f32.mrf.mxu0
      %v4089 = vadd.f32 0.0, %v4088
      %4090 = vmatmul.bf16.gmra.mxu0 %v3874
      %v4091 = vpop.f32.mrf.mxu0
      %v4092 = vadd.f32 0.0, %v4091
      %v4093 = vpop.f32.mrf.mxu0
      %v4094 = vadd.f32 0.0, %v4093
      %4095 = vmatmul.bf16.gmra.mxu0 %v3877
      %v4096 = vpop.f32.mrf.mxu0
      %v4097 = vadd.f32 0.0, %v4096
      %v4098 = vpop.f32.mrf.mxu0
      %v4099 = vadd.f32 0.0, %v4098
      %4100 = vmatmul.bf16.gmra.mxu0 %v3880
      %v4101 = vpop.f32.mrf.mxu0
      %v4102 = vadd.f32 0.0, %v4101
      %v4103 = vpop.f32.mrf.mxu0
      %v4104 = vadd.f32 0.0, %v4103
      %4105 = vmatmul.bf16.gmra.mxu0 %v3883
      %v4106 = vpop.f32.mrf.mxu0
      %v4107 = vadd.f32 0.0, %v4106
      %v4108 = vpop.f32.mrf.mxu0
      %v4109 = vadd.f32 0.0, %v4108
      %4110 = vmatmul.bf16.gmra.mxu0 %v3886
      %v4111 = vpop.f32.mrf.mxu0
      %v4112 = vadd.f32 0.0, %v4111
      %v4113 = vpop.f32.mrf.mxu0
      %v4114 = vadd.f32 0.0, %v4113
      %4115 = vmatmul.bf16.gmra.mxu0 %v3889
      %v4116 = vpop.f32.mrf.mxu0
      %v4117 = vadd.f32 0.0, %v4116
      %v4118 = vpop.f32.mrf.mxu0
      %v4119 = vadd.f32 0.0, %v4118
      %4120 = vmatmul.bf16.gmra.mxu0 %v3892
      %v4121 = vpop.f32.mrf.mxu0
      %v4122 = vadd.f32 0.0, %v4121
      %v4123 = vpop.f32.mrf.mxu0
      %v4124 = vadd.f32 0.0, %v4123
      %4125 = vmatmul.bf16.gmra.mxu0 %v3895
      %v4126 = vpop.f32.mrf.mxu0
      %v4127 = vadd.f32 0.0, %v4126
      %v4128 = vpop.f32.mrf.mxu0
      %v4129 = vadd.f32 0.0, %v4128
      %4130 = vdwg.mxu0
      %4131 = vmatpush.bf16.msra.mxu0 0
      %4132 = vmatpush.bf16.msra.mxu0 0
      %4133 = vmatpush.bf16.msra.mxu0 0
      %4134 = vmatpush.bf16.msra.mxu0 0
      %4135 = vmatpush.bf16.msra.mxu0 %v3981
      %4136 = vmatpush.bf16.msra.mxu0 %v3980
      %4137 = vmatpush.bf16.msra.mxu0 %v3979
      %4138 = vmatpush.bf16.msra.mxu0 %v3978
      %4139 = vmatmul.bf16.gmra.mxu0 %v3995
      %v4140 = vpop.f32.mrf.mxu0
      %v4141 = vadd.f32 %v4052, %v4140
      %v4142 = vpop.f32.mrf.mxu0
      %v4143 = vadd.f32 %v4054, %v4142
      %4144 = vmatmul.bf16.gmra.mxu0 %v3998
      %v4145 = vpop.f32.mrf.mxu0
      %v4146 = vadd.f32 %v4057, %v4145
      %v4147 = vpop.f32.mrf.mxu0
      %v4148 = vadd.f32 %v4059, %v4147
      %4149 = vmatmul.bf16.gmra.mxu0 %v4001
      %v4150 = vpop.f32.mrf.mxu0
      %v4151 = vadd.f32 %v4062, %v4150
      %v4152 = vpop.f32.mrf.mxu0
      %v4153 = vadd.f32 %v4064, %v4152
      %4154 = vmatmul.bf16.gmra.mxu0 %v4004
      %v4155 = vpop.f32.mrf.mxu0
      %v4156 = vadd.f32 %v4067, %v4155
      %v4157 = vpop.f32.mrf.mxu0
      %v4158 = vadd.f32 %v4069, %v4157
      %4159 = vmatmul.bf16.gmra.mxu0 %v4007
      %v4160 = vpop.f32.mrf.mxu0
      %v4161 = vadd.f32 %v4072, %v4160
      %v4162 = vpop.f32.mrf.mxu0
      %v4163 = vadd.f32 %v4074, %v4162
      %4164 = vmatmul.bf16.gmra.mxu0 %v4010
      %v4165 = vpop.f32.mrf.mxu0
      %v4166 = vadd.f32 %v4077, %v4165
      %v4167 = vpop.f32.mrf.mxu0
      %v4168 = vadd.f32 %v4079, %v4167
      %4169 = vmatmul.bf16.gmra.mxu0 %v4013
      %v4170 = vpop.f32.mrf.mxu0
      %v4171 = vadd.f32 %v4082, %v4170
      %v4172 = vpop.f32.mrf.mxu0
      %v4173 = vadd.f32 %v4084, %v4172
      %4174 = vmatmul.bf16.gmra.mxu0 %v4016
      %v4175 = vpop.f32.mrf.mxu0
      %v4176 = vadd.f32 %v4087, %v4175
      %v4177 = vpop.f32.mrf.mxu0
      %v4178 = vadd.f32 %v4089, %v4177
      %4179 = vmatmul.bf16.gmra.mxu0 %v4019
      %v4180 = vpop.f32.mrf.mxu0
      %v4181 = vadd.f32 %v4092, %v4180
      %v4182 = vpop.f32.mrf.mxu0
      %v4183 = vadd.f32 %v4094, %v4182
      %4184 = vmatmul.bf16.gmra.mxu0 %v4022
      %v4185 = vpop.f32.mrf.mxu0
      %v4186 = vadd.f32 %v4097, %v4185
      %v4187 = vpop.f32.mrf.mxu0
      %v4188 = vadd.f32 %v4099, %v4187
      %4189 = vmatmul.bf16.gmra.mxu0 %v4025
      %v4190 = vpop.f32.mrf.mxu0
      %v4191 = vadd.f32 %v4102, %v4190
      %v4192 = vpop.f32.mrf.mxu0
      %v4193 = vadd.f32 %v4104, %v4192
      %4194 = vmatmul.bf16.gmra.mxu0 %v4028
      %v4195 = vpop.f32.mrf.mxu0
      %v4196 = vadd.f32 %v4107, %v4195
      %v4197 = vpop.f32.mrf.mxu0
      %v4198 = vadd.f32 %v4109, %v4197
      %4199 = vmatmul.bf16.gmra.mxu0 %v4031
      %v4200 = vpop.f32.mrf.mxu0
      %v4201 = vadd.f32 %v4112, %v4200
      %v4202 = vpop.f32.mrf.mxu0
      %v4203 = vadd.f32 %v4114, %v4202
      %4204 = vmatmul.bf16.gmra.mxu0 %v4034
      %v4205 = vpop.f32.mrf.mxu0
      %v4206 = vadd.f32 %v4117, %v4205
      %v4207 = vpop.f32.mrf.mxu0
      %v4208 = vadd.f32 %v4119, %v4207
      %4209 = vmatmul.bf16.gmra.mxu0 %v4037
      %v4210 = vpop.f32.mrf.mxu0
      %v4211 = vadd.f32 %v4122, %v4210
      %v4212 = vpop.f32.mrf.mxu0
      %v4213 = vadd.f32 %v4124, %v4212
      %4214 = vmatmul.bf16.gmra.mxu0 %v4040
      %v4215 = vpop.f32.mrf.mxu0
      %v4216 = vadd.f32 %v4127, %v4215
      %v4217 = vpop.f32.mrf.mxu0
      %v4218 = vadd.f32 %v4129, %v4217
      %4219 = vdwg.mxu0
      %v4244 = vunpack.c.l.b16 %v3313
      %v4245 = vunpack.c.l.b16 %v3314
      %v4246 = vunpack.c.l.b16 %v3315
      %v4247 = vunpack.c.l.b16 %v3316
      %v4248 = vunpack.c.l.b16 %v3317
      %v4249 = vunpack.c.l.b16 %v3318
      %v4250 = vunpack.c.l.b16 %v3319
      %v4251 = vunpack.c.l.b16 %v3320
      %v4252 = vunpack.c.l.b16 %v3321
      %v4253 = vunpack.c.l.b16 %v3322
      %v4254 = vunpack.c.l.b16 %v3323
      %v4255 = vunpack.c.l.b16 %v3324
      %v4256 = vunpack.c.l.b16 %v3325
      %v4257 = vunpack.c.l.b16 %v3326
      %v4258 = vunpack.c.l.b16 %v3327
      %v4259 = vunpack.c.l.b16 %v3328
      %v4260 = vunpack.c.l.b16 %v3329
      %v4261 = vunpack.c.l.b16 %v3330
      %v4262 = vunpack.c.l.b16 %v3331
      %v4263 = vunpack.c.l.b16 %v3332
      %v4264 = vunpack.c.l.b16 %v3333
      %v4265 = vunpack.c.l.b16 %v3334
      %v4266 = vunpack.c.l.b16 %v3335
      %v4267 = vunpack.c.l.b16 %v3336
      %v4268 = vpack.c.b16 %v4245, %v4244
      %v4269 = vpack.c.b16 %v4247, %v4246
      %v4270 = vpack.c.b16 %v4249, %v4248
      %v4271 = vpack.c.b16 %v4251, %v4250
      %v4272 = vpack.c.b16 %v4253, %v4252
      %v4273 = vpack.c.b16 %v4255, %v4254
      %v4274 = vpack.c.b16 %v4257, %v4256
      %v4275 = vpack.c.b16 %v4259, %v4258
      %v4276 = vpack.c.b16 %v4261, %v4260
      %v4277 = vpack.c.b16 %v4263, %v4262
      %v4278 = vpack.c.b16 %v4265, %v4264
      %v4279 = vpack.c.b16 %v4267, %v4266
      %v4293 = vsel %vm499, %v3219, 0
      %v4296 = vsel %vm499, %v3222, 0
      %v4299 = vsel %vm499, %v3225, 0
      %v4302 = vsel %vm499, %v3228, 0
      %v4305 = vsel %vm499, %v3231, 0
      %v4308 = vsel %vm499, %v3234, 0
      %v4311 = vsel %vm499, %v3237, 0
      %v4314 = vsel %vm499, %v3240, 0
      %v4317 = vsel %vm499, %v3243, 0
      %v4320 = vsel %vm499, %v3246, 0
      %v4323 = vsel %vm499, %v3249, 0
      %v4326 = vsel %vm499, %v3252, 0
      %v4329 = vsel %vm499, %v3255, 0
      %v4332 = vsel %vm499, %v3258, 0
      %v4335 = vsel %vm499, %v3261, 0
      %v4338 = vsel %vm499, %v3264, 0
      %4340 = vmatpush.bf16.msra.mxu0 %v4275
      %4341 = vmatpush.bf16.msra.mxu0 %v4274
      %4342 = vmatpush.bf16.msra.mxu0 %v4273
      %4343 = vmatpush.bf16.msra.mxu0 %v4272
      %4344 = vmatpush.bf16.msra.mxu0 %v4271
      %4345 = vmatpush.bf16.msra.mxu0 %v4270
      %4346 = vmatpush.bf16.msra.mxu0 %v4269
      %4347 = vmatpush.bf16.msra.mxu0 %v4268
      %4348 = vmatmul.bf16.gmra.mxu0 %v3266
      %v4349 = vpop.f32.mrf.mxu0
      %v4350 = vadd.f32 %v4141, %v4349
      %v4351 = vpop.f32.mrf.mxu0
      %v4352 = vadd.f32 %v4143, %v4351
      %4353 = vmatmul.bf16.gmra.mxu0 %v3269
      %v4354 = vpop.f32.mrf.mxu0
      %v4355 = vadd.f32 %v4146, %v4354
      %v4356 = vpop.f32.mrf.mxu0
      %v4357 = vadd.f32 %v4148, %v4356
      %4358 = vmatmul.bf16.gmra.mxu0 %v3272
      %v4359 = vpop.f32.mrf.mxu0
      %v4360 = vadd.f32 %v4151, %v4359
      %v4361 = vpop.f32.mrf.mxu0
      %v4362 = vadd.f32 %v4153, %v4361
      %4363 = vmatmul.bf16.gmra.mxu0 %v3275
      %v4364 = vpop.f32.mrf.mxu0
      %v4365 = vadd.f32 %v4156, %v4364
      %v4366 = vpop.f32.mrf.mxu0
      %v4367 = vadd.f32 %v4158, %v4366
      %4368 = vmatmul.bf16.gmra.mxu0 %v3278
      %v4369 = vpop.f32.mrf.mxu0
      %v4370 = vadd.f32 %v4161, %v4369
      %v4371 = vpop.f32.mrf.mxu0
      %v4372 = vadd.f32 %v4163, %v4371
      %4373 = vmatmul.bf16.gmra.mxu0 %v3281
      %v4374 = vpop.f32.mrf.mxu0
      %v4375 = vadd.f32 %v4166, %v4374
      %v4376 = vpop.f32.mrf.mxu0
      %v4377 = vadd.f32 %v4168, %v4376
      %4378 = vmatmul.bf16.gmra.mxu0 %v3284
      %v4379 = vpop.f32.mrf.mxu0
      %v4380 = vadd.f32 %v4171, %v4379
      %v4381 = vpop.f32.mrf.mxu0
      %v4382 = vadd.f32 %v4173, %v4381
      %4383 = vmatmul.bf16.gmra.mxu0 %v3287
      %v4384 = vpop.f32.mrf.mxu0
      %v4385 = vadd.f32 %v4176, %v4384
      %v4386 = vpop.f32.mrf.mxu0
      %v4387 = vadd.f32 %v4178, %v4386
      %4388 = vmatmul.bf16.gmra.mxu0 %v3290
      %v4389 = vpop.f32.mrf.mxu0
      %v4390 = vadd.f32 %v4181, %v4389
      %v4391 = vpop.f32.mrf.mxu0
      %v4392 = vadd.f32 %v4183, %v4391
      %4393 = vmatmul.bf16.gmra.mxu0 %v3293
      %v4394 = vpop.f32.mrf.mxu0
      %v4395 = vadd.f32 %v4186, %v4394
      %v4396 = vpop.f32.mrf.mxu0
      %v4397 = vadd.f32 %v4188, %v4396
      %4398 = vmatmul.bf16.gmra.mxu0 %v3296
      %v4399 = vpop.f32.mrf.mxu0
      %v4400 = vadd.f32 %v4191, %v4399
      %v4401 = vpop.f32.mrf.mxu0
      %v4402 = vadd.f32 %v4193, %v4401
      %4403 = vmatmul.bf16.gmra.mxu0 %v3299
      %v4404 = vpop.f32.mrf.mxu0
      %v4405 = vadd.f32 %v4196, %v4404
      %v4406 = vpop.f32.mrf.mxu0
      %v4407 = vadd.f32 %v4198, %v4406
      %4408 = vmatmul.bf16.gmra.mxu0 %v3302
      %v4409 = vpop.f32.mrf.mxu0
      %v4410 = vadd.f32 %v4201, %v4409
      %v4411 = vpop.f32.mrf.mxu0
      %v4412 = vadd.f32 %v4203, %v4411
      %4413 = vmatmul.bf16.gmra.mxu0 %v3305
      %v4414 = vpop.f32.mrf.mxu0
      %v4415 = vadd.f32 %v4206, %v4414
      %v4416 = vpop.f32.mrf.mxu0
      %v4417 = vadd.f32 %v4208, %v4416
      %4418 = vmatmul.bf16.gmra.mxu0 %v3308
      %v4419 = vpop.f32.mrf.mxu0
      %v4420 = vadd.f32 %v4211, %v4419
      %v4421 = vpop.f32.mrf.mxu0
      %v4422 = vadd.f32 %v4213, %v4421
      %4423 = vmatmul.bf16.gmra.mxu0 %v3311
      %v4424 = vpop.f32.mrf.mxu0
      %v4425 = vadd.f32 %v4216, %v4424
      %v4426 = vpop.f32.mrf.mxu0
      %v4427 = vadd.f32 %v4218, %v4426
      %4428 = vdwg.mxu0
      %4429 = vmatpush.bf16.msra.mxu0 0
      %4430 = vmatpush.bf16.msra.mxu0 0
      %4431 = vmatpush.bf16.msra.mxu0 0
      %4432 = vmatpush.bf16.msra.mxu0 0
      %4433 = vmatpush.bf16.msra.mxu0 %v4279
      %4434 = vmatpush.bf16.msra.mxu0 %v4278
      %4435 = vmatpush.bf16.msra.mxu0 %v4277
      %4436 = vmatpush.bf16.msra.mxu0 %v4276
      %4437 = vmatmul.bf16.gmra.mxu0 %v4293
      %v4438 = vpop.f32.mrf.mxu0
      %v4439 = vadd.f32 %v4350, %v4438
      %v4440 = vpop.f32.mrf.mxu0
      %v4441 = vadd.f32 %v4352, %v4440
      %4442 = vmatmul.bf16.gmra.mxu0 %v4296
      %v4443 = vpop.f32.mrf.mxu0
      %v4444 = vadd.f32 %v4355, %v4443
      %v4445 = vpop.f32.mrf.mxu0
      %v4446 = vadd.f32 %v4357, %v4445
      %4447 = vmatmul.bf16.gmra.mxu0 %v4299
      %v4448 = vpop.f32.mrf.mxu0
      %v4449 = vadd.f32 %v4360, %v4448
      %v4450 = vpop.f32.mrf.mxu0
      %v4451 = vadd.f32 %v4362, %v4450
      %4452 = vmatmul.bf16.gmra.mxu0 %v4302
      %v4453 = vpop.f32.mrf.mxu0
      %v4454 = vadd.f32 %v4365, %v4453
      %v4455 = vpop.f32.mrf.mxu0
      %v4456 = vadd.f32 %v4367, %v4455
      %4457 = vmatmul.bf16.gmra.mxu0 %v4305
      %v4458 = vpop.f32.mrf.mxu0
      %v4459 = vadd.f32 %v4370, %v4458
      %v4460 = vpop.f32.mrf.mxu0
      %v4461 = vadd.f32 %v4372, %v4460
      %4462 = vmatmul.bf16.gmra.mxu0 %v4308
      %v4463 = vpop.f32.mrf.mxu0
      %v4464 = vadd.f32 %v4375, %v4463
      %v4465 = vpop.f32.mrf.mxu0
      %v4466 = vadd.f32 %v4377, %v4465
      %4467 = vmatmul.bf16.gmra.mxu0 %v4311
      %v4468 = vpop.f32.mrf.mxu0
      %v4469 = vadd.f32 %v4380, %v4468
      %v4470 = vpop.f32.mrf.mxu0
      %v4471 = vadd.f32 %v4382, %v4470
      %4472 = vmatmul.bf16.gmra.mxu0 %v4314
      %v4473 = vpop.f32.mrf.mxu0
      %v4474 = vadd.f32 %v4385, %v4473
      %v4475 = vpop.f32.mrf.mxu0
      %v4476 = vadd.f32 %v4387, %v4475
      %4477 = vmatmul.bf16.gmra.mxu0 %v4317
      %v4478 = vpop.f32.mrf.mxu0
      %v4479 = vadd.f32 %v4390, %v4478
      %v4480 = vpop.f32.mrf.mxu0
      %v4481 = vadd.f32 %v4392, %v4480
      %4482 = vmatmul.bf16.gmra.mxu0 %v4320
      %v4483 = vpop.f32.mrf.mxu0
      %v4484 = vadd.f32 %v4395, %v4483
      %v4485 = vpop.f32.mrf.mxu0
      %v4486 = vadd.f32 %v4397, %v4485
      %4487 = vmatmul.bf16.gmra.mxu0 %v4323
      %v4488 = vpop.f32.mrf.mxu0
      %v4489 = vadd.f32 %v4400, %v4488
      %v4490 = vpop.f32.mrf.mxu0
      %v4491 = vadd.f32 %v4402, %v4490
      %4492 = vmatmul.bf16.gmra.mxu0 %v4326
      %v4493 = vpop.f32.mrf.mxu0
      %v4494 = vadd.f32 %v4405, %v4493
      %v4495 = vpop.f32.mrf.mxu0
      %v4496 = vadd.f32 %v4407, %v4495
      %4497 = vmatmul.bf16.gmra.mxu0 %v4329
      %v4498 = vpop.f32.mrf.mxu0
      %v4499 = vadd.f32 %v4410, %v4498
      %v4500 = vpop.f32.mrf.mxu0
      %v4501 = vadd.f32 %v4412, %v4500
      %4502 = vmatmul.bf16.gmra.mxu0 %v4332
      %v4503 = vpop.f32.mrf.mxu0
      %v4504 = vadd.f32 %v4415, %v4503
      %v4505 = vpop.f32.mrf.mxu0
      %v4506 = vadd.f32 %v4417, %v4505
      %4507 = vmatmul.bf16.gmra.mxu0 %v4335
      %v4508 = vpop.f32.mrf.mxu0
      %v4509 = vadd.f32 %v4420, %v4508
      %v4510 = vpop.f32.mrf.mxu0
      %v4511 = vadd.f32 %v4422, %v4510
      %4512 = vmatmul.bf16.gmra.mxu0 %v4338
      %v4513 = vpop.f32.mrf.mxu0
      %v4514 = vadd.f32 %v4425, %v4513
      %v4515 = vpop.f32.mrf.mxu0
      %v4516 = vadd.f32 %v4427, %v4515
      %4517 = vdwg.mxu0
      %s4518 = scalar_lea.vmem [#allocation2], 24
      %v4519 = vld [vmem:[%s4518] sm:$0xf]
      %v4520 = vld [vmem:[%s4518 + $0x4] sm:$0xf]
      %v4521 = vld [vmem:[%s4518 + $0xc] sm:$0xf]
      %v4522 = vld [vmem:[%s4518 + $0x10] sm:$0xf]
      %v4523 = vld [vmem:[%s4518 + $0x18] sm:$0xf]
      %v4524 = vld [vmem:[%s4518 + $0x1c] sm:$0xf]
      %v4525 = vld [vmem:[%s4518 + $0x24] sm:$0xf]
      %v4526 = vld [vmem:[%s4518 + $0x28] sm:$0xf]
      %v4527 = vld [vmem:[%s4518 + $0x30] sm:$0xf]
      %v4528 = vld [vmem:[%s4518 + $0x34] sm:$0xf]
      %v4529 = vld [vmem:[%s4518 + $0x3c] sm:$0xf]
      %v4530 = vld [vmem:[%s4518 + $0x40] sm:$0xf]
      %v4531 = vld [vmem:[%s4518 + $0x48] sm:$0xf]
      %v4532 = vld [vmem:[%s4518 + $0x4c] sm:$0xf]
      %v4533 = vld [vmem:[%s4518 + $0x54] sm:$0xf]
      %v4534 = vld [vmem:[%s4518 + $0x58] sm:$0xf]
      %v4535 = vld [vmem:[%s4518 + $0x60] sm:$0xf]
      %v4536 = vld [vmem:[%s4518 + $0x64] sm:$0xf]
      %v4537 = vld [vmem:[%s4518 + $0x6c] sm:$0xf]
      %v4538 = vld [vmem:[%s4518 + $0x70] sm:$0xf]
      %v4539 = vld [vmem:[%s4518 + $0x78] sm:$0xf]
      %v4540 = vld [vmem:[%s4518 + $0x7c] sm:$0xf]
      %v4541 = vld [vmem:[%s4518 + $0x84] sm:$0xf]
      %v4542 = vld [vmem:[%s4518 + $0x88] sm:$0xf]
      %v4543 = vld [vmem:[%s4518 + $0x90] sm:$0xf]
      %v4544 = vld [vmem:[%s4518 + $0x94] sm:$0xf]
      %v4545 = vld [vmem:[%s4518 + $0x9c] sm:$0xf]
      %v4546 = vld [vmem:[%s4518 + $0xa0] sm:$0xf]
      %v4547 = vld [vmem:[%s4518 + $0xa8] sm:$0xf]
      %v4548 = vld [vmem:[%s4518 + $0xac] sm:$0xf]
      %v4549 = vld [vmem:[%s4518 + $0xb4] sm:$0xf]
      %v4550 = vld [vmem:[%s4518 + $0xb8] sm:$0xf]
      %v4551 = vld [vmem:[%s4518 + $0x8] sm:$0x1]
      %v4552 = vld [vmem:[%s4518 + $0x14] sm:$0x1]
      %v4553 = vld [vmem:[%s4518 + $0x20] sm:$0x1]
      %v4554 = vld [vmem:[%s4518 + $0x2c] sm:$0x1]
      %v4555 = vld [vmem:[%s4518 + $0x38] sm:$0x1]
      %v4556 = vld [vmem:[%s4518 + $0x44] sm:$0x1]
      %v4557 = vld [vmem:[%s4518 + $0x50] sm:$0x1]
      %v4558 = vld [vmem:[%s4518 + $0x5c] sm:$0x1]
      %v4559 = vld [vmem:[%s4518 + $0x68] sm:$0x1]
      %v4560 = vld [vmem:[%s4518 + $0x74] sm:$0x1]
      %v4561 = vld [vmem:[%s4518 + $0x80] sm:$0x1]
      %v4562 = vld [vmem:[%s4518 + $0x8c] sm:$0x1]
      %v4563 = vld [vmem:[%s4518 + $0x98] sm:$0x1]
      %v4564 = vld [vmem:[%s4518 + $0xa4] sm:$0x1]
      %v4565 = vld [vmem:[%s4518 + $0xb0] sm:$0x1]
      %v4566 = vld [vmem:[%s4518 + $0xbc] sm:$0x1]
      %v4567 = vld [vmem:[%s4518] sm:$0xe]
      %v4568 = vld [vmem:[%s4518 + $0xc] sm:$0xe]
      %v4569 = vld [vmem:[%s4518 + $0x18] sm:$0xe]
      %v4570 = vld [vmem:[%s4518 + $0x24] sm:$0xe]
      %v4571 = vld [vmem:[%s4518 + $0x30] sm:$0xe]
      %v4572 = vld [vmem:[%s4518 + $0x3c] sm:$0xe]
      %v4573 = vld [vmem:[%s4518 + $0x48] sm:$0xe]
      %v4574 = vld [vmem:[%s4518 + $0x54] sm:$0xe]
      %v4575 = vld [vmem:[%s4518 + $0x60] sm:$0xe]
      %v4576 = vld [vmem:[%s4518 + $0x6c] sm:$0xe]
      %v4577 = vld [vmem:[%s4518 + $0x78] sm:$0xe]
      %v4578 = vld [vmem:[%s4518 + $0x84] sm:$0xe]
      %v4579 = vld [vmem:[%s4518 + $0x90] sm:$0xe]
      %v4580 = vld [vmem:[%s4518 + $0x9c] sm:$0xe]
      %v4581 = vld [vmem:[%s4518 + $0xa8] sm:$0xe]
      %v4582 = vld [vmem:[%s4518 + $0xb4] sm:$0xe]
      %v4615 = vunpack.c.l.b16 %v4519
      %v4616 = vunpack.c.l.b16 %v4520
      %v4617 = vunpack.c.l.b16 %v4521
      %v4618 = vunpack.c.l.b16 %v4522
      %v4619 = vunpack.c.l.b16 %v4523
      %v4620 = vunpack.c.l.b16 %v4524
      %v4621 = vunpack.c.l.b16 %v4525
      %v4622 = vunpack.c.l.b16 %v4526
      %v4623 = vunpack.c.l.b16 %v4527
      %v4624 = vunpack.c.l.b16 %v4528
      %v4625 = vunpack.c.l.b16 %v4529
      %v4626 = vunpack.c.l.b16 %v4530
      %v4627 = vunpack.c.l.b16 %v4531
      %v4628 = vunpack.c.l.b16 %v4532
      %v4629 = vunpack.c.l.b16 %v4533
      %v4630 = vunpack.c.l.b16 %v4534
      %v4631 = vunpack.c.l.b16 %v4535
      %v4632 = vunpack.c.l.b16 %v4536
      %v4633 = vunpack.c.l.b16 %v4537
      %v4634 = vunpack.c.l.b16 %v4538
      %v4635 = vunpack.c.l.b16 %v4539
      %v4636 = vunpack.c.l.b16 %v4540
      %v4637 = vunpack.c.l.b16 %v4541
      %v4638 = vunpack.c.l.b16 %v4542
      %v4639 = vunpack.c.l.b16 %v4543
      %v4640 = vunpack.c.l.b16 %v4544
      %v4641 = vunpack.c.l.b16 %v4545
      %v4642 = vunpack.c.l.b16 %v4546
      %v4643 = vunpack.c.l.b16 %v4547
      %v4644 = vunpack.c.l.b16 %v4548
      %v4645 = vunpack.c.l.b16 %v4549
      %v4646 = vunpack.c.l.b16 %v4550
      %v4647 = vpack.c.b16 %v4616, %v4615
      %v4648 = vpack.c.b16 %v4618, %v4617
      %v4649 = vpack.c.b16 %v4620, %v4619
      %v4650 = vpack.c.b16 %v4622, %v4621
      %v4651 = vpack.c.b16 %v4624, %v4623
      %v4652 = vpack.c.b16 %v4626, %v4625
      %v4653 = vpack.c.b16 %v4628, %v4627
      %v4654 = vpack.c.b16 %v4630, %v4629
      %v4655 = vpack.c.b16 %v4632, %v4631
      %v4656 = vpack.c.b16 %v4634, %v4633
      %v4657 = vpack.c.b16 %v4636, %v4635
      %v4658 = vpack.c.b16 %v4638, %v4637
      %v4659 = vpack.c.b16 %v4640, %v4639
      %v4660 = vpack.c.b16 %v4642, %v4641
      %v4661 = vpack.c.b16 %v4644, %v4643
      %v4662 = vpack.c.b16 %v4646, %v4645
      %v4679 = vunpack.c.l.b16 %v4551
      %v4680 = vunpack.c.l.b16 %v4552
      %v4681 = vunpack.c.l.b16 %v4553
      %v4682 = vunpack.c.l.b16 %v4554
      %v4683 = vunpack.c.l.b16 %v4555
      %v4684 = vunpack.c.l.b16 %v4556
      %v4685 = vunpack.c.l.b16 %v4557
      %v4686 = vunpack.c.l.b16 %v4558
      %v4687 = vunpack.c.l.b16 %v4559
      %v4688 = vunpack.c.l.b16 %v4560
      %v4689 = vunpack.c.l.b16 %v4561
      %v4690 = vunpack.c.l.b16 %v4562
      %v4691 = vunpack.c.l.b16 %v4563
      %v4692 = vunpack.c.l.b16 %v4564
      %v4693 = vunpack.c.l.b16 %v4565
      %v4694 = vunpack.c.l.b16 %v4566
      %v4695 = vpack.c.b16 %v4679, %v4679
      %v4696 = vpack.c.b16 %v4680, %v4680
      %v4697 = vpack.c.b16 %v4681, %v4681
      %v4698 = vpack.c.b16 %v4682, %v4682
      %v4699 = vpack.c.b16 %v4683, %v4683
      %v4700 = vpack.c.b16 %v4684, %v4684
      %v4701 = vpack.c.b16 %v4685, %v4685
      %v4702 = vpack.c.b16 %v4686, %v4686
      %v4703 = vpack.c.b16 %v4687, %v4687
      %v4704 = vpack.c.b16 %v4688, %v4688
      %v4705 = vpack.c.b16 %v4689, %v4689
      %v4706 = vpack.c.b16 %v4690, %v4690
      %v4707 = vpack.c.b16 %v4691, %v4691
      %v4708 = vpack.c.b16 %v4692, %v4692
      %v4709 = vpack.c.b16 %v4693, %v4693
      %v4710 = vpack.c.b16 %v4694, %v4694
      %v4712 = vshrl.u32 %v4647, 16
      %v4714 = vshll.u32 %v4647, 16
      %v4716 = vrot.slane %v4714, 1
      %v4717 = vor.u32 %v4712, %v4716
      %v4719 = vshll.u32 %v4695, 16
      %v4721 = vrot.slane %v4719, 1
      %v4722 = vsel %vm2943, %v4717, %v4721
      %v4724 = vshrl.u32 %v4648, 16
      %v4726 = vshll.u32 %v4648, 16
      %v4728 = vrot.slane %v4726, 1
      %v4729 = vor.u32 %v4724, %v4728
      %v4731 = vshll.u32 %v4696, 16
      %v4733 = vrot.slane %v4731, 1
      %v4734 = vsel %vm2943, %v4729, %v4733
      %v4736 = vshrl.u32 %v4649, 16
      %v4738 = vshll.u32 %v4649, 16
      %v4740 = vrot.slane %v4738, 1
      %v4741 = vor.u32 %v4736, %v4740
      %v4743 = vshll.u32 %v4697, 16
      %v4745 = vrot.slane %v4743, 1
      %v4746 = vsel %vm2943, %v4741, %v4745
      %v4748 = vshrl.u32 %v4650, 16
      %v4750 = vshll.u32 %v4650, 16
      %v4752 = vrot.slane %v4750, 1
      %v4753 = vor.u32 %v4748, %v4752
      %v4755 = vshll.u32 %v4698, 16
      %v4757 = vrot.slane %v4755, 1
      %v4758 = vsel %vm2943, %v4753, %v4757
      %v4760 = vshrl.u32 %v4651, 16
      %v4762 = vshll.u32 %v4651, 16
      %v4764 = vrot.slane %v4762, 1
      %v4765 = vor.u32 %v4760, %v4764
      %v4767 = vshll.u32 %v4699, 16
      %v4769 = vrot.slane %v4767, 1
      %v4770 = vsel %vm2943, %v4765, %v4769
      %v4772 = vshrl.u32 %v4652, 16
      %v4774 = vshll.u32 %v4652, 16
      %v4776 = vrot.slane %v4774, 1
      %v4777 = vor.u32 %v4772, %v4776
      %v4779 = vshll.u32 %v4700, 16
      %v4781 = vrot.slane %v4779, 1
      %v4782 = vsel %vm2943, %v4777, %v4781
      %v4784 = vshrl.u32 %v4653, 16
      %v4786 = vshll.u32 %v4653, 16
      %v4788 = vrot.slane %v4786, 1
      %v4789 = vor.u32 %v4784, %v4788
      %v4791 = vshll.u32 %v4701, 16
      %v4793 = vrot.slane %v4791, 1
      %v4794 = vsel %vm2943, %v4789, %v4793
      %v4796 = vshrl.u32 %v4654, 16
      %v4798 = vshll.u32 %v4654, 16
      %v4800 = vrot.slane %v4798, 1
      %v4801 = vor.u32 %v4796, %v4800
      %v4803 = vshll.u32 %v4702, 16
      %v4805 = vrot.slane %v4803, 1
      %v4806 = vsel %vm2943, %v4801, %v4805
      %v4808 = vshrl.u32 %v4655, 16
      %v4810 = vshll.u32 %v4655, 16
      %v4812 = vrot.slane %v4810, 1
      %v4813 = vor.u32 %v4808, %v4812
      %v4815 = vshll.u32 %v4703, 16
      %v4817 = vrot.slane %v4815, 1
      %v4818 = vsel %vm2943, %v4813, %v4817
      %v4820 = vshrl.u32 %v4656, 16
      %v4822 = vshll.u32 %v4656, 16
      %v4824 = vrot.slane %v4822, 1
      %v4825 = vor.u32 %v4820, %v4824
      %v4827 = vshll.u32 %v4704, 16
      %v4829 = vrot.slane %v4827, 1
      %v4830 = vsel %vm2943, %v4825, %v4829
      %v4832 = vshrl.u32 %v4657, 16
      %v4834 = vshll.u32 %v4657, 16
      %v4836 = vrot.slane %v4834, 1
      %v4837 = vor.u32 %v4832, %v4836
      %v4839 = vshll.u32 %v4705, 16
      %v4841 = vrot.slane %v4839, 1
      %v4842 = vsel %vm2943, %v4837, %v4841
      %v4844 = vshrl.u32 %v4658, 16
      %v4846 = vshll.u32 %v4658, 16
      %v4848 = vrot.slane %v4846, 1
      %v4849 = vor.u32 %v4844, %v4848
      %v4851 = vshll.u32 %v4706, 16
      %v4853 = vrot.slane %v4851, 1
      %v4854 = vsel %vm2943, %v4849, %v4853
      %v4856 = vshrl.u32 %v4659, 16
      %v4858 = vshll.u32 %v4659, 16
      %v4860 = vrot.slane %v4858, 1
      %v4861 = vor.u32 %v4856, %v4860
      %v4863 = vshll.u32 %v4707, 16
      %v4865 = vrot.slane %v4863, 1
      %v4866 = vsel %vm2943, %v4861, %v4865
      %v4868 = vshrl.u32 %v4660, 16
      %v4870 = vshll.u32 %v4660, 16
      %v4872 = vrot.slane %v4870, 1
      %v4873 = vor.u32 %v4868, %v4872
      %v4875 = vshll.u32 %v4708, 16
      %v4877 = vrot.slane %v4875, 1
      %v4878 = vsel %vm2943, %v4873, %v4877
      %v4880 = vshrl.u32 %v4661, 16
      %v4882 = vshll.u32 %v4661, 16
      %v4884 = vrot.slane %v4882, 1
      %v4885 = vor.u32 %v4880, %v4884
      %v4887 = vshll.u32 %v4709, 16
      %v4889 = vrot.slane %v4887, 1
      %v4890 = vsel %vm2943, %v4885, %v4889
      %v4892 = vshrl.u32 %v4662, 16
      %v4894 = vshll.u32 %v4662, 16
      %v4896 = vrot.slane %v4894, 1
      %v4897 = vor.u32 %v4892, %v4896
      %v4899 = vshll.u32 %v4710, 16
      %v4901 = vrot.slane %v4899, 1
      %v4902 = vsel %vm2943, %v4897, %v4901
      %4903 = vrot.lane.b32.xlu0 %v4722, 64
      %v4904 = vpop.permute.xlu0 %4903
      %4905 = vrot.lane.b32.xlu0 %v4734, 64
      %v4906 = vpop.permute.xlu0 %4905
      %4907 = vrot.lane.b32.xlu0 %v4746, 64
      %v4908 = vpop.permute.xlu0 %4907
      %4909 = vrot.lane.b32.xlu0 %v4758, 64
      %v4910 = vpop.permute.xlu0 %4909
      %4911 = vrot.lane.b32.xlu0 %v4770, 64
      %v4912 = vpop.permute.xlu0 %4911
      %4913 = vrot.lane.b32.xlu0 %v4782, 64
      %v4914 = vpop.permute.xlu0 %4913
      %4915 = vrot.lane.b32.xlu0 %v4794, 64
      %v4916 = vpop.permute.xlu0 %4915
      %4917 = vrot.lane.b32.xlu0 %v4806, 64
      %v4918 = vpop.permute.xlu0 %4917
      %4919 = vrot.lane.b32.xlu0 %v4818, 64
      %v4920 = vpop.permute.xlu0 %4919
      %4921 = vrot.lane.b32.xlu0 %v4830, 64
      %v4922 = vpop.permute.xlu0 %4921
      %4923 = vrot.lane.b32.xlu0 %v4842, 64
      %v4924 = vpop.permute.xlu0 %4923
      %4925 = vrot.lane.b32.xlu0 %v4854, 64
      %v4926 = vpop.permute.xlu0 %4925
      %4927 = vrot.lane.b32.xlu0 %v4866, 64
      %v4928 = vpop.permute.xlu0 %4927
      %4929 = vrot.lane.b32.xlu0 %v4878, 64
      %v4930 = vpop.permute.xlu0 %4929
      %4931 = vrot.lane.b32.xlu0 %v4890, 64
      %v4932 = vpop.permute.xlu0 %4931
      %4933 = vrot.lane.b32.xlu0 %v4902, 64
      %v4934 = vpop.permute.xlu0 %4933
      %v4951 = vunpack.c.l.b16 %v4567
      %v4952 = vunpack.c.l.b16 %v4568
      %v4953 = vunpack.c.l.b16 %v4569
      %v4954 = vunpack.c.l.b16 %v4570
      %v4955 = vunpack.c.l.b16 %v4571
      %v4956 = vunpack.c.l.b16 %v4572
      %v4957 = vunpack.c.l.b16 %v4573
      %v4958 = vunpack.c.l.b16 %v4574
      %v4959 = vunpack.c.l.b16 %v4575
      %v4960 = vunpack.c.l.b16 %v4576
      %v4961 = vunpack.c.l.b16 %v4577
      %v4962 = vunpack.c.l.b16 %v4578
      %v4963 = vunpack.c.l.b16 %v4579
      %v4964 = vunpack.c.l.b16 %v4580
      %v4965 = vunpack.c.l.b16 %v4581
      %v4966 = vunpack.c.l.b16 %v4582
      %v4967 = vpack.c.b16 %v4616, %v4951
      %v4968 = vpack.c.b16 %v4618, %v4952
      %v4969 = vpack.c.b16 %v4620, %v4953
      %v4970 = vpack.c.b16 %v4622, %v4954
      %v4971 = vpack.c.b16 %v4624, %v4955
      %v4972 = vpack.c.b16 %v4626, %v4956
      %v4973 = vpack.c.b16 %v4628, %v4957
      %v4974 = vpack.c.b16 %v4630, %v4958
      %v4975 = vpack.c.b16 %v4632, %v4959
      %v4976 = vpack.c.b16 %v4634, %v4960
      %v4977 = vpack.c.b16 %v4636, %v4961
      %v4978 = vpack.c.b16 %v4638, %v4962
      %v4979 = vpack.c.b16 %v4640, %v4963
      %v4980 = vpack.c.b16 %v4642, %v4964
      %v4981 = vpack.c.b16 %v4644, %v4965
      %v4982 = vpack.c.b16 %v4646, %v4966
      %v4983 = vrot.slane %v4967, 1
      %v4984 = vrot.slane %v4695, 1
      %v4985 = vsel %vm3216, %v4983, %v4984
      %v4986 = vrot.slane %v4968, 1
      %v4987 = vrot.slane %v4696, 1
      %v4988 = vsel %vm3216, %v4986, %v4987
      %v4989 = vrot.slane %v4969, 1
      %v4990 = vrot.slane %v4697, 1
      %v4991 = vsel %vm3216, %v4989, %v4990
      %v4992 = vrot.slane %v4970, 1
      %v4993 = vrot.slane %v4698, 1
      %v4994 = vsel %vm3216, %v4992, %v4993
      %v4995 = vrot.slane %v4971, 1
      %v4996 = vrot.slane %v4699, 1
      %v4997 = vsel %vm3216, %v4995, %v4996
      %v4998 = vrot.slane %v4972, 1
      %v4999 = vrot.slane %v4700, 1
      %v5000 = vsel %vm3216, %v4998, %v4999
      %v5001 = vrot.slane %v4973, 1
      %v5002 = vrot.slane %v4701, 1
      %v5003 = vsel %vm3216, %v5001, %v5002
      %v5004 = vrot.slane %v4974, 1
      %v5005 = vrot.slane %v4702, 1
      %v5006 = vsel %vm3216, %v5004, %v5005
      %v5007 = vrot.slane %v4975, 1
      %v5008 = vrot.slane %v4703, 1
      %v5009 = vsel %vm3216, %v5007, %v5008
      %v5010 = vrot.slane %v4976, 1
      %v5011 = vrot.slane %v4704, 1
      %v5012 = vsel %vm3216, %v5010, %v5011
      %v5013 = vrot.slane %v4977, 1
      %v5014 = vrot.slane %v4705, 1
      %v5015 = vsel %vm3216, %v5013, %v5014
      %v5016 = vrot.slane %v4978, 1
      %v5017 = vrot.slane %v4706, 1
      %v5018 = vsel %vm3216, %v5016, %v5017
      %v5019 = vrot.slane %v4979, 1
      %v5020 = vrot.slane %v4707, 1
      %v5021 = vsel %vm3216, %v5019, %v5020
      %v5022 = vrot.slane %v4980, 1
      %v5023 = vrot.slane %v4708, 1
      %v5024 = vsel %vm3216, %v5022, %v5023
      %v5025 = vrot.slane %v4981, 1
      %v5026 = vrot.slane %v4709, 1
      %v5027 = vsel %vm3216, %v5025, %v5026
      %v5028 = vrot.slane %v4982, 1
      %v5029 = vrot.slane %v4710, 1
      %v5030 = vsel %vm3216, %v5028, %v5029
      %v5032 = vsel %vm499, %v4647, %v4904
      %v5035 = vsel %vm499, %v4648, %v4906
      %v5038 = vsel %vm499, %v4649, %v4908
      %v5041 = vsel %vm499, %v4650, %v4910
      %v5044 = vsel %vm499, %v4651, %v4912
      %v5047 = vsel %vm499, %v4652, %v4914
      %v5050 = vsel %vm499, %v4653, %v4916
      %v5053 = vsel %vm499, %v4654, %v4918
      %v5056 = vsel %vm499, %v4655, %v4920
      %v5059 = vsel %vm499, %v4656, %v4922
      %v5062 = vsel %vm499, %v4657, %v4924
      %v5065 = vsel %vm499, %v4658, %v4926
      %v5068 = vsel %vm499, %v4659, %v4928
      %v5071 = vsel %vm499, %v4660, %v4930
      %v5074 = vsel %vm499, %v4661, %v4932
      %v5077 = vsel %vm499, %v4662, %v4934
      %s5079 = scalar_lea.vmem %s4, 192
      %v5080 = vld [vmem:[%s5079] sm:$0xf]
      %v5081 = vld [vmem:[%s5079 + $0x4] sm:$0xf]
      %v5082 = vld [vmem:[%s5079 + $0x8] sm:$0xf]
      %v5083 = vld [vmem:[%s5079 + $0xc] sm:$0xf]
      %v5084 = vld [vmem:[%s5079 + $0x10] sm:$0xf]
      %v5085 = vld [vmem:[%s5079 + $0x14] sm:$0xf]
      %v5086 = vld [vmem:[%s5079 + $0x18] sm:$0xf]
      %v5087 = vld [vmem:[%s5079 + $0x1c] sm:$0xf]
      %v5088 = vld [vmem:[%s5079 + $0x20] sm:$0xf]
      %v5089 = vld [vmem:[%s5079 + $0x24] sm:$0xf]
      %v5090 = vld [vmem:[%s5079 + $0x28] sm:$0xf]
      %v5091 = vld [vmem:[%s5079 + $0x2c] sm:$0xf]
      %v5092 = vld [vmem:[%s5079 + $0x30] sm:$0xf]
      %v5093 = vld [vmem:[%s5079 + $0x34] sm:$0xf]
      %v5094 = vld [vmem:[%s5079 + $0x38] sm:$0xf]
      %v5095 = vld [vmem:[%s5079 + $0x3c] sm:$0xf]
      %v5096 = vld [vmem:[%s5079 + $0x40] sm:$0xf]
      %v5097 = vld [vmem:[%s5079 + $0x44] sm:$0xf]
      %v5098 = vld [vmem:[%s5079 + $0x48] sm:$0xf]
      %v5099 = vld [vmem:[%s5079 + $0x4c] sm:$0xf]
      %v5100 = vld [vmem:[%s5079 + $0x50] sm:$0xf]
      %v5101 = vld [vmem:[%s5079 + $0x54] sm:$0xf]
      %v5102 = vld [vmem:[%s5079 + $0x58] sm:$0xf]
      %v5103 = vld [vmem:[%s5079 + $0x5c] sm:$0xf]
      %v5128 = vunpack.c.l.b16 %v5080
      %v5129 = vunpack.c.l.b16 %v5081
      %v5130 = vunpack.c.l.b16 %v5082
      %v5131 = vunpack.c.l.b16 %v5083
      %v5132 = vunpack.c.l.b16 %v5084
      %v5133 = vunpack.c.l.b16 %v5085
      %v5134 = vunpack.c.l.b16 %v5086
      %v5135 = vunpack.c.l.b16 %v5087
      %v5136 = vunpack.c.l.b16 %v5088
      %v5137 = vunpack.c.l.b16 %v5089
      %v5138 = vunpack.c.l.b16 %v5090
      %v5139 = vunpack.c.l.b16 %v5091
      %v5140 = vunpack.c.l.b16 %v5092
      %v5141 = vunpack.c.l.b16 %v5093
      %v5142 = vunpack.c.l.b16 %v5094
      %v5143 = vunpack.c.l.b16 %v5095
      %v5144 = vunpack.c.l.b16 %v5096
      %v5145 = vunpack.c.l.b16 %v5097
      %v5146 = vunpack.c.l.b16 %v5098
      %v5147 = vunpack.c.l.b16 %v5099
      %v5148 = vunpack.c.l.b16 %v5100
      %v5149 = vunpack.c.l.b16 %v5101
      %v5150 = vunpack.c.l.b16 %v5102
      %v5151 = vunpack.c.l.b16 %v5103
      %v5152 = vpack.c.b16 %v5129, %v5128
      %v5153 = vpack.c.b16 %v5131, %v5130
      %v5154 = vpack.c.b16 %v5133, %v5132
      %v5155 = vpack.c.b16 %v5135, %v5134
      %v5156 = vpack.c.b16 %v5137, %v5136
      %v5157 = vpack.c.b16 %v5139, %v5138
      %v5158 = vpack.c.b16 %v5141, %v5140
      %v5159 = vpack.c.b16 %v5143, %v5142
      %v5160 = vpack.c.b16 %v5145, %v5144
      %v5161 = vpack.c.b16 %v5147, %v5146
      %v5162 = vpack.c.b16 %v5149, %v5148
      %v5163 = vpack.c.b16 %v5151, %v5150
      %v5177 = vsel %vm499, %v4985, 0
      %v5180 = vsel %vm499, %v4988, 0
      %v5183 = vsel %vm499, %v4991, 0
      %v5186 = vsel %vm499, %v4994, 0
      %v5189 = vsel %vm499, %v4997, 0
      %v5192 = vsel %vm499, %v5000, 0
      %v5195 = vsel %vm499, %v5003, 0
      %v5198 = vsel %vm499, %v5006, 0
      %v5201 = vsel %vm499, %v5009, 0
      %v5204 = vsel %vm499, %v5012, 0
      %v5207 = vsel %vm499, %v5015, 0
      %v5210 = vsel %vm499, %v5018, 0
      %v5213 = vsel %vm499, %v5021, 0
      %v5216 = vsel %vm499, %v5024, 0
      %v5219 = vsel %vm499, %v5027, 0
      %v5222 = vsel %vm499, %v5030, 0
      %5224 = vmatpush.bf16.msra.mxu0 %v5159
      %5225 = vmatpush.bf16.msra.mxu0 %v5158
      %5226 = vmatpush.bf16.msra.mxu0 %v5157
      %5227 = vmatpush.bf16.msra.mxu0 %v5156
      %5228 = vmatpush.bf16.msra.mxu0 %v5155
      %5229 = vmatpush.bf16.msra.mxu0 %v5154
      %5230 = vmatpush.bf16.msra.mxu0 %v5153
      %5231 = vmatpush.bf16.msra.mxu0 %v5152
      %5232 = vmatmul.bf16.gmra.mxu0 %v5032
      %v5233 = vpop.f32.mrf.mxu0
      %v5234 = vadd.f32 0.0, %v5233
      %v5235 = vpop.f32.mrf.mxu0
      %v5236 = vadd.f32 0.0, %v5235
      %5237 = vmatmul.bf16.gmra.mxu0 %v5035
      %v5238 = vpop.f32.mrf.mxu0
      %v5239 = vadd.f32 0.0, %v5238
      %v5240 = vpop.f32.mrf.mxu0
      %v5241 = vadd.f32 0.0, %v5240
      %5242 = vmatmul.bf16.gmra.mxu0 %v5038
      %v5243 = vpop.f32.mrf.mxu0
      %v5244 = vadd.f32 0.0, %v5243
      %v5245 = vpop.f32.mrf.mxu0
      %v5246 = vadd.f32 0.0, %v5245
      %5247 = vmatmul.bf16.gmra.mxu0 %v5041
      %v5248 = vpop.f32.mrf.mxu0
      %v5249 = vadd.f32 0.0, %v5248
      %v5250 = vpop.f32.mrf.mxu0
      %v5251 = vadd.f32 0.0, %v5250
      %5252 = vmatmul.bf16.gmra.mxu0 %v5044
      %v5253 = vpop.f32.mrf.mxu0
      %v5254 = vadd.f32 0.0, %v5253
      %v5255 = vpop.f32.mrf.mxu0
      %v5256 = vadd.f32 0.0, %v5255
      %5257 = vmatmul.bf16.gmra.mxu0 %v5047
      %v5258 = vpop.f32.mrf.mxu0
      %v5259 = vadd.f32 0.0, %v5258
      %v5260 = vpop.f32.mrf.mxu0
      %v5261 = vadd.f32 0.0, %v5260
      %5262 = vmatmul.bf16.gmra.mxu0 %v5050
      %v5263 = vpop.f32.mrf.mxu0
      %v5264 = vadd.f32 0.0, %v5263
      %v5265 = vpop.f32.mrf.mxu0
      %v5266 = vadd.f32 0.0, %v5265
      %5267 = vmatmul.bf16.gmra.mxu0 %v5053
      %v5268 = vpop.f32.mrf.mxu0
      %v5269 = vadd.f32 0.0, %v5268
      %v5270 = vpop.f32.mrf.mxu0
      %v5271 = vadd.f32 0.0, %v5270
      %5272 = vmatmul.bf16.gmra.mxu0 %v5056
      %v5273 = vpop.f32.mrf.mxu0
      %v5274 = vadd.f32 0.0, %v5273
      %v5275 = vpop.f32.mrf.mxu0
      %v5276 = vadd.f32 0.0, %v5275
      %5277 = vmatmul.bf16.gmra.mxu0 %v5059
      %v5278 = vpop.f32.mrf.mxu0
      %v5279 = vadd.f32 0.0, %v5278
      %v5280 = vpop.f32.mrf.mxu0
      %v5281 = vadd.f32 0.0, %v5280
      %5282 = vmatmul.bf16.gmra.mxu0 %v5062
      %v5283 = vpop.f32.mrf.mxu0
      %v5284 = vadd.f32 0.0, %v5283
      %v5285 = vpop.f32.mrf.mxu0
      %v5286 = vadd.f32 0.0, %v5285
      %5287 = vmatmul.bf16.gmra.mxu0 %v5065
      %v5288 = vpop.f32.mrf.mxu0
      %v5289 = vadd.f32 0.0, %v5288
      %v5290 = vpop.f32.mrf.mxu0
      %v5291 = vadd.f32 0.0, %v5290
      %5292 = vmatmul.bf16.gmra.mxu0 %v5068
      %v5293 = vpop.f32.mrf.mxu0
      %v5294 = vadd.f32 0.0, %v5293
      %v5295 = vpop.f32.mrf.mxu0
      %v5296 = vadd.f32 0.0, %v5295
      %5297 = vmatmul.bf16.gmra.mxu0 %v5071
      %v5298 = vpop.f32.mrf.mxu0
      %v5299 = vadd.f32 0.0, %v5298
      %v5300 = vpop.f32.mrf.mxu0
      %v5301 = vadd.f32 0.0, %v5300
      %5302 = vmatmul.bf16.gmra.mxu0 %v5074
      %v5303 = vpop.f32.mrf.mxu0
      %v5304 = vadd.f32 0.0, %v5303
      %v5305 = vpop.f32.mrf.mxu0
      %v5306 = vadd.f32 0.0, %v5305
      %5307 = vmatmul.bf16.gmra.mxu0 %v5077
      %v5308 = vpop.f32.mrf.mxu0
      %v5309 = vadd.f32 0.0, %v5308
      %v5310 = vpop.f32.mrf.mxu0
      %v5311 = vadd.f32 0.0, %v5310
      %5312 = vdwg.mxu0
      %5313 = vmatpush.bf16.msra.mxu0 0
      %5314 = vmatpush.bf16.msra.mxu0 0
      %5315 = vmatpush.bf16.msra.mxu0 0
      %5316 = vmatpush.bf16.msra.mxu0 0
      %5317 = vmatpush.bf16.msra.mxu0 %v5163
      %5318 = vmatpush.bf16.msra.mxu0 %v5162
      %5319 = vmatpush.bf16.msra.mxu0 %v5161
      %5320 = vmatpush.bf16.msra.mxu0 %v5160
      %5321 = vmatmul.bf16.gmra.mxu0 %v5177
      %v5322 = vpop.f32.mrf.mxu0
      %v5323 = vadd.f32 %v5234, %v5322
      %v5324 = vpop.f32.mrf.mxu0
      %v5325 = vadd.f32 %v5236, %v5324
      %5326 = vmatmul.bf16.gmra.mxu0 %v5180
      %v5327 = vpop.f32.mrf.mxu0
      %v5328 = vadd.f32 %v5239, %v5327
      %v5329 = vpop.f32.mrf.mxu0
      %v5330 = vadd.f32 %v5241, %v5329
      %5331 = vmatmul.bf16.gmra.mxu0 %v5183
      %v5332 = vpop.f32.mrf.mxu0
      %v5333 = vadd.f32 %v5244, %v5332
      %v5334 = vpop.f32.mrf.mxu0
      %v5335 = vadd.f32 %v5246, %v5334
      %5336 = vmatmul.bf16.gmra.mxu0 %v5186
      %v5337 = vpop.f32.mrf.mxu0
      %v5338 = vadd.f32 %v5249, %v5337
      %v5339 = vpop.f32.mrf.mxu0
      %v5340 = vadd.f32 %v5251, %v5339
      %5341 = vmatmul.bf16.gmra.mxu0 %v5189
      %v5342 = vpop.f32.mrf.mxu0
      %v5343 = vadd.f32 %v5254, %v5342
      %v5344 = vpop.f32.mrf.mxu0
      %v5345 = vadd.f32 %v5256, %v5344
      %5346 = vmatmul.bf16.gmra.mxu0 %v5192
      %v5347 = vpop.f32.mrf.mxu0
      %v5348 = vadd.f32 %v5259, %v5347
      %v5349 = vpop.f32.mrf.mxu0
      %v5350 = vadd.f32 %v5261, %v5349
      %5351 = vmatmul.bf16.gmra.mxu0 %v5195
      %v5352 = vpop.f32.mrf.mxu0
      %v5353 = vadd.f32 %v5264, %v5352
      %v5354 = vpop.f32.mrf.mxu0
      %v5355 = vadd.f32 %v5266, %v5354
      %5356 = vmatmul.bf16.gmra.mxu0 %v5198
      %v5357 = vpop.f32.mrf.mxu0
      %v5358 = vadd.f32 %v5269, %v5357
      %v5359 = vpop.f32.mrf.mxu0
      %v5360 = vadd.f32 %v5271, %v5359
      %5361 = vmatmul.bf16.gmra.mxu0 %v5201
      %v5362 = vpop.f32.mrf.mxu0
      %v5363 = vadd.f32 %v5274, %v5362
      %v5364 = vpop.f32.mrf.mxu0
      %v5365 = vadd.f32 %v5276, %v5364
      %5366 = vmatmul.bf16.gmra.mxu0 %v5204
      %v5367 = vpop.f32.mrf.mxu0
      %v5368 = vadd.f32 %v5279, %v5367
      %v5369 = vpop.f32.mrf.mxu0
      %v5370 = vadd.f32 %v5281, %v5369
      %5371 = vmatmul.bf16.gmra.mxu0 %v5207
      %v5372 = vpop.f32.mrf.mxu0
      %v5373 = vadd.f32 %v5284, %v5372
      %v5374 = vpop.f32.mrf.mxu0
      %v5375 = vadd.f32 %v5286, %v5374
      %5376 = vmatmul.bf16.gmra.mxu0 %v5210
      %v5377 = vpop.f32.mrf.mxu0
      %v5378 = vadd.f32 %v5289, %v5377
      %v5379 = vpop.f32.mrf.mxu0
      %v5380 = vadd.f32 %v5291, %v5379
      %5381 = vmatmul.bf16.gmra.mxu0 %v5213
      %v5382 = vpop.f32.mrf.mxu0
      %v5383 = vadd.f32 %v5294, %v5382
      %v5384 = vpop.f32.mrf.mxu0
      %v5385 = vadd.f32 %v5296, %v5384
      %5386 = vmatmul.bf16.gmra.mxu0 %v5216
      %v5387 = vpop.f32.mrf.mxu0
      %v5388 = vadd.f32 %v5299, %v5387
      %v5389 = vpop.f32.mrf.mxu0
      %v5390 = vadd.f32 %v5301, %v5389
      %5391 = vmatmul.bf16.gmra.mxu0 %v5219
      %v5392 = vpop.f32.mrf.mxu0
      %v5393 = vadd.f32 %v5304, %v5392
      %v5394 = vpop.f32.mrf.mxu0
      %v5395 = vadd.f32 %v5306, %v5394
      %5396 = vmatmul.bf16.gmra.mxu0 %v5222
      %v5397 = vpop.f32.mrf.mxu0
      %v5398 = vadd.f32 %v5309, %v5397
      %v5399 = vpop.f32.mrf.mxu0
      %v5400 = vadd.f32 %v5311, %v5399
      %5401 = vdwg.mxu0
      %v5402 = vadd.f32 %v4439, %v5323
      %v5403 = vadd.f32 %v4441, %v5325
      %v5404 = vadd.f32 %v4444, %v5328
      %v5405 = vadd.f32 %v4446, %v5330
      %v5406 = vadd.f32 %v4449, %v5333
      %v5407 = vadd.f32 %v4451, %v5335
      %v5408 = vadd.f32 %v4454, %v5338
      %v5409 = vadd.f32 %v4456, %v5340
      %v5410 = vadd.f32 %v4459, %v5343
      %v5411 = vadd.f32 %v4461, %v5345
      %v5412 = vadd.f32 %v4464, %v5348
      %v5413 = vadd.f32 %v4466, %v5350
      %v5414 = vadd.f32 %v4469, %v5353
      %v5415 = vadd.f32 %v4471, %v5355
      %v5416 = vadd.f32 %v4474, %v5358
      %v5417 = vadd.f32 %v4476, %v5360
      %v5418 = vadd.f32 %v4479, %v5363
      %v5419 = vadd.f32 %v4481, %v5365
      %v5420 = vadd.f32 %v4484, %v5368
      %v5421 = vadd.f32 %v4486, %v5370
      %v5422 = vadd.f32 %v4489, %v5373
      %v5423 = vadd.f32 %v4491, %v5375
      %v5424 = vadd.f32 %v4494, %v5378
      %v5425 = vadd.f32 %v4496, %v5380
      %v5426 = vadd.f32 %v4499, %v5383
      %v5427 = vadd.f32 %v4501, %v5385
      %v5428 = vadd.f32 %v4504, %v5388
      %v5429 = vadd.f32 %v4506, %v5390
      %v5430 = vadd.f32 %v4509, %v5393
      %v5431 = vadd.f32 %v4511, %v5395
      %v5432 = vadd.f32 %v4514, %v5398
      %v5433 = vadd.f32 %v4516, %v5400
      %v5434 = vld [vmem:[%s5] sm:$0x1]
      %v5436 = vperm.slane %v5434, 0
      %v5438 = vmul.f32 %v5402, %v5436
      %v5439 = vmul.f32 %v5403, %v5436
      %v5440 = vmul.f32 %v5404, %v5436
      %v5441 = vmul.f32 %v5405, %v5436
      %v5442 = vmul.f32 %v5406, %v5436
      %v5443 = vmul.f32 %v5407, %v5436
      %v5444 = vmul.f32 %v5408, %v5436
      %v5445 = vmul.f32 %v5409, %v5436
      %v5446 = vmul.f32 %v5410, %v5436
      %v5447 = vmul.f32 %v5411, %v5436
      %v5448 = vmul.f32 %v5412, %v5436
      %v5449 = vmul.f32 %v5413, %v5436
      %v5450 = vmul.f32 %v5414, %v5436
      %v5451 = vmul.f32 %v5415, %v5436
      %v5452 = vmul.f32 %v5416, %v5436
      %v5453 = vmul.f32 %v5417, %v5436
      %v5454 = vmul.f32 %v5418, %v5436
      %v5455 = vmul.f32 %v5419, %v5436
      %v5456 = vmul.f32 %v5420, %v5436
      %v5457 = vmul.f32 %v5421, %v5436
      %v5458 = vmul.f32 %v5422, %v5436
      %v5459 = vmul.f32 %v5423, %v5436
      %v5460 = vmul.f32 %v5424, %v5436
      %v5461 = vmul.f32 %v5425, %v5436
      %v5462 = vmul.f32 %v5426, %v5436
      %v5463 = vmul.f32 %v5427, %v5436
      %v5464 = vmul.f32 %v5428, %v5436
      %v5465 = vmul.f32 %v5429, %v5436
      %v5466 = vmul.f32 %v5430, %v5436
      %v5467 = vmul.f32 %v5431, %v5436
      %v5468 = vmul.f32 %v5432, %v5436
      %v5469 = vmul.f32 %v5433, %v5436
      %v5470 = vld [vmem:[%s6] sm:$0x1]
      %v5472 = vperm.slane %v5470, 0
      %v5474 = vadd.f32 %v5438, %v5472
      %v5475 = vadd.f32 %v5439, %v5472
      %v5476 = vadd.f32 %v5440, %v5472
      %v5477 = vadd.f32 %v5441, %v5472
      %v5478 = vadd.f32 %v5442, %v5472
      %v5479 = vadd.f32 %v5443, %v5472
      %v5480 = vadd.f32 %v5444, %v5472
      %v5481 = vadd.f32 %v5445, %v5472
      %v5482 = vadd.f32 %v5446, %v5472
      %v5483 = vadd.f32 %v5447, %v5472
      %v5484 = vadd.f32 %v5448, %v5472
      %v5485 = vadd.f32 %v5449, %v5472
      %v5486 = vadd.f32 %v5450, %v5472
      %v5487 = vadd.f32 %v5451, %v5472
      %v5488 = vadd.f32 %v5452, %v5472
      %v5489 = vadd.f32 %v5453, %v5472
      %v5490 = vadd.f32 %v5454, %v5472
      %v5491 = vadd.f32 %v5455, %v5472
      %v5492 = vadd.f32 %v5456, %v5472
      %v5493 = vadd.f32 %v5457, %v5472
      %v5494 = vadd.f32 %v5458, %v5472
      %v5495 = vadd.f32 %v5459, %v5472
      %v5496 = vadd.f32 %v5460, %v5472
      %v5497 = vadd.f32 %v5461, %v5472
      %v5498 = vadd.f32 %v5462, %v5472
      %v5499 = vadd.f32 %v5463, %v5472
      %v5500 = vadd.f32 %v5464, %v5472
      %v5501 = vadd.f32 %v5465, %v5472
      %v5502 = vadd.f32 %v5466, %v5472
      %v5503 = vadd.f32 %v5467, %v5472
      %v5504 = vadd.f32 %v5468, %v5472
      %v5505 = vadd.f32 %v5469, %v5472
      %v5506 = vmax.f32 %v5474, 0.0
      %v5507 = vmax.f32 %v5475, 0.0
      %v5508 = vmax.f32 %v5476, 0.0
      %v5509 = vmax.f32 %v5477, 0.0
      %v5510 = vmax.f32 %v5478, 0.0
      %v5511 = vmax.f32 %v5479, 0.0
      %v5512 = vmax.f32 %v5480, 0.0
      %v5513 = vmax.f32 %v5481, 0.0
      %v5514 = vmax.f32 %v5482, 0.0
      %v5515 = vmax.f32 %v5483, 0.0
      %v5516 = vmax.f32 %v5484, 0.0
      %v5517 = vmax.f32 %v5485, 0.0
      %v5518 = vmax.f32 %v5486, 0.0
      %v5519 = vmax.f32 %v5487, 0.0
      %v5520 = vmax.f32 %v5488, 0.0
      %v5521 = vmax.f32 %v5489, 0.0
      %v5522 = vmax.f32 %v5490, 0.0
      %v5523 = vmax.f32 %v5491, 0.0
      %v5524 = vmax.f32 %v5492, 0.0
      %v5525 = vmax.f32 %v5493, 0.0
      %v5526 = vmax.f32 %v5494, 0.0
      %v5527 = vmax.f32 %v5495, 0.0
      %v5528 = vmax.f32 %v5496, 0.0
      %v5529 = vmax.f32 %v5497, 0.0
      %v5530 = vmax.f32 %v5498, 0.0
      %v5531 = vmax.f32 %v5499, 0.0
      %v5532 = vmax.f32 %v5500, 0.0
      %v5533 = vmax.f32 %v5501, 0.0
      %v5534 = vmax.f32 %v5502, 0.0
      %v5535 = vmax.f32 %v5503, 0.0
      %v5536 = vmax.f32 %v5504, 0.0
      %v5537 = vmax.f32 %v5505, 0.0
      %vm5538 = vcmask 257024
      %5539 = vst.msk [vmem:[#allocation3] sm:$0xf] %vm5538, 0
      %5540 = vst.msk [vmem:[#allocation3 + $0x4] sm:$0xf] %vm5538, 0
      %vm5541 = vcmask 253952
      %5542 = vst.msk [vmem:[#allocation3 + $0x8] sm:$0x1] %vm5541, 0
      %s5543 = scalar_lea.vmem [#allocation3], 204
      %5544 = vst.msk [vmem:[%s5543] sm:$0xf] %vm5538, 0
      %5545 = vst.msk [vmem:[%s5543 + $0x4] sm:$0xf] %vm5538, 0
      %5546 = vst.msk [vmem:[%s5543 + $0x8] sm:$0x1] %vm5541, 0
      %vm5547 = vcmask 253952
      %vm5548 = vmand %vm5547, %vm1490
      %v5549 = vld [vmem:[#allocation3] sm:$0x1]
      %v5550 = vsel %vm5548, 0, %v5549
      %5551 = vst [vmem:[#allocation3] sm:$0x1] %v5550
      %v5552 = vld [vmem:[#allocation3 + $0xc] sm:$0x1]
      %v5553 = vsel %vm5548, 0, %v5552
      %5554 = vst [vmem:[#allocation3 + $0xc] sm:$0x1] %v5553
      %v5555 = vld [vmem:[#allocation3 + $0x18] sm:$0x1]
      %v5556 = vsel %vm5548, 0, %v5555
      %5557 = vst [vmem:[#allocation3 + $0x18] sm:$0x1] %v5556
      %v5558 = vld [vmem:[#allocation3 + $0x24] sm:$0x1]
      %v5559 = vsel %vm5548, 0, %v5558
      %5560 = vst [vmem:[#allocation3 + $0x24] sm:$0x1] %v5559
      %v5561 = vld [vmem:[#allocation3 + $0x30] sm:$0x1]
      %v5562 = vsel %vm5548, 0, %v5561
      %5563 = vst [vmem:[#allocation3 + $0x30] sm:$0x1] %v5562
      %v5564 = vld [vmem:[#allocation3 + $0x3c] sm:$0x1]
      %v5565 = vsel %vm5548, 0, %v5564
      %5566 = vst [vmem:[#allocation3 + $0x3c] sm:$0x1] %v5565
      %v5567 = vld [vmem:[#allocation3 + $0x48] sm:$0x1]
      %v5568 = vsel %vm5548, 0, %v5567
      %5569 = vst [vmem:[#allocation3 + $0x48] sm:$0x1] %v5568
      %v5570 = vld [vmem:[#allocation3 + $0x54] sm:$0x1]
      %v5571 = vsel %vm5548, 0, %v5570
      %5572 = vst [vmem:[#allocation3 + $0x54] sm:$0x1] %v5571
      %v5573 = vld [vmem:[#allocation3 + $0x60] sm:$0x1]
      %v5574 = vsel %vm5548, 0, %v5573
      %5575 = vst [vmem:[#allocation3 + $0x60] sm:$0x1] %v5574
      %v5576 = vld [vmem:[#allocation3 + $0x6c] sm:$0x1]
      %v5577 = vsel %vm5548, 0, %v5576
      %5578 = vst [vmem:[#allocation3 + $0x6c] sm:$0x1] %v5577
      %v5579 = vld [vmem:[#allocation3 + $0x78] sm:$0x1]
      %v5580 = vsel %vm5548, 0, %v5579
      %5581 = vst [vmem:[#allocation3 + $0x78] sm:$0x1] %v5580
      %v5582 = vld [vmem:[#allocation3 + $0x84] sm:$0x1]
      %v5583 = vsel %vm5548, 0, %v5582
      %5584 = vst [vmem:[#allocation3 + $0x84] sm:$0x1] %v5583
      %v5585 = vld [vmem:[#allocation3 + $0x90] sm:$0x1]
      %v5586 = vsel %vm5548, 0, %v5585
      %5587 = vst [vmem:[#allocation3 + $0x90] sm:$0x1] %v5586
      %v5588 = vld [vmem:[#allocation3 + $0x9c] sm:$0x1]
      %v5589 = vsel %vm5548, 0, %v5588
      %5590 = vst [vmem:[#allocation3 + $0x9c] sm:$0x1] %v5589
      %v5591 = vld [vmem:[#allocation3 + $0xa8] sm:$0x1]
      %v5592 = vsel %vm5548, 0, %v5591
      %5593 = vst [vmem:[#allocation3 + $0xa8] sm:$0x1] %v5592
      %v5594 = vld [vmem:[#allocation3 + $0xb4] sm:$0x1]
      %v5595 = vsel %vm5548, 0, %v5594
      %5596 = vst [vmem:[#allocation3 + $0xb4] sm:$0x1] %v5595
      %v5597 = vld [vmem:[#allocation3 + $0xc0] sm:$0x1]
      %v5598 = vsel %vm5548, 0, %v5597
      %5599 = vst [vmem:[#allocation3 + $0xc0] sm:$0x1] %v5598
      %v5600 = vld [vmem:[#allocation3 + $0xcc] sm:$0x1]
      %v5601 = vsel %vm5548, 0, %v5600
      %5602 = vst [vmem:[#allocation3 + $0xcc] sm:$0x1] %v5601
      %vm5603 = vmand %vm5547, %vm1546
      %v5604 = vld [vmem:[#allocation3 + $0x8] sm:$0x1]
      %v5605 = vsel %vm5603, 0, %v5604
      %5606 = vst [vmem:[#allocation3 + $0x8] sm:$0x1] %v5605
      %v5607 = vld [vmem:[#allocation3 + $0x14] sm:$0x1]
      %v5608 = vsel %vm5603, 0, %v5607
      %5609 = vst [vmem:[#allocation3 + $0x14] sm:$0x1] %v5608
      %v5610 = vld [vmem:[#allocation3 + $0x20] sm:$0x1]
      %v5611 = vsel %vm5603, 0, %v5610
      %5612 = vst [vmem:[#allocation3 + $0x20] sm:$0x1] %v5611
      %v5613 = vld [vmem:[#allocation3 + $0x2c] sm:$0x1]
      %v5614 = vsel %vm5603, 0, %v5613
      %5615 = vst [vmem:[#allocation3 + $0x2c] sm:$0x1] %v5614
      %v5616 = vld [vmem:[#allocation3 + $0x38] sm:$0x1]
      %v5617 = vsel %vm5603, 0, %v5616
      %5618 = vst [vmem:[#allocation3 + $0x38] sm:$0x1] %v5617
      %v5619 = vld [vmem:[#allocation3 + $0x44] sm:$0x1]
      %v5620 = vsel %vm5603, 0, %v5619
      %5621 = vst [vmem:[#allocation3 + $0x44] sm:$0x1] %v5620
      %v5622 = vld [vmem:[#allocation3 + $0x50] sm:$0x1]
      %v5623 = vsel %vm5603, 0, %v5622
      %5624 = vst [vmem:[#allocation3 + $0x50] sm:$0x1] %v5623
      %v5625 = vld [vmem:[#allocation3 + $0x5c] sm:$0x1]
      %v5626 = vsel %vm5603, 0, %v5625
      %5627 = vst [vmem:[#allocation3 + $0x5c] sm:$0x1] %v5626
      %v5628 = vld [vmem:[#allocation3 + $0x68] sm:$0x1]
      %v5629 = vsel %vm5603, 0, %v5628
      %5630 = vst [vmem:[#allocation3 + $0x68] sm:$0x1] %v5629
      %v5631 = vld [vmem:[#allocation3 + $0x74] sm:$0x1]
      %v5632 = vsel %vm5603, 0, %v5631
      %5633 = vst [vmem:[#allocation3 + $0x74] sm:$0x1] %v5632
      %v5634 = vld [vmem:[#allocation3 + $0x80] sm:$0x1]
      %v5635 = vsel %vm5603, 0, %v5634
      %5636 = vst [vmem:[#allocation3 + $0x80] sm:$0x1] %v5635
      %v5637 = vld [vmem:[#allocation3 + $0x8c] sm:$0x1]
      %v5638 = vsel %vm5603, 0, %v5637
      %5639 = vst [vmem:[#allocation3 + $0x8c] sm:$0x1] %v5638
      %v5640 = vld [vmem:[#allocation3 + $0x98] sm:$0x1]
      %v5641 = vsel %vm5603, 0, %v5640
      %5642 = vst [vmem:[#allocation3 + $0x98] sm:$0x1] %v5641
      %v5643 = vld [vmem:[#allocation3 + $0xa4] sm:$0x1]
      %v5644 = vsel %vm5603, 0, %v5643
      %5645 = vst [vmem:[#allocation3 + $0xa4] sm:$0x1] %v5644
      %v5646 = vld [vmem:[#allocation3 + $0xb0] sm:$0x1]
      %v5647 = vsel %vm5603, 0, %v5646
      %5648 = vst [vmem:[#allocation3 + $0xb0] sm:$0x1] %v5647
      %v5649 = vld [vmem:[#allocation3 + $0xbc] sm:$0x1]
      %v5650 = vsel %vm5603, 0, %v5649
      %5651 = vst [vmem:[#allocation3 + $0xbc] sm:$0x1] %v5650
      %v5652 = vld [vmem:[#allocation3 + $0xc8] sm:$0x1]
      %v5653 = vsel %vm5603, 0, %v5652
      %5654 = vst [vmem:[#allocation3 + $0xc8] sm:$0x1] %v5653
      %v5655 = vld [vmem:[#allocation3 + $0xd4] sm:$0x1]
      %v5656 = vsel %vm5603, 0, %v5655
      %5657 = vst [vmem:[#allocation3 + $0xd4] sm:$0x1] %v5656
      %v5658 = vpack.c.bf16 %v5506, %v5506
      %v5659 = vpack.c.bf16 %v5507, %v5507
      %v5660 = vpack.c.bf16 %v5508, %v5508
      %v5661 = vpack.c.bf16 %v5509, %v5509
      %v5662 = vpack.c.bf16 %v5510, %v5510
      %v5663 = vpack.c.bf16 %v5511, %v5511
      %v5664 = vpack.c.bf16 %v5512, %v5512
      %v5665 = vpack.c.bf16 %v5513, %v5513
      %v5666 = vpack.c.bf16 %v5514, %v5514
      %v5667 = vpack.c.bf16 %v5515, %v5515
      %v5668 = vpack.c.bf16 %v5516, %v5516
      %v5669 = vpack.c.bf16 %v5517, %v5517
      %v5670 = vpack.c.bf16 %v5518, %v5518
      %v5671 = vpack.c.bf16 %v5519, %v5519
      %v5672 = vpack.c.bf16 %v5520, %v5520
      %v5673 = vpack.c.bf16 %v5521, %v5521
      %v5674 = vpack.c.bf16 %v5522, %v5522
      %v5675 = vpack.c.bf16 %v5523, %v5523
      %v5676 = vpack.c.bf16 %v5524, %v5524
      %v5677 = vpack.c.bf16 %v5525, %v5525
      %v5678 = vpack.c.bf16 %v5526, %v5526
      %v5679 = vpack.c.bf16 %v5527, %v5527
      %v5680 = vpack.c.bf16 %v5528, %v5528
      %v5681 = vpack.c.bf16 %v5529, %v5529
      %v5682 = vpack.c.bf16 %v5530, %v5530
      %v5683 = vpack.c.bf16 %v5531, %v5531
      %v5684 = vpack.c.bf16 %v5532, %v5532
      %v5685 = vpack.c.bf16 %v5533, %v5533
      %v5686 = vpack.c.bf16 %v5534, %v5534
      %v5687 = vpack.c.bf16 %v5535, %v5535
      %v5688 = vpack.c.bf16 %v5536, %v5536
      %v5689 = vpack.c.bf16 %v5537, %v5537
      %v5691 = vshrl.u32 %v5658, 16
      %v5693 = vrot.slane %v5691, 7
      %v5694 = vshll.u32 %v5658, 16
      %v5696 = vor.u32 %v5693, %v5694
      %v5697 = vrot.slane %v5693, 4
      %v5699 = vshrl.u32 %v5659, 16
      %v5701 = vrot.slane %v5699, 7
      %v5702 = vshll.u32 %v5659, 16
      %v5704 = vor.u32 %v5701, %v5702
      %v5705 = vsel %vm2315, %v5697, %v5704
      %v5706 = vrot.slane %v5701, 4
      %v5708 = vshrl.u32 %v5660, 16
      %v5710 = vrot.slane %v5708, 7
      %v5711 = vshll.u32 %v5660, 16
      %v5713 = vor.u32 %v5710, %v5711
      %v5714 = vrot.slane %v5710, 4
      %v5716 = vshrl.u32 %v5661, 16
      %v5718 = vrot.slane %v5716, 7
      %v5719 = vshll.u32 %v5661, 16
      %v5721 = vor.u32 %v5718, %v5719
      %v5722 = vsel %vm2315, %v5714, %v5721
      %v5723 = vrot.slane %v5718, 4
      %v5725 = vshrl.u32 %v5662, 16
      %v5727 = vrot.slane %v5725, 7
      %v5728 = vshll.u32 %v5662, 16
      %v5730 = vor.u32 %v5727, %v5728
      %v5731 = vrot.slane %v5727, 4
      %v5733 = vshrl.u32 %v5663, 16
      %v5735 = vrot.slane %v5733, 7
      %v5736 = vshll.u32 %v5663, 16
      %v5738 = vor.u32 %v5735, %v5736
      %v5739 = vsel %vm2315, %v5731, %v5738
      %v5740 = vrot.slane %v5735, 4
      %v5742 = vshrl.u32 %v5664, 16
      %v5744 = vrot.slane %v5742, 7
      %v5745 = vshll.u32 %v5664, 16
      %v5747 = vor.u32 %v5744, %v5745
      %v5748 = vrot.slane %v5744, 4
      %v5750 = vshrl.u32 %v5665, 16
      %v5752 = vrot.slane %v5750, 7
      %v5753 = vshll.u32 %v5665, 16
      %v5755 = vor.u32 %v5752, %v5753
      %v5756 = vsel %vm2315, %v5748, %v5755
      %v5757 = vrot.slane %v5752, 4
      %v5759 = vshrl.u32 %v5666, 16
      %v5761 = vrot.slane %v5759, 7
      %v5762 = vshll.u32 %v5666, 16
      %v5764 = vor.u32 %v5761, %v5762
      %v5765 = vrot.slane %v5761, 4
      %v5767 = vshrl.u32 %v5667, 16
      %v5769 = vrot.slane %v5767, 7
      %v5770 = vshll.u32 %v5667, 16
      %v5772 = vor.u32 %v5769, %v5770
      %v5773 = vsel %vm2315, %v5765, %v5772
      %v5774 = vrot.slane %v5769, 4
      %v5776 = vshrl.u32 %v5668, 16
      %v5778 = vrot.slane %v5776, 7
      %v5779 = vshll.u32 %v5668, 16
      %v5781 = vor.u32 %v5778, %v5779
      %v5782 = vrot.slane %v5778, 4
      %v5784 = vshrl.u32 %v5669, 16
      %v5786 = vrot.slane %v5784, 7
      %v5787 = vshll.u32 %v5669, 16
      %v5789 = vor.u32 %v5786, %v5787
      %v5790 = vsel %vm2315, %v5782, %v5789
      %v5791 = vrot.slane %v5786, 4
      %v5793 = vshrl.u32 %v5670, 16
      %v5795 = vrot.slane %v5793, 7
      %v5796 = vshll.u32 %v5670, 16
      %v5798 = vor.u32 %v5795, %v5796
      %v5799 = vrot.slane %v5795, 4
      %v5801 = vshrl.u32 %v5671, 16
      %v5803 = vrot.slane %v5801, 7
      %v5804 = vshll.u32 %v5671, 16
      %v5806 = vor.u32 %v5803, %v5804
      %v5807 = vsel %vm2315, %v5799, %v5806
      %v5808 = vrot.slane %v5803, 4
      %v5810 = vshrl.u32 %v5672, 16
      %v5812 = vrot.slane %v5810, 7
      %v5813 = vshll.u32 %v5672, 16
      %v5815 = vor.u32 %v5812, %v5813
      %v5816 = vrot.slane %v5812, 4
      %v5818 = vshrl.u32 %v5673, 16
      %v5820 = vrot.slane %v5818, 7
      %v5821 = vshll.u32 %v5673, 16
      %v5823 = vor.u32 %v5820, %v5821
      %v5824 = vsel %vm2315, %v5816, %v5823
      %v5825 = vrot.slane %v5820, 4
      %v5827 = vshrl.u32 %v5674, 16
      %v5829 = vrot.slane %v5827, 7
      %v5830 = vshll.u32 %v5674, 16
      %v5832 = vor.u32 %v5829, %v5830
      %v5833 = vrot.slane %v5829, 4
      %v5835 = vshrl.u32 %v5675, 16
      %v5837 = vrot.slane %v5835, 7
      %v5838 = vshll.u32 %v5675, 16
      %v5840 = vor.u32 %v5837, %v5838
      %v5841 = vsel %vm2315, %v5833, %v5840
      %v5842 = vrot.slane %v5837, 4
      %v5844 = vshrl.u32 %v5676, 16
      %v5846 = vrot.slane %v5844, 7
      %v5847 = vshll.u32 %v5676, 16
      %v5849 = vor.u32 %v5846, %v5847
      %v5850 = vrot.slane %v5846, 4
      %v5852 = vshrl.u32 %v5677, 16
      %v5854 = vrot.slane %v5852, 7
      %v5855 = vshll.u32 %v5677, 16
      %v5857 = vor.u32 %v5854, %v5855
      %v5858 = vsel %vm2315, %v5850, %v5857
      %v5859 = vrot.slane %v5854, 4
      %v5861 = vshrl.u32 %v5678, 16
      %v5863 = vrot.slane %v5861, 7
      %v5864 = vshll.u32 %v5678, 16
      %v5866 = vor.u32 %v5863, %v5864
      %v5867 = vrot.slane %v5863, 4
      %v5869 = vshrl.u32 %v5679, 16
      %v5871 = vrot.slane %v5869, 7
      %v5872 = vshll.u32 %v5679, 16
      %v5874 = vor.u32 %v5871, %v5872
      %v5875 = vsel %vm2315, %v5867, %v5874
      %v5876 = vrot.slane %v5871, 4
      %v5878 = vshrl.u32 %v5680, 16
      %v5880 = vrot.slane %v5878, 7
      %v5881 = vshll.u32 %v5680, 16
      %v5883 = vor.u32 %v5880, %v5881
      %v5884 = vrot.slane %v5880, 4
      %v5886 = vshrl.u32 %v5681, 16
      %v5888 = vrot.slane %v5886, 7
      %v5889 = vshll.u32 %v5681, 16
      %v5891 = vor.u32 %v5888, %v5889
      %v5892 = vsel %vm2315, %v5884, %v5891
      %v5893 = vrot.slane %v5888, 4
      %v5895 = vshrl.u32 %v5682, 16
      %v5897 = vrot.slane %v5895, 7
      %v5898 = vshll.u32 %v5682, 16
      %v5900 = vor.u32 %v5897, %v5898
      %v5901 = vrot.slane %v5897, 4
      %v5903 = vshrl.u32 %v5683, 16
      %v5905 = vrot.slane %v5903, 7
      %v5906 = vshll.u32 %v5683, 16
      %v5908 = vor.u32 %v5905, %v5906
      %v5909 = vsel %vm2315, %v5901, %v5908
      %v5910 = vrot.slane %v5905, 4
      %v5912 = vshrl.u32 %v5684, 16
      %v5914 = vrot.slane %v5912, 7
      %v5915 = vshll.u32 %v5684, 16
      %v5917 = vor.u32 %v5914, %v5915
      %v5918 = vrot.slane %v5914, 4
      %v5920 = vshrl.u32 %v5685, 16
      %v5922 = vrot.slane %v5920, 7
      %v5923 = vshll.u32 %v5685, 16
      %v5925 = vor.u32 %v5922, %v5923
      %v5926 = vsel %vm2315, %v5918, %v5925
      %v5927 = vrot.slane %v5922, 4
      %v5929 = vshrl.u32 %v5686, 16
      %v5931 = vrot.slane %v5929, 7
      %v5932 = vshll.u32 %v5686, 16
      %v5934 = vor.u32 %v5931, %v5932
      %v5935 = vrot.slane %v5931, 4
      %v5937 = vshrl.u32 %v5687, 16
      %v5939 = vrot.slane %v5937, 7
      %v5940 = vshll.u32 %v5687, 16
      %v5942 = vor.u32 %v5939, %v5940
      %v5943 = vsel %vm2315, %v5935, %v5942
      %v5944 = vrot.slane %v5939, 4
      %v5946 = vshrl.u32 %v5688, 16
      %v5948 = vrot.slane %v5946, 7
      %v5949 = vshll.u32 %v5688, 16
      %v5951 = vor.u32 %v5948, %v5949
      %v5952 = vrot.slane %v5948, 4
      %v5954 = vshrl.u32 %v5689, 16
      %v5956 = vrot.slane %v5954, 7
      %v5957 = vshll.u32 %v5689, 16
      %v5959 = vor.u32 %v5956, %v5957
      %v5960 = vsel %vm2315, %v5952, %v5959
      %v5961 = vrot.slane %v5956, 4
      %s6010 = scalar_lea.vmem [#allocation3], 12
      %vm6011 = vcmask 257024
      %vm6012 = vmand %vm6011, %vm1546
      %v6013 = vld [vmem:[%s6010] sm:$0xf]
      %v6014 = vsel %vm6012, %v5696, %v6013
      %6015 = vst [vmem:[%s6010] sm:$0xf] %v6014
      %6016 = vst.msk [vmem:[%s6010 + $0x4] sm:$0xf] %vm5538, %v5705
      %v6017 = vld [vmem:[%s6010 + $0x8] sm:$0x1]
      %v6018 = vsel %vm5548, %v5706, %v6017
      %6019 = vst [vmem:[%s6010 + $0x8] sm:$0x1] %v6018
      %v6020 = vld [vmem:[%s6010 + $0xc] sm:$0xf]
      %v6021 = vsel %vm6012, %v5713, %v6020
      %6022 = vst [vmem:[%s6010 + $0xc] sm:$0xf] %v6021
      %6023 = vst.msk [vmem:[%s6010 + $0x10] sm:$0xf] %vm5538, %v5722
      %v6024 = vld [vmem:[%s6010 + $0x14] sm:$0x1]
      %v6025 = vsel %vm5548, %v5723, %v6024
      %6026 = vst [vmem:[%s6010 + $0x14] sm:$0x1] %v6025
      %v6027 = vld [vmem:[%s6010 + $0x18] sm:$0xf]
      %v6028 = vsel %vm6012, %v5730, %v6027
      %6029 = vst [vmem:[%s6010 + $0x18] sm:$0xf] %v6028
      %6030 = vst.msk [vmem:[%s6010 + $0x1c] sm:$0xf] %vm5538, %v5739
      %v6031 = vld [vmem:[%s6010 + $0x20] sm:$0x1]
      %v6032 = vsel %vm5548, %v5740, %v6031
      %6033 = vst [vmem:[%s6010 + $0x20] sm:$0x1] %v6032
      %v6034 = vld [vmem:[%s6010 + $0x24] sm:$0xf]
      %v6035 = vsel %vm6012, %v5747, %v6034
      %6036 = vst [vmem:[%s6010 + $0x24] sm:$0xf] %v6035
      %6037 = vst.msk [vmem:[%s6010 + $0x28] sm:$0xf] %vm5538, %v5756
      %v6038 = vld [vmem:[%s6010 + $0x2c] sm:$0x1]
      %v6039 = vsel %vm5548, %v5757, %v6038
      %6040 = vst [vmem:[%s6010 + $0x2c] sm:$0x1] %v6039
      %v6041 = vld [vmem:[%s6010 + $0x30] sm:$0xf]
      %v6042 = vsel %vm6012, %v5764, %v6041
      %6043 = vst [vmem:[%s6010 + $0x30] sm:$0xf] %v6042
      %6044 = vst.msk [vmem:[%s6010 + $0x34] sm:$0xf] %vm5538, %v5773
      %v6045 = vld [vmem:[%s6010 + $0x38] sm:$0x1]
      %v6046 = vsel %vm5548, %v5774, %v6045
      %6047 = vst [vmem:[%s6010 + $0x38] sm:$0x1] %v6046
      %v6048 = vld [vmem:[%s6010 + $0x3c] sm:$0xf]
      %v6049 = vsel %vm6012, %v5781, %v6048
      %6050 = vst [vmem:[%s6010 + $0x3c] sm:$0xf] %v6049
      %6051 = vst.msk [vmem:[%s6010 + $0x40] sm:$0xf] %vm5538, %v5790
      %v6052 = vld [vmem:[%s6010 + $0x44] sm:$0x1]
      %v6053 = vsel %vm5548, %v5791, %v6052
      %6054 = vst [vmem:[%s6010 + $0x44] sm:$0x1] %v6053
      %v6055 = vld [vmem:[%s6010 + $0x48] sm:$0xf]
      %v6056 = vsel %vm6012, %v5798, %v6055
      %6057 = vst [vmem:[%s6010 + $0x48] sm:$0xf] %v6056
      %6058 = vst.msk [vmem:[%s6010 + $0x4c] sm:$0xf] %vm5538, %v5807
      %v6059 = vld [vmem:[%s6010 + $0x50] sm:$0x1]
      %v6060 = vsel %vm5548, %v5808, %v6059
      %6061 = vst [vmem:[%s6010 + $0x50] sm:$0x1] %v6060
      %v6062 = vld [vmem:[%s6010 + $0x54] sm:$0xf]
      %v6063 = vsel %vm6012, %v5815, %v6062
      %6064 = vst [vmem:[%s6010 + $0x54] sm:$0xf] %v6063
      %6065 = vst.msk [vmem:[%s6010 + $0x58] sm:$0xf] %vm5538, %v5824
      %v6066 = vld [vmem:[%s6010 + $0x5c] sm:$0x1]
      %v6067 = vsel %vm5548, %v5825, %v6066
      %6068 = vst [vmem:[%s6010 + $0x5c] sm:$0x1] %v6067
      %v6069 = vld [vmem:[%s6010 + $0x60] sm:$0xf]
      %v6070 = vsel %vm6012, %v5832, %v6069
      %6071 = vst [vmem:[%s6010 + $0x60] sm:$0xf] %v6070
      %6072 = vst.msk [vmem:[%s6010 + $0x64] sm:$0xf] %vm5538, %v5841
      %v6073 = vld [vmem:[%s6010 + $0x68] sm:$0x1]
      %v6074 = vsel %vm5548, %v5842, %v6073
      %6075 = vst [vmem:[%s6010 + $0x68] sm:$0x1] %v6074
      %v6076 = vld [vmem:[%s6010 + $0x6c] sm:$0xf]
      %v6077 = vsel %vm6012, %v5849, %v6076
      %6078 = vst [vmem:[%s6010 + $0x6c] sm:$0xf] %v6077
      %6079 = vst.msk [vmem:[%s6010 + $0x70] sm:$0xf] %vm5538, %v5858
      %v6080 = vld [vmem:[%s6010 + $0x74] sm:$0x1]
      %v6081 = vsel %vm5548, %v5859, %v6080
      %6082 = vst [vmem:[%s6010 + $0x74] sm:$0x1] %v6081
      %v6083 = vld [vmem:[%s6010 + $0x78] sm:$0xf]
      %v6084 = vsel %vm6012, %v5866, %v6083
      %6085 = vst [vmem:[%s6010 + $0x78] sm:$0xf] %v6084
      %6086 = vst.msk [vmem:[%s6010 + $0x7c] sm:$0xf] %vm5538, %v5875
      %v6087 = vld [vmem:[%s6010 + $0x80] sm:$0x1]
      %v6088 = vsel %vm5548, %v5876, %v6087
      %6089 = vst [vmem:[%s6010 + $0x80] sm:$0x1] %v6088
      %v6090 = vld [vmem:[%s6010 + $0x84] sm:$0xf]
      %v6091 = vsel %vm6012, %v5883, %v6090
      %6092 = vst [vmem:[%s6010 + $0x84] sm:$0xf] %v6091
      %6093 = vst.msk [vmem:[%s6010 + $0x88] sm:$0xf] %vm5538, %v5892
      %v6094 = vld [vmem:[%s6010 + $0x8c] sm:$0x1]
      %v6095 = vsel %vm5548, %v5893, %v6094
      %6096 = vst [vmem:[%s6010 + $0x8c] sm:$0x1] %v6095
      %v6097 = vld [vmem:[%s6010 + $0x90] sm:$0xf]
      %v6098 = vsel %vm6012, %v5900, %v6097
      %6099 = vst [vmem:[%s6010 + $0x90] sm:$0xf] %v6098
      %6100 = vst.msk [vmem:[%s6010 + $0x94] sm:$0xf] %vm5538, %v5909
      %v6101 = vld [vmem:[%s6010 + $0x98] sm:$0x1]
      %v6102 = vsel %vm5548, %v5910, %v6101
      %6103 = vst [vmem:[%s6010 + $0x98] sm:$0x1] %v6102
      %v6104 = vld [vmem:[%s6010 + $0x9c] sm:$0xf]
      %v6105 = vsel %vm6012, %v5917, %v6104
      %6106 = vst [vmem:[%s6010 + $0x9c] sm:$0xf] %v6105
      %6107 = vst.msk [vmem:[%s6010 + $0xa0] sm:$0xf] %vm5538, %v5926
      %v6108 = vld [vmem:[%s6010 + $0xa4] sm:$0x1]
      %v6109 = vsel %vm5548, %v5927, %v6108
      %6110 = vst [vmem:[%s6010 + $0xa4] sm:$0x1] %v6109
      %v6111 = vld [vmem:[%s6010 + $0xa8] sm:$0xf]
      %v6112 = vsel %vm6012, %v5934, %v6111
      %6113 = vst [vmem:[%s6010 + $0xa8] sm:$0xf] %v6112
      %6114 = vst.msk [vmem:[%s6010 + $0xac] sm:$0xf] %vm5538, %v5943
      %v6115 = vld [vmem:[%s6010 + $0xb0] sm:$0x1]
      %v6116 = vsel %vm5548, %v5944, %v6115
      %6117 = vst [vmem:[%s6010 + $0xb0] sm:$0x1] %v6116
      %v6118 = vld [vmem:[%s6010 + $0xb4] sm:$0xf]
      %v6119 = vsel %vm6012, %v5951, %v6118
      %6120 = vst [vmem:[%s6010 + $0xb4] sm:$0xf] %v6119
      %6121 = vst.msk [vmem:[%s6010 + $0xb8] sm:$0xf] %vm5538, %v5960
      %v6122 = vld [vmem:[%s6010 + $0xbc] sm:$0x1]
      %v6123 = vsel %vm5548, %v5961, %v6122
      %6124 = vst [vmem:[%s6010 + $0xbc] sm:$0x1] %v6123
      %v6125 = vld [vmem:[#allocation3] sm:$0xf]
      %v6126 = vld [vmem:[#allocation3 + $0x4] sm:$0xf]
      %v6127 = vld [vmem:[#allocation3 + $0xc] sm:$0xf]
      %v6128 = vld [vmem:[#allocation3 + $0x10] sm:$0xf]
      %v6129 = vld [vmem:[#allocation3 + $0x18] sm:$0xf]
      %v6130 = vld [vmem:[#allocation3 + $0x1c] sm:$0xf]
      %v6131 = vld [vmem:[#allocation3 + $0x24] sm:$0xf]
      %v6132 = vld [vmem:[#allocation3 + $0x28] sm:$0xf]
      %v6133 = vld [vmem:[#allocation3 + $0x30] sm:$0xf]
      %v6134 = vld [vmem:[#allocation3 + $0x34] sm:$0xf]
      %v6135 = vld [vmem:[#allocation3 + $0x3c] sm:$0xf]
      %v6136 = vld [vmem:[#allocation3 + $0x40] sm:$0xf]
      %v6137 = vld [vmem:[#allocation3 + $0x48] sm:$0xf]
      %v6138 = vld [vmem:[#allocation3 + $0x4c] sm:$0xf]
      %v6139 = vld [vmem:[#allocation3 + $0x54] sm:$0xf]
      %v6140 = vld [vmem:[#allocation3 + $0x58] sm:$0xf]
      %v6141 = vld [vmem:[#allocation3 + $0x60] sm:$0xf]
      %v6142 = vld [vmem:[#allocation3 + $0x64] sm:$0xf]
      %v6143 = vld [vmem:[#allocation3 + $0x6c] sm:$0xf]
      %v6144 = vld [vmem:[#allocation3 + $0x70] sm:$0xf]
      %v6145 = vld [vmem:[#allocation3 + $0x78] sm:$0xf]
      %v6146 = vld [vmem:[#allocation3 + $0x7c] sm:$0xf]
      %v6147 = vld [vmem:[#allocation3 + $0x84] sm:$0xf]
      %v6148 = vld [vmem:[#allocation3 + $0x88] sm:$0xf]
      %v6149 = vld [vmem:[#allocation3 + $0x90] sm:$0xf]
      %v6150 = vld [vmem:[#allocation3 + $0x94] sm:$0xf]
      %v6151 = vld [vmem:[#allocation3 + $0x9c] sm:$0xf]
      %v6152 = vld [vmem:[#allocation3 + $0xa0] sm:$0xf]
      %v6153 = vld [vmem:[#allocation3 + $0xa8] sm:$0xf]
      %v6154 = vld [vmem:[#allocation3 + $0xac] sm:$0xf]
      %v6155 = vld [vmem:[#allocation3 + $0xb4] sm:$0xf]
      %v6156 = vld [vmem:[#allocation3 + $0xb8] sm:$0xf]
      %v6157 = vld [vmem:[#allocation3 + $0x8] sm:$0x1]
      %v6158 = vld [vmem:[#allocation3 + $0x14] sm:$0x1]
      %v6159 = vld [vmem:[#allocation3 + $0x20] sm:$0x1]
      %v6160 = vld [vmem:[#allocation3 + $0x2c] sm:$0x1]
      %v6161 = vld [vmem:[#allocation3 + $0x38] sm:$0x1]
      %v6162 = vld [vmem:[#allocation3 + $0x44] sm:$0x1]
      %v6163 = vld [vmem:[#allocation3 + $0x50] sm:$0x1]
      %v6164 = vld [vmem:[#allocation3 + $0x5c] sm:$0x1]
      %v6165 = vld [vmem:[#allocation3 + $0x68] sm:$0x1]
      %v6166 = vld [vmem:[#allocation3 + $0x74] sm:$0x1]
      %v6167 = vld [vmem:[#allocation3 + $0x80] sm:$0x1]
      %v6168 = vld [vmem:[#allocation3 + $0x8c] sm:$0x1]
      %v6169 = vld [vmem:[#allocation3 + $0x98] sm:$0x1]
      %v6170 = vld [vmem:[#allocation3 + $0xa4] sm:$0x1]
      %v6171 = vld [vmem:[#allocation3 + $0xb0] sm:$0x1]
      %v6172 = vld [vmem:[#allocation3 + $0xbc] sm:$0x1]
      %v6173 = vld [vmem:[#allocation3] sm:$0xe]
      %v6174 = vld [vmem:[#allocation3 + $0xc] sm:$0xe]
      %v6175 = vld [vmem:[#allocation3 + $0x18] sm:$0xe]
      %v6176 = vld [vmem:[#allocation3 + $0x24] sm:$0xe]
      %v6177 = vld [vmem:[#allocation3 + $0x30] sm:$0xe]
      %v6178 = vld [vmem:[#allocation3 + $0x3c] sm:$0xe]
      %v6179 = vld [vmem:[#allocation3 + $0x48] sm:$0xe]
      %v6180 = vld [vmem:[#allocation3 + $0x54] sm:$0xe]
      %v6181 = vld [vmem:[#allocation3 + $0x60] sm:$0xe]
      %v6182 = vld [vmem:[#allocation3 + $0x6c] sm:$0xe]
      %v6183 = vld [vmem:[#allocation3 + $0x78] sm:$0xe]
      %v6184 = vld [vmem:[#allocation3 + $0x84] sm:$0xe]
      %v6185 = vld [vmem:[#allocation3 + $0x90] sm:$0xe]
      %v6186 = vld [vmem:[#allocation3 + $0x9c] sm:$0xe]
      %v6187 = vld [vmem:[#allocation3 + $0xa8] sm:$0xe]
      %v6188 = vld [vmem:[#allocation3 + $0xb4] sm:$0xe]
      %v6221 = vunpack.c.l.b16 %v6125
      %v6222 = vunpack.c.l.b16 %v6126
      %v6223 = vunpack.c.l.b16 %v6127
      %v6224 = vunpack.c.l.b16 %v6128
      %v6225 = vunpack.c.l.b16 %v6129
      %v6226 = vunpack.c.l.b16 %v6130
      %v6227 = vunpack.c.l.b16 %v6131
      %v6228 = vunpack.c.l.b16 %v6132
      %v6229 = vunpack.c.l.b16 %v6133
      %v6230 = vunpack.c.l.b16 %v6134
      %v6231 = vunpack.c.l.b16 %v6135
      %v6232 = vunpack.c.l.b16 %v6136
      %v6233 = vunpack.c.l.b16 %v6137
      %v6234 = vunpack.c.l.b16 %v6138
      %v6235 = vunpack.c.l.b16 %v6139
      %v6236 = vunpack.c.l.b16 %v6140
      %v6237 = vunpack.c.l.b16 %v6141
      %v6238 = vunpack.c.l.b16 %v6142
      %v6239 = vunpack.c.l.b16 %v6143
      %v6240 = vunpack.c.l.b16 %v6144
      %v6241 = vunpack.c.l.b16 %v6145
      %v6242 = vunpack.c.l.b16 %v6146
      %v6243 = vunpack.c.l.b16 %v6147
      %v6244 = vunpack.c.l.b16 %v6148
      %v6245 = vunpack.c.l.b16 %v6149
      %v6246 = vunpack.c.l.b16 %v6150
      %v6247 = vunpack.c.l.b16 %v6151
      %v6248 = vunpack.c.l.b16 %v6152
      %v6249 = vunpack.c.l.b16 %v6153
      %v6250 = vunpack.c.l.b16 %v6154
      %v6251 = vunpack.c.l.b16 %v6155
      %v6252 = vunpack.c.l.b16 %v6156
      %v6253 = vpack.c.b16 %v6222, %v6221
      %v6254 = vpack.c.b16 %v6224, %v6223
      %v6255 = vpack.c.b16 %v6226, %v6225
      %v6256 = vpack.c.b16 %v6228, %v6227
      %v6257 = vpack.c.b16 %v6230, %v6229
      %v6258 = vpack.c.b16 %v6232, %v6231
      %v6259 = vpack.c.b16 %v6234, %v6233
      %v6260 = vpack.c.b16 %v6236, %v6235
      %v6261 = vpack.c.b16 %v6238, %v6237
      %v6262 = vpack.c.b16 %v6240, %v6239
      %v6263 = vpack.c.b16 %v6242, %v6241
      %v6264 = vpack.c.b16 %v6244, %v6243
      %v6265 = vpack.c.b16 %v6246, %v6245
      %v6266 = vpack.c.b16 %v6248, %v6247
      %v6267 = vpack.c.b16 %v6250, %v6249
      %v6268 = vpack.c.b16 %v6252, %v6251
      %v6285 = vunpack.c.l.b16 %v6157
      %v6286 = vunpack.c.l.b16 %v6158
      %v6287 = vunpack.c.l.b16 %v6159
      %v6288 = vunpack.c.l.b16 %v6160
      %v6289 = vunpack.c.l.b16 %v6161
      %v6290 = vunpack.c.l.b16 %v6162
      %v6291 = vunpack.c.l.b16 %v6163
      %v6292 = vunpack.c.l.b16 %v6164
      %v6293 = vunpack.c.l.b16 %v6165
      %v6294 = vunpack.c.l.b16 %v6166
      %v6295 = vunpack.c.l.b16 %v6167
      %v6296 = vunpack.c.l.b16 %v6168
      %v6297 = vunpack.c.l.b16 %v6169
      %v6298 = vunpack.c.l.b16 %v6170
      %v6299 = vunpack.c.l.b16 %v6171
      %v6300 = vunpack.c.l.b16 %v6172
      %v6301 = vpack.c.b16 %v6285, %v6285
      %v6302 = vpack.c.b16 %v6286, %v6286
      %v6303 = vpack.c.b16 %v6287, %v6287
      %v6304 = vpack.c.b16 %v6288, %v6288
      %v6305 = vpack.c.b16 %v6289, %v6289
      %v6306 = vpack.c.b16 %v6290, %v6290
      %v6307 = vpack.c.b16 %v6291, %v6291
      %v6308 = vpack.c.b16 %v6292, %v6292
      %v6309 = vpack.c.b16 %v6293, %v6293
      %v6310 = vpack.c.b16 %v6294, %v6294
      %v6311 = vpack.c.b16 %v6295, %v6295
      %v6312 = vpack.c.b16 %v6296, %v6296
      %v6313 = vpack.c.b16 %v6297, %v6297
      %v6314 = vpack.c.b16 %v6298, %v6298
      %v6315 = vpack.c.b16 %v6299, %v6299
      %v6316 = vpack.c.b16 %v6300, %v6300
      %v6318 = vshrl.u32 %v6253, 16
      %v6320 = vshll.u32 %v6253, 16
      %v6322 = vrot.slane %v6320, 1
      %v6323 = vor.u32 %v6318, %v6322
      %v6325 = vshll.u32 %v6301, 16
      %v6327 = vrot.slane %v6325, 1
      %v6328 = vsel %vm2943, %v6323, %v6327
      %v6330 = vshrl.u32 %v6254, 16
      %v6332 = vshll.u32 %v6254, 16
      %v6334 = vrot.slane %v6332, 1
      %v6335 = vor.u32 %v6330, %v6334
      %v6337 = vshll.u32 %v6302, 16
      %v6339 = vrot.slane %v6337, 1
      %v6340 = vsel %vm2943, %v6335, %v6339
      %v6342 = vshrl.u32 %v6255, 16
      %v6344 = vshll.u32 %v6255, 16
      %v6346 = vrot.slane %v6344, 1
      %v6347 = vor.u32 %v6342, %v6346
      %v6349 = vshll.u32 %v6303, 16
      %v6351 = vrot.slane %v6349, 1
      %v6352 = vsel %vm2943, %v6347, %v6351
      %v6354 = vshrl.u32 %v6256, 16
      %v6356 = vshll.u32 %v6256, 16
      %v6358 = vrot.slane %v6356, 1
      %v6359 = vor.u32 %v6354, %v6358
      %v6361 = vshll.u32 %v6304, 16
      %v6363 = vrot.slane %v6361, 1
      %v6364 = vsel %vm2943, %v6359, %v6363
      %v6366 = vshrl.u32 %v6257, 16
      %v6368 = vshll.u32 %v6257, 16
      %v6370 = vrot.slane %v6368, 1
      %v6371 = vor.u32 %v6366, %v6370
      %v6373 = vshll.u32 %v6305, 16
      %v6375 = vrot.slane %v6373, 1
      %v6376 = vsel %vm2943, %v6371, %v6375
      %v6378 = vshrl.u32 %v6258, 16
      %v6380 = vshll.u32 %v6258, 16
      %v6382 = vrot.slane %v6380, 1
      %v6383 = vor.u32 %v6378, %v6382
      %v6385 = vshll.u32 %v6306, 16
      %v6387 = vrot.slane %v6385, 1
      %v6388 = vsel %vm2943, %v6383, %v6387
      %v6390 = vshrl.u32 %v6259, 16
      %v6392 = vshll.u32 %v6259, 16
      %v6394 = vrot.slane %v6392, 1
      %v6395 = vor.u32 %v6390, %v6394
      %v6397 = vshll.u32 %v6307, 16
      %v6399 = vrot.slane %v6397, 1
      %v6400 = vsel %vm2943, %v6395, %v6399
      %v6402 = vshrl.u32 %v6260, 16
      %v6404 = vshll.u32 %v6260, 16
      %v6406 = vrot.slane %v6404, 1
      %v6407 = vor.u32 %v6402, %v6406
      %v6409 = vshll.u32 %v6308, 16
      %v6411 = vrot.slane %v6409, 1
      %v6412 = vsel %vm2943, %v6407, %v6411
      %v6414 = vshrl.u32 %v6261, 16
      %v6416 = vshll.u32 %v6261, 16
      %v6418 = vrot.slane %v6416, 1
      %v6419 = vor.u32 %v6414, %v6418
      %v6421 = vshll.u32 %v6309, 16
      %v6423 = vrot.slane %v6421, 1
      %v6424 = vsel %vm2943, %v6419, %v6423
      %v6426 = vshrl.u32 %v6262, 16
      %v6428 = vshll.u32 %v6262, 16
      %v6430 = vrot.slane %v6428, 1
      %v6431 = vor.u32 %v6426, %v6430
      %v6433 = vshll.u32 %v6310, 16
      %v6435 = vrot.slane %v6433, 1
      %v6436 = vsel %vm2943, %v6431, %v6435
      %v6438 = vshrl.u32 %v6263, 16
      %v6440 = vshll.u32 %v6263, 16
      %v6442 = vrot.slane %v6440, 1
      %v6443 = vor.u32 %v6438, %v6442
      %v6445 = vshll.u32 %v6311, 16
      %v6447 = vrot.slane %v6445, 1
      %v6448 = vsel %vm2943, %v6443, %v6447
      %v6450 = vshrl.u32 %v6264, 16
      %v6452 = vshll.u32 %v6264, 16
      %v6454 = vrot.slane %v6452, 1
      %v6455 = vor.u32 %v6450, %v6454
      %v6457 = vshll.u32 %v6312, 16
      %v6459 = vrot.slane %v6457, 1
      %v6460 = vsel %vm2943, %v6455, %v6459
      %v6462 = vshrl.u32 %v6265, 16
      %v6464 = vshll.u32 %v6265, 16
      %v6466 = vrot.slane %v6464, 1
      %v6467 = vor.u32 %v6462, %v6466
      %v6469 = vshll.u32 %v6313, 16
      %v6471 = vrot.slane %v6469, 1
      %v6472 = vsel %vm2943, %v6467, %v6471
      %v6474 = vshrl.u32 %v6266, 16
      %v6476 = vshll.u32 %v6266, 16
      %v6478 = vrot.slane %v6476, 1
      %v6479 = vor.u32 %v6474, %v6478
      %v6481 = vshll.u32 %v6314, 16
      %v6483 = vrot.slane %v6481, 1
      %v6484 = vsel %vm2943, %v6479, %v6483
      %v6486 = vshrl.u32 %v6267, 16
      %v6488 = vshll.u32 %v6267, 16
      %v6490 = vrot.slane %v6488, 1
      %v6491 = vor.u32 %v6486, %v6490
      %v6493 = vshll.u32 %v6315, 16
      %v6495 = vrot.slane %v6493, 1
      %v6496 = vsel %vm2943, %v6491, %v6495
      %v6498 = vshrl.u32 %v6268, 16
      %v6500 = vshll.u32 %v6268, 16
      %v6502 = vrot.slane %v6500, 1
      %v6503 = vor.u32 %v6498, %v6502
      %v6505 = vshll.u32 %v6316, 16
      %v6507 = vrot.slane %v6505, 1
      %v6508 = vsel %vm2943, %v6503, %v6507
      %6509 = vrot.lane.b32.xlu0 %v6328, 32
      %v6510 = vpop.permute.xlu0 %6509
      %6511 = vrot.lane.b32.xlu0 %v6340, 32
      %v6512 = vpop.permute.xlu0 %6511
      %6513 = vrot.lane.b32.xlu0 %v6352, 32
      %v6514 = vpop.permute.xlu0 %6513
      %6515 = vrot.lane.b32.xlu0 %v6364, 32
      %v6516 = vpop.permute.xlu0 %6515
      %6517 = vrot.lane.b32.xlu0 %v6376, 32
      %v6518 = vpop.permute.xlu0 %6517
      %6519 = vrot.lane.b32.xlu0 %v6388, 32
      %v6520 = vpop.permute.xlu0 %6519
      %6521 = vrot.lane.b32.xlu0 %v6400, 32
      %v6522 = vpop.permute.xlu0 %6521
      %6523 = vrot.lane.b32.xlu0 %v6412, 32
      %v6524 = vpop.permute.xlu0 %6523
      %6525 = vrot.lane.b32.xlu0 %v6424, 32
      %v6526 = vpop.permute.xlu0 %6525
      %6527 = vrot.lane.b32.xlu0 %v6436, 32
      %v6528 = vpop.permute.xlu0 %6527
      %6529 = vrot.lane.b32.xlu0 %v6448, 32
      %v6530 = vpop.permute.xlu0 %6529
      %6531 = vrot.lane.b32.xlu0 %v6460, 32
      %v6532 = vpop.permute.xlu0 %6531
      %6533 = vrot.lane.b32.xlu0 %v6472, 32
      %v6534 = vpop.permute.xlu0 %6533
      %6535 = vrot.lane.b32.xlu0 %v6484, 32
      %v6536 = vpop.permute.xlu0 %6535
      %6537 = vrot.lane.b32.xlu0 %v6496, 32
      %v6538 = vpop.permute.xlu0 %6537
      %6539 = vrot.lane.b32.xlu0 %v6508, 32
      %v6540 = vpop.permute.xlu0 %6539
      %v6557 = vunpack.c.l.b16 %v6173
      %v6558 = vunpack.c.l.b16 %v6174
      %v6559 = vunpack.c.l.b16 %v6175
      %v6560 = vunpack.c.l.b16 %v6176
      %v6561 = vunpack.c.l.b16 %v6177
      %v6562 = vunpack.c.l.b16 %v6178
      %v6563 = vunpack.c.l.b16 %v6179
      %v6564 = vunpack.c.l.b16 %v6180
      %v6565 = vunpack.c.l.b16 %v6181
      %v6566 = vunpack.c.l.b16 %v6182
      %v6567 = vunpack.c.l.b16 %v6183
      %v6568 = vunpack.c.l.b16 %v6184
      %v6569 = vunpack.c.l.b16 %v6185
      %v6570 = vunpack.c.l.b16 %v6186
      %v6571 = vunpack.c.l.b16 %v6187
      %v6572 = vunpack.c.l.b16 %v6188
      %v6573 = vpack.c.b16 %v6222, %v6557
      %v6574 = vpack.c.b16 %v6224, %v6558
      %v6575 = vpack.c.b16 %v6226, %v6559
      %v6576 = vpack.c.b16 %v6228, %v6560
      %v6577 = vpack.c.b16 %v6230, %v6561
      %v6578 = vpack.c.b16 %v6232, %v6562
      %v6579 = vpack.c.b16 %v6234, %v6563
      %v6580 = vpack.c.b16 %v6236, %v6564
      %v6581 = vpack.c.b16 %v6238, %v6565
      %v6582 = vpack.c.b16 %v6240, %v6566
      %v6583 = vpack.c.b16 %v6242, %v6567
      %v6584 = vpack.c.b16 %v6244, %v6568
      %v6585 = vpack.c.b16 %v6246, %v6569
      %v6586 = vpack.c.b16 %v6248, %v6570
      %v6587 = vpack.c.b16 %v6250, %v6571
      %v6588 = vpack.c.b16 %v6252, %v6572
      %v6589 = vrot.slane %v6573, 1
      %v6590 = vrot.slane %v6301, 1
      %v6591 = vsel %vm3216, %v6589, %v6590
      %v6592 = vrot.slane %v6574, 1
      %v6593 = vrot.slane %v6302, 1
      %v6594 = vsel %vm3216, %v6592, %v6593
      %v6595 = vrot.slane %v6575, 1
      %v6596 = vrot.slane %v6303, 1
      %v6597 = vsel %vm3216, %v6595, %v6596
      %v6598 = vrot.slane %v6576, 1
      %v6599 = vrot.slane %v6304, 1
      %v6600 = vsel %vm3216, %v6598, %v6599
      %v6601 = vrot.slane %v6577, 1
      %v6602 = vrot.slane %v6305, 1
      %v6603 = vsel %vm3216, %v6601, %v6602
      %v6604 = vrot.slane %v6578, 1
      %v6605 = vrot.slane %v6306, 1
      %v6606 = vsel %vm3216, %v6604, %v6605
      %v6607 = vrot.slane %v6579, 1
      %v6608 = vrot.slane %v6307, 1
      %v6609 = vsel %vm3216, %v6607, %v6608
      %v6610 = vrot.slane %v6580, 1
      %v6611 = vrot.slane %v6308, 1
      %v6612 = vsel %vm3216, %v6610, %v6611
      %v6613 = vrot.slane %v6581, 1
      %v6614 = vrot.slane %v6309, 1
      %v6615 = vsel %vm3216, %v6613, %v6614
      %v6616 = vrot.slane %v6582, 1
      %v6617 = vrot.slane %v6310, 1
      %v6618 = vsel %vm3216, %v6616, %v6617
      %v6619 = vrot.slane %v6583, 1
      %v6620 = vrot.slane %v6311, 1
      %v6621 = vsel %vm3216, %v6619, %v6620
      %v6622 = vrot.slane %v6584, 1
      %v6623 = vrot.slane %v6312, 1
      %v6624 = vsel %vm3216, %v6622, %v6623
      %v6625 = vrot.slane %v6585, 1
      %v6626 = vrot.slane %v6313, 1
      %v6627 = vsel %vm3216, %v6625, %v6626
      %v6628 = vrot.slane %v6586, 1
      %v6629 = vrot.slane %v6314, 1
      %v6630 = vsel %vm3216, %v6628, %v6629
      %v6631 = vrot.slane %v6587, 1
      %v6632 = vrot.slane %v6315, 1
      %v6633 = vsel %vm3216, %v6631, %v6632
      %v6634 = vrot.slane %v6588, 1
      %v6635 = vrot.slane %v6316, 1
      %v6636 = vsel %vm3216, %v6634, %v6635
      %6637 = vrot.lane.b32.xlu0 %v6591, 64
      %v6638 = vpop.permute.xlu0 %6637
      %6639 = vrot.lane.b32.xlu0 %v6594, 64
      %v6640 = vpop.permute.xlu0 %6639
      %6641 = vrot.lane.b32.xlu0 %v6597, 64
      %v6642 = vpop.permute.xlu0 %6641
      %6643 = vrot.lane.b32.xlu0 %v6600, 64
      %v6644 = vpop.permute.xlu0 %6643
      %6645 = vrot.lane.b32.xlu0 %v6603, 64
      %v6646 = vpop.permute.xlu0 %6645
      %6647 = vrot.lane.b32.xlu0 %v6606, 64
      %v6648 = vpop.permute.xlu0 %6647
      %6649 = vrot.lane.b32.xlu0 %v6609, 64
      %v6650 = vpop.permute.xlu0 %6649
      %6651 = vrot.lane.b32.xlu0 %v6612, 64
      %v6652 = vpop.permute.xlu0 %6651
      %6653 = vrot.lane.b32.xlu0 %v6615, 64
      %v6654 = vpop.permute.xlu0 %6653
      %6655 = vrot.lane.b32.xlu0 %v6618, 64
      %v6656 = vpop.permute.xlu0 %6655
      %6657 = vrot.lane.b32.xlu0 %v6621, 64
      %v6658 = vpop.permute.xlu0 %6657
      %6659 = vrot.lane.b32.xlu0 %v6624, 64
      %v6660 = vpop.permute.xlu0 %6659
      %6661 = vrot.lane.b32.xlu0 %v6627, 64
      %v6662 = vpop.permute.xlu0 %6661
      %6663 = vrot.lane.b32.xlu0 %v6630, 64
      %v6664 = vpop.permute.xlu0 %6663
      %6665 = vrot.lane.b32.xlu0 %v6633, 64
      %v6666 = vpop.permute.xlu0 %6665
      %6667 = vrot.lane.b32.xlu0 %v6636, 64
      %v6668 = vpop.permute.xlu0 %6667
      %v6670 = vsel %vm2185, %v6253, %v6510
      %v6672 = vsel %vm2185, %v6254, %v6512
      %v6674 = vsel %vm2185, %v6255, %v6514
      %v6676 = vsel %vm2185, %v6256, %v6516
      %v6678 = vsel %vm2185, %v6257, %v6518
      %v6680 = vsel %vm2185, %v6258, %v6520
      %v6682 = vsel %vm2185, %v6259, %v6522
      %v6684 = vsel %vm2185, %v6260, %v6524
      %v6686 = vsel %vm2185, %v6261, %v6526
      %v6688 = vsel %vm2185, %v6262, %v6528
      %v6690 = vsel %vm2185, %v6263, %v6530
      %v6692 = vsel %vm2185, %v6264, %v6532
      %v6694 = vsel %vm2185, %v6265, %v6534
      %v6696 = vsel %vm2185, %v6266, %v6536
      %v6698 = vsel %vm2185, %v6267, %v6538
      %v6700 = vsel %vm2185, %v6268, %v6540
      %v6702 = vsel %vm499, %v6670, %v6638
      %v6704 = vsel %vm499, %v6672, %v6640
      %v6706 = vsel %vm499, %v6674, %v6642
      %v6708 = vsel %vm499, %v6676, %v6644
      %v6710 = vsel %vm499, %v6678, %v6646
      %v6712 = vsel %vm499, %v6680, %v6648
      %v6714 = vsel %vm499, %v6682, %v6650
      %v6716 = vsel %vm499, %v6684, %v6652
      %v6718 = vsel %vm499, %v6686, %v6654
      %v6720 = vsel %vm499, %v6688, %v6656
      %v6722 = vsel %vm499, %v6690, %v6658
      %v6724 = vsel %vm499, %v6692, %v6660
      %v6726 = vsel %vm499, %v6694, %v6662
      %v6728 = vsel %vm499, %v6696, %v6664
      %v6730 = vsel %vm499, %v6698, %v6666
      %v6732 = vsel %vm499, %v6700, %v6668
      %v6733 = vld [vmem:[%s7] sm:$0xf]
      %v6734 = vld [vmem:[%s7 + $0x4] sm:$0xf]
      %v6735 = vld [vmem:[%s7 + $0x8] sm:$0xf]
      %v6736 = vld [vmem:[%s7 + $0xc] sm:$0xf]
      %v6737 = vld [vmem:[%s7 + $0x10] sm:$0xf]
      %v6738 = vld [vmem:[%s7 + $0x14] sm:$0xf]
      %v6739 = vld [vmem:[%s7 + $0x18] sm:$0xf]
      %v6740 = vld [vmem:[%s7 + $0x1c] sm:$0xf]
      %v6741 = vld [vmem:[%s7 + $0x20] sm:$0xf]
      %v6742 = vld [vmem:[%s7 + $0x24] sm:$0xf]
      %v6743 = vld [vmem:[%s7 + $0x28] sm:$0xf]
      %v6744 = vld [vmem:[%s7 + $0x2c] sm:$0xf]
      %v6745 = vld [vmem:[%s6010] sm:$0xf]
      %v6746 = vld [vmem:[%s6010 + $0x4] sm:$0xf]
      %v6747 = vld [vmem:[%s6010 + $0xc] sm:$0xf]
      %v6748 = vld [vmem:[%s6010 + $0x10] sm:$0xf]
      %v6749 = vld [vmem:[%s6010 + $0x18] sm:$0xf]
      %v6750 = vld [vmem:[%s6010 + $0x1c] sm:$0xf]
      %v6751 = vld [vmem:[%s6010 + $0x24] sm:$0xf]
      %v6752 = vld [vmem:[%s6010 + $0x28] sm:$0xf]
      %v6753 = vld [vmem:[%s6010 + $0x30] sm:$0xf]
      %v6754 = vld [vmem:[%s6010 + $0x34] sm:$0xf]
      %v6755 = vld [vmem:[%s6010 + $0x3c] sm:$0xf]
      %v6756 = vld [vmem:[%s6010 + $0x40] sm:$0xf]
      %v6757 = vld [vmem:[%s6010 + $0x48] sm:$0xf]
      %v6758 = vld [vmem:[%s6010 + $0x4c] sm:$0xf]
      %v6759 = vld [vmem:[%s6010 + $0x54] sm:$0xf]
      %v6760 = vld [vmem:[%s6010 + $0x58] sm:$0xf]
      %v6761 = vld [vmem:[%s6010 + $0x60] sm:$0xf]
      %v6762 = vld [vmem:[%s6010 + $0x64] sm:$0xf]
      %v6763 = vld [vmem:[%s6010 + $0x6c] sm:$0xf]
      %v6764 = vld [vmem:[%s6010 + $0x70] sm:$0xf]
      %v6765 = vld [vmem:[%s6010 + $0x78] sm:$0xf]
      %v6766 = vld [vmem:[%s6010 + $0x7c] sm:$0xf]
      %v6767 = vld [vmem:[%s6010 + $0x84] sm:$0xf]
      %v6768 = vld [vmem:[%s6010 + $0x88] sm:$0xf]
      %v6769 = vld [vmem:[%s6010 + $0x90] sm:$0xf]
      %v6770 = vld [vmem:[%s6010 + $0x94] sm:$0xf]
      %v6771 = vld [vmem:[%s6010 + $0x9c] sm:$0xf]
      %v6772 = vld [vmem:[%s6010 + $0xa0] sm:$0xf]
      %v6773 = vld [vmem:[%s6010 + $0xa8] sm:$0xf]
      %v6774 = vld [vmem:[%s6010 + $0xac] sm:$0xf]
      %v6775 = vld [vmem:[%s6010 + $0xb4] sm:$0xf]
      %v6776 = vld [vmem:[%s6010 + $0xb8] sm:$0xf]
      %v6777 = vld [vmem:[%s6010 + $0x8] sm:$0x1]
      %v6778 = vld [vmem:[%s6010 + $0x14] sm:$0x1]
      %v6779 = vld [vmem:[%s6010 + $0x20] sm:$0x1]
      %v6780 = vld [vmem:[%s6010 + $0x2c] sm:$0x1]
      %v6781 = vld [vmem:[%s6010 + $0x38] sm:$0x1]
      %v6782 = vld [vmem:[%s6010 + $0x44] sm:$0x1]
      %v6783 = vld [vmem:[%s6010 + $0x50] sm:$0x1]
      %v6784 = vld [vmem:[%s6010 + $0x5c] sm:$0x1]
      %v6785 = vld [vmem:[%s6010 + $0x68] sm:$0x1]
      %v6786 = vld [vmem:[%s6010 + $0x74] sm:$0x1]
      %v6787 = vld [vmem:[%s6010 + $0x80] sm:$0x1]
      %v6788 = vld [vmem:[%s6010 + $0x8c] sm:$0x1]
      %v6789 = vld [vmem:[%s6010 + $0x98] sm:$0x1]
      %v6790 = vld [vmem:[%s6010 + $0xa4] sm:$0x1]
      %v6791 = vld [vmem:[%s6010 + $0xb0] sm:$0x1]
      %v6792 = vld [vmem:[%s6010 + $0xbc] sm:$0x1]
      %v6793 = vld [vmem:[%s6010] sm:$0xe]
      %v6794 = vld [vmem:[%s6010 + $0xc] sm:$0xe]
      %v6795 = vld [vmem:[%s6010 + $0x18] sm:$0xe]
      %v6796 = vld [vmem:[%s6010 + $0x24] sm:$0xe]
      %v6797 = vld [vmem:[%s6010 + $0x30] sm:$0xe]
      %v6798 = vld [vmem:[%s6010 + $0x3c] sm:$0xe]
      %v6799 = vld [vmem:[%s6010 + $0x48] sm:$0xe]
      %v6800 = vld [vmem:[%s6010 + $0x54] sm:$0xe]
      %v6801 = vld [vmem:[%s6010 + $0x60] sm:$0xe]
      %v6802 = vld [vmem:[%s6010 + $0x6c] sm:$0xe]
      %v6803 = vld [vmem:[%s6010 + $0x78] sm:$0xe]
      %v6804 = vld [vmem:[%s6010 + $0x84] sm:$0xe]
      %v6805 = vld [vmem:[%s6010 + $0x90] sm:$0xe]
      %v6806 = vld [vmem:[%s6010 + $0x9c] sm:$0xe]
      %v6807 = vld [vmem:[%s6010 + $0xa8] sm:$0xe]
      %v6808 = vld [vmem:[%s6010 + $0xb4] sm:$0xe]
      %v6841 = vunpack.c.l.b16 %v6745
      %v6842 = vunpack.c.l.b16 %v6746
      %v6843 = vunpack.c.l.b16 %v6747
      %v6844 = vunpack.c.l.b16 %v6748
      %v6845 = vunpack.c.l.b16 %v6749
      %v6846 = vunpack.c.l.b16 %v6750
      %v6847 = vunpack.c.l.b16 %v6751
      %v6848 = vunpack.c.l.b16 %v6752
      %v6849 = vunpack.c.l.b16 %v6753
      %v6850 = vunpack.c.l.b16 %v6754
      %v6851 = vunpack.c.l.b16 %v6755
      %v6852 = vunpack.c.l.b16 %v6756
      %v6853 = vunpack.c.l.b16 %v6757
      %v6854 = vunpack.c.l.b16 %v6758
      %v6855 = vunpack.c.l.b16 %v6759
      %v6856 = vunpack.c.l.b16 %v6760
      %v6857 = vunpack.c.l.b16 %v6761
      %v6858 = vunpack.c.l.b16 %v6762
      %v6859 = vunpack.c.l.b16 %v6763
      %v6860 = vunpack.c.l.b16 %v6764
      %v6861 = vunpack.c.l.b16 %v6765
      %v6862 = vunpack.c.l.b16 %v6766
      %v6863 = vunpack.c.l.b16 %v6767
      %v6864 = vunpack.c.l.b16 %v6768
      %v6865 = vunpack.c.l.b16 %v6769
      %v6866 = vunpack.c.l.b16 %v6770
      %v6867 = vunpack.c.l.b16 %v6771
      %v6868 = vunpack.c.l.b16 %v6772
      %v6869 = vunpack.c.l.b16 %v6773
      %v6870 = vunpack.c.l.b16 %v6774
      %v6871 = vunpack.c.l.b16 %v6775
      %v6872 = vunpack.c.l.b16 %v6776
      %v6873 = vpack.c.b16 %v6842, %v6841
      %v6874 = vpack.c.b16 %v6844, %v6843
      %v6875 = vpack.c.b16 %v6846, %v6845
      %v6876 = vpack.c.b16 %v6848, %v6847
      %v6877 = vpack.c.b16 %v6850, %v6849
      %v6878 = vpack.c.b16 %v6852, %v6851
      %v6879 = vpack.c.b16 %v6854, %v6853
      %v6880 = vpack.c.b16 %v6856, %v6855
      %v6881 = vpack.c.b16 %v6858, %v6857
      %v6882 = vpack.c.b16 %v6860, %v6859
      %v6883 = vpack.c.b16 %v6862, %v6861
      %v6884 = vpack.c.b16 %v6864, %v6863
      %v6885 = vpack.c.b16 %v6866, %v6865
      %v6886 = vpack.c.b16 %v6868, %v6867
      %v6887 = vpack.c.b16 %v6870, %v6869
      %v6888 = vpack.c.b16 %v6872, %v6871
      %v6905 = vunpack.c.l.b16 %v6777
      %v6906 = vunpack.c.l.b16 %v6778
      %v6907 = vunpack.c.l.b16 %v6779
      %v6908 = vunpack.c.l.b16 %v6780
      %v6909 = vunpack.c.l.b16 %v6781
      %v6910 = vunpack.c.l.b16 %v6782
      %v6911 = vunpack.c.l.b16 %v6783
      %v6912 = vunpack.c.l.b16 %v6784
      %v6913 = vunpack.c.l.b16 %v6785
      %v6914 = vunpack.c.l.b16 %v6786
      %v6915 = vunpack.c.l.b16 %v6787
      %v6916 = vunpack.c.l.b16 %v6788
      %v6917 = vunpack.c.l.b16 %v6789
      %v6918 = vunpack.c.l.b16 %v6790
      %v6919 = vunpack.c.l.b16 %v6791
      %v6920 = vunpack.c.l.b16 %v6792
      %v6921 = vpack.c.b16 %v6905, %v6905
      %v6922 = vpack.c.b16 %v6906, %v6906
      %v6923 = vpack.c.b16 %v6907, %v6907
      %v6924 = vpack.c.b16 %v6908, %v6908
      %v6925 = vpack.c.b16 %v6909, %v6909
      %v6926 = vpack.c.b16 %v6910, %v6910
      %v6927 = vpack.c.b16 %v6911, %v6911
      %v6928 = vpack.c.b16 %v6912, %v6912
      %v6929 = vpack.c.b16 %v6913, %v6913
      %v6930 = vpack.c.b16 %v6914, %v6914
      %v6931 = vpack.c.b16 %v6915, %v6915
      %v6932 = vpack.c.b16 %v6916, %v6916
      %v6933 = vpack.c.b16 %v6917, %v6917
      %v6934 = vpack.c.b16 %v6918, %v6918
      %v6935 = vpack.c.b16 %v6919, %v6919
      %v6936 = vpack.c.b16 %v6920, %v6920
      %v6938 = vshrl.u32 %v6873, 16
      %v6940 = vshll.u32 %v6873, 16
      %v6942 = vrot.slane %v6940, 1
      %v6943 = vor.u32 %v6938, %v6942
      %v6945 = vshll.u32 %v6921, 16
      %v6947 = vrot.slane %v6945, 1
      %v6948 = vsel %vm2943, %v6943, %v6947
      %v6950 = vshrl.u32 %v6874, 16
      %v6952 = vshll.u32 %v6874, 16
      %v6954 = vrot.slane %v6952, 1
      %v6955 = vor.u32 %v6950, %v6954
      %v6957 = vshll.u32 %v6922, 16
      %v6959 = vrot.slane %v6957, 1
      %v6960 = vsel %vm2943, %v6955, %v6959
      %v6962 = vshrl.u32 %v6875, 16
      %v6964 = vshll.u32 %v6875, 16
      %v6966 = vrot.slane %v6964, 1
      %v6967 = vor.u32 %v6962, %v6966
      %v6969 = vshll.u32 %v6923, 16
      %v6971 = vrot.slane %v6969, 1
      %v6972 = vsel %vm2943, %v6967, %v6971
      %v6974 = vshrl.u32 %v6876, 16
      %v6976 = vshll.u32 %v6876, 16
      %v6978 = vrot.slane %v6976, 1
      %v6979 = vor.u32 %v6974, %v6978
      %v6981 = vshll.u32 %v6924, 16
      %v6983 = vrot.slane %v6981, 1
      %v6984 = vsel %vm2943, %v6979, %v6983
      %v6986 = vshrl.u32 %v6877, 16
      %v6988 = vshll.u32 %v6877, 16
      %v6990 = vrot.slane %v6988, 1
      %v6991 = vor.u32 %v6986, %v6990
      %v6993 = vshll.u32 %v6925, 16
      %v6995 = vrot.slane %v6993, 1
      %v6996 = vsel %vm2943, %v6991, %v6995
      %v6998 = vshrl.u32 %v6878, 16
      %v7000 = vshll.u32 %v6878, 16
      %v7002 = vrot.slane %v7000, 1
      %v7003 = vor.u32 %v6998, %v7002
      %v7005 = vshll.u32 %v6926, 16
      %v7007 = vrot.slane %v7005, 1
      %v7008 = vsel %vm2943, %v7003, %v7007
      %v7010 = vshrl.u32 %v6879, 16
      %v7012 = vshll.u32 %v6879, 16
      %v7014 = vrot.slane %v7012, 1
      %v7015 = vor.u32 %v7010, %v7014
      %v7017 = vshll.u32 %v6927, 16
      %v7019 = vrot.slane %v7017, 1
      %v7020 = vsel %vm2943, %v7015, %v7019
      %v7022 = vshrl.u32 %v6880, 16
      %v7024 = vshll.u32 %v6880, 16
      %v7026 = vrot.slane %v7024, 1
      %v7027 = vor.u32 %v7022, %v7026
      %v7029 = vshll.u32 %v6928, 16
      %v7031 = vrot.slane %v7029, 1
      %v7032 = vsel %vm2943, %v7027, %v7031
      %v7034 = vshrl.u32 %v6881, 16
      %v7036 = vshll.u32 %v6881, 16
      %v7038 = vrot.slane %v7036, 1
      %v7039 = vor.u32 %v7034, %v7038
      %v7041 = vshll.u32 %v6929, 16
      %v7043 = vrot.slane %v7041, 1
      %v7044 = vsel %vm2943, %v7039, %v7043
      %v7046 = vshrl.u32 %v6882, 16
      %v7048 = vshll.u32 %v6882, 16
      %v7050 = vrot.slane %v7048, 1
      %v7051 = vor.u32 %v7046, %v7050
      %v7053 = vshll.u32 %v6930, 16
      %v7055 = vrot.slane %v7053, 1
      %v7056 = vsel %vm2943, %v7051, %v7055
      %v7058 = vshrl.u32 %v6883, 16
      %v7060 = vshll.u32 %v6883, 16
      %v7062 = vrot.slane %v7060, 1
      %v7063 = vor.u32 %v7058, %v7062
      %v7065 = vshll.u32 %v6931, 16
      %v7067 = vrot.slane %v7065, 1
      %v7068 = vsel %vm2943, %v7063, %v7067
      %v7070 = vshrl.u32 %v6884, 16
      %v7072 = vshll.u32 %v6884, 16
      %v7074 = vrot.slane %v7072, 1
      %v7075 = vor.u32 %v7070, %v7074
      %v7077 = vshll.u32 %v6932, 16
      %v7079 = vrot.slane %v7077, 1
      %v7080 = vsel %vm2943, %v7075, %v7079
      %v7082 = vshrl.u32 %v6885, 16
      %v7084 = vshll.u32 %v6885, 16
      %v7086 = vrot.slane %v7084, 1
      %v7087 = vor.u32 %v7082, %v7086
      %v7089 = vshll.u32 %v6933, 16
      %v7091 = vrot.slane %v7089, 1
      %v7092 = vsel %vm2943, %v7087, %v7091
      %v7094 = vshrl.u32 %v6886, 16
      %v7096 = vshll.u32 %v6886, 16
      %v7098 = vrot.slane %v7096, 1
      %v7099 = vor.u32 %v7094, %v7098
      %v7101 = vshll.u32 %v6934, 16
      %v7103 = vrot.slane %v7101, 1
      %v7104 = vsel %vm2943, %v7099, %v7103
      %v7106 = vshrl.u32 %v6887, 16
      %v7108 = vshll.u32 %v6887, 16
      %v7110 = vrot.slane %v7108, 1
      %v7111 = vor.u32 %v7106, %v7110
      %v7113 = vshll.u32 %v6935, 16
      %v7115 = vrot.slane %v7113, 1
      %v7116 = vsel %vm2943, %v7111, %v7115
      %v7118 = vshrl.u32 %v6888, 16
      %v7120 = vshll.u32 %v6888, 16
      %v7122 = vrot.slane %v7120, 1
      %v7123 = vor.u32 %v7118, %v7122
      %v7125 = vshll.u32 %v6936, 16
      %v7127 = vrot.slane %v7125, 1
      %v7128 = vsel %vm2943, %v7123, %v7127
      %7129 = vrot.lane.b32.xlu0 %v6948, 32
      %v7130 = vpop.permute.xlu0 %7129
      %7131 = vrot.lane.b32.xlu0 %v6960, 32
      %v7132 = vpop.permute.xlu0 %7131
      %7133 = vrot.lane.b32.xlu0 %v6972, 32
      %v7134 = vpop.permute.xlu0 %7133
      %7135 = vrot.lane.b32.xlu0 %v6984, 32
      %v7136 = vpop.permute.xlu0 %7135
      %7137 = vrot.lane.b32.xlu0 %v6996, 32
      %v7138 = vpop.permute.xlu0 %7137
      %7139 = vrot.lane.b32.xlu0 %v7008, 32
      %v7140 = vpop.permute.xlu0 %7139
      %7141 = vrot.lane.b32.xlu0 %v7020, 32
      %v7142 = vpop.permute.xlu0 %7141
      %7143 = vrot.lane.b32.xlu0 %v7032, 32
      %v7144 = vpop.permute.xlu0 %7143
      %7145 = vrot.lane.b32.xlu0 %v7044, 32
      %v7146 = vpop.permute.xlu0 %7145
      %7147 = vrot.lane.b32.xlu0 %v7056, 32
      %v7148 = vpop.permute.xlu0 %7147
      %7149 = vrot.lane.b32.xlu0 %v7068, 32
      %v7150 = vpop.permute.xlu0 %7149
      %7151 = vrot.lane.b32.xlu0 %v7080, 32
      %v7152 = vpop.permute.xlu0 %7151
      %7153 = vrot.lane.b32.xlu0 %v7092, 32
      %v7154 = vpop.permute.xlu0 %7153
      %7155 = vrot.lane.b32.xlu0 %v7104, 32
      %v7156 = vpop.permute.xlu0 %7155
      %7157 = vrot.lane.b32.xlu0 %v7116, 32
      %v7158 = vpop.permute.xlu0 %7157
      %7159 = vrot.lane.b32.xlu0 %v7128, 32
      %v7160 = vpop.permute.xlu0 %7159
      %v7177 = vunpack.c.l.b16 %v6793
      %v7178 = vunpack.c.l.b16 %v6794
      %v7179 = vunpack.c.l.b16 %v6795
      %v7180 = vunpack.c.l.b16 %v6796
      %v7181 = vunpack.c.l.b16 %v6797
      %v7182 = vunpack.c.l.b16 %v6798
      %v7183 = vunpack.c.l.b16 %v6799
      %v7184 = vunpack.c.l.b16 %v6800
      %v7185 = vunpack.c.l.b16 %v6801
      %v7186 = vunpack.c.l.b16 %v6802
      %v7187 = vunpack.c.l.b16 %v6803
      %v7188 = vunpack.c.l.b16 %v6804
      %v7189 = vunpack.c.l.b16 %v6805
      %v7190 = vunpack.c.l.b16 %v6806
      %v7191 = vunpack.c.l.b16 %v6807
      %v7192 = vunpack.c.l.b16 %v6808
      %v7193 = vpack.c.b16 %v6842, %v7177
      %v7194 = vpack.c.b16 %v6844, %v7178
      %v7195 = vpack.c.b16 %v6846, %v7179
      %v7196 = vpack.c.b16 %v6848, %v7180
      %v7197 = vpack.c.b16 %v6850, %v7181
      %v7198 = vpack.c.b16 %v6852, %v7182
      %v7199 = vpack.c.b16 %v6854, %v7183
      %v7200 = vpack.c.b16 %v6856, %v7184
      %v7201 = vpack.c.b16 %v6858, %v7185
      %v7202 = vpack.c.b16 %v6860, %v7186
      %v7203 = vpack.c.b16 %v6862, %v7187
      %v7204 = vpack.c.b16 %v6864, %v7188
      %v7205 = vpack.c.b16 %v6866, %v7189
      %v7206 = vpack.c.b16 %v6868, %v7190
      %v7207 = vpack.c.b16 %v6870, %v7191
      %v7208 = vpack.c.b16 %v6872, %v7192
      %v7209 = vrot.slane %v7193, 1
      %v7210 = vrot.slane %v6921, 1
      %v7211 = vsel %vm3216, %v7209, %v7210
      %v7212 = vrot.slane %v7194, 1
      %v7213 = vrot.slane %v6922, 1
      %v7214 = vsel %vm3216, %v7212, %v7213
      %v7215 = vrot.slane %v7195, 1
      %v7216 = vrot.slane %v6923, 1
      %v7217 = vsel %vm3216, %v7215, %v7216
      %v7218 = vrot.slane %v7196, 1
      %v7219 = vrot.slane %v6924, 1
      %v7220 = vsel %vm3216, %v7218, %v7219
      %v7221 = vrot.slane %v7197, 1
      %v7222 = vrot.slane %v6925, 1
      %v7223 = vsel %vm3216, %v7221, %v7222
      %v7224 = vrot.slane %v7198, 1
      %v7225 = vrot.slane %v6926, 1
      %v7226 = vsel %vm3216, %v7224, %v7225
      %v7227 = vrot.slane %v7199, 1
      %v7228 = vrot.slane %v6927, 1
      %v7229 = vsel %vm3216, %v7227, %v7228
      %v7230 = vrot.slane %v7200, 1
      %v7231 = vrot.slane %v6928, 1
      %v7232 = vsel %vm3216, %v7230, %v7231
      %v7233 = vrot.slane %v7201, 1
      %v7234 = vrot.slane %v6929, 1
      %v7235 = vsel %vm3216, %v7233, %v7234
      %v7236 = vrot.slane %v7202, 1
      %v7237 = vrot.slane %v6930, 1
      %v7238 = vsel %vm3216, %v7236, %v7237
      %v7239 = vrot.slane %v7203, 1
      %v7240 = vrot.slane %v6931, 1
      %v7241 = vsel %vm3216, %v7239, %v7240
      %v7242 = vrot.slane %v7204, 1
      %v7243 = vrot.slane %v6932, 1
      %v7244 = vsel %vm3216, %v7242, %v7243
      %v7245 = vrot.slane %v7205, 1
      %v7246 = vrot.slane %v6933, 1
      %v7247 = vsel %vm3216, %v7245, %v7246
      %v7248 = vrot.slane %v7206, 1
      %v7249 = vrot.slane %v6934, 1
      %v7250 = vsel %vm3216, %v7248, %v7249
      %v7251 = vrot.slane %v7207, 1
      %v7252 = vrot.slane %v6935, 1
      %v7253 = vsel %vm3216, %v7251, %v7252
      %v7254 = vrot.slane %v7208, 1
      %v7255 = vrot.slane %v6936, 1
      %v7256 = vsel %vm3216, %v7254, %v7255
      %7257 = vrot.lane.b32.xlu0 %v7211, 64
      %v7258 = vpop.permute.xlu0 %7257
      %7259 = vrot.lane.b32.xlu0 %v7214, 64
      %v7260 = vpop.permute.xlu0 %7259
      %7261 = vrot.lane.b32.xlu0 %v7217, 64
      %v7262 = vpop.permute.xlu0 %7261
      %7263 = vrot.lane.b32.xlu0 %v7220, 64
      %v7264 = vpop.permute.xlu0 %7263
      %7265 = vrot.lane.b32.xlu0 %v7223, 64
      %v7266 = vpop.permute.xlu0 %7265
      %7267 = vrot.lane.b32.xlu0 %v7226, 64
      %v7268 = vpop.permute.xlu0 %7267
      %7269 = vrot.lane.b32.xlu0 %v7229, 64
      %v7270 = vpop.permute.xlu0 %7269
      %7271 = vrot.lane.b32.xlu0 %v7232, 64
      %v7272 = vpop.permute.xlu0 %7271
      %7273 = vrot.lane.b32.xlu0 %v7235, 64
      %v7274 = vpop.permute.xlu0 %7273
      %7275 = vrot.lane.b32.xlu0 %v7238, 64
      %v7276 = vpop.permute.xlu0 %7275
      %7277 = vrot.lane.b32.xlu0 %v7241, 64
      %v7278 = vpop.permute.xlu0 %7277
      %7279 = vrot.lane.b32.xlu0 %v7244, 64
      %v7280 = vpop.permute.xlu0 %7279
      %7281 = vrot.lane.b32.xlu0 %v7247, 64
      %v7282 = vpop.permute.xlu0 %7281
      %7283 = vrot.lane.b32.xlu0 %v7250, 64
      %v7284 = vpop.permute.xlu0 %7283
      %7285 = vrot.lane.b32.xlu0 %v7253, 64
      %v7286 = vpop.permute.xlu0 %7285
      %7287 = vrot.lane.b32.xlu0 %v7256, 64
      %v7288 = vpop.permute.xlu0 %7287
      %v7290 = vsel %vm2185, %v6873, %v7130
      %v7292 = vsel %vm2185, %v6874, %v7132
      %v7294 = vsel %vm2185, %v6875, %v7134
      %v7296 = vsel %vm2185, %v6876, %v7136
      %v7298 = vsel %vm2185, %v6877, %v7138
      %v7300 = vsel %vm2185, %v6878, %v7140
      %v7302 = vsel %vm2185, %v6879, %v7142
      %v7304 = vsel %vm2185, %v6880, %v7144
      %v7306 = vsel %vm2185, %v6881, %v7146
      %v7308 = vsel %vm2185, %v6882, %v7148
      %v7310 = vsel %vm2185, %v6883, %v7150
      %v7312 = vsel %vm2185, %v6884, %v7152
      %v7314 = vsel %vm2185, %v6885, %v7154
      %v7316 = vsel %vm2185, %v6886, %v7156
      %v7318 = vsel %vm2185, %v6887, %v7158
      %v7320 = vsel %vm2185, %v6888, %v7160
      %v7322 = vsel %vm499, %v7290, %v7258
      %v7324 = vsel %vm499, %v7292, %v7260
      %v7326 = vsel %vm499, %v7294, %v7262
      %v7328 = vsel %vm499, %v7296, %v7264
      %v7330 = vsel %vm499, %v7298, %v7266
      %v7332 = vsel %vm499, %v7300, %v7268
      %v7334 = vsel %vm499, %v7302, %v7270
      %v7336 = vsel %vm499, %v7304, %v7272
      %v7338 = vsel %vm499, %v7306, %v7274
      %v7340 = vsel %vm499, %v7308, %v7276
      %v7342 = vsel %vm499, %v7310, %v7278
      %v7344 = vsel %vm499, %v7312, %v7280
      %v7346 = vsel %vm499, %v7314, %v7282
      %v7348 = vsel %vm499, %v7316, %v7284
      %v7350 = vsel %vm499, %v7318, %v7286
      %v7352 = vsel %vm499, %v7320, %v7288
      %s7353 = scalar_lea.vmem %s7, 48
      %v7354 = vld [vmem:[%s7353] sm:$0xf]
      %v7355 = vld [vmem:[%s7353 + $0x4] sm:$0xf]
      %v7356 = vld [vmem:[%s7353 + $0x8] sm:$0xf]
      %v7357 = vld [vmem:[%s7353 + $0xc] sm:$0xf]
      %v7358 = vld [vmem:[%s7353 + $0x10] sm:$0xf]
      %v7359 = vld [vmem:[%s7353 + $0x14] sm:$0xf]
      %v7360 = vld [vmem:[%s7353 + $0x18] sm:$0xf]
      %v7361 = vld [vmem:[%s7353 + $0x1c] sm:$0xf]
      %v7362 = vld [vmem:[%s7353 + $0x20] sm:$0xf]
      %v7363 = vld [vmem:[%s7353 + $0x24] sm:$0xf]
      %v7364 = vld [vmem:[%s7353 + $0x28] sm:$0xf]
      %v7365 = vld [vmem:[%s7353 + $0x2c] sm:$0xf]
      %v7378 = vunpack.c.l.b16 %v7354
      %v7379 = vunpack.c.l.b16 %v7355
      %v7380 = vunpack.c.l.b16 %v7356
      %v7381 = vunpack.c.l.b16 %v7357
      %v7382 = vunpack.c.l.b16 %v7358
      %v7383 = vunpack.c.l.b16 %v7359
      %v7384 = vunpack.c.l.b16 %v7360
      %v7385 = vunpack.c.l.b16 %v7361
      %v7386 = vunpack.c.l.b16 %v7362
      %v7387 = vunpack.c.l.b16 %v7363
      %v7388 = vunpack.c.l.b16 %v7364
      %v7389 = vunpack.c.l.b16 %v7365
      %v7390 = vpack.c.b16 %v7379, %v7378
      %v7391 = vpack.c.b16 %v7381, %v7380
      %v7392 = vpack.c.b16 %v7383, %v7382
      %v7393 = vpack.c.b16 %v7385, %v7384
      %v7394 = vpack.c.b16 %v7387, %v7386
      %v7395 = vpack.c.b16 %v7389, %v7388
      %vm7402 = vcmask 785408
      %v7403 = vsel %vm7402, %v7322, 0
      %v7405 = vsel %vm7402, %v7324, 0
      %v7407 = vsel %vm7402, %v7326, 0
      %v7409 = vsel %vm7402, %v7328, 0
      %v7411 = vsel %vm7402, %v7330, 0
      %v7413 = vsel %vm7402, %v7332, 0
      %v7415 = vsel %vm7402, %v7334, 0
      %v7417 = vsel %vm7402, %v7336, 0
      %v7419 = vsel %vm7402, %v7338, 0
      %v7421 = vsel %vm7402, %v7340, 0
      %v7423 = vsel %vm7402, %v7342, 0
      %v7425 = vsel %vm7402, %v7344, 0
      %v7427 = vsel %vm7402, %v7346, 0
      %v7429 = vsel %vm7402, %v7348, 0
      %v7431 = vsel %vm7402, %v7350, 0
      %v7433 = vsel %vm7402, %v7352, 0
      %7435 = vmatpush.bf16.msra.mxu0 0
      %7436 = vmatpush.bf16.msra.mxu0 0
      %7437 = vmatpush.bf16.msra.mxu0 %v7395
      %7438 = vmatpush.bf16.msra.mxu0 %v7394
      %7439 = vmatpush.bf16.msra.mxu0 %v7393
      %7440 = vmatpush.bf16.msra.mxu0 %v7392
      %7441 = vmatpush.bf16.msra.mxu0 %v7391
      %7442 = vmatpush.bf16.msra.mxu0 %v7390
      %7443 = vmatmul.bf16.gmra.mxu0 %v7403
      %v7444 = vpop.f32.mrf.mxu0
      %v7445 = vadd.f32 0.0, %v7444
      %v7446 = vpop.f32.mrf.mxu0
      %v7447 = vadd.f32 0.0, %v7446
      %7448 = vmatmul.bf16.gmra.mxu0 %v7405
      %v7449 = vpop.f32.mrf.mxu0
      %v7450 = vadd.f32 0.0, %v7449
      %v7451 = vpop.f32.mrf.mxu0
      %v7452 = vadd.f32 0.0, %v7451
      %7453 = vmatmul.bf16.gmra.mxu0 %v7407
      %v7454 = vpop.f32.mrf.mxu0
      %v7455 = vadd.f32 0.0, %v7454
      %v7456 = vpop.f32.mrf.mxu0
      %v7457 = vadd.f32 0.0, %v7456
      %7458 = vmatmul.bf16.gmra.mxu0 %v7409
      %v7459 = vpop.f32.mrf.mxu0
      %v7460 = vadd.f32 0.0, %v7459
      %v7461 = vpop.f32.mrf.mxu0
      %v7462 = vadd.f32 0.0, %v7461
      %7463 = vmatmul.bf16.gmra.mxu0 %v7411
      %v7464 = vpop.f32.mrf.mxu0
      %v7465 = vadd.f32 0.0, %v7464
      %v7466 = vpop.f32.mrf.mxu0
      %v7467 = vadd.f32 0.0, %v7466
      %7468 = vmatmul.bf16.gmra.mxu0 %v7413
      %v7469 = vpop.f32.mrf.mxu0
      %v7470 = vadd.f32 0.0, %v7469
      %v7471 = vpop.f32.mrf.mxu0
      %v7472 = vadd.f32 0.0, %v7471
      %7473 = vmatmul.bf16.gmra.mxu0 %v7415
      %v7474 = vpop.f32.mrf.mxu0
      %v7475 = vadd.f32 0.0, %v7474
      %v7476 = vpop.f32.mrf.mxu0
      %v7477 = vadd.f32 0.0, %v7476
      %7478 = vmatmul.bf16.gmra.mxu0 %v7417
      %v7479 = vpop.f32.mrf.mxu0
      %v7480 = vadd.f32 0.0, %v7479
      %v7481 = vpop.f32.mrf.mxu0
      %v7482 = vadd.f32 0.0, %v7481
      %7483 = vmatmul.bf16.gmra.mxu0 %v7419
      %v7484 = vpop.f32.mrf.mxu0
      %v7485 = vadd.f32 0.0, %v7484
      %v7486 = vpop.f32.mrf.mxu0
      %v7487 = vadd.f32 0.0, %v7486
      %7488 = vmatmul.bf16.gmra.mxu0 %v7421
      %v7489 = vpop.f32.mrf.mxu0
      %v7490 = vadd.f32 0.0, %v7489
      %v7491 = vpop.f32.mrf.mxu0
      %v7492 = vadd.f32 0.0, %v7491
      %7493 = vmatmul.bf16.gmra.mxu0 %v7423
      %v7494 = vpop.f32.mrf.mxu0
      %v7495 = vadd.f32 0.0, %v7494
      %v7496 = vpop.f32.mrf.mxu0
      %v7497 = vadd.f32 0.0, %v7496
      %7498 = vmatmul.bf16.gmra.mxu0 %v7425
      %v7499 = vpop.f32.mrf.mxu0
      %v7500 = vadd.f32 0.0, %v7499
      %v7501 = vpop.f32.mrf.mxu0
      %v7502 = vadd.f32 0.0, %v7501
      %7503 = vmatmul.bf16.gmra.mxu0 %v7427
      %v7504 = vpop.f32.mrf.mxu0
      %v7505 = vadd.f32 0.0, %v7504
      %v7506 = vpop.f32.mrf.mxu0
      %v7507 = vadd.f32 0.0, %v7506
      %7508 = vmatmul.bf16.gmra.mxu0 %v7429
      %v7509 = vpop.f32.mrf.mxu0
      %v7510 = vadd.f32 0.0, %v7509
      %v7511 = vpop.f32.mrf.mxu0
      %v7512 = vadd.f32 0.0, %v7511
      %7513 = vmatmul.bf16.gmra.mxu0 %v7431
      %v7514 = vpop.f32.mrf.mxu0
      %v7515 = vadd.f32 0.0, %v7514
      %v7516 = vpop.f32.mrf.mxu0
      %v7517 = vadd.f32 0.0, %v7516
      %7518 = vmatmul.bf16.gmra.mxu0 %v7433
      %v7519 = vpop.f32.mrf.mxu0
      %v7520 = vadd.f32 0.0, %v7519
      %v7521 = vpop.f32.mrf.mxu0
      %v7522 = vadd.f32 0.0, %v7521
      %7523 = vdwg.mxu0
      %v7536 = vunpack.c.l.b16 %v6733
      %v7537 = vunpack.c.l.b16 %v6734
      %v7538 = vunpack.c.l.b16 %v6735
      %v7539 = vunpack.c.l.b16 %v6736
      %v7540 = vunpack.c.l.b16 %v6737
      %v7541 = vunpack.c.l.b16 %v6738
      %v7542 = vunpack.c.l.b16 %v6739
      %v7543 = vunpack.c.l.b16 %v6740
      %v7544 = vunpack.c.l.b16 %v6741
      %v7545 = vunpack.c.l.b16 %v6742
      %v7546 = vunpack.c.l.b16 %v6743
      %v7547 = vunpack.c.l.b16 %v6744
      %v7548 = vpack.c.b16 %v7537, %v7536
      %v7549 = vpack.c.b16 %v7539, %v7538
      %v7550 = vpack.c.b16 %v7541, %v7540
      %v7551 = vpack.c.b16 %v7543, %v7542
      %v7552 = vpack.c.b16 %v7545, %v7544
      %v7553 = vpack.c.b16 %v7547, %v7546
      %v7560 = vsel %vm7402, %v6702, 0
      %v7562 = vsel %vm7402, %v6704, 0
      %v7564 = vsel %vm7402, %v6706, 0
      %v7566 = vsel %vm7402, %v6708, 0
      %v7568 = vsel %vm7402, %v6710, 0
      %v7570 = vsel %vm7402, %v6712, 0
      %v7572 = vsel %vm7402, %v6714, 0
      %v7574 = vsel %vm7402, %v6716, 0
      %v7576 = vsel %vm7402, %v6718, 0
      %v7578 = vsel %vm7402, %v6720, 0
      %v7580 = vsel %vm7402, %v6722, 0
      %v7582 = vsel %vm7402, %v6724, 0
      %v7584 = vsel %vm7402, %v6726, 0
      %v7586 = vsel %vm7402, %v6728, 0
      %v7588 = vsel %vm7402, %v6730, 0
      %v7590 = vsel %vm7402, %v6732, 0
      %7592 = vmatpush.bf16.msra.mxu0 0
      %7593 = vmatpush.bf16.msra.mxu0 0
      %7594 = vmatpush.bf16.msra.mxu0 %v7553
      %7595 = vmatpush.bf16.msra.mxu0 %v7552
      %7596 = vmatpush.bf16.msra.mxu0 %v7551
      %7597 = vmatpush.bf16.msra.mxu0 %v7550
      %7598 = vmatpush.bf16.msra.mxu0 %v7549
      %7599 = vmatpush.bf16.msra.mxu0 %v7548
      %7600 = vmatmul.bf16.gmra.mxu0 %v7560
      %v7601 = vpop.f32.mrf.mxu0
      %v7602 = vadd.f32 %v7445, %v7601
      %v7603 = vpop.f32.mrf.mxu0
      %v7604 = vadd.f32 %v7447, %v7603
      %7605 = vmatmul.bf16.gmra.mxu0 %v7562
      %v7606 = vpop.f32.mrf.mxu0
      %v7607 = vadd.f32 %v7450, %v7606
      %v7608 = vpop.f32.mrf.mxu0
      %v7609 = vadd.f32 %v7452, %v7608
      %7610 = vmatmul.bf16.gmra.mxu0 %v7564
      %v7611 = vpop.f32.mrf.mxu0
      %v7612 = vadd.f32 %v7455, %v7611
      %v7613 = vpop.f32.mrf.mxu0
      %v7614 = vadd.f32 %v7457, %v7613
      %7615 = vmatmul.bf16.gmra.mxu0 %v7566
      %v7616 = vpop.f32.mrf.mxu0
      %v7617 = vadd.f32 %v7460, %v7616
      %v7618 = vpop.f32.mrf.mxu0
      %v7619 = vadd.f32 %v7462, %v7618
      %7620 = vmatmul.bf16.gmra.mxu0 %v7568
      %v7621 = vpop.f32.mrf.mxu0
      %v7622 = vadd.f32 %v7465, %v7621
      %v7623 = vpop.f32.mrf.mxu0
      %v7624 = vadd.f32 %v7467, %v7623
      %7625 = vmatmul.bf16.gmra.mxu0 %v7570
      %v7626 = vpop.f32.mrf.mxu0
      %v7627 = vadd.f32 %v7470, %v7626
      %v7628 = vpop.f32.mrf.mxu0
      %v7629 = vadd.f32 %v7472, %v7628
      %7630 = vmatmul.bf16.gmra.mxu0 %v7572
      %v7631 = vpop.f32.mrf.mxu0
      %v7632 = vadd.f32 %v7475, %v7631
      %v7633 = vpop.f32.mrf.mxu0
      %v7634 = vadd.f32 %v7477, %v7633
      %7635 = vmatmul.bf16.gmra.mxu0 %v7574
      %v7636 = vpop.f32.mrf.mxu0
      %v7637 = vadd.f32 %v7480, %v7636
      %v7638 = vpop.f32.mrf.mxu0
      %v7639 = vadd.f32 %v7482, %v7638
      %7640 = vmatmul.bf16.gmra.mxu0 %v7576
      %v7641 = vpop.f32.mrf.mxu0
      %v7642 = vadd.f32 %v7485, %v7641
      %v7643 = vpop.f32.mrf.mxu0
      %v7644 = vadd.f32 %v7487, %v7643
      %7645 = vmatmul.bf16.gmra.mxu0 %v7578
      %v7646 = vpop.f32.mrf.mxu0
      %v7647 = vadd.f32 %v7490, %v7646
      %v7648 = vpop.f32.mrf.mxu0
      %v7649 = vadd.f32 %v7492, %v7648
      %7650 = vmatmul.bf16.gmra.mxu0 %v7580
      %v7651 = vpop.f32.mrf.mxu0
      %v7652 = vadd.f32 %v7495, %v7651
      %v7653 = vpop.f32.mrf.mxu0
      %v7654 = vadd.f32 %v7497, %v7653
      %7655 = vmatmul.bf16.gmra.mxu0 %v7582
      %v7656 = vpop.f32.mrf.mxu0
      %v7657 = vadd.f32 %v7500, %v7656
      %v7658 = vpop.f32.mrf.mxu0
      %v7659 = vadd.f32 %v7502, %v7658
      %7660 = vmatmul.bf16.gmra.mxu0 %v7584
      %v7661 = vpop.f32.mrf.mxu0
      %v7662 = vadd.f32 %v7505, %v7661
      %v7663 = vpop.f32.mrf.mxu0
      %v7664 = vadd.f32 %v7507, %v7663
      %7665 = vmatmul.bf16.gmra.mxu0 %v7586
      %v7666 = vpop.f32.mrf.mxu0
      %v7667 = vadd.f32 %v7510, %v7666
      %v7668 = vpop.f32.mrf.mxu0
      %v7669 = vadd.f32 %v7512, %v7668
      %7670 = vmatmul.bf16.gmra.mxu0 %v7588
      %v7671 = vpop.f32.mrf.mxu0
      %v7672 = vadd.f32 %v7515, %v7671
      %v7673 = vpop.f32.mrf.mxu0
      %v7674 = vadd.f32 %v7517, %v7673
      %7675 = vmatmul.bf16.gmra.mxu0 %v7590
      %v7676 = vpop.f32.mrf.mxu0
      %v7677 = vadd.f32 %v7520, %v7676
      %v7678 = vpop.f32.mrf.mxu0
      %v7679 = vadd.f32 %v7522, %v7678
      %7680 = vdwg.mxu0
      %s7681 = scalar_lea.vmem [#allocation3], 24
      %v7682 = vld [vmem:[%s7681] sm:$0xf]
      %v7683 = vld [vmem:[%s7681 + $0x4] sm:$0xf]
      %v7684 = vld [vmem:[%s7681 + $0xc] sm:$0xf]
      %v7685 = vld [vmem:[%s7681 + $0x10] sm:$0xf]
      %v7686 = vld [vmem:[%s7681 + $0x18] sm:$0xf]
      %v7687 = vld [vmem:[%s7681 + $0x1c] sm:$0xf]
      %v7688 = vld [vmem:[%s7681 + $0x24] sm:$0xf]
      %v7689 = vld [vmem:[%s7681 + $0x28] sm:$0xf]
      %v7690 = vld [vmem:[%s7681 + $0x30] sm:$0xf]
      %v7691 = vld [vmem:[%s7681 + $0x34] sm:$0xf]
      %v7692 = vld [vmem:[%s7681 + $0x3c] sm:$0xf]
      %v7693 = vld [vmem:[%s7681 + $0x40] sm:$0xf]
      %v7694 = vld [vmem:[%s7681 + $0x48] sm:$0xf]
      %v7695 = vld [vmem:[%s7681 + $0x4c] sm:$0xf]
      %v7696 = vld [vmem:[%s7681 + $0x54] sm:$0xf]
      %v7697 = vld [vmem:[%s7681 + $0x58] sm:$0xf]
      %v7698 = vld [vmem:[%s7681 + $0x60] sm:$0xf]
      %v7699 = vld [vmem:[%s7681 + $0x64] sm:$0xf]
      %v7700 = vld [vmem:[%s7681 + $0x6c] sm:$0xf]
      %v7701 = vld [vmem:[%s7681 + $0x70] sm:$0xf]
      %v7702 = vld [vmem:[%s7681 + $0x78] sm:$0xf]
      %v7703 = vld [vmem:[%s7681 + $0x7c] sm:$0xf]
      %v7704 = vld [vmem:[%s7681 + $0x84] sm:$0xf]
      %v7705 = vld [vmem:[%s7681 + $0x88] sm:$0xf]
      %v7706 = vld [vmem:[%s7681 + $0x90] sm:$0xf]
      %v7707 = vld [vmem:[%s7681 + $0x94] sm:$0xf]
      %v7708 = vld [vmem:[%s7681 + $0x9c] sm:$0xf]
      %v7709 = vld [vmem:[%s7681 + $0xa0] sm:$0xf]
      %v7710 = vld [vmem:[%s7681 + $0xa8] sm:$0xf]
      %v7711 = vld [vmem:[%s7681 + $0xac] sm:$0xf]
      %v7712 = vld [vmem:[%s7681 + $0xb4] sm:$0xf]
      %v7713 = vld [vmem:[%s7681 + $0xb8] sm:$0xf]
      %v7714 = vld [vmem:[%s7681 + $0x8] sm:$0x1]
      %v7715 = vld [vmem:[%s7681 + $0x14] sm:$0x1]
      %v7716 = vld [vmem:[%s7681 + $0x20] sm:$0x1]
      %v7717 = vld [vmem:[%s7681 + $0x2c] sm:$0x1]
      %v7718 = vld [vmem:[%s7681 + $0x38] sm:$0x1]
      %v7719 = vld [vmem:[%s7681 + $0x44] sm:$0x1]
      %v7720 = vld [vmem:[%s7681 + $0x50] sm:$0x1]
      %v7721 = vld [vmem:[%s7681 + $0x5c] sm:$0x1]
      %v7722 = vld [vmem:[%s7681 + $0x68] sm:$0x1]
      %v7723 = vld [vmem:[%s7681 + $0x74] sm:$0x1]
      %v7724 = vld [vmem:[%s7681 + $0x80] sm:$0x1]
      %v7725 = vld [vmem:[%s7681 + $0x8c] sm:$0x1]
      %v7726 = vld [vmem:[%s7681 + $0x98] sm:$0x1]
      %v7727 = vld [vmem:[%s7681 + $0xa4] sm:$0x1]
      %v7728 = vld [vmem:[%s7681 + $0xb0] sm:$0x1]
      %v7729 = vld [vmem:[%s7681 + $0xbc] sm:$0x1]
      %v7730 = vld [vmem:[%s7681] sm:$0xe]
      %v7731 = vld [vmem:[%s7681 + $0xc] sm:$0xe]
      %v7732 = vld [vmem:[%s7681 + $0x18] sm:$0xe]
      %v7733 = vld [vmem:[%s7681 + $0x24] sm:$0xe]
      %v7734 = vld [vmem:[%s7681 + $0x30] sm:$0xe]
      %v7735 = vld [vmem:[%s7681 + $0x3c] sm:$0xe]
      %v7736 = vld [vmem:[%s7681 + $0x48] sm:$0xe]
      %v7737 = vld [vmem:[%s7681 + $0x54] sm:$0xe]
      %v7738 = vld [vmem:[%s7681 + $0x60] sm:$0xe]
      %v7739 = vld [vmem:[%s7681 + $0x6c] sm:$0xe]
      %v7740 = vld [vmem:[%s7681 + $0x78] sm:$0xe]
      %v7741 = vld [vmem:[%s7681 + $0x84] sm:$0xe]
      %v7742 = vld [vmem:[%s7681 + $0x90] sm:$0xe]
      %v7743 = vld [vmem:[%s7681 + $0x9c] sm:$0xe]
      %v7744 = vld [vmem:[%s7681 + $0xa8] sm:$0xe]
      %v7745 = vld [vmem:[%s7681 + $0xb4] sm:$0xe]
      %v7778 = vunpack.c.l.b16 %v7682
      %v7779 = vunpack.c.l.b16 %v7683
      %v7780 = vunpack.c.l.b16 %v7684
      %v7781 = vunpack.c.l.b16 %v7685
      %v7782 = vunpack.c.l.b16 %v7686
      %v7783 = vunpack.c.l.b16 %v7687
      %v7784 = vunpack.c.l.b16 %v7688
      %v7785 = vunpack.c.l.b16 %v7689
      %v7786 = vunpack.c.l.b16 %v7690
      %v7787 = vunpack.c.l.b16 %v7691
      %v7788 = vunpack.c.l.b16 %v7692
      %v7789 = vunpack.c.l.b16 %v7693
      %v7790 = vunpack.c.l.b16 %v7694
      %v7791 = vunpack.c.l.b16 %v7695
      %v7792 = vunpack.c.l.b16 %v7696
      %v7793 = vunpack.c.l.b16 %v7697
      %v7794 = vunpack.c.l.b16 %v7698
      %v7795 = vunpack.c.l.b16 %v7699
      %v7796 = vunpack.c.l.b16 %v7700
      %v7797 = vunpack.c.l.b16 %v7701
      %v7798 = vunpack.c.l.b16 %v7702
      %v7799 = vunpack.c.l.b16 %v7703
      %v7800 = vunpack.c.l.b16 %v7704
      %v7801 = vunpack.c.l.b16 %v7705
      %v7802 = vunpack.c.l.b16 %v7706
      %v7803 = vunpack.c.l.b16 %v7707
      %v7804 = vunpack.c.l.b16 %v7708
      %v7805 = vunpack.c.l.b16 %v7709
      %v7806 = vunpack.c.l.b16 %v7710
      %v7807 = vunpack.c.l.b16 %v7711
      %v7808 = vunpack.c.l.b16 %v7712
      %v7809 = vunpack.c.l.b16 %v7713
      %v7810 = vpack.c.b16 %v7779, %v7778
      %v7811 = vpack.c.b16 %v7781, %v7780
      %v7812 = vpack.c.b16 %v7783, %v7782
      %v7813 = vpack.c.b16 %v7785, %v7784
      %v7814 = vpack.c.b16 %v7787, %v7786
      %v7815 = vpack.c.b16 %v7789, %v7788
      %v7816 = vpack.c.b16 %v7791, %v7790
      %v7817 = vpack.c.b16 %v7793, %v7792
      %v7818 = vpack.c.b16 %v7795, %v7794
      %v7819 = vpack.c.b16 %v7797, %v7796
      %v7820 = vpack.c.b16 %v7799, %v7798
      %v7821 = vpack.c.b16 %v7801, %v7800
      %v7822 = vpack.c.b16 %v7803, %v7802
      %v7823 = vpack.c.b16 %v7805, %v7804
      %v7824 = vpack.c.b16 %v7807, %v7806
      %v7825 = vpack.c.b16 %v7809, %v7808
      %v7842 = vunpack.c.l.b16 %v7714
      %v7843 = vunpack.c.l.b16 %v7715
      %v7844 = vunpack.c.l.b16 %v7716
      %v7845 = vunpack.c.l.b16 %v7717
      %v7846 = vunpack.c.l.b16 %v7718
      %v7847 = vunpack.c.l.b16 %v7719
      %v7848 = vunpack.c.l.b16 %v7720
      %v7849 = vunpack.c.l.b16 %v7721
      %v7850 = vunpack.c.l.b16 %v7722
      %v7851 = vunpack.c.l.b16 %v7723
      %v7852 = vunpack.c.l.b16 %v7724
      %v7853 = vunpack.c.l.b16 %v7725
      %v7854 = vunpack.c.l.b16 %v7726
      %v7855 = vunpack.c.l.b16 %v7727
      %v7856 = vunpack.c.l.b16 %v7728
      %v7857 = vunpack.c.l.b16 %v7729
      %v7858 = vpack.c.b16 %v7842, %v7842
      %v7859 = vpack.c.b16 %v7843, %v7843
      %v7860 = vpack.c.b16 %v7844, %v7844
      %v7861 = vpack.c.b16 %v7845, %v7845
      %v7862 = vpack.c.b16 %v7846, %v7846
      %v7863 = vpack.c.b16 %v7847, %v7847
      %v7864 = vpack.c.b16 %v7848, %v7848
      %v7865 = vpack.c.b16 %v7849, %v7849
      %v7866 = vpack.c.b16 %v7850, %v7850
      %v7867 = vpack.c.b16 %v7851, %v7851
      %v7868 = vpack.c.b16 %v7852, %v7852
      %v7869 = vpack.c.b16 %v7853, %v7853
      %v7870 = vpack.c.b16 %v7854, %v7854
      %v7871 = vpack.c.b16 %v7855, %v7855
      %v7872 = vpack.c.b16 %v7856, %v7856
      %v7873 = vpack.c.b16 %v7857, %v7857
      %v7875 = vshrl.u32 %v7810, 16
      %v7877 = vshll.u32 %v7810, 16
      %v7879 = vrot.slane %v7877, 1
      %v7880 = vor.u32 %v7875, %v7879
      %v7882 = vshll.u32 %v7858, 16
      %v7884 = vrot.slane %v7882, 1
      %v7885 = vsel %vm2943, %v7880, %v7884
      %v7887 = vshrl.u32 %v7811, 16
      %v7889 = vshll.u32 %v7811, 16
      %v7891 = vrot.slane %v7889, 1
      %v7892 = vor.u32 %v7887, %v7891
      %v7894 = vshll.u32 %v7859, 16
      %v7896 = vrot.slane %v7894, 1
      %v7897 = vsel %vm2943, %v7892, %v7896
      %v7899 = vshrl.u32 %v7812, 16
      %v7901 = vshll.u32 %v7812, 16
      %v7903 = vrot.slane %v7901, 1
      %v7904 = vor.u32 %v7899, %v7903
      %v7906 = vshll.u32 %v7860, 16
      %v7908 = vrot.slane %v7906, 1
      %v7909 = vsel %vm2943, %v7904, %v7908
      %v7911 = vshrl.u32 %v7813, 16
      %v7913 = vshll.u32 %v7813, 16
      %v7915 = vrot.slane %v7913, 1
      %v7916 = vor.u32 %v7911, %v7915
      %v7918 = vshll.u32 %v7861, 16
      %v7920 = vrot.slane %v7918, 1
      %v7921 = vsel %vm2943, %v7916, %v7920
      %v7923 = vshrl.u32 %v7814, 16
      %v7925 = vshll.u32 %v7814, 16
      %v7927 = vrot.slane %v7925, 1
      %v7928 = vor.u32 %v7923, %v7927
      %v7930 = vshll.u32 %v7862, 16
      %v7932 = vrot.slane %v7930, 1
      %v7933 = vsel %vm2943, %v7928, %v7932
      %v7935 = vshrl.u32 %v7815, 16
      %v7937 = vshll.u32 %v7815, 16
      %v7939 = vrot.slane %v7937, 1
      %v7940 = vor.u32 %v7935, %v7939
      %v7942 = vshll.u32 %v7863, 16
      %v7944 = vrot.slane %v7942, 1
      %v7945 = vsel %vm2943, %v7940, %v7944
      %v7947 = vshrl.u32 %v7816, 16
      %v7949 = vshll.u32 %v7816, 16
      %v7951 = vrot.slane %v7949, 1
      %v7952 = vor.u32 %v7947, %v7951
      %v7954 = vshll.u32 %v7864, 16
      %v7956 = vrot.slane %v7954, 1
      %v7957 = vsel %vm2943, %v7952, %v7956
      %v7959 = vshrl.u32 %v7817, 16
      %v7961 = vshll.u32 %v7817, 16
      %v7963 = vrot.slane %v7961, 1
      %v7964 = vor.u32 %v7959, %v7963
      %v7966 = vshll.u32 %v7865, 16
      %v7968 = vrot.slane %v7966, 1
      %v7969 = vsel %vm2943, %v7964, %v7968
      %v7971 = vshrl.u32 %v7818, 16
      %v7973 = vshll.u32 %v7818, 16
      %v7975 = vrot.slane %v7973, 1
      %v7976 = vor.u32 %v7971, %v7975
      %v7978 = vshll.u32 %v7866, 16
      %v7980 = vrot.slane %v7978, 1
      %v7981 = vsel %vm2943, %v7976, %v7980
      %v7983 = vshrl.u32 %v7819, 16
      %v7985 = vshll.u32 %v7819, 16
      %v7987 = vrot.slane %v7985, 1
      %v7988 = vor.u32 %v7983, %v7987
      %v7990 = vshll.u32 %v7867, 16
      %v7992 = vrot.slane %v7990, 1
      %v7993 = vsel %vm2943, %v7988, %v7992
      %v7995 = vshrl.u32 %v7820, 16
      %v7997 = vshll.u32 %v7820, 16
      %v7999 = vrot.slane %v7997, 1
      %v8000 = vor.u32 %v7995, %v7999
      %v8002 = vshll.u32 %v7868, 16
      %v8004 = vrot.slane %v8002, 1
      %v8005 = vsel %vm2943, %v8000, %v8004
      %v8007 = vshrl.u32 %v7821, 16
      %v8009 = vshll.u32 %v7821, 16
      %v8011 = vrot.slane %v8009, 1
      %v8012 = vor.u32 %v8007, %v8011
      %v8014 = vshll.u32 %v7869, 16
      %v8016 = vrot.slane %v8014, 1
      %v8017 = vsel %vm2943, %v8012, %v8016
      %v8019 = vshrl.u32 %v7822, 16
      %v8021 = vshll.u32 %v7822, 16
      %v8023 = vrot.slane %v8021, 1
      %v8024 = vor.u32 %v8019, %v8023
      %v8026 = vshll.u32 %v7870, 16
      %v8028 = vrot.slane %v8026, 1
      %v8029 = vsel %vm2943, %v8024, %v8028
      %v8031 = vshrl.u32 %v7823, 16
      %v8033 = vshll.u32 %v7823, 16
      %v8035 = vrot.slane %v8033, 1
      %v8036 = vor.u32 %v8031, %v8035
      %v8038 = vshll.u32 %v7871, 16
      %v8040 = vrot.slane %v8038, 1
      %v8041 = vsel %vm2943, %v8036, %v8040
      %v8043 = vshrl.u32 %v7824, 16
      %v8045 = vshll.u32 %v7824, 16
      %v8047 = vrot.slane %v8045, 1
      %v8048 = vor.u32 %v8043, %v8047
      %v8050 = vshll.u32 %v7872, 16
      %v8052 = vrot.slane %v8050, 1
      %v8053 = vsel %vm2943, %v8048, %v8052
      %v8055 = vshrl.u32 %v7825, 16
      %v8057 = vshll.u32 %v7825, 16
      %v8059 = vrot.slane %v8057, 1
      %v8060 = vor.u32 %v8055, %v8059
      %v8062 = vshll.u32 %v7873, 16
      %v8064 = vrot.slane %v8062, 1
      %v8065 = vsel %vm2943, %v8060, %v8064
      %8066 = vrot.lane.b32.xlu0 %v7885, 32
      %v8067 = vpop.permute.xlu0 %8066
      %8068 = vrot.lane.b32.xlu0 %v7897, 32
      %v8069 = vpop.permute.xlu0 %8068
      %8070 = vrot.lane.b32.xlu0 %v7909, 32
      %v8071 = vpop.permute.xlu0 %8070
      %8072 = vrot.lane.b32.xlu0 %v7921, 32
      %v8073 = vpop.permute.xlu0 %8072
      %8074 = vrot.lane.b32.xlu0 %v7933, 32
      %v8075 = vpop.permute.xlu0 %8074
      %8076 = vrot.lane.b32.xlu0 %v7945, 32
      %v8077 = vpop.permute.xlu0 %8076
      %8078 = vrot.lane.b32.xlu0 %v7957, 32
      %v8079 = vpop.permute.xlu0 %8078
      %8080 = vrot.lane.b32.xlu0 %v7969, 32
      %v8081 = vpop.permute.xlu0 %8080
      %8082 = vrot.lane.b32.xlu0 %v7981, 32
      %v8083 = vpop.permute.xlu0 %8082
      %8084 = vrot.lane.b32.xlu0 %v7993, 32
      %v8085 = vpop.permute.xlu0 %8084
      %8086 = vrot.lane.b32.xlu0 %v8005, 32
      %v8087 = vpop.permute.xlu0 %8086
      %8088 = vrot.lane.b32.xlu0 %v8017, 32
      %v8089 = vpop.permute.xlu0 %8088
      %8090 = vrot.lane.b32.xlu0 %v8029, 32
      %v8091 = vpop.permute.xlu0 %8090
      %8092 = vrot.lane.b32.xlu0 %v8041, 32
      %v8093 = vpop.permute.xlu0 %8092
      %8094 = vrot.lane.b32.xlu0 %v8053, 32
      %v8095 = vpop.permute.xlu0 %8094
      %8096 = vrot.lane.b32.xlu0 %v8065, 32
      %v8097 = vpop.permute.xlu0 %8096
      %v8114 = vunpack.c.l.b16 %v7730
      %v8115 = vunpack.c.l.b16 %v7731
      %v8116 = vunpack.c.l.b16 %v7732
      %v8117 = vunpack.c.l.b16 %v7733
      %v8118 = vunpack.c.l.b16 %v7734
      %v8119 = vunpack.c.l.b16 %v7735
      %v8120 = vunpack.c.l.b16 %v7736
      %v8121 = vunpack.c.l.b16 %v7737
      %v8122 = vunpack.c.l.b16 %v7738
      %v8123 = vunpack.c.l.b16 %v7739
      %v8124 = vunpack.c.l.b16 %v7740
      %v8125 = vunpack.c.l.b16 %v7741
      %v8126 = vunpack.c.l.b16 %v7742
      %v8127 = vunpack.c.l.b16 %v7743
      %v8128 = vunpack.c.l.b16 %v7744
      %v8129 = vunpack.c.l.b16 %v7745
      %v8130 = vpack.c.b16 %v7779, %v8114
      %v8131 = vpack.c.b16 %v7781, %v8115
      %v8132 = vpack.c.b16 %v7783, %v8116
      %v8133 = vpack.c.b16 %v7785, %v8117
      %v8134 = vpack.c.b16 %v7787, %v8118
      %v8135 = vpack.c.b16 %v7789, %v8119
      %v8136 = vpack.c.b16 %v7791, %v8120
      %v8137 = vpack.c.b16 %v7793, %v8121
      %v8138 = vpack.c.b16 %v7795, %v8122
      %v8139 = vpack.c.b16 %v7797, %v8123
      %v8140 = vpack.c.b16 %v7799, %v8124
      %v8141 = vpack.c.b16 %v7801, %v8125
      %v8142 = vpack.c.b16 %v7803, %v8126
      %v8143 = vpack.c.b16 %v7805, %v8127
      %v8144 = vpack.c.b16 %v7807, %v8128
      %v8145 = vpack.c.b16 %v7809, %v8129
      %v8146 = vrot.slane %v8130, 1
      %v8147 = vrot.slane %v7858, 1
      %v8148 = vsel %vm3216, %v8146, %v8147
      %v8149 = vrot.slane %v8131, 1
      %v8150 = vrot.slane %v7859, 1
      %v8151 = vsel %vm3216, %v8149, %v8150
      %v8152 = vrot.slane %v8132, 1
      %v8153 = vrot.slane %v7860, 1
      %v8154 = vsel %vm3216, %v8152, %v8153
      %v8155 = vrot.slane %v8133, 1
      %v8156 = vrot.slane %v7861, 1
      %v8157 = vsel %vm3216, %v8155, %v8156
      %v8158 = vrot.slane %v8134, 1
      %v8159 = vrot.slane %v7862, 1
      %v8160 = vsel %vm3216, %v8158, %v8159
      %v8161 = vrot.slane %v8135, 1
      %v8162 = vrot.slane %v7863, 1
      %v8163 = vsel %vm3216, %v8161, %v8162
      %v8164 = vrot.slane %v8136, 1
      %v8165 = vrot.slane %v7864, 1
      %v8166 = vsel %vm3216, %v8164, %v8165
      %v8167 = vrot.slane %v8137, 1
      %v8168 = vrot.slane %v7865, 1
      %v8169 = vsel %vm3216, %v8167, %v8168
      %v8170 = vrot.slane %v8138, 1
      %v8171 = vrot.slane %v7866, 1
      %v8172 = vsel %vm3216, %v8170, %v8171
      %v8173 = vrot.slane %v8139, 1
      %v8174 = vrot.slane %v7867, 1
      %v8175 = vsel %vm3216, %v8173, %v8174
      %v8176 = vrot.slane %v8140, 1
      %v8177 = vrot.slane %v7868, 1
      %v8178 = vsel %vm3216, %v8176, %v8177
      %v8179 = vrot.slane %v8141, 1
      %v8180 = vrot.slane %v7869, 1
      %v8181 = vsel %vm3216, %v8179, %v8180
      %v8182 = vrot.slane %v8142, 1
      %v8183 = vrot.slane %v7870, 1
      %v8184 = vsel %vm3216, %v8182, %v8183
      %v8185 = vrot.slane %v8143, 1
      %v8186 = vrot.slane %v7871, 1
      %v8187 = vsel %vm3216, %v8185, %v8186
      %v8188 = vrot.slane %v8144, 1
      %v8189 = vrot.slane %v7872, 1
      %v8190 = vsel %vm3216, %v8188, %v8189
      %v8191 = vrot.slane %v8145, 1
      %v8192 = vrot.slane %v7873, 1
      %v8193 = vsel %vm3216, %v8191, %v8192
      %8194 = vrot.lane.b32.xlu0 %v8148, 64
      %v8195 = vpop.permute.xlu0 %8194
      %8196 = vrot.lane.b32.xlu0 %v8151, 64
      %v8197 = vpop.permute.xlu0 %8196
      %8198 = vrot.lane.b32.xlu0 %v8154, 64
      %v8199 = vpop.permute.xlu0 %8198
      %8200 = vrot.lane.b32.xlu0 %v8157, 64
      %v8201 = vpop.permute.xlu0 %8200
      %8202 = vrot.lane.b32.xlu0 %v8160, 64
      %v8203 = vpop.permute.xlu0 %8202
      %8204 = vrot.lane.b32.xlu0 %v8163, 64
      %v8205 = vpop.permute.xlu0 %8204
      %8206 = vrot.lane.b32.xlu0 %v8166, 64
      %v8207 = vpop.permute.xlu0 %8206
      %8208 = vrot.lane.b32.xlu0 %v8169, 64
      %v8209 = vpop.permute.xlu0 %8208
      %8210 = vrot.lane.b32.xlu0 %v8172, 64
      %v8211 = vpop.permute.xlu0 %8210
      %8212 = vrot.lane.b32.xlu0 %v8175, 64
      %v8213 = vpop.permute.xlu0 %8212
      %8214 = vrot.lane.b32.xlu0 %v8178, 64
      %v8215 = vpop.permute.xlu0 %8214
      %8216 = vrot.lane.b32.xlu0 %v8181, 64
      %v8217 = vpop.permute.xlu0 %8216
      %8218 = vrot.lane.b32.xlu0 %v8184, 64
      %v8219 = vpop.permute.xlu0 %8218
      %8220 = vrot.lane.b32.xlu0 %v8187, 64
      %v8221 = vpop.permute.xlu0 %8220
      %8222 = vrot.lane.b32.xlu0 %v8190, 64
      %v8223 = vpop.permute.xlu0 %8222
      %8224 = vrot.lane.b32.xlu0 %v8193, 64
      %v8225 = vpop.permute.xlu0 %8224
      %v8227 = vsel %vm2185, %v7810, %v8067
      %v8229 = vsel %vm2185, %v7811, %v8069
      %v8231 = vsel %vm2185, %v7812, %v8071
      %v8233 = vsel %vm2185, %v7813, %v8073
      %v8235 = vsel %vm2185, %v7814, %v8075
      %v8237 = vsel %vm2185, %v7815, %v8077
      %v8239 = vsel %vm2185, %v7816, %v8079
      %v8241 = vsel %vm2185, %v7817, %v8081
      %v8243 = vsel %vm2185, %v7818, %v8083
      %v8245 = vsel %vm2185, %v7819, %v8085
      %v8247 = vsel %vm2185, %v7820, %v8087
      %v8249 = vsel %vm2185, %v7821, %v8089
      %v8251 = vsel %vm2185, %v7822, %v8091
      %v8253 = vsel %vm2185, %v7823, %v8093
      %v8255 = vsel %vm2185, %v7824, %v8095
      %v8257 = vsel %vm2185, %v7825, %v8097
      %v8259 = vsel %vm499, %v8227, %v8195
      %v8261 = vsel %vm499, %v8229, %v8197
      %v8263 = vsel %vm499, %v8231, %v8199
      %v8265 = vsel %vm499, %v8233, %v8201
      %v8267 = vsel %vm499, %v8235, %v8203
      %v8269 = vsel %vm499, %v8237, %v8205
      %v8271 = vsel %vm499, %v8239, %v8207
      %v8273 = vsel %vm499, %v8241, %v8209
      %v8275 = vsel %vm499, %v8243, %v8211
      %v8277 = vsel %vm499, %v8245, %v8213
      %v8279 = vsel %vm499, %v8247, %v8215
      %v8281 = vsel %vm499, %v8249, %v8217
      %v8283 = vsel %vm499, %v8251, %v8219
      %v8285 = vsel %vm499, %v8253, %v8221
      %v8287 = vsel %vm499, %v8255, %v8223
      %v8289 = vsel %vm499, %v8257, %v8225
      %s8290 = scalar_lea.vmem %s7, 96
      %v8291 = vld [vmem:[%s8290] sm:$0xf]
      %v8292 = vld [vmem:[%s8290 + $0x4] sm:$0xf]
      %v8293 = vld [vmem:[%s8290 + $0x8] sm:$0xf]
      %v8294 = vld [vmem:[%s8290 + $0xc] sm:$0xf]
      %v8295 = vld [vmem:[%s8290 + $0x10] sm:$0xf]
      %v8296 = vld [vmem:[%s8290 + $0x14] sm:$0xf]
      %v8297 = vld [vmem:[%s8290 + $0x18] sm:$0xf]
      %v8298 = vld [vmem:[%s8290 + $0x1c] sm:$0xf]
      %v8299 = vld [vmem:[%s8290 + $0x20] sm:$0xf]
      %v8300 = vld [vmem:[%s8290 + $0x24] sm:$0xf]
      %v8301 = vld [vmem:[%s8290 + $0x28] sm:$0xf]
      %v8302 = vld [vmem:[%s8290 + $0x2c] sm:$0xf]
      %v8315 = vunpack.c.l.b16 %v8291
      %v8316 = vunpack.c.l.b16 %v8292
      %v8317 = vunpack.c.l.b16 %v8293
      %v8318 = vunpack.c.l.b16 %v8294
      %v8319 = vunpack.c.l.b16 %v8295
      %v8320 = vunpack.c.l.b16 %v8296
      %v8321 = vunpack.c.l.b16 %v8297
      %v8322 = vunpack.c.l.b16 %v8298
      %v8323 = vunpack.c.l.b16 %v8299
      %v8324 = vunpack.c.l.b16 %v8300
      %v8325 = vunpack.c.l.b16 %v8301
      %v8326 = vunpack.c.l.b16 %v8302
      %v8327 = vpack.c.b16 %v8316, %v8315
      %v8328 = vpack.c.b16 %v8318, %v8317
      %v8329 = vpack.c.b16 %v8320, %v8319
      %v8330 = vpack.c.b16 %v8322, %v8321
      %v8331 = vpack.c.b16 %v8324, %v8323
      %v8332 = vpack.c.b16 %v8326, %v8325
      %v8339 = vsel %vm7402, %v8259, 0
      %v8341 = vsel %vm7402, %v8261, 0
      %v8343 = vsel %vm7402, %v8263, 0
      %v8345 = vsel %vm7402, %v8265, 0
      %v8347 = vsel %vm7402, %v8267, 0
      %v8349 = vsel %vm7402, %v8269, 0
      %v8351 = vsel %vm7402, %v8271, 0
      %v8353 = vsel %vm7402, %v8273, 0
      %v8355 = vsel %vm7402, %v8275, 0
      %v8357 = vsel %vm7402, %v8277, 0
      %v8359 = vsel %vm7402, %v8279, 0
      %v8361 = vsel %vm7402, %v8281, 0
      %v8363 = vsel %vm7402, %v8283, 0
      %v8365 = vsel %vm7402, %v8285, 0
      %v8367 = vsel %vm7402, %v8287, 0
      %v8369 = vsel %vm7402, %v8289, 0
      %8371 = vmatpush.bf16.msra.mxu0 0
      %8372 = vmatpush.bf16.msra.mxu0 0
      %8373 = vmatpush.bf16.msra.mxu0 %v8332
      %8374 = vmatpush.bf16.msra.mxu0 %v8331
      %8375 = vmatpush.bf16.msra.mxu0 %v8330
      %8376 = vmatpush.bf16.msra.mxu0 %v8329
      %8377 = vmatpush.bf16.msra.mxu0 %v8328
      %8378 = vmatpush.bf16.msra.mxu0 %v8327
      %8379 = vmatmul.bf16.gmra.mxu0 %v8339
      %v8380 = vpop.f32.mrf.mxu0
      %v8381 = vadd.f32 0.0, %v8380
      %v8382 = vpop.f32.mrf.mxu0
      %v8383 = vadd.f32 0.0, %v8382
      %8384 = vmatmul.bf16.gmra.mxu0 %v8341
      %v8385 = vpop.f32.mrf.mxu0
      %v8386 = vadd.f32 0.0, %v8385
      %v8387 = vpop.f32.mrf.mxu0
      %v8388 = vadd.f32 0.0, %v8387
      %8389 = vmatmul.bf16.gmra.mxu0 %v8343
      %v8390 = vpop.f32.mrf.mxu0
      %v8391 = vadd.f32 0.0, %v8390
      %v8392 = vpop.f32.mrf.mxu0
      %v8393 = vadd.f32 0.0, %v8392
      %8394 = vmatmul.bf16.gmra.mxu0 %v8345
      %v8395 = vpop.f32.mrf.mxu0
      %v8396 = vadd.f32 0.0, %v8395
      %v8397 = vpop.f32.mrf.mxu0
      %v8398 = vadd.f32 0.0, %v8397
      %8399 = vmatmul.bf16.gmra.mxu0 %v8347
      %v8400 = vpop.f32.mrf.mxu0
      %v8401 = vadd.f32 0.0, %v8400
      %v8402 = vpop.f32.mrf.mxu0
      %v8403 = vadd.f32 0.0, %v8402
      %8404 = vmatmul.bf16.gmra.mxu0 %v8349
      %v8405 = vpop.f32.mrf.mxu0
      %v8406 = vadd.f32 0.0, %v8405
      %v8407 = vpop.f32.mrf.mxu0
      %v8408 = vadd.f32 0.0, %v8407
      %8409 = vmatmul.bf16.gmra.mxu0 %v8351
      %v8410 = vpop.f32.mrf.mxu0
      %v8411 = vadd.f32 0.0, %v8410
      %v8412 = vpop.f32.mrf.mxu0
      %v8413 = vadd.f32 0.0, %v8412
      %8414 = vmatmul.bf16.gmra.mxu0 %v8353
      %v8415 = vpop.f32.mrf.mxu0
      %v8416 = vadd.f32 0.0, %v8415
      %v8417 = vpop.f32.mrf.mxu0
      %v8418 = vadd.f32 0.0, %v8417
      %8419 = vmatmul.bf16.gmra.mxu0 %v8355
      %v8420 = vpop.f32.mrf.mxu0
      %v8421 = vadd.f32 0.0, %v8420
      %v8422 = vpop.f32.mrf.mxu0
      %v8423 = vadd.f32 0.0, %v8422
      %8424 = vmatmul.bf16.gmra.mxu0 %v8357
      %v8425 = vpop.f32.mrf.mxu0
      %v8426 = vadd.f32 0.0, %v8425
      %v8427 = vpop.f32.mrf.mxu0
      %v8428 = vadd.f32 0.0, %v8427
      %8429 = vmatmul.bf16.gmra.mxu0 %v8359
      %v8430 = vpop.f32.mrf.mxu0
      %v8431 = vadd.f32 0.0, %v8430
      %v8432 = vpop.f32.mrf.mxu0
      %v8433 = vadd.f32 0.0, %v8432
      %8434 = vmatmul.bf16.gmra.mxu0 %v8361
      %v8435 = vpop.f32.mrf.mxu0
      %v8436 = vadd.f32 0.0, %v8435
      %v8437 = vpop.f32.mrf.mxu0
      %v8438 = vadd.f32 0.0, %v8437
      %8439 = vmatmul.bf16.gmra.mxu0 %v8363
      %v8440 = vpop.f32.mrf.mxu0
      %v8441 = vadd.f32 0.0, %v8440
      %v8442 = vpop.f32.mrf.mxu0
      %v8443 = vadd.f32 0.0, %v8442
      %8444 = vmatmul.bf16.gmra.mxu0 %v8365
      %v8445 = vpop.f32.mrf.mxu0
      %v8446 = vadd.f32 0.0, %v8445
      %v8447 = vpop.f32.mrf.mxu0
      %v8448 = vadd.f32 0.0, %v8447
      %8449 = vmatmul.bf16.gmra.mxu0 %v8367
      %v8450 = vpop.f32.mrf.mxu0
      %v8451 = vadd.f32 0.0, %v8450
      %v8452 = vpop.f32.mrf.mxu0
      %v8453 = vadd.f32 0.0, %v8452
      %8454 = vmatmul.bf16.gmra.mxu0 %v8369
      %v8455 = vpop.f32.mrf.mxu0
      %v8456 = vadd.f32 0.0, %v8455
      %v8457 = vpop.f32.mrf.mxu0
      %v8458 = vadd.f32 0.0, %v8457
      %8459 = vdwg.mxu0
      %v8460 = vadd.f32 %v7602, %v8381
      %v8461 = vadd.f32 %v7604, %v8383
      %v8462 = vadd.f32 %v7607, %v8386
      %v8463 = vadd.f32 %v7609, %v8388
      %v8464 = vadd.f32 %v7612, %v8391
      %v8465 = vadd.f32 %v7614, %v8393
      %v8466 = vadd.f32 %v7617, %v8396
      %v8467 = vadd.f32 %v7619, %v8398
      %v8468 = vadd.f32 %v7622, %v8401
      %v8469 = vadd.f32 %v7624, %v8403
      %v8470 = vadd.f32 %v7627, %v8406
      %v8471 = vadd.f32 %v7629, %v8408
      %v8472 = vadd.f32 %v7632, %v8411
      %v8473 = vadd.f32 %v7634, %v8413
      %v8474 = vadd.f32 %v7637, %v8416
      %v8475 = vadd.f32 %v7639, %v8418
      %v8476 = vadd.f32 %v7642, %v8421
      %v8477 = vadd.f32 %v7644, %v8423
      %v8478 = vadd.f32 %v7647, %v8426
      %v8479 = vadd.f32 %v7649, %v8428
      %v8480 = vadd.f32 %v7652, %v8431
      %v8481 = vadd.f32 %v7654, %v8433
      %v8482 = vadd.f32 %v7657, %v8436
      %v8483 = vadd.f32 %v7659, %v8438
      %v8484 = vadd.f32 %v7662, %v8441
      %v8485 = vadd.f32 %v7664, %v8443
      %v8486 = vadd.f32 %v7667, %v8446
      %v8487 = vadd.f32 %v7669, %v8448
      %v8488 = vadd.f32 %v7672, %v8451
      %v8489 = vadd.f32 %v7674, %v8453
      %v8490 = vadd.f32 %v7677, %v8456
      %v8491 = vadd.f32 %v7679, %v8458
      %v8492 = vld [vmem:[%s8] sm:$0x1]
      %v8494 = vperm.slane %v8492, 0
      %v8496 = vmul.f32 %v8460, %v8494
      %v8497 = vmul.f32 %v8461, %v8494
      %v8498 = vmul.f32 %v8462, %v8494
      %v8499 = vmul.f32 %v8463, %v8494
      %v8500 = vmul.f32 %v8464, %v8494
      %v8501 = vmul.f32 %v8465, %v8494
      %v8502 = vmul.f32 %v8466, %v8494
      %v8503 = vmul.f32 %v8467, %v8494
      %v8504 = vmul.f32 %v8468, %v8494
      %v8505 = vmul.f32 %v8469, %v8494
      %v8506 = vmul.f32 %v8470, %v8494
      %v8507 = vmul.f32 %v8471, %v8494
      %v8508 = vmul.f32 %v8472, %v8494
      %v8509 = vmul.f32 %v8473, %v8494
      %v8510 = vmul.f32 %v8474, %v8494
      %v8511 = vmul.f32 %v8475, %v8494
      %v8512 = vmul.f32 %v8476, %v8494
      %v8513 = vmul.f32 %v8477, %v8494
      %v8514 = vmul.f32 %v8478, %v8494
      %v8515 = vmul.f32 %v8479, %v8494
      %v8516 = vmul.f32 %v8480, %v8494
      %v8517 = vmul.f32 %v8481, %v8494
      %v8518 = vmul.f32 %v8482, %v8494
      %v8519 = vmul.f32 %v8483, %v8494
      %v8520 = vmul.f32 %v8484, %v8494
      %v8521 = vmul.f32 %v8485, %v8494
      %v8522 = vmul.f32 %v8486, %v8494
      %v8523 = vmul.f32 %v8487, %v8494
      %v8524 = vmul.f32 %v8488, %v8494
      %v8525 = vmul.f32 %v8489, %v8494
      %v8526 = vmul.f32 %v8490, %v8494
      %v8527 = vmul.f32 %v8491, %v8494
      %v8528 = vld [vmem:[%s9] sm:$0x1]
      %v8530 = vperm.slane %v8528, 0
      %v8532 = vadd.f32 %v8496, %v8530
      %v8533 = vadd.f32 %v8497, %v8530
      %v8534 = vadd.f32 %v8498, %v8530
      %v8535 = vadd.f32 %v8499, %v8530
      %v8536 = vadd.f32 %v8500, %v8530
      %v8537 = vadd.f32 %v8501, %v8530
      %v8538 = vadd.f32 %v8502, %v8530
      %v8539 = vadd.f32 %v8503, %v8530
      %v8540 = vadd.f32 %v8504, %v8530
      %v8541 = vadd.f32 %v8505, %v8530
      %v8542 = vadd.f32 %v8506, %v8530
      %v8543 = vadd.f32 %v8507, %v8530
      %v8544 = vadd.f32 %v8508, %v8530
      %v8545 = vadd.f32 %v8509, %v8530
      %v8546 = vadd.f32 %v8510, %v8530
      %v8547 = vadd.f32 %v8511, %v8530
      %v8548 = vadd.f32 %v8512, %v8530
      %v8549 = vadd.f32 %v8513, %v8530
      %v8550 = vadd.f32 %v8514, %v8530
      %v8551 = vadd.f32 %v8515, %v8530
      %v8552 = vadd.f32 %v8516, %v8530
      %v8553 = vadd.f32 %v8517, %v8530
      %v8554 = vadd.f32 %v8518, %v8530
      %v8555 = vadd.f32 %v8519, %v8530
      %v8556 = vadd.f32 %v8520, %v8530
      %v8557 = vadd.f32 %v8521, %v8530
      %v8558 = vadd.f32 %v8522, %v8530
      %v8559 = vadd.f32 %v8523, %v8530
      %v8560 = vadd.f32 %v8524, %v8530
      %v8561 = vadd.f32 %v8525, %v8530
      %v8562 = vadd.f32 %v8526, %v8530
      %v8563 = vadd.f32 %v8527, %v8530
      %v8564 = vmax.f32 %v8532, 0.0
      %v8565 = vmax.f32 %v8533, 0.0
      %v8566 = vmax.f32 %v8534, 0.0
      %v8567 = vmax.f32 %v8535, 0.0
      %v8568 = vmax.f32 %v8536, 0.0
      %v8569 = vmax.f32 %v8537, 0.0
      %v8570 = vmax.f32 %v8538, 0.0
      %v8571 = vmax.f32 %v8539, 0.0
      %v8572 = vmax.f32 %v8540, 0.0
      %v8573 = vmax.f32 %v8541, 0.0
      %v8574 = vmax.f32 %v8542, 0.0
      %v8575 = vmax.f32 %v8543, 0.0
      %v8576 = vmax.f32 %v8544, 0.0
      %v8577 = vmax.f32 %v8545, 0.0
      %v8578 = vmax.f32 %v8546, 0.0
      %v8579 = vmax.f32 %v8547, 0.0
      %v8580 = vmax.f32 %v8548, 0.0
      %v8581 = vmax.f32 %v8549, 0.0
      %v8582 = vmax.f32 %v8550, 0.0
      %v8583 = vmax.f32 %v8551, 0.0
      %v8584 = vmax.f32 %v8552, 0.0
      %v8585 = vmax.f32 %v8553, 0.0
      %v8586 = vmax.f32 %v8554, 0.0
      %v8587 = vmax.f32 %v8555, 0.0
      %v8588 = vmax.f32 %v8556, 0.0
      %v8589 = vmax.f32 %v8557, 0.0
      %v8590 = vmax.f32 %v8558, 0.0
      %v8591 = vmax.f32 %v8559, 0.0
      %v8592 = vmax.f32 %v8560, 0.0
      %v8593 = vmax.f32 %v8561, 0.0
      %v8594 = vmax.f32 %v8562, 0.0
      %v8595 = vmax.f32 %v8563, 0.0
      %v8596 = vpack.c.bf16 %v8565, %v8564
      %v8597 = vpack.c.bf16 %v8567, %v8566
      %v8598 = vpack.c.bf16 %v8569, %v8568
      %v8599 = vpack.c.bf16 %v8571, %v8570
      %v8600 = vpack.c.bf16 %v8573, %v8572
      %v8601 = vpack.c.bf16 %v8575, %v8574
      %v8602 = vpack.c.bf16 %v8577, %v8576
      %v8603 = vpack.c.bf16 %v8579, %v8578
      %v8604 = vpack.c.bf16 %v8581, %v8580
      %v8605 = vpack.c.bf16 %v8583, %v8582
      %v8606 = vpack.c.bf16 %v8585, %v8584
      %v8607 = vpack.c.bf16 %v8587, %v8586
      %v8608 = vpack.c.bf16 %v8589, %v8588
      %v8609 = vpack.c.bf16 %v8591, %v8590
      %v8610 = vpack.c.bf16 %v8593, %v8592
      %v8611 = vpack.c.bf16 %v8595, %v8594
      %v8612 = vld [vmem:[%s10] sm:$0xf]
      %v8613 = vld [vmem:[%s10 + $0x4] sm:$0xf]
      %v8614 = vld [vmem:[%s10 + $0x8] sm:$0xf]
      %v8615 = vld [vmem:[%s10 + $0xc] sm:$0xf]
      %v8616 = vld [vmem:[%s11] sm:$0x1]
      %v8618 = vperm.slane %v8616, 0
      %v8624 = vunpack.c.l.b16 %v8612
      %v8625 = vunpack.c.l.b16 %v8613
      %v8626 = vunpack.c.l.b16 %v8614
      %v8627 = vunpack.c.l.b16 %v8615
      %v8628 = vpack.c.b16 %v8625, %v8624
      %v8629 = vpack.c.b16 %v8627, %v8626
      %v8633 = vsel %vm2185, %v8596, 0
      %v8636 = vsel %vm2185, %v8597, 0
      %v8639 = vsel %vm2185, %v8598, 0
      %v8642 = vsel %vm2185, %v8599, 0
      %v8645 = vsel %vm2185, %v8600, 0
      %v8648 = vsel %vm2185, %v8601, 0
      %v8651 = vsel %vm2185, %v8602, 0
      %v8654 = vsel %vm2185, %v8603, 0
      %v8657 = vsel %vm2185, %v8604, 0
      %v8660 = vsel %vm2185, %v8605, 0
      %v8663 = vsel %vm2185, %v8606, 0
      %v8666 = vsel %vm2185, %v8607, 0
      %v8669 = vsel %vm2185, %v8608, 0
      %v8672 = vsel %vm2185, %v8609, 0
      %v8675 = vsel %vm2185, %v8610, 0
      %v8678 = vsel %vm2185, %v8611, 0
      %8680 = vmatpush.bf16.msra.mxu0 0
      %8681 = vmatpush.bf16.msra.mxu0 0
      %8682 = vmatpush.bf16.msra.mxu0 0
      %8683 = vmatpush.bf16.msra.mxu0 0
      %8684 = vmatpush.bf16.msra.mxu0 0
      %8685 = vmatpush.bf16.msra.mxu0 0
      %8686 = vmatpush.bf16.msra.mxu0 %v8629
      %8687 = vmatpush.bf16.msra.mxu0 %v8628
      %8688 = vmatmul.bf16.gmra.mxu0 %v8633
      %v8689 = vpop.f32.mrf.mxu0
      %v8690 = vadd.f32 %v8618, %v8689
      %v8691 = vpop.f32.mrf.mxu0
      %v8692 = vadd.f32 %v8618, %v8691
      %8693 = vmatmul.bf16.gmra.mxu0 %v8636
      %v8694 = vpop.f32.mrf.mxu0
      %v8695 = vadd.f32 %v8618, %v8694
      %v8696 = vpop.f32.mrf.mxu0
      %v8697 = vadd.f32 %v8618, %v8696
      %8698 = vmatmul.bf16.gmra.mxu0 %v8639
      %v8699 = vpop.f32.mrf.mxu0
      %v8700 = vadd.f32 %v8618, %v8699
      %v8701 = vpop.f32.mrf.mxu0
      %v8702 = vadd.f32 %v8618, %v8701
      %8703 = vmatmul.bf16.gmra.mxu0 %v8642
      %v8704 = vpop.f32.mrf.mxu0
      %v8705 = vadd.f32 %v8618, %v8704
      %v8706 = vpop.f32.mrf.mxu0
      %v8707 = vadd.f32 %v8618, %v8706
      %8708 = vmatmul.bf16.gmra.mxu0 %v8645
      %v8709 = vpop.f32.mrf.mxu0
      %v8710 = vadd.f32 %v8618, %v8709
      %v8711 = vpop.f32.mrf.mxu0
      %v8712 = vadd.f32 %v8618, %v8711
      %8713 = vmatmul.bf16.gmra.mxu0 %v8648
      %v8714 = vpop.f32.mrf.mxu0
      %v8715 = vadd.f32 %v8618, %v8714
      %v8716 = vpop.f32.mrf.mxu0
      %v8717 = vadd.f32 %v8618, %v8716
      %8718 = vmatmul.bf16.gmra.mxu0 %v8651
      %v8719 = vpop.f32.mrf.mxu0
      %v8720 = vadd.f32 %v8618, %v8719
      %v8721 = vpop.f32.mrf.mxu0
      %v8722 = vadd.f32 %v8618, %v8721
      %8723 = vmatmul.bf16.gmra.mxu0 %v8654
      %v8724 = vpop.f32.mrf.mxu0
      %v8725 = vadd.f32 %v8618, %v8724
      %v8726 = vpop.f32.mrf.mxu0
      %v8727 = vadd.f32 %v8618, %v8726
      %8728 = vmatmul.bf16.gmra.mxu0 %v8657
      %v8729 = vpop.f32.mrf.mxu0
      %v8730 = vadd.f32 %v8618, %v8729
      %v8731 = vpop.f32.mrf.mxu0
      %v8732 = vadd.f32 %v8618, %v8731
      %8733 = vmatmul.bf16.gmra.mxu0 %v8660
      %v8734 = vpop.f32.mrf.mxu0
      %v8735 = vadd.f32 %v8618, %v8734
      %v8736 = vpop.f32.mrf.mxu0
      %v8737 = vadd.f32 %v8618, %v8736
      %8738 = vmatmul.bf16.gmra.mxu0 %v8663
      %v8739 = vpop.f32.mrf.mxu0
      %v8740 = vadd.f32 %v8618, %v8739
      %v8741 = vpop.f32.mrf.mxu0
      %v8742 = vadd.f32 %v8618, %v8741
      %8743 = vmatmul.bf16.gmra.mxu0 %v8666
      %v8744 = vpop.f32.mrf.mxu0
      %v8745 = vadd.f32 %v8618, %v8744
      %v8746 = vpop.f32.mrf.mxu0
      %v8747 = vadd.f32 %v8618, %v8746
      %8748 = vmatmul.bf16.gmra.mxu0 %v8669
      %v8749 = vpop.f32.mrf.mxu0
      %v8750 = vadd.f32 %v8618, %v8749
      %v8751 = vpop.f32.mrf.mxu0
      %v8752 = vadd.f32 %v8618, %v8751
      %8753 = vmatmul.bf16.gmra.mxu0 %v8672
      %v8754 = vpop.f32.mrf.mxu0
      %v8755 = vadd.f32 %v8618, %v8754
      %v8756 = vpop.f32.mrf.mxu0
      %v8757 = vadd.f32 %v8618, %v8756
      %8758 = vmatmul.bf16.gmra.mxu0 %v8675
      %v8759 = vpop.f32.mrf.mxu0
      %v8760 = vadd.f32 %v8618, %v8759
      %v8761 = vpop.f32.mrf.mxu0
      %v8762 = vadd.f32 %v8618, %v8761
      %8763 = vmatmul.bf16.gmra.mxu0 %v8678
      %v8764 = vpop.f32.mrf.mxu0
      %v8765 = vadd.f32 %v8618, %v8764
      %v8766 = vpop.f32.mrf.mxu0
      %v8767 = vadd.f32 %v8618, %v8766
      %8768 = vdwg.mxu0
      %vm8769 = vcmask 23552
      %8770 = vst.msk [vmem:[%s433] sm:$0xff] %vm8769, %v8690
      %8771 = vst.msk [vmem:[%s433 + $0x8] sm:$0xff] %vm8769, %v8692
      %8772 = vst.msk [vmem:[%s433 + $0x10] sm:$0xff] %vm8769, %v8695
      %8773 = vst.msk [vmem:[%s433 + $0x18] sm:$0xff] %vm8769, %v8697
      %8774 = vst.msk [vmem:[%s433 + $0x20] sm:$0xff] %vm8769, %v8700
      %8775 = vst.msk [vmem:[%s433 + $0x28] sm:$0xff] %vm8769, %v8702
      %8776 = vst.msk [vmem:[%s433 + $0x30] sm:$0xff] %vm8769, %v8705
      %8777 = vst.msk [vmem:[%s433 + $0x38] sm:$0xff] %vm8769, %v8707
      %8778 = vst.msk [vmem:[%s433 + $0x40] sm:$0xff] %vm8769, %v8710
      %8779 = vst.msk [vmem:[%s433 + $0x48] sm:$0xff] %vm8769, %v8712
      %8780 = vst.msk [vmem:[%s433 + $0x50] sm:$0xff] %vm8769, %v8715
      %8781 = vst.msk [vmem:[%s433 + $0x58] sm:$0xff] %vm8769, %v8717
      %8782 = vst.msk [vmem:[%s433 + $0x60] sm:$0xff] %vm8769, %v8720
      %8783 = vst.msk [vmem:[%s433 + $0x68] sm:$0xff] %vm8769, %v8722
      %8784 = vst.msk [vmem:[%s433 + $0x70] sm:$0xff] %vm8769, %v8725
      %8785 = vst.msk [vmem:[%s433 + $0x78] sm:$0xff] %vm8769, %v8727
      %8786 = vst.msk [vmem:[%s433 + $0x80] sm:$0xff] %vm8769, %v8730
      %8787 = vst.msk [vmem:[%s433 + $0x88] sm:$0xff] %vm8769, %v8732
      %8788 = vst.msk [vmem:[%s433 + $0x90] sm:$0xff] %vm8769, %v8735
      %8789 = vst.msk [vmem:[%s433 + $0x98] sm:$0xff] %vm8769, %v8737
      %8790 = vst.msk [vmem:[%s433 + $0xa0] sm:$0xff] %vm8769, %v8740
      %8791 = vst.msk [vmem:[%s433 + $0xa8] sm:$0xff] %vm8769, %v8742
      %8792 = vst.msk [vmem:[%s433 + $0xb0] sm:$0xff] %vm8769, %v8745
      %8793 = vst.msk [vmem:[%s433 + $0xb8] sm:$0xff] %vm8769, %v8747
      %8794 = vst.msk [vmem:[%s433 + $0xc0] sm:$0xff] %vm8769, %v8750
      %8795 = vst.msk [vmem:[%s433 + $0xc8] sm:$0xff] %vm8769, %v8752
      %8796 = vst.msk [vmem:[%s433 + $0xd0] sm:$0xff] %vm8769, %v8755
      %8797 = vst.msk [vmem:[%s433 + $0xd8] sm:$0xff] %vm8769, %v8757
      %8798 = vst.msk [vmem:[%s433 + $0xe0] sm:$0xff] %vm8769, %v8760
      %8799 = vst.msk [vmem:[%s433 + $0xe8] sm:$0xff] %vm8769, %v8762
      %8800 = vst.msk [vmem:[%s433 + $0xf0] sm:$0xff] %vm8769, %v8765
      %8801 = vst.msk [vmem:[%s433 + $0xf8] sm:$0xff] %vm8769, %v8767
      %p8802 = scmp.lt.s32.totalorder %s23, 1
      %s8803 = scalar_select %p8802, %s23, 1
      %s8804 = smul.addr %s8803, 32
      %s8805 = smul.addr %s8804, 8
      %s8806 = scalar_lea.vmem %s12, %s8805
      // Predicated region
      $region69: #{decoder_forward.3} parent=67 // pred_check
        %p8807 = pneg %p303
      $region70: #{decoder_forward.3} parent=67 // pred_check_branch
        %8809 = sbr.rel (%p8807) target = $region72
      $region71: #{decoder_forward.3} parent=67 // pred_region
        _
      $region72: #{decoder_forward.3} parent=67 // pred_fallthru
        _
    $region68: #{decoder_forward.3} parent=5 // pred_fallthru
      _
    %p8810 = scmp.le.s32.totalorder 2, %s18
    // Predicated region
    $region73: #{decoder_forward.3} parent=5 // pred_check
      %p8811 = pneg %p8810
    $region74: #{decoder_forward.3} parent=5 // pred_check_branch
      %8813 = sbr.rel (%p8811) target = $region76
    $region75: #{decoder_forward.3} parent=5 // pred_region
      %s8814 = ssub.s32 %s18, 2
      // Predicated region
      $region77: #{decoder_forward.3} parent=75 // pred_check
        %p8815 = pneg %p309
      $region78: #{decoder_forward.3} parent=75 // pred_check_branch
        %8817 = sbr.rel (%p8815) target = $region80
      $region79: #{decoder_forward.3} parent=75 // pred_region
        %p8818 = scmp.lt.s32.totalorder %s24, 1
        %s8819 = scalar_select %p8818, %s24, 1
        %s8820 = smul.addr %s8819, 32
        %s8821 = smul.addr %s8820, 8
        %s8822 = scalar_lea.vmem %s12, %s8821
      $region80: #{decoder_forward.3} parent=75 // pred_fallthru
        _
    $region76: #{decoder_forward.3} parent=5 // pred_fallthru
      _
  $region6: #{decoder_forward.3} parent=0 // loop_footer
    %s22 = sadd.s32 1, %s18
  $region7: #{decoder_forward.3} parent=0 // loop_footer_branch
    %17 = sbr.rel target = $region3
  $region8: #{decoder_forward.3} parent=0 // loop_exit
    _

</llo_original>
